<compile_context>
chip_gen: v6e
topology: v6e:2x2x1
jax: 0.10.0
libtpu: 0.0.40
codegen_flags: <defaults>
</compile_context>

<pallas_src>
import jax
import jax.numpy as jnp
from jax import lax
from jax.experimental import pallas as pl
from jax.experimental.pallas import tpu as pltpu


# --------------------------- compiler params helpers --------------------------

def _vmem_limit_bytes():
    # ~3/4 of physical VMEM, capped; falls back to a value safe on v5e/v6e
    # (128 MiB physical) and v7x (64 MiB physical).
    try:
        cap = getattr(pltpu.get_tpu_info(), "vmem_capacity_bytes", None)
        if cap:
            return int(min(cap * 3 // 4, 96 * 1024 * 1024))
    except Exception:
        pass
    return 48 * 1024 * 1024


_VMEM_LIMIT = _vmem_limit_bytes()


def _cp(n_axes):
    return pltpu.CompilerParams(
        dimension_semantics=("parallel",) * n_axes,
        vmem_limit_bytes=_VMEM_LIMIT,
    )


# ------------------------------ tile-size pickers ----------------------------

def _pick_row_tile(M, target=1024):
    """Row tile for (rows, C) kernels.

    Prefers a multiple-of-8 divisor of M (no pad / slice HBM passes) close to
    `target`, and >=2 grid steps when M is large enough (v7x megacore)."""
    if M <= target:
        if M >= 256 and M % 16 == 0:
            return M // 2, M
        return M, M
    t = (target // 8) * 8
    while t >= 128:
        if M % t == 0:
            return t, M
        t -= 8
    TM = (target // 8) * 8                 # pathological M: fall back to padding
    return TM, pl.cdiv(M, TM) * TM


def _pick_lane_tile(B, target=512):
    """Lane (minor-axis) tile: multiple of 128, or the full extent."""
    if B <= target:
        if B % 256 == 0 and B >= 256:
            return B // 2, B               # >=2 grid steps for v7x megacore
        return B, B
    t = (target // 128) * 128
    while t >= 128:
        if B % t == 0:
            return t, B
        t -= 128
    TB = max((target // 128) * 128, 128)   # fall back to padding
    return TB, pl.cdiv(B, TB) * TB


def _pick_channel_tile(C, H, W, budget=8 * 1024 * 1024):
    """Channel tile for the depthwise chain (multiple of 128, or full C)."""
    def bytes_for(tc):
        return (8 * H * W * tc                       # dbl-buffered bf16 in+out
                + (H + 2) * (W + 2) * tc * 4         # f32 halo scratch
                + 3 * H * W * tc * 4)                # live f32 temporaries
    cands = [d for d in range(128, C + 1, 128) if C % d == 0]
    if not cands:
        return C                                     # C < 128 or not 128-aligned
    fitting = [d for d in cands if bytes_for(d) <= budget]
    return max(fitting) if fitting else min(cands)


# ----------------------------- 1x1 conv (matmul) -----------------------------

def _pw_kernel(x_ref, w_ref, b_ref, o_ref):
    # (TM, Cin) @ (Cin, Cout) on the MXU: bf16 operands, f32 accumulation.
    acc = jnp.dot(x_ref[...], w_ref[...], preferred_element_type=jnp.float32)
    o_ref[...] = (acc + b_ref[...]).astype(o_ref.dtype)


def pointwise_conv_rows(x_rows, w_io, b, tm=1024, out_dtype=None):
    """x_rows: (M, Cin) bf16; w_io: (Cin, Cout); b: (Cout,) or None."""
    M, cin = x_rows.shape
    cout = w_io.shape[1]
    out_dtype = x_rows.dtype if out_dtype is None else out_dtype
    TM, Mp = _pick_row_tile(M, tm)
    xp = x_rows if Mp == M else jnp.pad(x_rows, ((0, Mp - M), (0, 0)))
    bvec = (jnp.zeros((cout,), jnp.float32) if b is None
            else b.astype(jnp.float32)).reshape(1, cout)
    # NOTE: cout below 128 (e.g. 96/32 in the demo) still forces masked stores;
    # padding channels internally would cost extra whole-tensor HBM passes, so
    # it is only worth doing when the model dims are already 128-friendly.
    out = pl.pallas_call(
        _pw_kernel,
        out_shape=jax.ShapeDtypeStruct((Mp, cout), out_dtype),
        grid=(Mp // TM,),
        in_specs=[
            pl.BlockSpec((TM, cin), lambda i: (i, 0)),
            pl.BlockSpec((cin, cout), lambda i: (0, 0)),   # VMEM-resident weight
            pl.BlockSpec((1, cout), lambda i: (0, 0)),
        ],
        out_specs=pl.BlockSpec((TM, cout), lambda i: (i, 0)),
        compiler_params=_cp(1),
    )(xp, w_io.astype(jnp.bfloat16), bvec)
    return out if Mp == M else out[:M]


# ---------------------- exact GELU helper (f32 erf poly) ---------------------

def _erf_f32(x):
    # Eigen / XLA single-precision erf: x*P(x^2)/Q(x^2), |x| clamped to 4.
    x = jnp.clip(x, -4.0, 4.0)
    x2 = x * x
    a = 0.00022905065861350646
    a = a * x2 + 0.0034082910107109506
    a = a * x2 + 0.050955695062380861
    a = a * x2 + 0.18520832239976145
    a = a * x2 + 1.128379143519084
    b = -1.1791602954361697e-7
    b = b * x2 + 0.000023547966471313185
    b = b * x2 + 0.0010179625278914885
    b = b * x2 + 0.014070470171167667
    b = b * x2 + 0.11098505178285362
    b = b * x2 + 0.49746925110067538
    b = b * x2 + 1.0
    return x * a / b


# --------------------- depthwise 3x3 conv chain (fused) ----------------------

def _make_dw_kernel(n_pass, fuse_ln):
    def kernel(*refs):
        x_ref = refs[0]
        wb = refs[1:1 + 2 * n_pass]
        idx = 1 + 2 * n_pass
        if fuse_ln:
            lnw_ref, lnb_ref = refs[idx], refs[idx + 1]
            idx += 2
        o_ref, pad_ref = refs[idx], refs[idx + 1]
        _, H, W, C = o_ref.shape

        # Zero only the 1-px halo border (interior is always overwritten).
        pad_ref[0:1, :, :] = jnp.zeros((1, W + 2, C), jnp.float32)
        pad_ref[H + 1:H + 2, :, :] = jnp.zeros((1, W + 2, C), jnp.float32)
        pad_ref[:, 0:1, :] = jnp.zeros((H + 2, 1, C), jnp.float32)
        pad_ref[:, W + 1:W + 2, :] = jnp.zeros((H + 2, 1, C), jnp.float32)
        pad_ref[1:H + 1, 1:W + 1, :] = x_ref[0].astype(jnp.float32)

        for p in range(n_pass):
            w_ref, b_ref = wb[2 * p], wb[2 * p + 1]      # (9, C), (1, C)
            acc = None
            # Hoist the sublane-unaligned W-shift: 3 shifted column slabs per
            # pass instead of 9 shifted reads; H-shifts below are vreg-granular.
            for j in range(3):
                col = pad_ref[:, j:j + W, :]             # (H+2, W, C)
                for i in range(3):
                    tap = w_ref[i * 3 + j:i * 3 + j + 1, :].reshape(1, 1, C)
                    term = col[i:i + H, :, :] * tap
                    acc = term if acc is None else acc + term
            acc = acc + b_ref[...].reshape(1, 1, C)
            if p + 1 < n_pass:
                pad_ref[1:H + 1, 1:W + 1, :] = acc       # re-pad for next conv
            else:
                if fuse_ln:
                    # WithBias_LayerNorm over channels + exact(erf) GELU, fused
                    # so the (n,h,w,c) activation never round-trips HBM.
                    mu = jnp.mean(acc, axis=-1, keepdims=True)
                    xc = acc - mu
                    var = jnp.mean(xc * xc, axis=-1, keepdims=True)
                    xn = (xc * lax.rsqrt(var + 1e-5) * lnw_ref[...].reshape(1, 1, C)
                          + lnb_ref[...].reshape(1, 1, C))
                    acc = 0.5 * xn * (1.0 + _erf_f32(xn * 0.7071067811865476))
                o_ref[0] = acc.astype(o_ref.dtype)
    return kernel


def depthwise_conv3x3_chain(x_cl, wb_list, ln_gelu=None):
    """x_cl: (N, H, W, C) channels-last bf16; wb_list: [(w (9, C), b (C,)), ...].

    Applies the depthwise 3x3 convs back-to-back on the same VMEM tile (zero
    re-padding between passes, matching torch padding=1 on each conv).  If
    `ln_gelu=(w, b)` is given, fuses channel-LayerNorm + GELU on the last pass
    (requires the channel tile to cover all channels)."""
    n, H, W, C = x_cl.shape
    TC = _pick_channel_tile(C, H, W)
    fuse_ln = ln_gelu is not None
    if fuse_ln:
        assert TC == C, "LN+GELU fusion requires a full-channel tile"
    n_pass = len(wb_list)

    flat = []
    in_specs = [pl.BlockSpec((1, H, W, TC), lambda b, cc: (b, 0, 0, cc))]
    for w9c, bc in wb_list:
        flat += [w9c.astype(jnp.float32), bc.reshape(1, C).astype(jnp.float32)]
        in_specs += [pl.BlockSpec((9, TC), lambda b, cc: (0, cc)),
                     pl.BlockSpec((1, TC), lambda b, cc: (0, cc))]
    if fuse_ln:
        lw, lb = ln_gelu
        flat += [lw.reshape(1, C).astype(jnp.float32),
                 lb.reshape(1, C).astype(jnp.float32)]
        in_specs += [pl.BlockSpec((1, TC), lambda b, cc: (0, cc)),
                     pl.BlockSpec((1, TC), lambda b, cc: (0, cc))]

    return pl.pallas_call(
        _make_dw_kernel(n_pass, fuse_ln),
        out_shape=jax.ShapeDtypeStruct((n, H, W, C), x_cl.dtype),
        grid=(n, C // TC),
        in_specs=in_specs,
        out_specs=pl.BlockSpec((1, H, W, TC), lambda b, cc: (b, 0, 0, cc)),
        scratch_shapes=[pltpu.VMEM((H + 2, W + 2, TC), jnp.float32)],
        compiler_params=_cp(2),
    )(x_cl, *flat)


# --------------------------------- attention ---------------------------------

def _attn_kernel(fac_ref, q_ref, k_ref, v_ref, o_ref):
    # Blocks are (W, dh, TB) with the attention batch TB (>=128 when possible)
    # on the lane axis, so every vreg op / load / store is lane-dense.  Per-head
    # dh is far below the MXU tile, so the contractions run on the VPU as
    # broadcast-FMAs with statically unrolled tiny loops (W, dh are small).
    W_, dh, TB = q_ref.shape
    q = q_ref[...].astype(jnp.float32)
    k = k_ref[...].astype(jnp.float32)
    v = v_ref[...].astype(jnp.float32)
    # F.normalize(dim=-1): x * rsqrt(max(||x||^2, 1e-24))  (dh is axis 1 here)
    qn = q * lax.rsqrt(jnp.maximum(jnp.sum(q * q, axis=1, keepdims=True), 1e-24))
    kn = k * lax.rsqrt(jnp.maximum(jnp.sum(k * k, axis=1, keepdims=True), 1e-24))
    qn = qn * fac_ref[0]                        # fold fac into q
    # scores s[i, j, b] = sum_d qn[i, d, b] * kn[j, d, b]
    s = jnp.zeros((W_, W_, TB), jnp.float32)
    for d in range(dh):
        qd = qn[:, d, :].reshape(W_, 1, TB)
        kd = kn[:, d, :].reshape(1, W_, TB)
        s = s + qd * kd
    # softmax over the key axis (axis=1)
    s = s - jnp.max(s, axis=1, keepdims=True)
    p = jnp.exp(s)
    p = p * pl.reciprocal(jnp.sum(p, axis=1, keepdims=True), approx=True)
    # out[i, d, b] = sum_j p[i, j, b] * v[j, d, b]
    out = jnp.zeros((W_, dh, TB), jnp.float32)
    for j in range(W_):
        pj = p[:, j, :].reshape(W_, 1, TB)
        vj = v[j, :, :].reshape(1, dh, TB)
        out = out + pj * vj
    o_ref[...] = out.astype(o_ref.dtype)


def attention_lanes(q, k, v, fac, tb_target=512):
    """q, k, v: (W, dh, B) with the attention batch B = n*nh*h on the lane axis."""
    W_, dh, B = q.shape
    TB, Bp = _pick_lane_tile(B, tb_target)
    if Bp != B:
        pad = ((0, 0), (0, 0), (0, Bp - B))
        q, k, v = jnp.pad(q, pad), jnp.pad(k, pad), jnp.pad(v, pad)
    spec = pl.BlockSpec((W_, dh, TB), lambda b: (0, 0, b))
    out = pl.pallas_call(
        _attn_kernel,
        out_shape=jax.ShapeDtypeStruct((W_, dh, Bp), q.dtype),
        grid=(Bp // TB,),
        in_specs=[pl.BlockSpec(memory_space=pltpu.MemorySpace.SMEM),
                  spec, spec, spec],
        out_specs=spec,
        compiler_params=_cp(1),
    )(fac, q, k, v)
    return out if Bp == B else out[:, :, :B]


# ----------------- channel LayerNorm + GELU (fallback, row-tiled) ------------

def _ln_gelu_kernel(x_ref, w_ref, b_ref, o_ref):
    x = x_ref[...].astype(jnp.float32)
    mu = jnp.mean(x, axis=-1, keepdims=True)
    xc = x - mu
    var = jnp.mean(xc * xc, axis=-1, keepdims=True)
    xn = xc * lax.rsqrt(var + 1e-5) * w_ref[...] + b_ref[...]
    o_ref[...] = (0.5 * xn * (1.0 + _erf_f32(xn * 0.7071067811865476))).astype(o_ref.dtype)


def channel_layernorm_gelu(x_rows, w, b, tm=1024):
    M, C = x_rows.shape
    TM, Mp = _pick_row_tile(M, tm)
    xp = x_rows if Mp == M else jnp.pad(x_rows, ((0, Mp - M), (0, 0)))
    out = pl.pallas_call(
        _ln_gelu_kernel,
        out_shape=jax.ShapeDtypeStruct((Mp, C), x_rows.dtype),
        grid=(Mp // TM,),
        in_specs=[pl.BlockSpec((TM, C), lambda i: (i, 0)),
                  pl.BlockSpec((1, C), lambda i: (0, 0)),
                  pl.BlockSpec((1, C), lambda i: (0, 0))],
        out_specs=pl.BlockSpec((TM, C), lambda i: (i, 0)),
        compiler_params=_cp(1),
    )(xp, w.reshape(1, C).astype(jnp.float32), b.reshape(1, C).astype(jnp.float32))
    return out if Mp == M else out[:M]


# ------------------------- plain-JAX glue pieces ------------------------------

def channel_interaction(conv_x_cl, w1, w2):
    """conv_x_cl: (n, h, w, c) channels-last -> (n, 1, 1, c) gate."""
    n, h, w, c = conv_x_cl.shape
    xf = conv_x_cl.reshape(n, h * w, c).astype(jnp.float32)
    max_r = jnp.max(xf, axis=1)
    avg_r = jnp.mean(xf, axis=1)
    # TODO(synk): SoftPool2d source not provided; assuming global softmax-weighted pooling.
    m = jnp.max(xf, axis=1, keepdims=True)
    e = jnp.exp(xf - m)
    soft_r = jnp.sum(e * xf, axis=1) / jnp.sum(e, axis=1)

    def se(y):  # Conv1x1(no bias) -> Swish -> Conv1x1(no bias) -> Tanh
        h1 = y @ w1
        h1 = h1 * jax.nn.sigmoid(h1)            # MemoryEfficientSwish
        return jnp.tanh(h1 @ w2)

    out = jax.nn.sigmoid(se(max_r) + se(avg_r) + se(soft_r))
    return out.reshape(n, 1, 1, c)


def spatial_interaction(x_cl, convs):
    """x_cl: (n, h, w, c) -> (n, h, w, 1) gate.

    The three SAME convs (3x3 / 5x5 / 7x7) feed the same sum, so by linearity
    they are pre-summed into ONE 7x7 kernel (3x fewer lane-poor XLA convs)."""
    x32 = x_cl.astype(jnp.float32)
    max_r = jnp.max(x32, axis=-1, keepdims=True)
    avg_r = jnp.mean(x32, axis=-1, keepdims=True)
    inp = jnp.concatenate([max_r, avg_r], axis=-1)               # (n, h, w, 2)
    (w3, b3), (w5, b5), (w7, b7) = convs                         # HWIO filters
    wk = (w7
          + jnp.pad(w5, ((1, 1), (1, 1), (0, 0), (0, 0)))
          + jnp.pad(w3, ((2, 2), (2, 2), (0, 0), (0, 0))))
    bk = b3 + b5 + b7
    o = lax.conv_general_dilated(inp, wk, (1, 1), 'SAME',
                                 dimension_numbers=('NHWC', 'HWIO', 'NHWC'))
    return jax.nn.sigmoid(o + bk.reshape(1, 1, 1, 1))


# ------------------------------- forward pass --------------------------------

def next_attention_impl_z(x, params):
    n, c, h, w = x.shape
    nh = params['num_heads']
    dh = c // nh

    # Internal pipeline: channels-last bf16 (halves HBM traffic everywhere);
    # all kernels accumulate in f32.
    x_cl = jnp.transpose(x, (0, 2, 3, 1)).astype(jnp.bfloat16)       # (n, h, w, c)
    rows = x_cl.reshape(n * h * w, c)

    qkv_rows = pointwise_conv_rows(rows, params['q1_w'], params['q1_b'])   # q1
    qkv = qkv_rows.reshape(n, h, w, 3 * c)
    qkv = depthwise_conv3x3_chain(                                          # q2+q3 fused
        qkv, [(params['q2_w'], params['q2_b']), (params['q3_w'], params['q3_b'])])
    q4, k4, v4 = jnp.split(qkv, 3, axis=-1)                          # (n, h, w, c)

    # Put the attention batch (n, nh, h) on the minor (lane) axis so the
    # attention kernel is >=128-lane dense even for tiny per-head dims.
    perm = (2, 4, 0, 3, 1)                                           # involution

    def to_lanes(t):    # (n, h, w, c) -> (w, dh, n*nh*h)
        return jnp.transpose(t.reshape(n, h, w, nh, dh), perm).reshape(w, dh, n * nh * h)

    def from_lanes(t):  # (w, dh, n*nh*h) -> (n, h, w, c)
        return jnp.transpose(t.reshape(w, dh, n, nh, h), perm).reshape(n, h, w, c)

    res = attention_lanes(to_lanes(q4), to_lanes(k4), to_lanes(v4), params['fac'])
    res_cl = from_lanes(res)
    v_cl = v4   # torch's rearrange of v back to 'n (nh dh) h w' is just v4 again

    # dwConv2d branch: depthwise 3x3 -> channel LayerNorm(WithBias) -> GELU.
    tc_v = _pick_channel_tile(c, h, w)
    if tc_v == c:
        conv_x = depthwise_conv3x3_chain(v_cl, [(params['dw_w'], params['dw_b'])],
                                         ln_gelu=(params['ln_w'], params['ln_b']))
    else:
        cx = depthwise_conv3x3_chain(v_cl, [(params['dw_w'], params['dw_b'])])
        conv_x = channel_layernorm_gelu(cx.reshape(n * h * w, c),
                                        params['ln_w'],
                                        params['ln_b']).reshape(n, h, w, c)

    channel_map = channel_interaction(conv_x, params['se_w1'], params['se_w2'])
    spatial_map = spatial_interaction(res_cl, params['sp_convs'])

    # Elementwise gating (XLA fuses this into a single bf16-in / bf16-out pass).
    attened_x = res_cl.astype(jnp.float32) * jax.nn.sigmoid(channel_map)  # double sigmoid (as in torch)
    conv_x_g = conv_x.astype(jnp.float32) * jax.nn.sigmoid(spatial_map)
    result = (attened_x + conv_x_g).astype(jnp.bfloat16)

    out_rows = pointwise_conv_rows(result.reshape(n * h * w, c),
                                   params['proj_w'], params['proj_b'],
                                   out_dtype=jnp.float32)
    out_cl = out_rows.reshape(n, h, w, c)
    # proj_drop(p=0.0) is identity; self.fin is unused in forward.
    return jnp.transpose(out_cl, (0, 3, 1, 2))                       # back to NCHW


# ---------------------------- deterministic params ---------------------------

def init_params(key, num_dims, num_heads, bias=True, reduction=16):
    c = num_dims
    cr = max(c // reduction, 1)
    ks = jax.random.split(key, 20)
    f = lambda k, shp, s=0.1: (s * jax.random.normal(k, shp)).astype(jnp.float32)
    zeros = lambda shp: jnp.zeros(shp, jnp.float32)
    return {
        'num_heads': num_heads,
        'q1_w': f(ks[0], (c, 3 * c)),
        'q1_b': f(ks[1], (3 * c,)) if bias else zeros((3 * c,)),
        'q2_w': f(ks[2], (9, 3 * c)),                  # (tap, channel): channels-last dw layout
        'q2_b': f(ks[3], (3 * c,)) if bias else zeros((3 * c,)),
        'q3_w': f(ks[4], (9, 3 * c)),
        'q3_b': f(ks[5], (3 * c,)) if bias else zeros((3 * c,)),
        'fac': jnp.ones((1,), jnp.float32),            # nn.Parameter(torch.ones(1))
        'proj_w': f(ks[6], (c, c)),
        'proj_b': f(ks[7], (c,)) if bias else zeros((c,)),
        'dw_w': f(ks[8], (9, c)),
        'dw_b': f(ks[9], (c,)),                        # dwConv2d conv default bias=True
        'ln_w': jnp.ones((c,), jnp.float32),
        'ln_b': zeros((c,)),
        'se_w1': f(ks[10], (c, cr)),                   # SE convs are bias=False
        'se_w2': f(ks[11], (cr, c)),
        'sp_convs': [                                  # HWIO filters for NHWC convs
            (f(ks[12], (3, 3, 2, 1)), f(ks[13], (1,))),
            (f(ks[14], (5, 5, 2, 1)), f(ks[15], (1,))),
            (f(ks[16], (7, 7, 2, 1)), f(ks[17], (1,))),
        ],
    }


if __name__ == "__main__":
    key = jax.random.PRNGKey(0)
    kx, kp = jax.random.split(key)
    # num_dims >= reduction(16) for the SE bottleneck, as in the torch module.
    n, c, h, w = 2, 32, 16, 16
    num_heads = 4
    x = jax.random.normal(kx, (n, c, h, w), dtype=jnp.float32)
    params = init_params(kp, num_dims=c, num_heads=num_heads, bias=True)

    fwd = jax.jit(lambda xx: next_attention_impl_z(xx, params))
    out = fwd(x)
    jax.block_until_ready(out)
    assert out.shape == (n, c, h, w) and out.dtype == jnp.float32
    assert bool(jnp.all(jnp.isfinite(out)))
    print("KERNEL_OK")
</pallas_src>

<mosaic_0001>
module attributes {stable_mosaic.version = 11 : i64} {
  func.func @_pw_kernel(%arg0: i32, %arg1: memref<256x32xbf16, #tpu.memory_space<vmem>>, %arg2: memref<32x96xbf16, #tpu.memory_space<vmem>>, %arg3: memref<1x96xf32, #tpu.memory_space<vmem>>, %arg4: memref<256x96xbf16, #tpu.memory_space<vmem>>) attributes {dimension_semantics = [#tpu.dimension_semantics<parallel>], iteration_bounds = array<i64: 2>, scalar_prefetch = 0 : i64, scratch_operands = 0 : i64, tpu.core_type = #tpu.core_type<tc>, window_params = [{transform_indices = @transform_0, window_bounds = array<i64: 256, 32>}, {pipeline_mode = #tpu.pipeline_mode<synchronous>, transform_indices = @transform_1, window_bounds = array<i64: 32, 96>}, {pipeline_mode = #tpu.pipeline_mode<synchronous>, transform_indices = @transform_2, window_bounds = array<i64: 1, 96>}, {transform_indices = @transform_3, window_bounds = array<i64: 256, 96>}]} {
    %c0 = arith.constant 0 : index
    %c0_0 = arith.constant 0 : index
    %0 = vector.load %arg1[%c0, %c0_0] : memref<256x32xbf16, #tpu.memory_space<vmem>>, vector<256x32xbf16>
    %c0_1 = arith.constant 0 : index
    %c0_2 = arith.constant 0 : index
    %1 = vector.load %arg2[%c0_1, %c0_2] : memref<32x96xbf16, #tpu.memory_space<vmem>>, vector<32x96xbf16>
    %cst = arith.constant dense<0.000000e+00> : vector<256x96xf32>
    %2 = tpu.matmul %0, %1, %cst {dimension_numbers = #tpu.dot_dimension_numbers<[1], [0], [0], [1], [0, 0, 1, 1], [], []>} : vector<256x32xbf16>, vector<32x96xbf16>, vector<256x96xf32> -> vector<256x96xf32>
    %c0_3 = arith.constant 0 : index
    %c0_4 = arith.constant 0 : index
    %3 = vector.load %arg3[%c0_3, %c0_4] : memref<1x96xf32, #tpu.memory_space<vmem>>, vector<1x96xf32>
    %4 = vector.broadcast %3 : vector<1x96xf32> to vector<256x96xf32>
    %5 = arith.addf %2, %4 : vector<256x96xf32>
    %6 = arith.truncf %5 : vector<256x96xf32> to vector<256x96xbf16>
    %c0_5 = arith.constant 0 : index
    %c0_6 = arith.constant 0 : index
    %7 = vector.load %arg4[%c0_5, %c0_6] : memref<256x96xbf16, #tpu.memory_space<vmem>>, vector<256x96xbf16>
    tpu.vector_store %arg4[%c0_5, %c0_6], %6 {strides = array<i32>} : memref<256x96xbf16, #tpu.memory_space<vmem>>, vector<256x96xbf16>,
    return
  }
  func.func @transform_0(%arg0: i32) -> (i32, i32) {
    %c0_i32 = arith.constant 0 : i32
    %c0_i32_0 = arith.constant 0 : i32
    return %arg0, %c0_i32 : i32, i32
  }
  func.func @transform_1(%arg0: i32) -> (i32, i32) {
    %c0_i32 = arith.constant 0 : i32
    %c0_i32_0 = arith.constant 0 : i32
    %c0_i32_1 = arith.constant 0 : i32
    return %c0_i32, %c0_i32_0 : i32, i32
  }
  func.func @transform_2(%arg0: i32) -> (i32, i32) {
    %c0_i32 = arith.constant 0 : i32
    %c0_i32_0 = arith.constant 0 : i32
    %c0_i32_1 = arith.constant 0 : i32
    return %c0_i32, %c0_i32_0 : i32, i32
  }
  func.func @transform_3(%arg0: i32) -> (i32, i32) {
    %c0_i32 = arith.constant 0 : i32
    %c0_i32_0 = arith.constant 0 : i32
    return %arg0, %c0_i32 : i32, i32
  }
}

module attributes {stable_mosaic.version = 11 : i64} {
  func.func @kernel(%arg0: i32, %arg1: i32, %arg2: memref<1x16x16x96xbf16, #tpu.memory_space<vmem>>, %arg3: memref<9x96xf32, #tpu.memory_space<vmem>>, %arg4: memref<1x96xf32, #tpu.memory_space<vmem>>, %arg5: memref<9x96xf32, #tpu.memory_space<vmem>>, %arg6: memref<1x96xf32, #tpu.memory_space<vmem>>, %arg7: memref<1x16x16x96xbf16, #tpu.memory_space<vmem>>, %arg8: memref<18x18x96xf32, #tpu.memory_space<vmem>>) attributes {dimension_semantics = [#tpu.dimension_semantics<parallel>, #tpu.dimension_semantics<parallel>], iteration_bounds = array<i64: 2, 1>, scalar_prefetch = 0 : i64, scratch_operands = 1 : i64, tpu.core_type = #tpu.core_type<tc>, window_params = [{transform_indices = @transform_0, window_bounds = array<i64: 1, 16, 16, 96>}, {transform_indices = @transform_1, window_bounds = array<i64: 9, 96>}, {transform_indices = @transform_2, window_bounds = array<i64: 1, 96>}, {transform_indices = @transform_3, window_bounds = array<i64: 9, 96>}, {transform_indices = @transform_4, window_bounds = array<i64: 1, 96>}, {transform_indices = @transform_5, window_bounds = array<i64: 1, 16, 16, 96>}]} {
    %cst = arith.constant 0.000000e+00 : f32
    %0 = vector.broadcast %cst : f32 to vector<1x18x96xf32>
    %c0 = arith.constant 0 : index
    %c0_0 = arith.constant 0 : index
    %c0_1 = arith.constant 0 : index
    %1 = vector.load %arg8[%c0, %c0_0, %c0_1] : memref<18x18x96xf32, #tpu.memory_space<vmem>>, vector<1x18x96xf32>
    tpu.vector_store %arg8[%c0, %c0_0, %c0_1], %0 {strides = array<i32>} : memref<18x18x96xf32, #tpu.memory_space<vmem>>, vector<1x18x96xf32>,
    %cst_2 = arith.constant 0.000000e+00 : f32
    %2 = vector.broadcast %cst_2 : f32 to vector<1x18x96xf32>
    %c17 = arith.constant 17 : index
    %c0_3 = arith.constant 0 : index
    %c0_4 = arith.constant 0 : index
    %3 = vector.load %arg8[%c17, %c0_3, %c0_4] : memref<18x18x96xf32, #tpu.memory_space<vmem>>, vector<1x18x96xf32>
    tpu.vector_store %arg8[%c17, %c0_3, %c0_4], %2 {strides = array<i32>} : memref<18x18x96xf32, #tpu.memory_space<vmem>>, vector<1x18x96xf32>,
    %cst_5 = arith.constant 0.000000e+00 : f32
    %4 = vector.broadcast %cst_5 : f32 to vector<18x1x96xf32>
    %c0_6 = arith.constant 0 : index
    %c0_7 = arith.constant 0 : index
    %c0_8 = arith.constant 0 : index
    %5 = vector.load %arg8[%c0_6, %c0_7, %c0_8] : memref<18x18x96xf32, #tpu.memory_space<vmem>>, vector<18x1x96xf32>
    tpu.vector_store %arg8[%c0_6, %c0_7, %c0_8], %4 {strides = array<i32>} : memref<18x18x96xf32, #tpu.memory_space<vmem>>, vector<18x1x96xf32>,
    %cst_9 = arith.constant 0.000000e+00 : f32
    %6 = vector.broadcast %cst_9 : f32 to vector<18x1x96xf32>
    %c0_10 = arith.constant 0 : index
    %c17_11 = arith.constant 17 : index
    %c0_12 = arith.constant 0 : index
    %7 = vector.load %arg8[%c0_10, %c17_11, %c0_12] : memref<18x18x96xf32, #tpu.memory_space<vmem>>, vector<18x1x96xf32>
    tpu.vector_store %arg8[%c0_10, %c17_11, %c0_12], %6 {strides = array<i32>} : memref<18x18x96xf32, #tpu.memory_space<vmem>>, vector<18x1x96xf32>,
    %c0_13 = arith.constant 0 : index
    %c0_14 = arith.constant 0 : index
    %c0_15 = arith.constant 0 : index
    %c0_16 = arith.constant 0 : index
    %8 = vector.load %arg2[%c0_13, %c0_14, %c0_15, %c0_16] : memref<1x16x16x96xbf16, #tpu.memory_space<vmem>>, vector<1x16x16x96xbf16>
    %9 = vector.shape_cast %8 : vector<1x16x16x96xbf16> to vector<16x16x96xbf16>
    %10 = arith.extf %9 : vector<16x16x96xbf16> to vector<16x16x96xf32>
    %c1 = arith.constant 1 : index
    %c1_17 = arith.constant 1 : index
    %c0_18 = arith.constant 0 : index
    %11 = vector.load %arg8[%c1, %c1_17, %c0_18] : memref<18x18x96xf32, #tpu.memory_space<vmem>>, vector<16x16x96xf32>
    tpu.vector_store %arg8[%c1, %c1_17, %c0_18], %10 {strides = array<i32>} : memref<18x18x96xf32, #tpu.memory_space<vmem>>, vector<16x16x96xf32>,
    %c0_19 = arith.constant 0 : index
    %c0_20 = arith.constant 0 : index
    %c0_21 = arith.constant 0 : index
    %12 = vector.load %arg8[%c0_19, %c0_20, %c0_21] : memref<18x18x96xf32, #tpu.memory_space<vmem>>, vector<18x16x96xf32>
    %c0_22 = arith.constant 0 : index
    %c0_23 = arith.constant 0 : index
    %13 = vector.load %arg3[%c0_22, %c0_23] : memref<9x96xf32, #tpu.memory_space<vmem>>, vector<1x96xf32>
    %14 = vector.shape_cast %13 : vector<1x96xf32> to vector<1x1x96xf32>
    %15 = vector.extract_strided_slice %12 {offsets = [0, 0, 0], sizes = [16, 16, 96], strides = [1, 1, 1]} : vector<18x16x96xf32> to vector<16x16x96xf32>
    %16 = vector.broadcast %14 : vector<1x1x96xf32> to vector<16x16x96xf32>
    %17 = arith.mulf %15, %16 : vector<16x16x96xf32>
    %c3 = arith.constant 3 : index
    %c0_24 = arith.constant 0 : index
    %18 = vector.load %arg3[%c3, %c0_24] : memref<9x96xf32, #tpu.memory_space<vmem>>, vector<1x96xf32>
    %19 = vector.shape_cast %18 : vector<1x96xf32> to vector<1x1x96xf32>
    %20 = vector.extract_strided_slice %12 {offsets = [1, 0, 0], sizes = [16, 16, 96], strides = [1, 1, 1]} : vector<18x16x96xf32> to vector<16x16x96xf32>
    %21 = vector.broadcast %19 : vector<1x1x96xf32> to vector<16x16x96xf32>
    %22 = arith.mulf %20, %21 : vector<16x16x96xf32>
    %23 = arith.addf %17, %22 : vector<16x16x96xf32>
    %c6 = arith.constant 6 : index
    %c0_25 = arith.constant 0 : index
    %24 = vector.load %arg3[%c6, %c0_25] : memref<9x96xf32, #tpu.memory_space<vmem>>, vector<1x96xf32>
    %25 = vector.shape_cast %24 : vector<1x96xf32> to vector<1x1x96xf32>
    %26 = vector.extract_strided_slice %12 {offsets = [2, 0, 0], sizes = [16, 16, 96], strides = [1, 1, 1]} : vector<18x16x96xf32> to vector<16x16x96xf32>
    %27 = vector.broadcast %25 : vector<1x1x96xf32> to vector<16x16x96xf32>
    %28 = arith.mulf %26, %27 : vector<16x16x96xf32>
    %29 = arith.addf %23, %28 : vector<16x16x96xf32>
    %c0_26 = arith.constant 0 : index
    %c1_27 = arith.constant 1 : index
    %c0_28 = arith.constant 0 : index
    %30 = vector.load %arg8[%c0_26, %c1_27, %c0_28] : memref<18x18x96xf32, #tpu.memory_space<vmem>>, vector<18x16x96xf32>
    %c1_29 = arith.constant 1 : index
    %c0_30 = arith.constant 0 : index
    %31 = vector.load %arg3[%c1_29, %c0_30] : memref<9x96xf32, #tpu.memory_space<vmem>>, vector<1x96xf32>
    %32 = vector.shape_cast %31 : vector<1x96xf32> to vector<1x1x96xf32>
    %33 = vector.extract_strided_slice %30 {offsets = [0, 0, 0], sizes = [16, 16, 96], strides = [1, 1, 1]} : vector<18x16x96xf32> to vector<16x16x96xf32>
    %34 = vector.broadcast %32 : vector<1x1x96xf32> to vector<16x16x96xf32>
    %35 = arith.mulf %33, %34 : vector<16x16x96xf32>
    %36 = arith.addf %29, %35 : vector<16x16x96xf32>
    %c4 = arith.constant 4 : index
    %c0_31 = arith.constant 0 : index
    %37 = vector.load %arg3[%c4, %c0_31] : memref<9x96xf32, #tpu.memory_space<vmem>>, vector<1x96xf32>
    %38 = vector.shape_cast %37 : vector<1x96xf32> to vector<1x1x96xf32>
    %39 = vector.extract_strided_slice %30 {offsets = [1, 0, 0], sizes = [16, 16, 96], strides = [1, 1, 1]} : vector<18x16x96xf32> to vector<16x16x96xf32>
    %40 = vector.broadcast %38 : vector<1x1x96xf32> to vector<16x16x96xf32>
    %41 = arith.mulf %39, %40 : vector<16x16x96xf32>
    %42 = arith.addf %36, %41 : vector<16x16x96xf32>
    %c7 = arith.constant 7 : index
    %c0_32 = arith.constant 0 : index
    %43 = vector.load %arg3[%c7, %c0_32] : memref<9x96xf32, #tpu.memory_space<vmem>>, vector<1x96xf32>
    %44 = vector.shape_cast %43 : vector<1x96xf32> to vector<1x1x96xf32>
    %45 = vector.extract_strided_slice %30 {offsets = [2, 0, 0], sizes = [16, 16, 96], strides = [1, 1, 1]} : vector<18x16x96xf32> to vector<16x16x96xf32>
    %46 = vector.broadcast %44 : vector<1x1x96xf32> to vector<16x16x96xf32>
    %47 = arith.mulf %45, %46 : vector<16x16x96xf32>
    %48 = arith.addf %42, %47 : vector<16x16x96xf32>
    %c0_33 = arith.constant 0 : index
    %c2 = arith.constant 2 : index
    %c0_34 = arith.constant 0 : index
    %49 = vector.load %arg8[%c0_33, %c2, %c0_34] : memref<18x18x96xf32, #tpu.memory_space<vmem>>, vector<18x16x96xf32>
    %c2_35 = arith.constant 2 : index
    %c0_36 = arith.constant 0 : index
    %50 = vector.load %arg3[%c2_35, %c0_36] : memref<9x96xf32, #tpu.memory_space<vmem>>, vector<1x96xf32>
    %51 = vector.shape_cast %50 : vector<1x96xf32> to vector<1x1x96xf32>
    %52 = vector.extract_strided_slice %49 {offsets = [0, 0, 0], sizes = [16, 16, 96], strides = [1, 1, 1]} : vector<18x16x96xf32> to vector<16x16x96xf32>
    %53 = vector.broadcast %51 : vector<1x1x96xf32> to vector<16x16x96xf32>
    %54 = arith.mulf %52, %53 : vector<16x16x96xf32>
    %55 = arith.addf %48, %54 : vector<16x16x96xf32>
    %c5 = arith.constant 5 : index
    %c0_37 = arith.constant 0 : index
    %56 = vector.load %arg3[%c5, %c0_37] : memref<9x96xf32, #tpu.memory_space<vmem>>, vector<1x96xf32>
    %57 = vector.shape_cast %56 : vector<1x96xf32> to vector<1x1x96xf32>
    %58 = vector.extract_strided_slice %49 {offsets = [1, 0, 0], sizes = [16, 16, 96], strides = [1, 1, 1]} : vector<18x16x96xf32> to vector<16x16x96xf32>
    %59 = vector.broadcast %57 : vector<1x1x96xf32> to vector<16x16x96xf32>
    %60 = arith.mulf %58, %59 : vector<16x16x96xf32>
    %61 = arith.addf %55, %60 : vector<16x16x96xf32>
    %c8 = arith.constant 8 : index
    %c0_38 = arith.constant 0 : index
    %62 = vector.load %arg3[%c8, %c0_38] : memref<9x96xf32, #tpu.memory_space<vmem>>, vector<1x96xf32>
    %63 = vector.shape_cast %62 : vector<1x96xf32> to vector<1x1x96xf32>
    %64 = vector.extract_strided_slice %49 {offsets = [2, 0, 0], sizes = [16, 16, 96], strides = [1, 1, 1]} : vector<18x16x96xf32> to vector<16x16x96xf32>
    %65 = vector.broadcast %63 : vector<1x1x96xf32> to vector<16x16x96xf32>
    %66 = arith.mulf %64, %65 : vector<16x16x96xf32>
    %67 = arith.addf %61, %66 : vector<16x16x96xf32>
    %c0_39 = arith.constant 0 : index
    %c0_40 = arith.constant 0 : index
    %68 = vector.load %arg4[%c0_39, %c0_40] : memref<1x96xf32, #tpu.memory_space<vmem>>, vector<1x96xf32>
    %69 = vector.shape_cast %68 : vector<1x96xf32> to vector<1x1x96xf32>
    %70 = vector.broadcast %69 : vector<1x1x96xf32> to vector<16x16x96xf32>
    %71 = arith.addf %67, %70 : vector<16x16x96xf32>
    %c1_41 = arith.constant 1 : index
    %c1_42 = arith.constant 1 : index
    %c0_43 = arith.constant 0 : index
    %72 = vector.load %arg8[%c1_41, %c1_42, %c0_43] : memref<18x18x96xf32, #tpu.memory_space<vmem>>, vector<16x16x96xf32>
    tpu.vector_store %arg8[%c1_41, %c1_42, %c0_43], %71 {strides = array<i32>} : memref<18x18x96xf32, #tpu.memory_space<vmem>>, vector<16x16x96xf32>,
    %c0_44 = arith.constant 0 : index
    %c0_45 = arith.constant 0 : index
    %c0_46 = arith.constant 0 : index
    %73 = vector.load %arg8[%c0_44, %c0_45, %c0_46] : memref<18x18x96xf32, #tpu.memory_space<vmem>>, vector<18x16x96xf32>
    %c0_47 = arith.constant 0 : index
    %c0_48 = arith.constant 0 : index
    %74 = vector.load %arg5[%c0_47, %c0_48] : memref<9x96xf32, #tpu.memory_space<vmem>>, vector<1x96xf32>
    %75 = vector.shape_cast %74 : vector<1x96xf32> to vector<1x1x96xf32>
    %76 = vector.extract_strided_slice %73 {offsets = [0, 0, 0], sizes = [16, 16, 96], strides = [1, 1, 1]} : vector<18x16x96xf32> to vector<16x16x96xf32>
    %77 = vector.broadcast %75 : vector<1x1x96xf32> to vector<16x16x96xf32>
    %78 = arith.mulf %76, %77 : vector<16x16x96xf32>
    %c3_49 = arith.constant 3 : index
    %c0_50 = arith.constant 0 : index
    %79 = vector.load %arg5[%c3_49, %c0_50] : memref<9x96xf32, #tpu.memory_space<vmem>>, vector<1x96xf32>
    %80 = vector.shape_cast %79 : vector<1x96xf32> to vector<1x1x96xf32>
    %81 = vector.extract_strided_slice %73 {offsets = [1, 0, 0], sizes = [16, 16, 96], strides = [1, 1, 1]} : vector<18x16x96xf32> to vector<16x16x96xf32>
    %82 = vector.broadcast %80 : vector<1x1x96xf32> to vector<16x16x96xf32>
    %83 = arith.mulf %81, %82 : vector<16x16x96xf32>
    %84 = arith.addf %78, %83 : vector<16x16x96xf32>
    %c6_51 = arith.constant 6 : index
    %c0_52 = arith.constant 0 : index
    %85 = vector.load %arg5[%c6_51, %c0_52] : memref<9x96xf32, #tpu.memory_space<vmem>>, vector<1x96xf32>
    %86 = vector.shape_cast %85 : vector<1x96xf32> to vector<1x1x96xf32>
    %87 = vector.extract_strided_slice %73 {offsets = [2, 0, 0], sizes = [16, 16, 96], strides = [1, 1, 1]} : vector<18x16x96xf32> to vector<16x16x96xf32>
    %88 = vector.broadcast %86 : vector<1x1x96xf32> to vector<16x16x96xf32>
    %89 = arith.mulf %87, %88 : vector<16x16x96xf32>
    %90 = arith.addf %84, %89 : vector<16x16x96xf32>
    %c0_53 = arith.constant 0 : index
    %c1_54 = arith.constant 1 : index
    %c0_55 = arith.constant 0 : index
    %91 = vector.load %arg8[%c0_53, %c1_54, %c0_55] : memref<18x18x96xf32, #tpu.memory_space<vmem>>, vector<18x16x96xf32>
    %c1_56 = arith.constant 1 : index
    %c0_57 = arith.constant 0 : index
    %92 = vector.load %arg5[%c1_56, %c0_57] : memref<9x96xf32, #tpu.memory_space<vmem>>, vector<1x96xf32>
    %93 = vector.shape_cast %92 : vector<1x96xf32> to vector<1x1x96xf32>
    %94 = vector.extract_strided_slice %91 {offsets = [0, 0, 0], sizes = [16, 16, 96], strides = [1, 1, 1]} : vector<18x16x96xf32> to vector<16x16x96xf32>
    %95 = vector.broadcast %93 : vector<1x1x96xf32> to vector<16x16x96xf32>
    %96 = arith.mulf %94, %95 : vector<16x16x96xf32>
    %97 = arith.addf %90, %96 : vector<16x16x96xf32>
    %c4_58 = arith.constant 4 : index
    %c0_59 = arith.constant 0 : index
    %98 = vector.load %arg5[%c4_58, %c0_59] : memref<9x96xf32, #tpu.memory_space<vmem>>, vector<1x96xf32>
    %99 = vector.shape_cast %98 : vector<1x96xf32> to vector<1x1x96xf32>
    %100 = vector.extract_strided_slice %91 {offsets = [1, 0, 0], sizes = [16, 16, 96], strides = [1, 1, 1]} : vector<18x16x96xf32> to vector<16x16x96xf32>
    %101 = vector.broadcast %99 : vector<1x1x96xf32> to vector<16x16x96xf32>
    %102 = arith.mulf %100, %101 : vector<16x16x96xf32>
    %103 = arith.addf %97, %102 : vector<16x16x96xf32>
    %c7_60 = arith.constant 7 : index
    %c0_61 = arith.constant 0 : index
    %104 = vector.load %arg5[%c7_60, %c0_61] : memref<9x96xf32, #tpu.memory_space<vmem>>, vector<1x96xf32>
    %105 = vector.shape_cast %104 : vector<1x96xf32> to vector<1x1x96xf32>
    %106 = vector.extract_strided_slice %91 {offsets = [2, 0, 0], sizes = [16, 16, 96], strides = [1, 1, 1]} : vector<18x16x96xf32> to vector<16x16x96xf32>
    %107 = vector.broadcast %105 : vector<1x1x96xf32> to vector<16x16x96xf32>
    %108 = arith.mulf %106, %107 : vector<16x16x96xf32>
    %109 = arith.addf %103, %108 : vector<16x16x96xf32>
    %c0_62 = arith.constant 0 : index
    %c2_63 = arith.constant 2 : index
    %c0_64 = arith.constant 0 : index
    %110 = vector.load %arg8[%c0_62, %c2_63, %c0_64] : memref<18x18x96xf32, #tpu.memory_space<vmem>>, vector<18x16x96xf32>
    %c2_65 = arith.constant 2 : index
    %c0_66 = arith.constant 0 : index
    %111 = vector.load %arg5[%c2_65, %c0_66] : memref<9x96xf32, #tpu.memory_space<vmem>>, vector<1x96xf32>
    %112 = vector.shape_cast %111 : vector<1x96xf32> to vector<1x1x96xf32>
    %113 = vector.extract_strided_slice %110 {offsets = [0, 0, 0], sizes = [16, 16, 96], strides = [1, 1, 1]} : vector<18x16x96xf32> to vector<16x16x96xf32>
    %114 = vector.broadcast %112 : vector<1x1x96xf32> to vector<16x16x96xf32>
    %115 = arith.mulf %113, %114 : vector<16x16x96xf32>
    %116 = arith.addf %109, %115 : vector<16x16x96xf32>
    %c5_67 = arith.constant 5 : index
    %c0_68 = arith.constant 0 : index
    %117 = vector.load %arg5[%c5_67, %c0_68] : memref<9x96xf32, #tpu.memory_space<vmem>>, vector<1x96xf32>
    %118 = vector.shape_cast %117 : vector<1x96xf32> to vector<1x1x96xf32>
    %119 = vector.extract_strided_slice %110 {offsets = [1, 0, 0], sizes = [16, 16, 96], strides = [1, 1, 1]} : vector<18x16x96xf32> to vector<16x16x96xf32>
    %120 = vector.broadcast %118 : vector<1x1x96xf32> to vector<16x16x96xf32>
    %121 = arith.mulf %119, %120 : vector<16x16x96xf32>
    %122 = arith.addf %116, %121 : vector<16x16x96xf32>
    %c8_69 = arith.constant 8 : index
    %c0_70 = arith.constant 0 : index
    %123 = vector.load %arg5[%c8_69, %c0_70] : memref<9x96xf32, #tpu.memory_space<vmem>>, vector<1x96xf32>
    %124 = vector.shape_cast %123 : vector<1x96xf32> to vector<1x1x96xf32>
    %125 = vector.extract_strided_slice %110 {offsets = [2, 0, 0], sizes = [16, 16, 96], strides = [1, 1, 1]} : vector<18x16x96xf32> to vector<16x16x96xf32>
    %126 = vector.broadcast %124 : vector<1x1x96xf32> to vector<16x16x96xf32>
    %127 = arith.mulf %125, %126 : vector<16x16x96xf32>
    %128 = arith.addf %122, %127 : vector<16x16x96xf32>
    %c0_71 = arith.constant 0 : index
    %c0_72 = arith.constant 0 : index
    %129 = vector.load %arg6[%c0_71, %c0_72] : memref<1x96xf32, #tpu.memory_space<vmem>>, vector<1x96xf32>
    %130 = vector.shape_cast %129 : vector<1x96xf32> to vector<1x1x96xf32>
    %131 = vector.broadcast %130 : vector<1x1x96xf32> to vector<16x16x96xf32>
    %132 = arith.addf %128, %131 : vector<16x16x96xf32>
    %133 = arith.truncf %132 : vector<16x16x96xf32> to vector<16x16x96xbf16>
    %c0_73 = arith.constant 0 : index
    %c0_74 = arith.constant 0 : index
    %c0_75 = arith.constant 0 : index
    %c0_76 = arith.constant 0 : index
    %134 = vector.load %arg7[%c0_73, %c0_74, %c0_75, %c0_76] : memref<1x16x16x96xbf16, #tpu.memory_space<vmem>>, vector<1x16x16x96xbf16>
    %135 = vector.shape_cast %134 : vector<1x16x16x96xbf16> to vector<16x16x96xbf16>
    %136 = vector.shape_cast %133 : vector<16x16x96xbf16> to vector<1x16x16x96xbf16>
    tpu.vector_store %arg7[%c0_73, %c0_74, %c0_75, %c0_76], %136 {strides = array<i32>} : memref<1x16x16x96xbf16, #tpu.memory_space<vmem>>, vector<1x16x16x96xbf16>,
    return
  }
  func.func @transform_0(%arg0: i32, %arg1: i32) -> (i32, i32, i32, i32) {
    %c0_i32 = arith.constant 0 : i32
    %c0_i32_0 = arith.constant 0 : i32
    %c0_i32_1 = arith.constant 0 : i32
    return %arg0, %c0_i32, %c0_i32_0, %arg1 : i32, i32, i32, i32
  }
  func.func @transform_1(%arg0: i32, %arg1: i32) -> (i32, i32) {
    %c0_i32 = arith.constant 0 : i32
    %c0_i32_0 = arith.constant 0 : i32
    return %c0_i32, %arg1 : i32, i32
  }
  func.func @transform_2(%arg0: i32, %arg1: i32) -> (i32, i32) {
    %c0_i32 = arith.constant 0 : i32
    %c0_i32_0 = arith.constant 0 : i32
    return %c0_i32, %arg1 : i32, i32
  }
  func.func @transform_3(%arg0: i32, %arg1: i32) -> (i32, i32) {
    %c0_i32 = arith.constant 0 : i32
    %c0_i32_0 = arith.constant 0 : i32
    return %c0_i32, %arg1 : i32, i32
  }
  func.func @transform_4(%arg0: i32, %arg1: i32) -> (i32, i32) {
    %c0_i32 = arith.constant 0 : i32
    %c0_i32_0 = arith.constant 0 : i32
    return %c0_i32, %arg1 : i32, i32
  }
  func.func @transform_5(%arg0: i32, %arg1: i32) -> (i32, i32, i32, i32) {
    %c0_i32 = arith.constant 0 : i32
    %c0_i32_0 = arith.constant 0 : i32
    %c0_i32_1 = arith.constant 0 : i32
    return %arg0, %c0_i32, %c0_i32_0, %arg1 : i32, i32, i32, i32
  }
}

module attributes {stable_mosaic.version = 11 : i64} {
  func.func @kernel(%arg0: i32, %arg1: i32, %arg2: memref<1x16x16x32xbf16, #tpu.memory_space<vmem>>, %arg3: memref<9x32xf32, #tpu.memory_space<vmem>>, %arg4: memref<1x32xf32, #tpu.memory_space<vmem>>, %arg5: memref<1x32xf32, #tpu.memory_space<vmem>>, %arg6: memref<1x32xf32, #tpu.memory_space<vmem>>, %arg7: memref<1x16x16x32xbf16, #tpu.memory_space<vmem>>, %arg8: memref<18x18x32xf32, #tpu.memory_space<vmem>>) attributes {dimension_semantics = [#tpu.dimension_semantics<parallel>, #tpu.dimension_semantics<parallel>], iteration_bounds = array<i64: 2, 1>, scalar_prefetch = 0 : i64, scratch_operands = 1 : i64, tpu.core_type = #tpu.core_type<tc>, window_params = [{transform_indices = @transform_0, window_bounds = array<i64: 1, 16, 16, 32>}, {transform_indices = @transform_1, window_bounds = array<i64: 9, 32>}, {transform_indices = @transform_2, window_bounds = array<i64: 1, 32>}, {transform_indices = @transform_3, window_bounds = array<i64: 1, 32>}, {transform_indices = @transform_4, window_bounds = array<i64: 1, 32>}, {transform_indices = @transform_5, window_bounds = array<i64: 1, 16, 16, 32>}]} {
    %cst = arith.constant 0.000000e+00 : f32
    %0 = vector.broadcast %cst : f32 to vector<1x18x32xf32>
    %c0 = arith.constant 0 : index
    %c0_0 = arith.constant 0 : index
    %c0_1 = arith.constant 0 : index
    %1 = vector.load %arg8[%c0, %c0_0, %c0_1] : memref<18x18x32xf32, #tpu.memory_space<vmem>>, vector<1x18x32xf32>
    tpu.vector_store %arg8[%c0, %c0_0, %c0_1], %0 {strides = array<i32>} : memref<18x18x32xf32, #tpu.memory_space<vmem>>, vector<1x18x32xf32>,
    %cst_2 = arith.constant 0.000000e+00 : f32
    %2 = vector.broadcast %cst_2 : f32 to vector<1x18x32xf32>
    %c17 = arith.constant 17 : index
    %c0_3 = arith.constant 0 : index
    %c0_4 = arith.constant 0 : index
    %3 = vector.load %arg8[%c17, %c0_3, %c0_4] : memref<18x18x32xf32, #tpu.memory_space<vmem>>, vector<1x18x32xf32>
    tpu.vector_store %arg8[%c17, %c0_3, %c0_4], %2 {strides = array<i32>} : memref<18x18x32xf32, #tpu.memory_space<vmem>>, vector<1x18x32xf32>,
    %cst_5 = arith.constant 0.000000e+00 : f32
    %4 = vector.broadcast %cst_5 : f32 to vector<18x1x32xf32>
    %c0_6 = arith.constant 0 : index
    %c0_7 = arith.constant 0 : index
    %c0_8 = arith.constant 0 : index
    %5 = vector.load %arg8[%c0_6, %c0_7, %c0_8] : memref<18x18x32xf32, #tpu.memory_space<vmem>>, vector<18x1x32xf32>
    tpu.vector_store %arg8[%c0_6, %c0_7, %c0_8], %4 {strides = array<i32>} : memref<18x18x32xf32, #tpu.memory_space<vmem>>, vector<18x1x32xf32>,
    %cst_9 = arith.constant 0.000000e+00 : f32
    %6 = vector.broadcast %cst_9 : f32 to vector<18x1x32xf32>
    %c0_10 = arith.constant 0 : index
    %c17_11 = arith.constant 17 : index
    %c0_12 = arith.constant 0 : index
    %7 = vector.load %arg8[%c0_10, %c17_11, %c0_12] : memref<18x18x32xf32, #tpu.memory_space<vmem>>, vector<18x1x32xf32>
    tpu.vector_store %arg8[%c0_10, %c17_11, %c0_12], %6 {strides = array<i32>} : memref<18x18x32xf32, #tpu.memory_space<vmem>>, vector<18x1x32xf32>,
    %c0_13 = arith.constant 0 : index
    %c0_14 = arith.constant 0 : index
    %c0_15 = arith.constant 0 : index
    %c0_16 = arith.constant 0 : index
    %8 = vector.load %arg2[%c0_13, %c0_14, %c0_15, %c0_16] : memref<1x16x16x32xbf16, #tpu.memory_space<vmem>>, vector<1x16x16x32xbf16>
    %9 = vector.shape_cast %8 : vector<1x16x16x32xbf16> to vector<16x16x32xbf16>
    %10 = arith.extf %9 : vector<16x16x32xbf16> to vector<16x16x32xf32>
    %c1 = arith.constant 1 : index
    %c1_17 = arith.constant 1 : index
    %c0_18 = arith.constant 0 : index
    %11 = vector.load %arg8[%c1, %c1_17, %c0_18] : memref<18x18x32xf32, #tpu.memory_space<vmem>>, vector<16x16x32xf32>
    tpu.vector_store %arg8[%c1, %c1_17, %c0_18], %10 {strides = array<i32>} : memref<18x18x32xf32, #tpu.memory_space<vmem>>, vector<16x16x32xf32>,
    %c0_19 = arith.constant 0 : index
    %c0_20 = arith.constant 0 : index
    %c0_21 = arith.constant 0 : index
    %12 = vector.load %arg8[%c0_19, %c0_20, %c0_21] : memref<18x18x32xf32, #tpu.memory_space<vmem>>, vector<18x16x32xf32>
    %c0_22 = arith.constant 0 : index
    %c0_23 = arith.constant 0 : index
    %13 = vector.load %arg3[%c0_22, %c0_23] : memref<9x32xf32, #tpu.memory_space<vmem>>, vector<1x32xf32>
    %14 = vector.shape_cast %13 : vector<1x32xf32> to vector<1x1x32xf32>
    %15 = vector.extract_strided_slice %12 {offsets = [0, 0, 0], sizes = [16, 16, 32], strides = [1, 1, 1]} : vector<18x16x32xf32> to vector<16x16x32xf32>
    %16 = vector.broadcast %14 : vector<1x1x32xf32> to vector<16x16x32xf32>
    %17 = arith.mulf %15, %16 : vector<16x16x32xf32>
    %c3 = arith.constant 3 : index
    %c0_24 = arith.constant 0 : index
    %18 = vector.load %arg3[%c3, %c0_24] : memref<9x32xf32, #tpu.memory_space<vmem>>, vector<1x32xf32>
    %19 = vector.shape_cast %18 : vector<1x32xf32> to vector<1x1x32xf32>
    %20 = vector.extract_strided_slice %12 {offsets = [1, 0, 0], sizes = [16, 16, 32], strides = [1, 1, 1]} : vector<18x16x32xf32> to vector<16x16x32xf32>
    %21 = vector.broadcast %19 : vector<1x1x32xf32> to vector<16x16x32xf32>
    %22 = arith.mulf %20, %21 : vector<16x16x32xf32>
    %23 = arith.addf %17, %22 : vector<16x16x32xf32>
    %c6 = arith.constant 6 : index
    %c0_25 = arith.constant 0 : index
    %24 = vector.load %arg3[%c6, %c0_25] : memref<9x32xf32, #tpu.memory_space<vmem>>, vector<1x32xf32>
    %25 = vector.shape_cast %24 : vector<1x32xf32> to vector<1x1x32xf32>
    %26 = vector.extract_strided_slice %12 {offsets = [2, 0, 0], sizes = [16, 16, 32], strides = [1, 1, 1]} : vector<18x16x32xf32> to vector<16x16x32xf32>
    %27 = vector.broadcast %25 : vector<1x1x32xf32> to vector<16x16x32xf32>
    %28 = arith.mulf %26, %27 : vector<16x16x32xf32>
    %29 = arith.addf %23, %28 : vector<16x16x32xf32>
    %c0_26 = arith.constant 0 : index
    %c1_27 = arith.constant 1 : index
    %c0_28 = arith.constant 0 : index
    %30 = vector.load %arg8[%c0_26, %c1_27, %c0_28] : memref<18x18x32xf32, #tpu.memory_space<vmem>>, vector<18x16x32xf32>
    %c1_29 = arith.constant 1 : index
    %c0_30 = arith.constant 0 : index
    %31 = vector.load %arg3[%c1_29, %c0_30] : memref<9x32xf32, #tpu.memory_space<vmem>>, vector<1x32xf32>
    %32 = vector.shape_cast %31 : vector<1x32xf32> to vector<1x1x32xf32>
    %33 = vector.extract_strided_slice %30 {offsets = [0, 0, 0], sizes = [16, 16, 32], strides = [1, 1, 1]} : vector<18x16x32xf32> to vector<16x16x32xf32>
    %34 = vector.broadcast %32 : vector<1x1x32xf32> to vector<16x16x32xf32>
    %35 = arith.mulf %33, %34 : vector<16x16x32xf32>
    %36 = arith.addf %29, %35 : vector<16x16x32xf32>
    %c4 = arith.constant 4 : index
    %c0_31 = arith.constant 0 : index
    %37 = vector.load %arg3[%c4, %c0_31] : memref<9x32xf32, #tpu.memory_space<vmem>>, vector<1x32xf32>
    %38 = vector.shape_cast %37 : vector<1x32xf32> to vector<1x1x32xf32>
    %39 = vector.extract_strided_slice %30 {offsets = [1, 0, 0], sizes = [16, 16, 32], strides = [1, 1, 1]} : vector<18x16x32xf32> to vector<16x16x32xf32>
    %40 = vector.broadcast %38 : vector<1x1x32xf32> to vector<16x16x32xf32>
    %41 = arith.mulf %39, %40 : vector<16x16x32xf32>
    %42 = arith.addf %36, %41 : vector<16x16x32xf32>
    %c7 = arith.constant 7 : index
    %c0_32 = arith.constant 0 : index
    %43 = vector.load %arg3[%c7, %c0_32] : memref<9x32xf32, #tpu.memory_space<vmem>>, vector<1x32xf32>
    %44 = vector.shape_cast %43 : vector<1x32xf32> to vector<1x1x32xf32>
    %45 = vector.extract_strided_slice %30 {offsets = [2, 0, 0], sizes = [16, 16, 32], strides = [1, 1, 1]} : vector<18x16x32xf32> to vector<16x16x32xf32>
    %46 = vector.broadcast %44 : vector<1x1x32xf32> to vector<16x16x32xf32>
    %47 = arith.mulf %45, %46 : vector<16x16x32xf32>
    %48 = arith.addf %42, %47 : vector<16x16x32xf32>
    %c0_33 = arith.constant 0 : index
    %c2 = arith.constant 2 : index
    %c0_34 = arith.constant 0 : index
    %49 = vector.load %arg8[%c0_33, %c2, %c0_34] : memref<18x18x32xf32, #tpu.memory_space<vmem>>, vector<18x16x32xf32>
    %c2_35 = arith.constant 2 : index
    %c0_36 = arith.constant 0 : index
    %50 = vector.load %arg3[%c2_35, %c0_36] : memref<9x32xf32, #tpu.memory_space<vmem>>, vector<1x32xf32>
    %51 = vector.shape_cast %50 : vector<1x32xf32> to vector<1x1x32xf32>
    %52 = vector.extract_strided_slice %49 {offsets = [0, 0, 0], sizes = [16, 16, 32], strides = [1, 1, 1]} : vector<18x16x32xf32> to vector<16x16x32xf32>
    %53 = vector.broadcast %51 : vector<1x1x32xf32> to vector<16x16x32xf32>
    %54 = arith.mulf %52, %53 : vector<16x16x32xf32>
    %55 = arith.addf %48, %54 : vector<16x16x32xf32>
    %c5 = arith.constant 5 : index
    %c0_37 = arith.constant 0 : index
    %56 = vector.load %arg3[%c5, %c0_37] : memref<9x32xf32, #tpu.memory_space<vmem>>, vector<1x32xf32>
    %57 = vector.shape_cast %56 : vector<1x32xf32> to vector<1x1x32xf32>
    %58 = vector.extract_strided_slice %49 {offsets = [1, 0, 0], sizes = [16, 16, 32], strides = [1, 1, 1]} : vector<18x16x32xf32> to vector<16x16x32xf32>
    %59 = vector.broadcast %57 : vector<1x1x32xf32> to vector<16x16x32xf32>
    %60 = arith.mulf %58, %59 : vector<16x16x32xf32>
    %61 = arith.addf %55, %60 : vector<16x16x32xf32>
    %c8 = arith.constant 8 : index
    %c0_38 = arith.constant 0 : index
    %62 = vector.load %arg3[%c8, %c0_38] : memref<9x32xf32, #tpu.memory_space<vmem>>, vector<1x32xf32>
    %63 = vector.shape_cast %62 : vector<1x32xf32> to vector<1x1x32xf32>
    %64 = vector.extract_strided_slice %49 {offsets = [2, 0, 0], sizes = [16, 16, 32], strides = [1, 1, 1]} : vector<18x16x32xf32> to vector<16x16x32xf32>
    %65 = vector.broadcast %63 : vector<1x1x32xf32> to vector<16x16x32xf32>
    %66 = arith.mulf %64, %65 : vector<16x16x32xf32>
    %67 = arith.addf %61, %66 : vector<16x16x32xf32>
    %c0_39 = arith.constant 0 : index
    %c0_40 = arith.constant 0 : index
    %68 = vector.load %arg4[%c0_39, %c0_40] : memref<1x32xf32, #tpu.memory_space<vmem>>, vector<1x32xf32>
    %69 = vector.shape_cast %68 : vector<1x32xf32> to vector<1x1x32xf32>
    %70 = vector.broadcast %69 : vector<1x1x32xf32> to vector<16x16x32xf32>
    %71 = arith.addf %67, %70 : vector<16x16x32xf32>
    %cst_41 = arith.constant dense<0.000000e+00> : vector<16x16xf32>
    %72 = vector.multi_reduction <add>, %71, %cst_41 [2] : vector<16x16x32xf32> to vector<16x16xf32>
    %73 = vector.shape_cast %72 : vector<16x16xf32> to vector<16x16x1xf32>
    %cst_42 = arith.constant 3.200000e+01 : f32
    %74 = vector.broadcast %cst_42 : f32 to vector<16x16x1xf32>
    %75 = arith.divf %73, %74 : vector<16x16x1xf32>
    %76 = vector.broadcast %75 : vector<16x16x1xf32> to vector<16x16x32xf32>
    %77 = arith.subf %71, %76 : vector<16x16x32xf32>
    %78 = arith.mulf %77, %77 : vector<16x16x32xf32>
    %cst_43 = arith.constant dense<0.000000e+00> : vector<16x16xf32>
    %79 = vector.multi_reduction <add>, %78, %cst_43 [2] : vector<16x16x32xf32> to vector<16x16xf32>
    %80 = vector.shape_cast %79 : vector<16x16xf32> to vector<16x16x1xf32>
    %cst_44 = arith.constant 3.200000e+01 : f32
    %81 = vector.broadcast %cst_44 : f32 to vector<16x16x1xf32>
    %82 = arith.divf %80, %81 : vector<16x16x1xf32>
    %cst_45 = arith.constant 9.99999974E-6 : f32
    %83 = vector.broadcast %cst_45 : f32 to vector<16x16x1xf32>
    %84 = arith.addf %82, %83 : vector<16x16x1xf32>
    %85 = math.rsqrt %84 : vector<16x16x1xf32>
    %86 = vector.broadcast %85 : vector<16x16x1xf32> to vector<16x16x32xf32>
    %87 = arith.mulf %77, %86 : vector<16x16x32xf32>
    %c0_46 = arith.constant 0 : index
    %c0_47 = arith.constant 0 : index
    %88 = vector.load %arg5[%c0_46, %c0_47] : memref<1x32xf32, #tpu.memory_space<vmem>>, vector<1x32xf32>
    %89 = vector.shape_cast %88 : vector<1x32xf32> to vector<1x1x32xf32>
    %90 = vector.broadcast %89 : vector<1x1x32xf32> to vector<16x16x32xf32>
    %91 = arith.mulf %87, %90 : vector<16x16x32xf32>
    %c0_48 = arith.constant 0 : index
    %c0_49 = arith.constant 0 : index
    %92 = vector.load %arg6[%c0_48, %c0_49] : memref<1x32xf32, #tpu.memory_space<vmem>>, vector<1x32xf32>
    %93 = vector.shape_cast %92 : vector<1x32xf32> to vector<1x1x32xf32>
    %94 = vector.broadcast %93 : vector<1x1x32xf32> to vector<16x16x32xf32>
    %95 = arith.addf %91, %94 : vector<16x16x32xf32>
    %cst_50 = arith.constant 5.000000e-01 : f32
    %96 = vector.broadcast %cst_50 : f32 to vector<16x16x32xf32>
    %97 = arith.mulf %96, %95 : vector<16x16x32xf32>
    %cst_51 = arith.constant 0.707106769 : f32
    %98 = vector.broadcast %cst_51 : f32 to vector<16x16x32xf32>
    %99 = arith.mulf %95, %98 : vector<16x16x32xf32>
    %cst_52 = arith.constant -4.000000e+00 : f32
    %cst_53 = arith.constant 4.000000e+00 : f32
    %100 = vector.broadcast %cst_52 : f32 to vector<16x16x32xf32>
    %101 = arith.maximumf %100, %99 : vector<16x16x32xf32>
    %102 = vector.broadcast %cst_53 : f32 to vector<16x16x32xf32>
    %103 = arith.minimumf %102, %101 : vector<16x16x32xf32>
    %104 = arith.mulf %103, %103 : vector<16x16x32xf32>
    %cst_54 = arith.constant 2.29050653E-4 : f32
    %105 = vector.broadcast %cst_54 : f32 to vector<16x16x32xf32>
    %106 = arith.mulf %105, %104 : vector<16x16x32xf32>
    %cst_55 = arith.constant 0.00340829091 : f32
    %107 = vector.broadcast %cst_55 : f32 to vector<16x16x32xf32>
    %108 = arith.addf %106, %107 : vector<16x16x32xf32>
    %109 = arith.mulf %108, %104 : vector<16x16x32xf32>
    %cst_56 = arith.constant 0.0509556942 : f32
    %110 = vector.broadcast %cst_56 : f32 to vector<16x16x32xf32>
    %111 = arith.addf %109, %110 : vector<16x16x32xf32>
    %112 = arith.mulf %111, %104 : vector<16x16x32xf32>
    %cst_57 = arith.constant 0.185208321 : f32
    %113 = vector.broadcast %cst_57 : f32 to vector<16x16x32xf32>
    %114 = arith.addf %112, %113 : vector<16x16x32xf32>
    %115 = arith.mulf %114, %104 : vector<16x16x32xf32>
    %cst_58 = arith.constant 1.12837911 : f32
    %116 = vector.broadcast %cst_58 : f32 to vector<16x16x32xf32>
    %117 = arith.addf %115, %116 : vector<16x16x32xf32>
    %cst_59 = arith.constant -1.17916031E-7 : f32
    %118 = vector.broadcast %cst_59 : f32 to vector<16x16x32xf32>
    %119 = arith.mulf %118, %104 : vector<16x16x32xf32>
    %cst_60 = arith.constant 2.35479656E-5 : f32
    %120 = vector.broadcast %cst_60 : f32 to vector<16x16x32xf32>
    %121 = arith.addf %119, %120 : vector<16x16x32xf32>
    %122 = arith.mulf %121, %104 : vector<16x16x32xf32>
    %cst_61 = arith.constant 0.00101796258 : f32
    %123 = vector.broadcast %cst_61 : f32 to vector<16x16x32xf32>
    %124 = arith.addf %122, %123 : vector<16x16x32xf32>
    %125 = arith.mulf %124, %104 : vector<16x16x32xf32>
    %cst_62 = arith.constant 0.0140704699 : f32
    %126 = vector.broadcast %cst_62 : f32 to vector<16x16x32xf32>
    %127 = arith.addf %125, %126 : vector<16x16x32xf32>
    %128 = arith.mulf %127, %104 : vector<16x16x32xf32>
    %cst_63 = arith.constant 0.110985048 : f32
    %129 = vector.broadcast %cst_63 : f32 to vector<16x16x32xf32>
    %130 = arith.addf %128, %129 : vector<16x16x32xf32>
    %131 = arith.mulf %130, %104 : vector<16x16x32xf32>
    %cst_64 = arith.constant 0.497469246 : f32
    %132 = vector.broadcast %cst_64 : f32 to vector<16x16x32xf32>
    %133 = arith.addf %131, %132 : vector<16x16x32xf32>
    %134 = arith.mulf %133, %104 : vector<16x16x32xf32>
    %cst_65 = arith.constant 1.000000e+00 : f32
    %135 = vector.broadcast %cst_65 : f32 to vector<16x16x32xf32>
    %136 = arith.addf %134, %135 : vector<16x16x32xf32>
    %137 = arith.mulf %103, %117 : vector<16x16x32xf32>
    %138 = arith.divf %137, %136 : vector<16x16x32xf32>
    %cst_66 = arith.constant 1.000000e+00 : f32
    %139 = vector.broadcast %cst_66 : f32 to vector<16x16x32xf32>
    %140 = arith.addf %139, %138 : vector<16x16x32xf32>
    %141 = arith.mulf %97, %140 : vector<16x16x32xf32>
    %142 = arith.truncf %141 : vector<16x16x32xf32> to vector<16x16x32xbf16>
    %c0_67 = arith.constant 0 : index
    %c0_68 = arith.constant 0 : index
    %c0_69 = arith.constant 0 : index
    %c0_70 = arith.constant 0 : index
    %143 = vector.load %arg7[%c0_67, %c0_68, %c0_69, %c0_70] : memref<1x16x16x32xbf16, #tpu.memory_space<vmem>>, vector<1x16x16x32xbf16>
    %144 = vector.shape_cast %143 : vector<1x16x16x32xbf16> to vector<16x16x32xbf16>
    %145 = vector.shape_cast %142 : vector<16x16x32xbf16> to vector<1x16x16x32xbf16>
    tpu.vector_store %arg7[%c0_67, %c0_68, %c0_69, %c0_70], %145 {strides = array<i32>} : memref<1x16x16x32xbf16, #tpu.memory_space<vmem>>, vector<1x16x16x32xbf16>,
    return
  }
  func.func @transform_0(%arg0: i32, %arg1: i32) -> (i32, i32, i32, i32) {
    %c0_i32 = arith.constant 0 : i32
    %c0_i32_0 = arith.constant 0 : i32
    %c0_i32_1 = arith.constant 0 : i32
    return %arg0, %c0_i32, %c0_i32_0, %arg1 : i32, i32, i32, i32
  }
  func.func @transform_1(%arg0: i32, %arg1: i32) -> (i32, i32) {
    %c0_i32 = arith.constant 0 : i32
    %c0_i32_0 = arith.constant 0 : i32
    return %c0_i32, %arg1 : i32, i32
  }
  func.func @transform_2(%arg0: i32, %arg1: i32) -> (i32, i32) {
    %c0_i32 = arith.constant 0 : i32
    %c0_i32_0 = arith.constant 0 : i32
    return %c0_i32, %arg1 : i32, i32
  }
  func.func @transform_3(%arg0: i32, %arg1: i32) -> (i32, i32) {
    %c0_i32 = arith.constant 0 : i32
    %c0_i32_0 = arith.constant 0 : i32
    return %c0_i32, %arg1 : i32, i32
  }
  func.func @transform_4(%arg0: i32, %arg1: i32) -> (i32, i32) {
    %c0_i32 = arith.constant 0 : i32
    %c0_i32_0 = arith.constant 0 : i32
    return %c0_i32, %arg1 : i32, i32
  }
  func.func @transform_5(%arg0: i32, %arg1: i32) -> (i32, i32, i32, i32) {
    %c0_i32 = arith.constant 0 : i32
    %c0_i32_0 = arith.constant 0 : i32
    %c0_i32_1 = arith.constant 0 : i32
    return %arg0, %c0_i32, %c0_i32_0, %arg1 : i32, i32, i32, i32
  }
}

module attributes {stable_mosaic.version = 11 : i64} {
  func.func @_attn_kernel(%arg0: i32, %arg1: memref<1xf32, #tpu.memory_space<smem>>, %arg2: memref<16x8x128xbf16, #tpu.memory_space<vmem>>, %arg3: memref<16x8x128xbf16, #tpu.memory_space<vmem>>, %arg4: memref<16x8x128xbf16, #tpu.memory_space<vmem>>, %arg5: memref<16x8x128xbf16, #tpu.memory_space<vmem>>) attributes {dimension_semantics = [#tpu.dimension_semantics<parallel>], iteration_bounds = array<i64: 1>, scalar_prefetch = 0 : i64, scratch_operands = 0 : i64, tpu.core_type = #tpu.core_type<tc>, window_params = [{transform_indices = @transform_0, window_bounds = array<i64: 1>}, {transform_indices = @transform_1, window_bounds = array<i64: 16, 8, 128>}, {transform_indices = @transform_2, window_bounds = array<i64: 16, 8, 128>}, {transform_indices = @transform_3, window_bounds = array<i64: 16, 8, 128>}, {transform_indices = @transform_4, window_bounds = array<i64: 16, 8, 128>}]} {
    %c0 = arith.constant 0 : index
    %c0_0 = arith.constant 0 : index
    %c0_1 = arith.constant 0 : index
    %0 = vector.load %arg2[%c0, %c0_0, %c0_1] : memref<16x8x128xbf16, #tpu.memory_space<vmem>>, vector<16x8x128xbf16>
    %1 = arith.extf %0 : vector<16x8x128xbf16> to vector<16x8x128xf32>
    %c0_2 = arith.constant 0 : index
    %c0_3 = arith.constant 0 : index
    %c0_4 = arith.constant 0 : index
    %2 = vector.load %arg3[%c0_2, %c0_3, %c0_4] : memref<16x8x128xbf16, #tpu.memory_space<vmem>>, vector<16x8x128xbf16>
    %3 = arith.extf %2 : vector<16x8x128xbf16> to vector<16x8x128xf32>
    %c0_5 = arith.constant 0 : index
    %c0_6 = arith.constant 0 : index
    %c0_7 = arith.constant 0 : index
    %4 = vector.load %arg4[%c0_5, %c0_6, %c0_7] : memref<16x8x128xbf16, #tpu.memory_space<vmem>>, vector<16x8x128xbf16>
    %5 = arith.extf %4 : vector<16x8x128xbf16> to vector<16x8x128xf32>
    %6 = arith.mulf %1, %1 : vector<16x8x128xf32>
    %cst = arith.constant dense<0.000000e+00> : vector<16x128xf32>
    %7 = vector.multi_reduction <add>, %6, %cst [1] : vector<16x8x128xf32> to vector<16x128xf32>
    %8 = vector.shape_cast %7 : vector<16x128xf32> to vector<16x1x128xf32>
    %cst_8 = arith.constant 1.000000e-24 : f32
    %9 = vector.broadcast %cst_8 : f32 to vector<16x1x128xf32>
    %10 = arith.maximumf %8, %9 : vector<16x1x128xf32>
    %11 = math.rsqrt %10 : vector<16x1x128xf32>
    %12 = vector.broadcast %11 : vector<16x1x128xf32> to vector<16x8x128xf32>
    %13 = arith.mulf %1, %12 : vector<16x8x128xf32>
    %14 = arith.mulf %3, %3 : vector<16x8x128xf32>
    %cst_9 = arith.constant dense<0.000000e+00> : vector<16x128xf32>
    %15 = vector.multi_reduction <add>, %14, %cst_9 [1] : vector<16x8x128xf32> to vector<16x128xf32>
    %16 = vector.shape_cast %15 : vector<16x128xf32> to vector<16x1x128xf32>
    %cst_10 = arith.constant 1.000000e-24 : f32
    %17 = vector.broadcast %cst_10 : f32 to vector<16x1x128xf32>
    %18 = arith.maximumf %16, %17 : vector<16x1x128xf32>
    %19 = math.rsqrt %18 : vector<16x1x128xf32>
    %20 = vector.broadcast %19 : vector<16x1x128xf32> to vector<16x8x128xf32>
    %21 = arith.mulf %3, %20 : vector<16x8x128xf32>
    %c0_11 = arith.constant 0 : index
    %22 = memref.load %arg1[%c0_11] : memref<1xf32, #tpu.memory_space<smem>>
    %23 = vector.broadcast %22 : f32 to vector<16x8x128xf32>
    %24 = arith.mulf %13, %23 : vector<16x8x128xf32>
    %cst_12 = arith.constant 0.000000e+00 : f32
    %25 = vector.broadcast %cst_12 : f32 to vector<16x16x128xf32>
    %26 = vector.extract_strided_slice %24 {offsets = [0, 0, 0], sizes = [16, 1, 128], strides = [1, 1, 1]} : vector<16x8x128xf32> to vector<16x1x128xf32>
    %27 = vector.shape_cast %26 : vector<16x1x128xf32> to vector<16x128xf32>
    %28 = vector.shape_cast %27 : vector<16x128xf32> to vector<16x1x128xf32>
    %29 = vector.extract_strided_slice %21 {offsets = [0, 0, 0], sizes = [16, 1, 128], strides = [1, 1, 1]} : vector<16x8x128xf32> to vector<16x1x128xf32>
    %30 = vector.shape_cast %29 : vector<16x1x128xf32> to vector<16x128xf32>
    %31 = vector.shape_cast %30 : vector<16x128xf32> to vector<1x16x128xf32>
    %32 = vector.broadcast %28 : vector<16x1x128xf32> to vector<16x16x128xf32>
    %33 = vector.broadcast %31 : vector<1x16x128xf32> to vector<16x16x128xf32>
    %34 = arith.mulf %32, %33 : vector<16x16x128xf32>
    %35 = arith.addf %25, %34 : vector<16x16x128xf32>
    %36 = vector.extract_strided_slice %24 {offsets = [0, 1, 0], sizes = [16, 1, 128], strides = [1, 1, 1]} : vector<16x8x128xf32> to vector<16x1x128xf32>
    %37 = vector.shape_cast %36 : vector<16x1x128xf32> to vector<16x128xf32>
    %38 = vector.shape_cast %37 : vector<16x128xf32> to vector<16x1x128xf32>
    %39 = vector.extract_strided_slice %21 {offsets = [0, 1, 0], sizes = [16, 1, 128], strides = [1, 1, 1]} : vector<16x8x128xf32> to vector<16x1x128xf32>
    %40 = vector.shape_cast %39 : vector<16x1x128xf32> to vector<16x128xf32>
    %41 = vector.shape_cast %40 : vector<16x128xf32> to vector<1x16x128xf32>
    %42 = vector.broadcast %38 : vector<16x1x128xf32> to vector<16x16x128xf32>
    %43 = vector.broadcast %41 : vector<1x16x128xf32> to vector<16x16x128xf32>
    %44 = arith.mulf %42, %43 : vector<16x16x128xf32>
    %45 = arith.addf %35, %44 : vector<16x16x128xf32>
    %46 = vector.extract_strided_slice %24 {offsets = [0, 2, 0], sizes = [16, 1, 128], strides = [1, 1, 1]} : vector<16x8x128xf32> to vector<16x1x128xf32>
    %47 = vector.shape_cast %46 : vector<16x1x128xf32> to vector<16x128xf32>
    %48 = vector.shape_cast %47 : vector<16x128xf32> to vector<16x1x128xf32>
    %49 = vector.extract_strided_slice %21 {offsets = [0, 2, 0], sizes = [16, 1, 128], strides = [1, 1, 1]} : vector<16x8x128xf32> to vector<16x1x128xf32>
    %50 = vector.shape_cast %49 : vector<16x1x128xf32> to vector<16x128xf32>
    %51 = vector.shape_cast %50 : vector<16x128xf32> to vector<1x16x128xf32>
    %52 = vector.broadcast %48 : vector<16x1x128xf32> to vector<16x16x128xf32>
    %53 = vector.broadcast %51 : vector<1x16x128xf32> to vector<16x16x128xf32>
    %54 = arith.mulf %52, %53 : vector<16x16x128xf32>
    %55 = arith.addf %45, %54 : vector<16x16x128xf32>
    %56 = vector.extract_strided_slice %24 {offsets = [0, 3, 0], sizes = [16, 1, 128], strides = [1, 1, 1]} : vector<16x8x128xf32> to vector<16x1x128xf32>
    %57 = vector.shape_cast %56 : vector<16x1x128xf32> to vector<16x128xf32>
    %58 = vector.shape_cast %57 : vector<16x128xf32> to vector<16x1x128xf32>
    %59 = vector.extract_strided_slice %21 {offsets = [0, 3, 0], sizes = [16, 1, 128], strides = [1, 1, 1]} : vector<16x8x128xf32> to vector<16x1x128xf32>
    %60 = vector.shape_cast %59 : vector<16x1x128xf32> to vector<16x128xf32>
    %61 = vector.shape_cast %60 : vector<16x128xf32> to vector<1x16x128xf32>
    %62 = vector.broadcast %58 : vector<16x1x128xf32> to vector<16x16x128xf32>
    %63 = vector.broadcast %61 : vector<1x16x128xf32> to vector<16x16x128xf32>
    %64 = arith.mulf %62, %63 : vector<16x16x128xf32>
    %65 = arith.addf %55, %64 : vector<16x16x128xf32>
    %66 = vector.extract_strided_slice %24 {offsets = [0, 4, 0], sizes = [16, 1, 128], strides = [1, 1, 1]} : vector<16x8x128xf32> to vector<16x1x128xf32>
    %67 = vector.shape_cast %66 : vector<16x1x128xf32> to vector<16x128xf32>
    %68 = vector.shape_cast %67 : vector<16x128xf32> to vector<16x1x128xf32>
    %69 = vector.extract_strided_slice %21 {offsets = [0, 4, 0], sizes = [16, 1, 128], strides = [1, 1, 1]} : vector<16x8x128xf32> to vector<16x1x128xf32>
    %70 = vector.shape_cast %69 : vector<16x1x128xf32> to vector<16x128xf32>
    %71 = vector.shape_cast %70 : vector<16x128xf32> to vector<1x16x128xf32>
    %72 = vector.broadcast %68 : vector<16x1x128xf32> to vector<16x16x128xf32>
    %73 = vector.broadcast %71 : vector<1x16x128xf32> to vector<16x16x128xf32>
    %74 = arith.mulf %72, %73 : vector<16x16x128xf32>
    %75 = arith.addf %65, %74 : vector<16x16x128xf32>
    %76 = vector.extract_strided_slice %24 {offsets = [0, 5, 0], sizes = [16, 1, 128], strides = [1, 1, 1]} : vector<16x8x128xf32> to vector<16x1x128xf32>
    %77 = vector.shape_cast %76 : vector<16x1x128xf32> to vector<16x128xf32>
    %78 = vector.shape_cast %77 : vector<16x128xf32> to vector<16x1x128xf32>
    %79 = vector.extract_strided_slice %21 {offsets = [0, 5, 0], sizes = [16, 1, 128], strides = [1, 1, 1]} : vector<16x8x128xf32> to vector<16x1x128xf32>
    %80 = vector.shape_cast %79 : vector<16x1x128xf32> to vector<16x128xf32>
    %81 = vector.shape_cast %80 : vector<16x128xf32> to vector<1x16x128xf32>
    %82 = vector.broadcast %78 : vector<16x1x128xf32> to vector<16x16x128xf32>
    %83 = vector.broadcast %81 : vector<1x16x128xf32> to vector<16x16x128xf32>
    %84 = arith.mulf %82, %83 : vector<16x16x128xf32>
    %85 = arith.addf %75, %84 : vector<16x16x128xf32>
    %86 = vector.extract_strided_slice %24 {offsets = [0, 6, 0], sizes = [16, 1, 128], strides = [1, 1, 1]} : vector<16x8x128xf32> to vector<16x1x128xf32>
    %87 = vector.shape_cast %86 : vector<16x1x128xf32> to vector<16x128xf32>
    %88 = vector.shape_cast %87 : vector<16x128xf32> to vector<16x1x128xf32>
    %89 = vector.extract_strided_slice %21 {offsets = [0, 6, 0], sizes = [16, 1, 128], strides = [1, 1, 1]} : vector<16x8x128xf32> to vector<16x1x128xf32>
    %90 = vector.shape_cast %89 : vector<16x1x128xf32> to vector<16x128xf32>
    %91 = vector.shape_cast %90 : vector<16x128xf32> to vector<1x16x128xf32>
    %92 = vector.broadcast %88 : vector<16x1x128xf32> to vector<16x16x128xf32>
    %93 = vector.broadcast %91 : vector<1x16x128xf32> to vector<16x16x128xf32>
    %94 = arith.mulf %92, %93 : vector<16x16x128xf32>
    %95 = arith.addf %85, %94 : vector<16x16x128xf32>
    %96 = vector.extract_strided_slice %24 {offsets = [0, 7, 0], sizes = [16, 1, 128], strides = [1, 1, 1]} : vector<16x8x128xf32> to vector<16x1x128xf32>
    %97 = vector.shape_cast %96 : vector<16x1x128xf32> to vector<16x128xf32>
    %98 = vector.shape_cast %97 : vector<16x128xf32> to vector<16x1x128xf32>
    %99 = vector.extract_strided_slice %21 {offsets = [0, 7, 0], sizes = [16, 1, 128], strides = [1, 1, 1]} : vector<16x8x128xf32> to vector<16x1x128xf32>
    %100 = vector.shape_cast %99 : vector<16x1x128xf32> to vector<16x128xf32>
    %101 = vector.shape_cast %100 : vector<16x128xf32> to vector<1x16x128xf32>
    %102 = vector.broadcast %98 : vector<16x1x128xf32> to vector<16x16x128xf32>
    %103 = vector.broadcast %101 : vector<1x16x128xf32> to vector<16x16x128xf32>
    %104 = arith.mulf %102, %103 : vector<16x16x128xf32>
    %105 = arith.addf %95, %104 : vector<16x16x128xf32>
    %cst_13 = arith.constant dense<0xFF800000> : vector<16x128xf32>
    %106 = vector.multi_reduction <maximumf>, %105, %cst_13 [1] : vector<16x16x128xf32> to vector<16x128xf32>
    %107 = vector.shape_cast %106 : vector<16x128xf32> to vector<16x1x128xf32>
    %108 = vector.broadcast %107 : vector<16x1x128xf32> to vector<16x16x128xf32>
    %109 = arith.subf %105, %108 : vector<16x16x128xf32>
    %110 = math.exp %109 : vector<16x16x128xf32>
    %cst_14 = arith.constant dense<0.000000e+00> : vector<16x128xf32>
    %111 = vector.multi_reduction <add>, %110, %cst_14 [1] : vector<16x16x128xf32> to vector<16x128xf32>
    %112 = vector.shape_cast %111 : vector<16x128xf32> to vector<16x1x128xf32>
    %113 = tpu.reciprocal %112 {approx = true} : vector<16x1x128xf32> -> vector<16x1x128xf32>
    %114 = vector.broadcast %113 : vector<16x1x128xf32> to vector<16x16x128xf32>
    %115 = arith.mulf %110, %114 : vector<16x16x128xf32>
    %cst_15 = arith.constant 0.000000e+00 : f32
    %116 = vector.broadcast %cst_15 : f32 to vector<16x8x128xf32>
    %117 = vector.extract_strided_slice %115 {offsets = [0, 0, 0], sizes = [16, 1, 128], strides = [1, 1, 1]} : vector<16x16x128xf32> to vector<16x1x128xf32>
    %118 = vector.shape_cast %117 : vector<16x1x128xf32> to vector<16x128xf32>
    %119 = vector.shape_cast %118 : vector<16x128xf32> to vector<16x1x128xf32>
    %120 = vector.extract_strided_slice %5 {offsets = [0, 0, 0], sizes = [1, 8, 128], strides = [1, 1, 1]} : vector<16x8x128xf32> to vector<1x8x128xf32>
    %121 = vector.shape_cast %120 : vector<1x8x128xf32> to vector<8x128xf32>
    %122 = vector.shape_cast %121 : vector<8x128xf32> to vector<1x8x128xf32>
    %123 = vector.broadcast %119 : vector<16x1x128xf32> to vector<16x8x128xf32>
    %124 = vector.broadcast %122 : vector<1x8x128xf32> to vector<16x8x128xf32>
    %125 = arith.mulf %123, %124 : vector<16x8x128xf32>
    %126 = arith.addf %116, %125 : vector<16x8x128xf32>
    %127 = vector.extract_strided_slice %115 {offsets = [0, 1, 0], sizes = [16, 1, 128], strides = [1, 1, 1]} : vector<16x16x128xf32> to vector<16x1x128xf32>
    %128 = vector.shape_cast %127 : vector<16x1x128xf32> to vector<16x128xf32>
    %129 = vector.shape_cast %128 : vector<16x128xf32> to vector<16x1x128xf32>
    %130 = vector.extract_strided_slice %5 {offsets = [1, 0, 0], sizes = [1, 8, 128], strides = [1, 1, 1]} : vector<16x8x128xf32> to vector<1x8x128xf32>
    %131 = vector.shape_cast %130 : vector<1x8x128xf32> to vector<8x128xf32>
    %132 = vector.shape_cast %131 : vector<8x128xf32> to vector<1x8x128xf32>
    %133 = vector.broadcast %129 : vector<16x1x128xf32> to vector<16x8x128xf32>
    %134 = vector.broadcast %132 : vector<1x8x128xf32> to vector<16x8x128xf32>
    %135 = arith.mulf %133, %134 : vector<16x8x128xf32>
    %136 = arith.addf %126, %135 : vector<16x8x128xf32>
    %137 = vector.extract_strided_slice %115 {offsets = [0, 2, 0], sizes = [16, 1, 128], strides = [1, 1, 1]} : vector<16x16x128xf32> to vector<16x1x128xf32>
    %138 = vector.shape_cast %137 : vector<16x1x128xf32> to vector<16x128xf32>
    %139 = vector.shape_cast %138 : vector<16x128xf32> to vector<16x1x128xf32>
    %140 = vector.extract_strided_slice %5 {offsets = [2, 0, 0], sizes = [1, 8, 128], strides = [1, 1, 1]} : vector<16x8x128xf32> to vector<1x8x128xf32>
    %141 = vector.shape_cast %140 : vector<1x8x128xf32> to vector<8x128xf32>
    %142 = vector.shape_cast %141 : vector<8x128xf32> to vector<1x8x128xf32>
    %143 = vector.broadcast %139 : vector<16x1x128xf32> to vector<16x8x128xf32>
    %144 = vector.broadcast %142 : vector<1x8x128xf32> to vector<16x8x128xf32>
    %145 = arith.mulf %143, %144 : vector<16x8x128xf32>
    %146 = arith.addf %136, %145 : vector<16x8x128xf32>
    %147 = vector.extract_strided_slice %115 {offsets = [0, 3, 0], sizes = [16, 1, 128], strides = [1, 1, 1]} : vector<16x16x128xf32> to vector<16x1x128xf32>
    %148 = vector.shape_cast %147 : vector<16x1x128xf32> to vector<16x128xf32>
    %149 = vector.shape_cast %148 : vector<16x128xf32> to vector<16x1x128xf32>
    %150 = vector.extract_strided_slice %5 {offsets = [3, 0, 0], sizes = [1, 8, 128], strides = [1, 1, 1]} : vector<16x8x128xf32> to vector<1x8x128xf32>
    %151 = vector.shape_cast %150 : vector<1x8x128xf32> to vector<8x128xf32>
    %152 = vector.shape_cast %151 : vector<8x128xf32> to vector<1x8x128xf32>
    %153 = vector.broadcast %149 : vector<16x1x128xf32> to vector<16x8x128xf32>
    %154 = vector.broadcast %152 : vector<1x8x128xf32> to vector<16x8x128xf32>
    %155 = arith.mulf %153, %154 : vector<16x8x128xf32>
    %156 = arith.addf %146, %155 : vector<16x8x128xf32>
    %157 = vector.extract_strided_slice %115 {offsets = [0, 4, 0], sizes = [16, 1, 128], strides = [1, 1, 1]} : vector<16x16x128xf32> to vector<16x1x128xf32>
    %158 = vector.shape_cast %157 : vector<16x1x128xf32> to vector<16x128xf32>
    %159 = vector.shape_cast %158 : vector<16x128xf32> to vector<16x1x128xf32>
    %160 = vector.extract_strided_slice %5 {offsets = [4, 0, 0], sizes = [1, 8, 128], strides = [1, 1, 1]} : vector<16x8x128xf32> to vector<1x8x128xf32>
    %161 = vector.shape_cast %160 : vector<1x8x128xf32> to vector<8x128xf32>
    %162 = vector.shape_cast %161 : vector<8x128xf32> to vector<1x8x128xf32>
    %163 = vector.broadcast %159 : vector<16x1x128xf32> to vector<16x8x128xf32>
    %164 = vector.broadcast %162 : vector<1x8x128xf32> to vector<16x8x128xf32>
    %165 = arith.mulf %163, %164 : vector<16x8x128xf32>
    %166 = arith.addf %156, %165 : vector<16x8x128xf32>
    %167 = vector.extract_strided_slice %115 {offsets = [0, 5, 0], sizes = [16, 1, 128], strides = [1, 1, 1]} : vector<16x16x128xf32> to vector<16x1x128xf32>
    %168 = vector.shape_cast %167 : vector<16x1x128xf32> to vector<16x128xf32>
    %169 = vector.shape_cast %168 : vector<16x128xf32> to vector<16x1x128xf32>
    %170 = vector.extract_strided_slice %5 {offsets = [5, 0, 0], sizes = [1, 8, 128], strides = [1, 1, 1]} : vector<16x8x128xf32> to vector<1x8x128xf32>
    %171 = vector.shape_cast %170 : vector<1x8x128xf32> to vector<8x128xf32>
    %172 = vector.shape_cast %171 : vector<8x128xf32> to vector<1x8x128xf32>
    %173 = vector.broadcast %169 : vector<16x1x128xf32> to vector<16x8x128xf32>
    %174 = vector.broadcast %172 : vector<1x8x128xf32> to vector<16x8x128xf32>
    %175 = arith.mulf %173, %174 : vector<16x8x128xf32>
    %176 = arith.addf %166, %175 : vector<16x8x128xf32>
    %177 = vector.extract_strided_slice %115 {offsets = [0, 6, 0], sizes = [16, 1, 128], strides = [1, 1, 1]} : vector<16x16x128xf32> to vector<16x1x128xf32>
    %178 = vector.shape_cast %177 : vector<16x1x128xf32> to vector<16x128xf32>
    %179 = vector.shape_cast %178 : vector<16x128xf32> to vector<16x1x128xf32>
    %180 = vector.extract_strided_slice %5 {offsets = [6, 0, 0], sizes = [1, 8, 128], strides = [1, 1, 1]} : vector<16x8x128xf32> to vector<1x8x128xf32>
    %181 = vector.shape_cast %180 : vector<1x8x128xf32> to vector<8x128xf32>
    %182 = vector.shape_cast %181 : vector<8x128xf32> to vector<1x8x128xf32>
    %183 = vector.broadcast %179 : vector<16x1x128xf32> to vector<16x8x128xf32>
    %184 = vector.broadcast %182 : vector<1x8x128xf32> to vector<16x8x128xf32>
    %185 = arith.mulf %183, %184 : vector<16x8x128xf32>
    %186 = arith.addf %176, %185 : vector<16x8x128xf32>
    %187 = vector.extract_strided_slice %115 {offsets = [0, 7, 0], sizes = [16, 1, 128], strides = [1, 1, 1]} : vector<16x16x128xf32> to vector<16x1x128xf32>
    %188 = vector.shape_cast %187 : vector<16x1x128xf32> to vector<16x128xf32>
    %189 = vector.shape_cast %188 : vector<16x128xf32> to vector<16x1x128xf32>
    %190 = vector.extract_strided_slice %5 {offsets = [7, 0, 0], sizes = [1, 8, 128], strides = [1, 1, 1]} : vector<16x8x128xf32> to vector<1x8x128xf32>
    %191 = vector.shape_cast %190 : vector<1x8x128xf32> to vector<8x128xf32>
    %192 = vector.shape_cast %191 : vector<8x128xf32> to vector<1x8x128xf32>
    %193 = vector.broadcast %189 : vector<16x1x128xf32> to vector<16x8x128xf32>
    %194 = vector.broadcast %192 : vector<1x8x128xf32> to vector<16x8x128xf32>
    %195 = arith.mulf %193, %194 : vector<16x8x128xf32>
    %196 = arith.addf %186, %195 : vector<16x8x128xf32>
    %197 = vector.extract_strided_slice %115 {offsets = [0, 8, 0], sizes = [16, 1, 128], strides = [1, 1, 1]} : vector<16x16x128xf32> to vector<16x1x128xf32>
    %198 = vector.shape_cast %197 : vector<16x1x128xf32> to vector<16x128xf32>
    %199 = vector.shape_cast %198 : vector<16x128xf32> to vector<16x1x128xf32>
    %200 = vector.extract_strided_slice %5 {offsets = [8, 0, 0], sizes = [1, 8, 128], strides = [1, 1, 1]} : vector<16x8x128xf32> to vector<1x8x128xf32>
    %201 = vector.shape_cast %200 : vector<1x8x128xf32> to vector<8x128xf32>
    %202 = vector.shape_cast %201 : vector<8x128xf32> to vector<1x8x128xf32>
    %203 = vector.broadcast %199 : vector<16x1x128xf32> to vector<16x8x128xf32>
    %204 = vector.broadcast %202 : vector<1x8x128xf32> to vector<16x8x128xf32>
    %205 = arith.mulf %203, %204 : vector<16x8x128xf32>
    %206 = arith.addf %196, %205 : vector<16x8x128xf32>
    %207 = vector.extract_strided_slice %115 {offsets = [0, 9, 0], sizes = [16, 1, 128], strides = [1, 1, 1]} : vector<16x16x128xf32> to vector<16x1x128xf32>
    %208 = vector.shape_cast %207 : vector<16x1x128xf32> to vector<16x128xf32>
    %209 = vector.shape_cast %208 : vector<16x128xf32> to vector<16x1x128xf32>
    %210 = vector.extract_strided_slice %5 {offsets = [9, 0, 0], sizes = [1, 8, 128], strides = [1, 1, 1]} : vector<16x8x128xf32> to vector<1x8x128xf32>
    %211 = vector.shape_cast %210 : vector<1x8x128xf32> to vector<8x128xf32>
    %212 = vector.shape_cast %211 : vector<8x128xf32> to vector<1x8x128xf32>
    %213 = vector.broadcast %209 : vector<16x1x128xf32> to vector<16x8x128xf32>
    %214 = vector.broadcast %212 : vector<1x8x128xf32> to vector<16x8x128xf32>
    %215 = arith.mulf %213, %214 : vector<16x8x128xf32>
    %216 = arith.addf %206, %215 : vector<16x8x128xf32>
    %217 = vector.extract_strided_slice %115 {offsets = [0, 10, 0], sizes = [16, 1, 128], strides = [1, 1, 1]} : vector<16x16x128xf32> to vector<16x1x128xf32>
    %218 = vector.shape_cast %217 : vector<16x1x128xf32> to vector<16x128xf32>
    %219 = vector.shape_cast %218 : vector<16x128xf32> to vector<16x1x128xf32>
    %220 = vector.extract_strided_slice %5 {offsets = [10, 0, 0], sizes = [1, 8, 128], strides = [1, 1, 1]} : vector<16x8x128xf32> to vector<1x8x128xf32>
    %221 = vector.shape_cast %220 : vector<1x8x128xf32> to vector<8x128xf32>
    %222 = vector.shape_cast %221 : vector<8x128xf32> to vector<1x8x128xf32>
    %223 = vector.broadcast %219 : vector<16x1x128xf32> to vector<16x8x128xf32>
    %224 = vector.broadcast %222 : vector<1x8x128xf32> to vector<16x8x128xf32>
    %225 = arith.mulf %223, %224 : vector<16x8x128xf32>
    %226 = arith.addf %216, %225 : vector<16x8x128xf32>
    %227 = vector.extract_strided_slice %115 {offsets = [0, 11, 0], sizes = [16, 1, 128], strides = [1, 1, 1]} : vector<16x16x128xf32> to vector<16x1x128xf32>
    %228 = vector.shape_cast %227 : vector<16x1x128xf32> to vector<16x128xf32>
    %229 = vector.shape_cast %228 : vector<16x128xf32> to vector<16x1x128xf32>
    %230 = vector.extract_strided_slice %5 {offsets = [11, 0, 0], sizes = [1, 8, 128], strides = [1, 1, 1]} : vector<16x8x128xf32> to vector<1x8x128xf32>
    %231 = vector.shape_cast %230 : vector<1x8x128xf32> to vector<8x128xf32>
    %232 = vector.shape_cast %231 : vector<8x128xf32> to vector<1x8x128xf32>
    %233 = vector.broadcast %229 : vector<16x1x128xf32> to vector<16x8x128xf32>
    %234 = vector.broadcast %232 : vector<1x8x128xf32> to vector<16x8x128xf32>
    %235 = arith.mulf %233, %234 : vector<16x8x128xf32>
    %236 = arith.addf %226, %235 : vector<16x8x128xf32>
    %237 = vector.extract_strided_slice %115 {offsets = [0, 12, 0], sizes = [16, 1, 128], strides = [1, 1, 1]} : vector<16x16x128xf32> to vector<16x1x128xf32>
    %238 = vector.shape_cast %237 : vector<16x1x128xf32> to vector<16x128xf32>
    %239 = vector.shape_cast %238 : vector<16x128xf32> to vector<16x1x128xf32>
    %240 = vector.extract_strided_slice %5 {offsets = [12, 0, 0], sizes = [1, 8, 128], strides = [1, 1, 1]} : vector<16x8x128xf32> to vector<1x8x128xf32>
    %241 = vector.shape_cast %240 : vector<1x8x128xf32> to vector<8x128xf32>
    %242 = vector.shape_cast %241 : vector<8x128xf32> to vector<1x8x128xf32>
    %243 = vector.broadcast %239 : vector<16x1x128xf32> to vector<16x8x128xf32>
    %244 = vector.broadcast %242 : vector<1x8x128xf32> to vector<16x8x128xf32>
    %245 = arith.mulf %243, %244 : vector<16x8x128xf32>
    %246 = arith.addf %236, %245 : vector<16x8x128xf32>
    %247 = vector.extract_strided_slice %115 {offsets = [0, 13, 0], sizes = [16, 1, 128], strides = [1, 1, 1]} : vector<16x16x128xf32> to vector<16x1x128xf32>
    %248 = vector.shape_cast %247 : vector<16x1x128xf32> to vector<16x128xf32>
    %249 = vector.shape_cast %248 : vector<16x128xf32> to vector<16x1x128xf32>
    %250 = vector.extract_strided_slice %5 {offsets = [13, 0, 0], sizes = [1, 8, 128], strides = [1, 1, 1]} : vector<16x8x128xf32> to vector<1x8x128xf32>
    %251 = vector.shape_cast %250 : vector<1x8x128xf32> to vector<8x128xf32>
    %252 = vector.shape_cast %251 : vector<8x128xf32> to vector<1x8x128xf32>
    %253 = vector.broadcast %249 : vector<16x1x128xf32> to vector<16x8x128xf32>
    %254 = vector.broadcast %252 : vector<1x8x128xf32> to vector<16x8x128xf32>
    %255 = arith.mulf %253, %254 : vector<16x8x128xf32>
    %256 = arith.addf %246, %255 : vector<16x8x128xf32>
    %257 = vector.extract_strided_slice %115 {offsets = [0, 14, 0], sizes = [16, 1, 128], strides = [1, 1, 1]} : vector<16x16x128xf32> to vector<16x1x128xf32>
    %258 = vector.shape_cast %257 : vector<16x1x128xf32> to vector<16x128xf32>
    %259 = vector.shape_cast %258 : vector<16x128xf32> to vector<16x1x128xf32>
    %260 = vector.extract_strided_slice %5 {offsets = [14, 0, 0], sizes = [1, 8, 128], strides = [1, 1, 1]} : vector<16x8x128xf32> to vector<1x8x128xf32>
    %261 = vector.shape_cast %260 : vector<1x8x128xf32> to vector<8x128xf32>
    %262 = vector.shape_cast %261 : vector<8x128xf32> to vector<1x8x128xf32>
    %263 = vector.broadcast %259 : vector<16x1x128xf32> to vector<16x8x128xf32>
    %264 = vector.broadcast %262 : vector<1x8x128xf32> to vector<16x8x128xf32>
    %265 = arith.mulf %263, %264 : vector<16x8x128xf32>
    %266 = arith.addf %256, %265 : vector<16x8x128xf32>
    %267 = vector.extract_strided_slice %115 {offsets = [0, 15, 0], sizes = [16, 1, 128], strides = [1, 1, 1]} : vector<16x16x128xf32> to vector<16x1x128xf32>
    %268 = vector.shape_cast %267 : vector<16x1x128xf32> to vector<16x128xf32>
    %269 = vector.shape_cast %268 : vector<16x128xf32> to vector<16x1x128xf32>
    %270 = vector.extract_strided_slice %5 {offsets = [15, 0, 0], sizes = [1, 8, 128], strides = [1, 1, 1]} : vector<16x8x128xf32> to vector<1x8x128xf32>
    %271 = vector.shape_cast %270 : vector<1x8x128xf32> to vector<8x128xf32>
    %272 = vector.shape_cast %271 : vector<8x128xf32> to vector<1x8x128xf32>
    %273 = vector.broadcast %269 : vector<16x1x128xf32> to vector<16x8x128xf32>
    %274 = vector.broadcast %272 : vector<1x8x128xf32> to vector<16x8x128xf32>
    %275 = arith.mulf %273, %274 : vector<16x8x128xf32>
    %276 = arith.addf %266, %275 : vector<16x8x128xf32>
    %277 = arith.truncf %276 : vector<16x8x128xf32> to vector<16x8x128xbf16>
    %c0_16 = arith.constant 0 : index
    %c0_17 = arith.constant 0 : index
    %c0_18 = arith.constant 0 : index
    %278 = vector.load %arg5[%c0_16, %c0_17, %c0_18] : memref<16x8x128xbf16, #tpu.memory_space<vmem>>, vector<16x8x128xbf16>
    tpu.vector_store %arg5[%c0_16, %c0_17, %c0_18], %277 {strides = array<i32>} : memref<16x8x128xbf16, #tpu.memory_space<vmem>>, vector<16x8x128xbf16>,
    return
  }
  func.func @transform_0(%arg0: i32) -> i32 {
    %c0_i32 = arith.constant 0 : i32
    %c0_i32_0 = arith.constant 0 : i32
    return %c0_i32 : i32
  }
  func.func @transform_1(%arg0: i32) -> (i32, i32, i32) {
    %c0_i32 = arith.constant 0 : i32
    %c0_i32_0 = arith.constant 0 : i32
    %c0_i32_1 = arith.constant 0 : i32
    return %c0_i32, %c0_i32_0, %arg0 : i32, i32, i32
  }
  func.func @transform_2(%arg0: i32) -> (i32, i32, i32) {
    %c0_i32 = arith.constant 0 : i32
    %c0_i32_0 = arith.constant 0 : i32
    %c0_i32_1 = arith.constant 0 : i32
    return %c0_i32, %c0_i32_0, %arg0 : i32, i32, i32
  }
  func.func @transform_3(%arg0: i32) -> (i32, i32, i32) {
    %c0_i32 = arith.constant 0 : i32
    %c0_i32_0 = arith.constant 0 : i32
    %c0_i32_1 = arith.constant 0 : i32
    return %c0_i32, %c0_i32_0, %arg0 : i32, i32, i32
  }
  func.func @transform_4(%arg0: i32) -> (i32, i32, i32) {
    %c0_i32 = arith.constant 0 : i32
    %c0_i32_0 = arith.constant 0 : i32
    %c0_i32_1 = arith.constant 0 : i32
    return %c0_i32, %c0_i32_0, %arg0 : i32, i32, i32
  }
}

module attributes {stable_mosaic.version = 11 : i64} {
  func.func @_pw_kernel(%arg0: i32, %arg1: memref<256x32xbf16, #tpu.memory_space<vmem>>, %arg2: memref<32x32xbf16, #tpu.memory_space<vmem>>, %arg3: memref<1x32xf32, #tpu.memory_space<vmem>>, %arg4: memref<256x32xf32, #tpu.memory_space<vmem>>) attributes {dimension_semantics = [#tpu.dimension_semantics<parallel>], iteration_bounds = array<i64: 2>, scalar_prefetch = 0 : i64, scratch_operands = 0 : i64, tpu.core_type = #tpu.core_type<tc>, window_params = [{transform_indices = @transform_0, window_bounds = array<i64: 256, 32>}, {pipeline_mode = #tpu.pipeline_mode<synchronous>, transform_indices = @transform_1, window_bounds = array<i64: 32, 32>}, {pipeline_mode = #tpu.pipeline_mode<synchronous>, transform_indices = @transform_2, window_bounds = array<i64: 1, 32>}, {transform_indices = @transform_3, window_bounds = array<i64: 256, 32>}]} {
    %c0 = arith.constant 0 : index
    %c0_0 = arith.constant 0 : index
    %0 = vector.load %arg1[%c0, %c0_0] : memref<256x32xbf16, #tpu.memory_space<vmem>>, vector<256x32xbf16>
    %c0_1 = arith.constant 0 : index
    %c0_2 = arith.constant 0 : index
    %1 = vector.load %arg2[%c0_1, %c0_2] : memref<32x32xbf16, #tpu.memory_space<vmem>>, vector<32x32xbf16>
    %cst = arith.constant dense<0.000000e+00> : vector<256x32xf32>
    %2 = tpu.matmul %0, %1, %cst {dimension_numbers = #tpu.dot_dimension_numbers<[1], [0], [0], [1], [0, 0, 1, 1], [], []>} : vector<256x32xbf16>, vector<32x32xbf16>, vector<256x32xf32> -> vector<256x32xf32>
    %c0_3 = arith.constant 0 : index
    %c0_4 = arith.constant 0 : index
    %3 = vector.load %arg3[%c0_3, %c0_4] : memref<1x32xf32, #tpu.memory_space<vmem>>, vector<1x32xf32>
    %4 = vector.broadcast %3 : vector<1x32xf32> to vector<256x32xf32>
    %5 = arith.addf %2, %4 : vector<256x32xf32>
    %c0_5 = arith.constant 0 : index
    %c0_6 = arith.constant 0 : index
    %6 = vector.load %arg4[%c0_5, %c0_6] : memref<256x32xf32, #tpu.memory_space<vmem>>, vector<256x32xf32>
    tpu.vector_store %arg4[%c0_5, %c0_6], %5 {strides = array<i32>} : memref<256x32xf32, #tpu.memory_space<vmem>>, vector<256x32xf32>,
    return
  }
  func.func @transform_0(%arg0: i32) -> (i32, i32) {
    %c0_i32 = arith.constant 0 : i32
    %c0_i32_0 = arith.constant 0 : i32
    return %arg0, %c0_i32 : i32, i32
  }
  func.func @transform_1(%arg0: i32) -> (i32, i32) {
    %c0_i32 = arith.constant 0 : i32
    %c0_i32_0 = arith.constant 0 : i32
    %c0_i32_1 = arith.constant 0 : i32
    return %c0_i32, %c0_i32_0 : i32, i32
  }
  func.func @transform_2(%arg0: i32) -> (i32, i32) {
    %c0_i32 = arith.constant 0 : i32
    %c0_i32_0 = arith.constant 0 : i32
    %c0_i32_1 = arith.constant 0 : i32
    return %c0_i32, %c0_i32_0 : i32, i32
  }
  func.func @transform_3(%arg0: i32) -> (i32, i32) {
    %c0_i32 = arith.constant 0 : i32
    %c0_i32_0 = arith.constant 0 : i32
    return %arg0, %c0_i32 : i32, i32
  }
}

</mosaic_0001>

<llo_original>
// kernel: _lambda_.5
$region0: #{_lambda_.5}
  #allocation0 [shape = 'u32[]', space=smem, size = 0x4, offset = 0x4, fixed_abs, tag = 'smem constant byte address 0x4 - core index']
  #allocation1 [shape = 'u32[144,128]{1,0:T(1,128)}', space=vmem, size = 0x12000, scoped, tag = 'internal scratch']
  %s0 = inlined_call_operand.vmem [shape: bf16[512,32], index: 0, kind: input, shape index: {}]
  %s1 = inlined_call_operand.vmem [shape: bf16[32,96], index: 1, kind: input, shape index: {}]
  %s2 = inlined_call_operand.vmem [shape: f32[1,96], index: 2, kind: input, shape index: {}]
  %s3 = inlined_call_operand.vmem [shape: bf16[512,96], index: 3, kind: output, shape index: {}]
  %s4 = sld [smem:[#allocation0]]
  $region45: #{_lambda_.5} parent=0
    _
  %s6 = ssub.s32 1, %s4
  %s7 = scalar_select 0, %s6, %s4
  loop: start=0, step=1, limit=4
  $region2: #{_lambda_.5} parent=0 // loop_pre_header
    _
  $region3: #{_lambda_.5} parent=0 // loop_header
    %s9 = sphi 0, %s13
    %p10 = scmp.ge.s32.totalorder %s9, 4
    %s19 = sphi 0, %s21
    %s22 = sphi 0, %s19
    %s23 = sphi 0, %s22
    %s39 = sphi 0, %s23
    %s43 = sphi 0, %s43
    %s45 = sphi 0, %s43
    %s46 = sphi 0, %s45
    %s60 = sphi 0, %s46
    %s64 = sphi 0, %s64
    %s66 = sphi 0, %s64
    %s67 = sphi 0, %s66
    %s81 = sphi 0, %s67
    %s87 = sphi 0, %s89
    %s90 = sphi 0, %s87
    %s91 = sphi 0, %s90
    %s107 = sphi 0, %s91
  $region4: #{_lambda_.5} parent=0 // loop_header_branch
    %12 = sbr.rel (%p10) target = $region8
  $region5: #{_lambda_.5} parent=0 // loop_body
    %s14 = ssub.s32 %s9, 1
    %s15 = ssub.s32 %s9, 2
    %s16 = sadd.s32 %s9, 1
    %s17 = ssub.s32 %s9, %s16
    %p18 = scmp.eq.s32.totalorder %s17, 0
    %s20 = sadd.s32 %s19, 1
    %s21 = scalar_select %p18, %s19, %s20
    %p24 = pneg %p18
    %p25 = scmp.eq.s32.totalorder %s9, 1
    %p26 = por %p24, %p25
    %p27 = scmp.ne.s32.totalorder %s19, %s22
    %p28 = scmp.eq.s32.totalorder %s9, 0
    %p29 = por %p27, %p28
    %p30 = scmp.ne.s32.totalorder %s19, %s22
    %p31 = scmp.eq.s32.totalorder %s14, 1
    %p32 = por %p30, %p31
    %p33 = scmp.ne.s32.totalorder %s22, %s23
    %p34 = scmp.eq.s32.totalorder %s14, 0
    %p35 = por %p33, %p34
    %p36 = scmp.ne.s32.totalorder %s22, %s23
    %p37 = scmp.eq.s32.totalorder %s15, 1
    %p38 = por %p36, %p37
    %p40 = scmp.ne.s32.totalorder %s23, %s39
    %p41 = scmp.eq.s32.totalorder %s15, 0
    %p42 = por %p40, %p41
    %s44 = sadd.s32 %s43, 1
    %p47 = scmp.eq.s32.totalorder %s9, 1
    %p48 = scmp.ne.s32.totalorder %s43, %s45
    %p49 = scmp.eq.s32.totalorder %s9, 0
    %p50 = por %p48, %p49
    %p51 = scmp.ne.s32.totalorder %s43, %s45
    %p52 = scmp.eq.s32.totalorder %s14, 1
    %p53 = por %p51, %p52
    %p54 = scmp.ne.s32.totalorder %s45, %s46
    %p55 = scmp.eq.s32.totalorder %s14, 0
    %p56 = por %p54, %p55
    %p57 = scmp.ne.s32.totalorder %s45, %s46
    %p58 = scmp.eq.s32.totalorder %s15, 1
    %p59 = por %p57, %p58
    %p61 = scmp.ne.s32.totalorder %s46, %s60
    %p62 = scmp.eq.s32.totalorder %s15, 0
    %p63 = por %p61, %p62
    %s65 = sadd.s32 %s64, 1
    %p68 = scmp.eq.s32.totalorder %s9, 1
    %p69 = scmp.ne.s32.totalorder %s64, %s66
    %p70 = scmp.eq.s32.totalorder %s9, 0
    %p71 = por %p69, %p70
    %p72 = scmp.ne.s32.totalorder %s64, %s66
    %p73 = scmp.eq.s32.totalorder %s14, 1
    %p74 = por %p72, %p73
    %p75 = scmp.ne.s32.totalorder %s66, %s67
    %p76 = scmp.eq.s32.totalorder %s14, 0
    %p77 = por %p75, %p76
    %p78 = scmp.ne.s32.totalorder %s66, %s67
    %p79 = scmp.eq.s32.totalorder %s15, 1
    %p80 = por %p78, %p79
    %p82 = scmp.ne.s32.totalorder %s67, %s81
    %p83 = scmp.eq.s32.totalorder %s15, 0
    %p84 = por %p82, %p83
    %s85 = ssub.s32 %s9, %s16
    %p86 = scmp.eq.s32.totalorder %s85, 0
    %s88 = sadd.s32 %s87, 1
    %s89 = scalar_select %p86, %s87, %s88
    %p92 = pneg %p86
    %p93 = scmp.eq.s32.totalorder %s9, 1
    %p94 = por %p92, %p93
    %p95 = scmp.ne.s32.totalorder %s87, %s90
    %p96 = scmp.eq.s32.totalorder %s9, 0
    %p97 = por %p95, %p96
    %p98 = scmp.ne.s32.totalorder %s87, %s90
    %p99 = scmp.eq.s32.totalorder %s14, 1
    %p100 = por %p98, %p99
    %p101 = scmp.ne.s32.totalorder %s90, %s91
    %p102 = scmp.eq.s32.totalorder %s14, 0
    %p103 = por %p101, %p102
    %p104 = scmp.ne.s32.totalorder %s90, %s91
    %p105 = scmp.eq.s32.totalorder %s15, 1
    %p106 = por %p104, %p105
    %p108 = scmp.ne.s32.totalorder %s91, %s107
    %p109 = scmp.eq.s32.totalorder %s15, 0
    %p110 = por %p108, %p109
    %p111 = scmp.le.s32.totalorder 1, %s9
    %p112 = scmp.lt.s32.totalorder %s9, 3
    %p113 = pnand %p111, %p112
    %p114 = pneg %p113
    // Predicated region
    $region9: #{_lambda_.5} parent=5 // pred_check
      _
    $region10: #{_lambda_.5} parent=5 // pred_check_branch
      %116 = sbr.rel (%p113) target = $region12
    $region11: #{_lambda_.5} parent=5 // pred_region
      %s117 = ssub.s32 %s9, 1
      // Predicated region
      $region13: #{_lambda_.5} parent=11 // pred_check
        %p118 = pneg %p56
      $region14: #{_lambda_.5} parent=11 // pred_check_branch
        %120 = sbr.rel (%p118) target = $region16
      $region15: #{_lambda_.5} parent=11 // pred_region
        _
      $region16: #{_lambda_.5} parent=11 // pred_fallthru
        _
      // Predicated region
      $region17: #{_lambda_.5} parent=11 // pred_check
        %p121 = pneg %p77
      $region18: #{_lambda_.5} parent=11 // pred_check_branch
        %123 = sbr.rel (%p121) target = $region20
      $region19: #{_lambda_.5} parent=11 // pred_region
        _
      $region20: #{_lambda_.5} parent=11 // pred_fallthru
        _
    $region12: #{_lambda_.5} parent=5 // pred_fallthru
      _
    %p124 = scmp.lt.s32.totalorder %s9, 2
    // Predicated region
    $region21: #{_lambda_.5} parent=5 // pred_check
      %p125 = pneg %p124
    $region22: #{_lambda_.5} parent=5 // pred_check_branch
      %127 = sbr.rel (%p125) target = $region24
    $region23: #{_lambda_.5} parent=5 // pred_region
      // Predicated region
      $region25: #{_lambda_.5} parent=23 // pred_check
        %p128 = pneg %p29
      $region26: #{_lambda_.5} parent=23 // pred_check_branch
        %130 = sbr.rel (%p128) target = $region28
      $region27: #{_lambda_.5} parent=23 // pred_region
        %s131 = smul.u32 32, %s9
        %p132 = scmp.lt.s32.totalorder %s131, 63
        %s133 = scalar_select %p132, %s131, 63
        %s134 = smul.addr %s133, 4
        %s135 = scalar_lea.vmem %s0, %s134
        %s136 = smul.u32 32, %s9
      $region28: #{_lambda_.5} parent=23 // pred_fallthru
        _
    $region24: #{_lambda_.5} parent=5 // pred_fallthru
      _
    %p137 = scmp.le.s32.totalorder 1, %s9
    %p138 = scmp.lt.s32.totalorder %s9, 3
    %p139 = pnand %p137, %p138
    %p140 = pneg %p139
    // Predicated region
    $region29: #{_lambda_.5} parent=5 // pred_check
      _
    $region30: #{_lambda_.5} parent=5 // pred_check_branch
      %142 = sbr.rel (%p139) target = $region32
    $region31: #{_lambda_.5} parent=5 // pred_region
      %s143 = ssub.s32 %s9, 1
      %s144 = smul.u32 32, %s14
      %p145 = scmp.lt.s32.totalorder %s144, 63
      %s146 = scalar_select %p145, %s144, 63
      %s147 = smul.addr %s146, 4
      %s148 = scalar_lea.vmem %s0, %s147
      %p149 = pneg %p35
      %p150 = pneg %p32
      %p151 = pneg %p56
      %p152 = pneg %p53
      %p153 = pneg %p77
      %p154 = pneg %p74
      %p155 = pneg %p103
      %p156 = pneg %p100
      %s157 = smul.u32 32, %s14
      %p158 = scmp.lt.s32.totalorder %s157, 63
      %s159 = scalar_select %p158, %s157, 63
      %s160 = smul.addr %s159, 4
      %s161 = scalar_lea.vmem %s3, %s160
      %s162 = smul.u32 32, %s14
      %p163 = scmp.lt.s32.totalorder %s162, 63
      %s164 = scalar_select %p163, %s162, 63
      %s165 = smul.addr %s164, 4
      %s166 = scalar_lea.vmem %s0, %s165
      %s167 = smul.u32 32, %s14
      %s168 = smul.u32 32, %s14
      %p169 = scmp.lt.s32.totalorder %s168, 63
      %s170 = scalar_select %p169, %s168, 63
      %s171 = smul.addr %s170, 4
      %s172 = scalar_lea.vmem %s3, %s171
      %s173 = smul.u32 32, %s14
      %v175 = vld [vmem:[%s166] sm:$0xf]
      %v176 = vld [vmem:[%s166 + $0x4] sm:$0xf]
      %v177 = vld [vmem:[%s166 + $0x8] sm:$0xf]
      %v178 = vld [vmem:[%s166 + $0xc] sm:$0xf]
      %v179 = vld [vmem:[%s166 + $0x10] sm:$0xf]
      %v180 = vld [vmem:[%s166 + $0x14] sm:$0xf]
      %v181 = vld [vmem:[%s166 + $0x18] sm:$0xf]
      %v182 = vld [vmem:[%s166 + $0x1c] sm:$0xf]
      %v183 = vld [vmem:[%s166 + $0x20] sm:$0xf]
      %v184 = vld [vmem:[%s166 + $0x24] sm:$0xf]
      %v185 = vld [vmem:[%s166 + $0x28] sm:$0xf]
      %v186 = vld [vmem:[%s166 + $0x2c] sm:$0xf]
      %v187 = vld [vmem:[%s166 + $0x30] sm:$0xf]
      %v188 = vld [vmem:[%s166 + $0x34] sm:$0xf]
      %v189 = vld [vmem:[%s166 + $0x38] sm:$0xf]
      %v190 = vld [vmem:[%s166 + $0x3c] sm:$0xf]
      %v191 = vld [vmem:[%s166 + $0x40] sm:$0xf]
      %v192 = vld [vmem:[%s166 + $0x44] sm:$0xf]
      %v193 = vld [vmem:[%s166 + $0x48] sm:$0xf]
      %v194 = vld [vmem:[%s166 + $0x4c] sm:$0xf]
      %v195 = vld [vmem:[%s166 + $0x50] sm:$0xf]
      %v196 = vld [vmem:[%s166 + $0x54] sm:$0xf]
      %v197 = vld [vmem:[%s166 + $0x58] sm:$0xf]
      %v198 = vld [vmem:[%s166 + $0x5c] sm:$0xf]
      %v199 = vld [vmem:[%s166 + $0x60] sm:$0xf]
      %v200 = vld [vmem:[%s166 + $0x64] sm:$0xf]
      %v201 = vld [vmem:[%s166 + $0x68] sm:$0xf]
      %v202 = vld [vmem:[%s166 + $0x6c] sm:$0xf]
      %v203 = vld [vmem:[%s166 + $0x70] sm:$0xf]
      %v204 = vld [vmem:[%s166 + $0x74] sm:$0xf]
      %v205 = vld [vmem:[%s166 + $0x78] sm:$0xf]
      %v206 = vld [vmem:[%s166 + $0x7c] sm:$0xf]
      %v207 = vld [vmem:[%s1] sm:$0xf]
      %v208 = vld [vmem:[%s1 + $0x4] sm:$0xf]
      %v209 = vld [vmem:[%s1 + $0x8] sm:$0xf]
      %v210 = vld [vmem:[%s1 + $0xc] sm:$0xf]
      %v211 = vld [vmem:[%s2] sm:$0x1]
      %v213 = vlaneseq
      %v214 = vshrl.u32 %v213, 7
      %v215 = vsub.s32 0, %v214
      %v216 = vrot.slane %v211, %v215
      %v250 = vunpack.c.l.b16 %v175
      %v251 = vunpack.c.l.b16 %v176
      %v252 = vunpack.c.l.b16 %v177
      %v253 = vunpack.c.l.b16 %v178
      %v254 = vunpack.c.l.b16 %v179
      %v255 = vunpack.c.l.b16 %v180
      %v256 = vunpack.c.l.b16 %v181
      %v257 = vunpack.c.l.b16 %v182
      %v258 = vunpack.c.l.b16 %v183
      %v259 = vunpack.c.l.b16 %v184
      %v260 = vunpack.c.l.b16 %v185
      %v261 = vunpack.c.l.b16 %v186
      %v262 = vunpack.c.l.b16 %v187
      %v263 = vunpack.c.l.b16 %v188
      %v264 = vunpack.c.l.b16 %v189
      %v265 = vunpack.c.l.b16 %v190
      %v266 = vunpack.c.l.b16 %v191
      %v267 = vunpack.c.l.b16 %v192
      %v268 = vunpack.c.l.b16 %v193
      %v269 = vunpack.c.l.b16 %v194
      %v270 = vunpack.c.l.b16 %v195
      %v271 = vunpack.c.l.b16 %v196
      %v272 = vunpack.c.l.b16 %v197
      %v273 = vunpack.c.l.b16 %v198
      %v274 = vunpack.c.l.b16 %v199
      %v275 = vunpack.c.l.b16 %v200
      %v276 = vunpack.c.l.b16 %v201
      %v277 = vunpack.c.l.b16 %v202
      %v278 = vunpack.c.l.b16 %v203
      %v279 = vunpack.c.l.b16 %v204
      %v280 = vunpack.c.l.b16 %v205
      %v281 = vunpack.c.l.b16 %v206
      %v282 = vpack.c.b16 %v251, %v250
      %v283 = vpack.c.b16 %v253, %v252
      %v284 = vpack.c.b16 %v255, %v254
      %v285 = vpack.c.b16 %v257, %v256
      %v286 = vpack.c.b16 %v259, %v258
      %v287 = vpack.c.b16 %v261, %v260
      %v288 = vpack.c.b16 %v263, %v262
      %v289 = vpack.c.b16 %v265, %v264
      %v290 = vpack.c.b16 %v267, %v266
      %v291 = vpack.c.b16 %v269, %v268
      %v292 = vpack.c.b16 %v271, %v270
      %v293 = vpack.c.b16 %v273, %v272
      %v294 = vpack.c.b16 %v275, %v274
      %v295 = vpack.c.b16 %v277, %v276
      %v296 = vpack.c.b16 %v279, %v278
      %v297 = vpack.c.b16 %v281, %v280
      %v302 = vunpack.c.l.b16 %v207
      %v303 = vunpack.c.l.b16 %v208
      %v304 = vunpack.c.l.b16 %v209
      %v305 = vunpack.c.l.b16 %v210
      %v306 = vpack.c.b16 %v303, %v302
      %v307 = vpack.c.b16 %v305, %v304
      %vm310 = vcmask 261120
      %v312 = vsel %vm310, %v282, 0
      %v315 = vsel %vm310, %v283, 0
      %v318 = vsel %vm310, %v284, 0
      %v321 = vsel %vm310, %v285, 0
      %v324 = vsel %vm310, %v286, 0
      %v327 = vsel %vm310, %v287, 0
      %v330 = vsel %vm310, %v288, 0
      %v333 = vsel %vm310, %v289, 0
      %v336 = vsel %vm310, %v290, 0
      %v339 = vsel %vm310, %v291, 0
      %v342 = vsel %vm310, %v292, 0
      %v345 = vsel %vm310, %v293, 0
      %v348 = vsel %vm310, %v294, 0
      %v351 = vsel %vm310, %v295, 0
      %v354 = vsel %vm310, %v296, 0
      %v357 = vsel %vm310, %v297, 0
      %359 = vmatprep.subr.bf16.mxu0 0
      %360 = vmatpush1.bf16.msra.mxu0 0
      %361 = vmatprep.subr.bf16.mxu0 0
      %362 = vmatpush1.bf16.msra.mxu0 0
      %363 = vmatprep.subr.bf16.mxu0 0
      %364 = vmatpush1.bf16.msra.mxu0 0
      %365 = vmatprep.subr.bf16.mxu0 0
      %366 = vmatpush1.bf16.msra.mxu0 0
      %367 = vmatprep.subr.bf16.mxu0 0
      %368 = vmatpush1.bf16.msra.mxu0 0
      %369 = vmatprep.subr.bf16.mxu0 0
      %370 = vmatpush1.bf16.msra.mxu0 0
      %371 = vmatprep.subr.bf16.mxu0 0
      %372 = vmatpush1.bf16.msra.mxu0 %v307
      %373 = vmatprep.subr.bf16.mxu0 0
      %374 = vmatpush1.bf16.msra.mxu0 %v306
      %375 = vmatprep.subr.bf16.mxu0 0
      %376 = vmatpush2.bf16.msra.mxu0 0
      %377 = vmatprep.subr.bf16.mxu0 0
      %378 = vmatpush2.bf16.msra.mxu0 0
      %379 = vmatprep.subr.bf16.mxu0 0
      %380 = vmatpush2.bf16.msra.mxu0 0
      %381 = vmatprep.subr.bf16.mxu0 0
      %382 = vmatpush2.bf16.msra.mxu0 0
      %383 = vmatprep.subr.bf16.mxu0 0
      %384 = vmatpush2.bf16.msra.mxu0 0
      %385 = vmatprep.subr.bf16.mxu0 0
      %386 = vmatpush2.bf16.msra.mxu0 0
      %387 = vmatprep.subr.bf16.mxu0 0
      %388 = vmatpush2.bf16.msra.mxu0 0
      %389 = vmatprep.subr.bf16.mxu0 0
      %390 = vmatpush2.bf16.msra.mxu0 0
      %391 = vmatprep.mubr.bf16.mxu0 0
      %392 = vmatmul.mubr.bf16.gmra.mxu0 %v312
      %v393 = vpop.f32.mrf.mxu0
      %v394 = vadd.f32 %v216, %v393
      %v395 = vpop.f32.mrf.mxu0
      %v396 = vpop.f32.mrf.mxu0
      %v397 = vadd.f32 %v216, %v396
      %v398 = vpop.f32.mrf.mxu0
      %399 = vmatprep.mubr.bf16.mxu0 0
      %400 = vmatmul.mubr.bf16.gmra.mxu0 %v315
      %v401 = vpop.f32.mrf.mxu0
      %v402 = vadd.f32 %v216, %v401
      %v403 = vpop.f32.mrf.mxu0
      %v404 = vpop.f32.mrf.mxu0
      %v405 = vadd.f32 %v216, %v404
      %v406 = vpop.f32.mrf.mxu0
      %407 = vmatprep.mubr.bf16.mxu0 0
      %408 = vmatmul.mubr.bf16.gmra.mxu0 %v318
      %v409 = vpop.f32.mrf.mxu0
      %v410 = vadd.f32 %v216, %v409
      %v411 = vpop.f32.mrf.mxu0
      %v412 = vpop.f32.mrf.mxu0
      %v413 = vadd.f32 %v216, %v412
      %v414 = vpop.f32.mrf.mxu0
      %415 = vmatprep.mubr.bf16.mxu0 0
      %416 = vmatmul.mubr.bf16.gmra.mxu0 %v321
      %v417 = vpop.f32.mrf.mxu0
      %v418 = vadd.f32 %v216, %v417
      %v419 = vpop.f32.mrf.mxu0
      %v420 = vpop.f32.mrf.mxu0
      %v421 = vadd.f32 %v216, %v420
      %v422 = vpop.f32.mrf.mxu0
      %423 = vmatprep.mubr.bf16.mxu0 0
      %424 = vmatmul.mubr.bf16.gmra.mxu0 %v324
      %v425 = vpop.f32.mrf.mxu0
      %v426 = vadd.f32 %v216, %v425
      %v427 = vpop.f32.mrf.mxu0
      %v428 = vpop.f32.mrf.mxu0
      %v429 = vadd.f32 %v216, %v428
      %v430 = vpop.f32.mrf.mxu0
      %431 = vmatprep.mubr.bf16.mxu0 0
      %432 = vmatmul.mubr.bf16.gmra.mxu0 %v327
      %v433 = vpop.f32.mrf.mxu0
      %v434 = vadd.f32 %v216, %v433
      %v435 = vpop.f32.mrf.mxu0
      %v436 = vpop.f32.mrf.mxu0
      %v437 = vadd.f32 %v216, %v436
      %v438 = vpop.f32.mrf.mxu0
      %439 = vmatprep.mubr.bf16.mxu0 0
      %440 = vmatmul.mubr.bf16.gmra.mxu0 %v330
      %v441 = vpop.f32.mrf.mxu0
      %v442 = vadd.f32 %v216, %v441
      %v443 = vpop.f32.mrf.mxu0
      %v444 = vpop.f32.mrf.mxu0
      %v445 = vadd.f32 %v216, %v444
      %v446 = vpop.f32.mrf.mxu0
      %447 = vmatprep.mubr.bf16.mxu0 0
      %448 = vmatmul.mubr.bf16.gmra.mxu0 %v333
      %v449 = vpop.f32.mrf.mxu0
      %v450 = vadd.f32 %v216, %v449
      %v451 = vpop.f32.mrf.mxu0
      %v452 = vpop.f32.mrf.mxu0
      %v453 = vadd.f32 %v216, %v452
      %v454 = vpop.f32.mrf.mxu0
      %455 = vmatprep.mubr.bf16.mxu0 0
      %456 = vmatmul.mubr.bf16.gmra.mxu0 %v336
      %v457 = vpop.f32.mrf.mxu0
      %v458 = vadd.f32 %v216, %v457
      %v459 = vpop.f32.mrf.mxu0
      %v460 = vpop.f32.mrf.mxu0
      %v461 = vadd.f32 %v216, %v460
      %v462 = vpop.f32.mrf.mxu0
      %463 = vmatprep.mubr.bf16.mxu0 0
      %464 = vmatmul.mubr.bf16.gmra.mxu0 %v339
      %v465 = vpop.f32.mrf.mxu0
      %v466 = vadd.f32 %v216, %v465
      %v467 = vpop.f32.mrf.mxu0
      %v468 = vpop.f32.mrf.mxu0
      %v469 = vadd.f32 %v216, %v468
      %v470 = vpop.f32.mrf.mxu0
      %471 = vmatprep.mubr.bf16.mxu0 0
      %472 = vmatmul.mubr.bf16.gmra.mxu0 %v342
      %v473 = vpop.f32.mrf.mxu0
      %v474 = vadd.f32 %v216, %v473
      %v475 = vpop.f32.mrf.mxu0
      %v476 = vpop.f32.mrf.mxu0
      %v477 = vadd.f32 %v216, %v476
      %v478 = vpop.f32.mrf.mxu0
      %479 = vmatprep.mubr.bf16.mxu0 0
      %480 = vmatmul.mubr.bf16.gmra.mxu0 %v345
      %v481 = vpop.f32.mrf.mxu0
      %v482 = vadd.f32 %v216, %v481
      %v483 = vpop.f32.mrf.mxu0
      %v484 = vpop.f32.mrf.mxu0
      %v485 = vadd.f32 %v216, %v484
      %v486 = vpop.f32.mrf.mxu0
      %487 = vmatprep.mubr.bf16.mxu0 0
      %488 = vmatmul.mubr.bf16.gmra.mxu0 %v348
      %v489 = vpop.f32.mrf.mxu0
      %v490 = vadd.f32 %v216, %v489
      %v491 = vpop.f32.mrf.mxu0
      %v492 = vpop.f32.mrf.mxu0
      %v493 = vadd.f32 %v216, %v492
      %v494 = vpop.f32.mrf.mxu0
      %495 = vmatprep.mubr.bf16.mxu0 0
      %496 = vmatmul.mubr.bf16.gmra.mxu0 %v351
      %v497 = vpop.f32.mrf.mxu0
      %v498 = vadd.f32 %v216, %v497
      %v499 = vpop.f32.mrf.mxu0
      %v500 = vpop.f32.mrf.mxu0
      %v501 = vadd.f32 %v216, %v500
      %v502 = vpop.f32.mrf.mxu0
      %503 = vmatprep.mubr.bf16.mxu0 0
      %504 = vmatmul.mubr.bf16.gmra.mxu0 %v354
      %v505 = vpop.f32.mrf.mxu0
      %v506 = vadd.f32 %v216, %v505
      %v507 = vpop.f32.mrf.mxu0
      %v508 = vpop.f32.mrf.mxu0
      %v509 = vadd.f32 %v216, %v508
      %v510 = vpop.f32.mrf.mxu0
      %511 = vmatprep.mubr.bf16.mxu0 0
      %512 = vmatmul.mubr.bf16.gmra.mxu0 %v357
      %v513 = vpop.f32.mrf.mxu0
      %v514 = vadd.f32 %v216, %v513
      %v515 = vpop.f32.mrf.mxu0
      %v516 = vpop.f32.mrf.mxu0
      %v517 = vadd.f32 %v216, %v516
      %v518 = vpop.f32.mrf.mxu0
      %519 = vdwg.mxu0
      %v520 = vpack.c.bf16 %v397, %v394
      %v521 = vpack.c.bf16 %v405, %v402
      %v522 = vpack.c.bf16 %v413, %v410
      %v523 = vpack.c.bf16 %v421, %v418
      %v524 = vpack.c.bf16 %v429, %v426
      %v525 = vpack.c.bf16 %v437, %v434
      %v526 = vpack.c.bf16 %v445, %v442
      %v527 = vpack.c.bf16 %v453, %v450
      %v528 = vpack.c.bf16 %v461, %v458
      %v529 = vpack.c.bf16 %v469, %v466
      %v530 = vpack.c.bf16 %v477, %v474
      %v531 = vpack.c.bf16 %v485, %v482
      %v532 = vpack.c.bf16 %v493, %v490
      %v533 = vpack.c.bf16 %v501, %v498
      %v534 = vpack.c.bf16 %v509, %v506
      %v535 = vpack.c.bf16 %v517, %v514
      %v552 = vunpack.c.l.b16 %v520
      %v553 = vunpack.c.h.b16 %v520
      %v554 = vunpack.c.l.b16 %v521
      %v555 = vunpack.c.h.b16 %v521
      %v556 = vunpack.c.l.b16 %v522
      %v557 = vunpack.c.h.b16 %v522
      %v558 = vunpack.c.l.b16 %v523
      %v559 = vunpack.c.h.b16 %v523
      %v560 = vunpack.c.l.b16 %v524
      %v561 = vunpack.c.h.b16 %v524
      %v562 = vunpack.c.l.b16 %v525
      %v563 = vunpack.c.h.b16 %v525
      %v564 = vunpack.c.l.b16 %v526
      %v565 = vunpack.c.h.b16 %v526
      %v566 = vunpack.c.l.b16 %v527
      %v567 = vunpack.c.h.b16 %v527
      %v568 = vunpack.c.l.b16 %v528
      %v569 = vunpack.c.h.b16 %v528
      %v570 = vunpack.c.l.b16 %v529
      %v571 = vunpack.c.h.b16 %v529
      %v572 = vunpack.c.l.b16 %v530
      %v573 = vunpack.c.h.b16 %v530
      %v574 = vunpack.c.l.b16 %v531
      %v575 = vunpack.c.h.b16 %v531
      %v576 = vunpack.c.l.b16 %v532
      %v577 = vunpack.c.h.b16 %v532
      %v578 = vunpack.c.l.b16 %v533
      %v579 = vunpack.c.h.b16 %v533
      %v580 = vunpack.c.l.b16 %v534
      %v581 = vunpack.c.h.b16 %v534
      %v582 = vunpack.c.l.b16 %v535
      %v583 = vunpack.c.h.b16 %v535
      %v584 = vpack.c.b16 %v552, %v552
      %v585 = vpack.c.b16 %v553, %v553
      %v586 = vpack.c.b16 %v554, %v554
      %v587 = vpack.c.b16 %v555, %v555
      %v588 = vpack.c.b16 %v556, %v556
      %v589 = vpack.c.b16 %v557, %v557
      %v590 = vpack.c.b16 %v558, %v558
      %v591 = vpack.c.b16 %v559, %v559
      %v592 = vpack.c.b16 %v560, %v560
      %v593 = vpack.c.b16 %v561, %v561
      %v594 = vpack.c.b16 %v562, %v562
      %v595 = vpack.c.b16 %v563, %v563
      %v596 = vpack.c.b16 %v564, %v564
      %v597 = vpack.c.b16 %v565, %v565
      %v598 = vpack.c.b16 %v566, %v566
      %v599 = vpack.c.b16 %v567, %v567
      %v600 = vpack.c.b16 %v568, %v568
      %v601 = vpack.c.b16 %v569, %v569
      %v602 = vpack.c.b16 %v570, %v570
      %v603 = vpack.c.b16 %v571, %v571
      %v604 = vpack.c.b16 %v572, %v572
      %v605 = vpack.c.b16 %v573, %v573
      %v606 = vpack.c.b16 %v574, %v574
      %v607 = vpack.c.b16 %v575, %v575
      %v608 = vpack.c.b16 %v576, %v576
      %v609 = vpack.c.b16 %v577, %v577
      %v610 = vpack.c.b16 %v578, %v578
      %v611 = vpack.c.b16 %v579, %v579
      %v612 = vpack.c.b16 %v580, %v580
      %v613 = vpack.c.b16 %v581, %v581
      %v614 = vpack.c.b16 %v582, %v582
      %v615 = vpack.c.b16 %v583, %v583
      %vm648 = vcmask 781312
      %649 = vst.msk [vmem:[%s172] sm:$0xf] %vm648, %v584
      %650 = vst.msk [vmem:[%s172 + $0x4] sm:$0xf] %vm648, %v585
      %651 = vst.msk [vmem:[%s172 + $0x8] sm:$0xf] %vm648, %v586
      %652 = vst.msk [vmem:[%s172 + $0xc] sm:$0xf] %vm648, %v587
      %653 = vst.msk [vmem:[%s172 + $0x10] sm:$0xf] %vm648, %v588
      %654 = vst.msk [vmem:[%s172 + $0x14] sm:$0xf] %vm648, %v589
      %655 = vst.msk [vmem:[%s172 + $0x18] sm:$0xf] %vm648, %v590
      %656 = vst.msk [vmem:[%s172 + $0x1c] sm:$0xf] %vm648, %v591
      %657 = vst.msk [vmem:[%s172 + $0x20] sm:$0xf] %vm648, %v592
      %658 = vst.msk [vmem:[%s172 + $0x24] sm:$0xf] %vm648, %v593
      %659 = vst.msk [vmem:[%s172 + $0x28] sm:$0xf] %vm648, %v594
      %660 = vst.msk [vmem:[%s172 + $0x2c] sm:$0xf] %vm648, %v595
      %661 = vst.msk [vmem:[%s172 + $0x30] sm:$0xf] %vm648, %v596
      %662 = vst.msk [vmem:[%s172 + $0x34] sm:$0xf] %vm648, %v597
      %663 = vst.msk [vmem:[%s172 + $0x38] sm:$0xf] %vm648, %v598
      %664 = vst.msk [vmem:[%s172 + $0x3c] sm:$0xf] %vm648, %v599
      %665 = vst.msk [vmem:[%s172 + $0x40] sm:$0xf] %vm648, %v600
      %666 = vst.msk [vmem:[%s172 + $0x44] sm:$0xf] %vm648, %v601
      %667 = vst.msk [vmem:[%s172 + $0x48] sm:$0xf] %vm648, %v602
      %668 = vst.msk [vmem:[%s172 + $0x4c] sm:$0xf] %vm648, %v603
      %669 = vst.msk [vmem:[%s172 + $0x50] sm:$0xf] %vm648, %v604
      %670 = vst.msk [vmem:[%s172 + $0x54] sm:$0xf] %vm648, %v605
      %671 = vst.msk [vmem:[%s172 + $0x58] sm:$0xf] %vm648, %v606
      %672 = vst.msk [vmem:[%s172 + $0x5c] sm:$0xf] %vm648, %v607
      %673 = vst.msk [vmem:[%s172 + $0x60] sm:$0xf] %vm648, %v608
      %674 = vst.msk [vmem:[%s172 + $0x64] sm:$0xf] %vm648, %v609
      %675 = vst.msk [vmem:[%s172 + $0x68] sm:$0xf] %vm648, %v610
      %676 = vst.msk [vmem:[%s172 + $0x6c] sm:$0xf] %vm648, %v611
      %677 = vst.msk [vmem:[%s172 + $0x70] sm:$0xf] %vm648, %v612
      %678 = vst.msk [vmem:[%s172 + $0x74] sm:$0xf] %vm648, %v613
      %679 = vst.msk [vmem:[%s172 + $0x78] sm:$0xf] %vm648, %v614
      %680 = vst.msk [vmem:[%s172 + $0x7c] sm:$0xf] %vm648, %v615
      %s681 = smul.u32 32, %s14
      %p682 = scmp.lt.s32.totalorder %s681, 63
      %s683 = scalar_select %p682, %s681, 63
      %s684 = smul.addr %s683, 4
      %s685 = scalar_lea.vmem %s3, %s684
      // Predicated region
      $region33: #{_lambda_.5} parent=31 // pred_check
        %p686 = pneg %p100
      $region34: #{_lambda_.5} parent=31 // pred_check_branch
        %688 = sbr.rel (%p686) target = $region36
      $region35: #{_lambda_.5} parent=31 // pred_region
        %s689 = smul.u32 32, %s14
      $region36: #{_lambda_.5} parent=31 // pred_fallthru
        _
    $region32: #{_lambda_.5} parent=5 // pred_fallthru
      _
    %p690 = scmp.le.s32.totalorder 2, %s9
    // Predicated region
    $region37: #{_lambda_.5} parent=5 // pred_check
      %p691 = pneg %p690
    $region38: #{_lambda_.5} parent=5 // pred_check_branch
      %693 = sbr.rel (%p691) target = $region40
    $region39: #{_lambda_.5} parent=5 // pred_region
      %s694 = ssub.s32 %s9, 2
      // Predicated region
      $region41: #{_lambda_.5} parent=39 // pred_check
        %p695 = pneg %p106
      $region42: #{_lambda_.5} parent=39 // pred_check_branch
        %697 = sbr.rel (%p695) target = $region44
      $region43: #{_lambda_.5} parent=39 // pred_region
        %s698 = smul.u32 32, %s15
        %p699 = scmp.lt.s32.totalorder %s698, 63
        %s700 = scalar_select %p699, %s698, 63
        %s701 = smul.addr %s700, 4
        %s702 = scalar_lea.vmem %s3, %s701
      $region44: #{_lambda_.5} parent=39 // pred_fallthru
        _
    $region40: #{_lambda_.5} parent=5 // pred_fallthru
      _
  $region6: #{_lambda_.5} parent=0 // loop_footer
    %s13 = sadd.s32 1, %s9
  $region7: #{_lambda_.5} parent=0 // loop_footer_branch
    %8 = sbr.rel target = $region3
  $region8: #{_lambda_.5} parent=0 // loop_exit
    _

// kernel: _lambda_.6
$region0: #{_lambda_.6}
  #allocation0 [shape = 'u32[]', space=smem, size = 0x4, offset = 0x4, fixed_abs, tag = 'smem constant byte address 0x4 - core index']
  #allocation1 [shape = 'u32[144,128]{1,0:T(1,128)}', space=vmem, size = 0x12000, scoped, tag = 'internal scratch']
  #allocation2 [shape = 'f32[18,18,96]{2,1,0:T(8,128)}', space=vmem, size = 0x36000, scoped, tag = 'scratch operand']
  %s0 = inlined_call_operand.vmem [shape: bf16[2,16,16,96], index: 0, kind: input, shape index: {}]
  %s1 = inlined_call_operand.vmem [shape: f32[9,96], index: 1, kind: input, shape index: {}]
  %s2 = inlined_call_operand.vmem [shape: f32[1,96], index: 2, kind: input, shape index: {}]
  %s3 = inlined_call_operand.vmem [shape: f32[9,96], index: 3, kind: input, shape index: {}]
  %s4 = inlined_call_operand.vmem [shape: f32[1,96], index: 4, kind: input, shape index: {}]
  %s5 = inlined_call_operand.vmem [shape: bf16[2,16,16,96], index: 5, kind: output, shape index: {}]
  %s6 = sld [smem:[#allocation0]]
  $region53: #{_lambda_.6} parent=0
    _
  %s8 = ssub.s32 1, %s6
  %s9 = scalar_select 0, %s8, %s6
  loop: start=0, step=1, limit=4
  $region2: #{_lambda_.6} parent=0 // loop_pre_header
    _
  $region3: #{_lambda_.6} parent=0 // loop_header
    %s11 = sphi 0, %s15
    %p12 = scmp.ge.s32.totalorder %s11, 4
    %s18 = sphi 0, %s30
    %s19 = sphi 0, %s26
    %s20 = sphi 0, %s18
    %s21 = sphi 0, %s19
    %s22 = sphi 0, %s20
    %s23 = sphi 0, %s21
    %s35 = sphi 0, %s37
    %s38 = sphi 0, %s35
    %s39 = sphi 0, %s38
    %s55 = sphi 0, %s39
    %s61 = sphi 0, %s63
    %s64 = sphi 0, %s61
    %s65 = sphi 0, %s64
    %s81 = sphi 0, %s65
    %s87 = sphi 0, %s89
    %s90 = sphi 0, %s87
    %s91 = sphi 0, %s90
    %s107 = sphi 0, %s91
    %s113 = sphi 0, %s115
    %s116 = sphi 0, %s113
    %s117 = sphi 0, %s116
    %s133 = sphi 0, %s117
    %s139 = sphi 0, %s141
    %s142 = sphi 0, %s139
    %s143 = sphi 0, %s142
    %s159 = sphi 0, %s143
    %s167 = sphi 0, %s169
    %s170 = sphi 0, %s167
    %s171 = sphi 0, %s170
    %s187 = sphi 0, %s171
  $region4: #{_lambda_.6} parent=0 // loop_header_branch
    %14 = sbr.rel (%p12) target = $region8
  $region5: #{_lambda_.6} parent=0 // loop_body
    %s16 = ssub.s32 %s11, 1
    %s17 = ssub.s32 %s11, 2
    %s24 = sadd.s32 1, %s19
    %p25 = scmp.ge.s32.totalorder %s24, 1
    %s26 = scalar_select %p25, 0, %s24
    %s27 = sadd.s32 1, %s18
    %s28 = scalar_select %p25, %s27, %s18
    %p29 = scmp.ge.s32.totalorder %s28, 2
    %s30 = scalar_select %p29, 0, %s28
    %s31 = ssub.s32 %s18, %s30
    %s32 = ssub.s32 %s19, %s26
    %s33 = sor.u32 %s31, %s32
    %p34 = scmp.eq.s32.totalorder %s33, 0
    %s36 = sadd.s32 %s35, 1
    %s37 = scalar_select %p34, %s35, %s36
    %p40 = pneg %p34
    %p41 = scmp.eq.s32.totalorder %s11, 1
    %p42 = por %p40, %p41
    %p43 = scmp.ne.s32.totalorder %s35, %s38
    %p44 = scmp.eq.s32.totalorder %s11, 0
    %p45 = por %p43, %p44
    %p46 = scmp.ne.s32.totalorder %s35, %s38
    %p47 = scmp.eq.s32.totalorder %s16, 1
    %p48 = por %p46, %p47
    %p49 = scmp.ne.s32.totalorder %s38, %s39
    %p50 = scmp.eq.s32.totalorder %s16, 0
    %p51 = por %p49, %p50
    %p52 = scmp.ne.s32.totalorder %s38, %s39
    %p53 = scmp.eq.s32.totalorder %s17, 1
    %p54 = por %p52, %p53
    %p56 = scmp.ne.s32.totalorder %s39, %s55
    %p57 = scmp.eq.s32.totalorder %s17, 0
    %p58 = por %p56, %p57
    %s59 = ssub.s32 %s19, %s26
    %p60 = scmp.eq.s32.totalorder %s59, 0
    %s62 = sadd.s32 %s61, 1
    %s63 = scalar_select %p60, %s61, %s62
    %p66 = pneg %p60
    %p67 = scmp.eq.s32.totalorder %s11, 1
    %p68 = por %p66, %p67
    %p69 = scmp.ne.s32.totalorder %s61, %s64
    %p70 = scmp.eq.s32.totalorder %s11, 0
    %p71 = por %p69, %p70
    %p72 = scmp.ne.s32.totalorder %s61, %s64
    %p73 = scmp.eq.s32.totalorder %s16, 1
    %p74 = por %p72, %p73
    %p75 = scmp.ne.s32.totalorder %s64, %s65
    %p76 = scmp.eq.s32.totalorder %s16, 0
    %p77 = por %p75, %p76
    %p78 = scmp.ne.s32.totalorder %s64, %s65
    %p79 = scmp.eq.s32.totalorder %s17, 1
    %p80 = por %p78, %p79
    %p82 = scmp.ne.s32.totalorder %s65, %s81
    %p83 = scmp.eq.s32.totalorder %s17, 0
    %p84 = por %p82, %p83
    %s85 = ssub.s32 %s19, %s26
    %p86 = scmp.eq.s32.totalorder %s85, 0
    %s88 = sadd.s32 %s87, 1
    %s89 = scalar_select %p86, %s87, %s88
    %p92 = pneg %p86
    %p93 = scmp.eq.s32.totalorder %s11, 1
    %p94 = por %p92, %p93
    %p95 = scmp.ne.s32.totalorder %s87, %s90
    %p96 = scmp.eq.s32.totalorder %s11, 0
    %p97 = por %p95, %p96
    %p98 = scmp.ne.s32.totalorder %s87, %s90
    %p99 = scmp.eq.s32.totalorder %s16, 1
    %p100 = por %p98, %p99
    %p101 = scmp.ne.s32.totalorder %s90, %s91
    %p102 = scmp.eq.s32.totalorder %s16, 0
    %p103 = por %p101, %p102
    %p104 = scmp.ne.s32.totalorder %s90, %s91
    %p105 = scmp.eq.s32.totalorder %s17, 1
    %p106 = por %p104, %p105
    %p108 = scmp.ne.s32.totalorder %s91, %s107
    %p109 = scmp.eq.s32.totalorder %s17, 0
    %p110 = por %p108, %p109
    %s111 = ssub.s32 %s19, %s26
    %p112 = scmp.eq.s32.totalorder %s111, 0
    %s114 = sadd.s32 %s113, 1
    %s115 = scalar_select %p112, %s113, %s114
    %p118 = pneg %p112
    %p119 = scmp.eq.s32.totalorder %s11, 1
    %p120 = por %p118, %p119
    %p121 = scmp.ne.s32.totalorder %s113, %s116
    %p122 = scmp.eq.s32.totalorder %s11, 0
    %p123 = por %p121, %p122
    %p124 = scmp.ne.s32.totalorder %s113, %s116
    %p125 = scmp.eq.s32.totalorder %s16, 1
    %p126 = por %p124, %p125
    %p127 = scmp.ne.s32.totalorder %s116, %s117
    %p128 = scmp.eq.s32.totalorder %s16, 0
    %p129 = por %p127, %p128
    %p130 = scmp.ne.s32.totalorder %s116, %s117
    %p131 = scmp.eq.s32.totalorder %s17, 1
    %p132 = por %p130, %p131
    %p134 = scmp.ne.s32.totalorder %s117, %s133
    %p135 = scmp.eq.s32.totalorder %s17, 0
    %p136 = por %p134, %p135
    %s137 = ssub.s32 %s19, %s26
    %p138 = scmp.eq.s32.totalorder %s137, 0
    %s140 = sadd.s32 %s139, 1
    %s141 = scalar_select %p138, %s139, %s140
    %p144 = pneg %p138
    %p145 = scmp.eq.s32.totalorder %s11, 1
    %p146 = por %p144, %p145
    %p147 = scmp.ne.s32.totalorder %s139, %s142
    %p148 = scmp.eq.s32.totalorder %s11, 0
    %p149 = por %p147, %p148
    %p150 = scmp.ne.s32.totalorder %s139, %s142
    %p151 = scmp.eq.s32.totalorder %s16, 1
    %p152 = por %p150, %p151
    %p153 = scmp.ne.s32.totalorder %s142, %s143
    %p154 = scmp.eq.s32.totalorder %s16, 0
    %p155 = por %p153, %p154
    %p156 = scmp.ne.s32.totalorder %s142, %s143
    %p157 = scmp.eq.s32.totalorder %s17, 1
    %p158 = por %p156, %p157
    %p160 = scmp.ne.s32.totalorder %s143, %s159
    %p161 = scmp.eq.s32.totalorder %s17, 0
    %p162 = por %p160, %p161
    %s163 = ssub.s32 %s18, %s30
    %s164 = ssub.s32 %s19, %s26
    %s165 = sor.u32 %s163, %s164
    %p166 = scmp.eq.s32.totalorder %s165, 0
    %s168 = sadd.s32 %s167, 1
    %s169 = scalar_select %p166, %s167, %s168
    %p172 = pneg %p166
    %p173 = scmp.eq.s32.totalorder %s11, 1
    %p174 = por %p172, %p173
    %p175 = scmp.ne.s32.totalorder %s167, %s170
    %p176 = scmp.eq.s32.totalorder %s11, 0
    %p177 = por %p175, %p176
    %p178 = scmp.ne.s32.totalorder %s167, %s170
    %p179 = scmp.eq.s32.totalorder %s16, 1
    %p180 = por %p178, %p179
    %p181 = scmp.ne.s32.totalorder %s170, %s171
    %p182 = scmp.eq.s32.totalorder %s16, 0
    %p183 = por %p181, %p182
    %p184 = scmp.ne.s32.totalorder %s170, %s171
    %p185 = scmp.eq.s32.totalorder %s17, 1
    %p186 = por %p184, %p185
    %p188 = scmp.ne.s32.totalorder %s171, %s187
    %p189 = scmp.eq.s32.totalorder %s17, 0
    %p190 = por %p188, %p189
    %p191 = scmp.le.s32.totalorder 1, %s11
    %p192 = scmp.lt.s32.totalorder %s11, 3
    %p193 = pnand %p191, %p192
    %p194 = pneg %p193
    // Predicated region
    $region9: #{_lambda_.6} parent=5 // pred_check
      _
    $region10: #{_lambda_.6} parent=5 // pred_check_branch
      %196 = sbr.rel (%p193) target = $region12
    $region11: #{_lambda_.6} parent=5 // pred_region
      %s197 = ssub.s32 %s11, 1
      // Predicated region
      $region13: #{_lambda_.6} parent=11 // pred_check
        %p198 = pneg %p77
      $region14: #{_lambda_.6} parent=11 // pred_check_branch
        %200 = sbr.rel (%p198) target = $region16
      $region15: #{_lambda_.6} parent=11 // pred_region
        %p201 = scmp.lt.s32.totalorder %s21, 0
        %s202 = scalar_select %p201, %s21, 0
        %s203 = smul.addr %s202, 8
        %s204 = scalar_lea.vmem %s1, %s203
      $region16: #{_lambda_.6} parent=11 // pred_fallthru
        _
      // Predicated region
      $region17: #{_lambda_.6} parent=11 // pred_check
        %p205 = pneg %p103
      $region18: #{_lambda_.6} parent=11 // pred_check_branch
        %207 = sbr.rel (%p205) target = $region20
      $region19: #{_lambda_.6} parent=11 // pred_region
        %p208 = scmp.lt.s32.totalorder %s21, 0
        %s209 = scalar_select %p208, %s21, 0
        %s210 = scalar_lea.vmem %s2, %s209
      $region20: #{_lambda_.6} parent=11 // pred_fallthru
        _
      // Predicated region
      $region21: #{_lambda_.6} parent=11 // pred_check
        %p211 = pneg %p129
      $region22: #{_lambda_.6} parent=11 // pred_check_branch
        %213 = sbr.rel (%p211) target = $region24
      $region23: #{_lambda_.6} parent=11 // pred_region
        %p214 = scmp.lt.s32.totalorder %s21, 0
        %s215 = scalar_select %p214, %s21, 0
        %s216 = smul.addr %s215, 8
        %s217 = scalar_lea.vmem %s3, %s216
      $region24: #{_lambda_.6} parent=11 // pred_fallthru
        _
      // Predicated region
      $region25: #{_lambda_.6} parent=11 // pred_check
        %p218 = pneg %p155
      $region26: #{_lambda_.6} parent=11 // pred_check_branch
        %220 = sbr.rel (%p218) target = $region28
      $region27: #{_lambda_.6} parent=11 // pred_region
        %p221 = scmp.lt.s32.totalorder %s21, 0
        %s222 = scalar_select %p221, %s21, 0
        %s223 = scalar_lea.vmem %s4, %s222
      $region28: #{_lambda_.6} parent=11 // pred_fallthru
        _
    $region12: #{_lambda_.6} parent=5 // pred_fallthru
      _
    %p224 = scmp.lt.s32.totalorder %s11, 2
    // Predicated region
    $region29: #{_lambda_.6} parent=5 // pred_check
      %p225 = pneg %p224
    $region30: #{_lambda_.6} parent=5 // pred_check_branch
      %227 = sbr.rel (%p225) target = $region32
    $region31: #{_lambda_.6} parent=5 // pred_region
      // Predicated region
      $region33: #{_lambda_.6} parent=31 // pred_check
        %p228 = pneg %p45
      $region34: #{_lambda_.6} parent=31 // pred_check_branch
        %230 = sbr.rel (%p228) target = $region36
      $region35: #{_lambda_.6} parent=31 // pred_region
        %p231 = scmp.lt.s32.totalorder %s18, 1
        %s232 = scalar_select %p231, %s18, 1
        %p233 = scmp.lt.s32.totalorder %s19, 0
        %s234 = scalar_select %p233, %s19, 0
        %s235 = smul.addr %s232, 32
        %s236 = sadd.s32 %s234, %s235
        %s237 = smul.addr %s236, 4
        %s238 = scalar_lea.vmem %s0, %s237
      $region36: #{_lambda_.6} parent=31 // pred_fallthru
        _
    $region32: #{_lambda_.6} parent=5 // pred_fallthru
      _
    %p239 = scmp.le.s32.totalorder 1, %s11
    %p240 = scmp.lt.s32.totalorder %s11, 3
    %p241 = pnand %p239, %p240
    %p242 = pneg %p241
    // Predicated region
    $region37: #{_lambda_.6} parent=5 // pred_check
      _
    $region38: #{_lambda_.6} parent=5 // pred_check_branch
      %244 = sbr.rel (%p241) target = $region40
    $region39: #{_lambda_.6} parent=5 // pred_region
      %s245 = ssub.s32 %s11, 1
      %p246 = scmp.lt.s32.totalorder %s20, 1
      %s247 = scalar_select %p246, %s20, 1
      %p248 = scmp.lt.s32.totalorder %s21, 0
      %s249 = scalar_select %p248, %s21, 0
      %s250 = smul.addr %s247, 32
      %s251 = sadd.s32 %s249, %s250
      %s252 = smul.addr %s251, 4
      %s253 = scalar_lea.vmem %s0, %s252
      %p254 = pneg %p51
      %p255 = pneg %p48
      %p256 = scmp.lt.s32.totalorder %s21, 0
      %s257 = scalar_select %p256, %s21, 0
      %s258 = smul.addr %s257, 8
      %s259 = scalar_lea.vmem %s1, %s258
      %p260 = pneg %p77
      %p261 = pneg %p74
      %p262 = scmp.lt.s32.totalorder %s21, 0
      %s263 = scalar_select %p262, %s21, 0
      %s264 = scalar_lea.vmem %s2, %s263
      %p265 = pneg %p103
      %p266 = pneg %p100
      %p267 = scmp.lt.s32.totalorder %s21, 0
      %s268 = scalar_select %p267, %s21, 0
      %s269 = smul.addr %s268, 8
      %s270 = scalar_lea.vmem %s3, %s269
      %p271 = pneg %p129
      %p272 = pneg %p126
      %p273 = scmp.lt.s32.totalorder %s21, 0
      %s274 = scalar_select %p273, %s21, 0
      %s275 = scalar_lea.vmem %s4, %s274
      %p276 = pneg %p155
      %p277 = pneg %p152
      %p278 = pneg %p183
      %p279 = pneg %p180
      %p280 = scmp.lt.s32.totalorder %s20, 1
      %s281 = scalar_select %p280, %s20, 1
      %p282 = scmp.lt.s32.totalorder %s21, 0
      %s283 = scalar_select %p282, %s21, 0
      %s284 = smul.addr %s281, 32
      %s285 = sadd.s32 %s283, %s284
      %s286 = smul.addr %s285, 4
      %s287 = scalar_lea.vmem %s5, %s286
      %p288 = scmp.lt.s32.totalorder %s20, 1
      %s289 = scalar_select %p288, %s20, 1
      %p290 = scmp.lt.s32.totalorder %s21, 0
      %s291 = scalar_select %p290, %s21, 0
      %s292 = smul.addr %s289, 32
      %s293 = sadd.s32 %s291, %s292
      %s294 = smul.addr %s293, 4
      %s295 = scalar_lea.vmem %s0, %s294
      %p296 = scmp.lt.s32.totalorder %s21, 0
      %s297 = scalar_select %p296, %s21, 0
      %s298 = smul.addr %s297, 8
      %s299 = scalar_lea.vmem %s1, %s298
      %p300 = scmp.lt.s32.totalorder %s21, 0
      %s301 = scalar_select %p300, %s21, 0
      %s302 = scalar_lea.vmem %s2, %s301
      %p303 = scmp.lt.s32.totalorder %s21, 0
      %s304 = scalar_select %p303, %s21, 0
      %s305 = smul.addr %s304, 8
      %s306 = scalar_lea.vmem %s3, %s305
      %p307 = scmp.lt.s32.totalorder %s21, 0
      %s308 = scalar_select %p307, %s21, 0
      %s309 = scalar_lea.vmem %s4, %s308
      %p310 = scmp.lt.s32.totalorder %s20, 1
      %s311 = scalar_select %p310, %s20, 1
      %p312 = scmp.lt.s32.totalorder %s21, 0
      %s313 = scalar_select %p312, %s21, 0
      %s314 = smul.addr %s311, 32
      %s315 = sadd.s32 %s313, %s314
      %s316 = smul.addr %s315, 4
      %s317 = scalar_lea.vmem %s5, %s316
      %vm318 = vcmask 785408
      %319 = vst.msk [vmem:[#allocation2] sm:$0xff] %vm318, 0.0
      %320 = vst.msk [vmem:[#allocation2 + $0x8] sm:$0xff] %vm318, 0.0
      %vm321 = vcmask 779264
      %322 = vst.msk [vmem:[#allocation2 + $0x10] sm:$0x3] %vm321, 0.0
      %s323 = scalar_lea.vmem [#allocation2], 408
      %324 = vst.msk [vmem:[%s323] sm:$0xff] %vm318, 0.0
      %325 = vst.msk [vmem:[%s323 + $0x8] sm:$0xff] %vm318, 0.0
      %326 = vst.msk [vmem:[%s323 + $0x10] sm:$0x3] %vm321, 0.0
      %vm327 = vcmask 778240
      %328 = vst.msk [vmem:[#allocation2] sm:$0x1] %vm327, 0.0
      %329 = vst.msk [vmem:[#allocation2 + $0x18] sm:$0x1] %vm327, 0.0
      %330 = vst.msk [vmem:[#allocation2 + $0x30] sm:$0x1] %vm327, 0.0
      %331 = vst.msk [vmem:[#allocation2 + $0x48] sm:$0x1] %vm327, 0.0
      %332 = vst.msk [vmem:[#allocation2 + $0x60] sm:$0x1] %vm327, 0.0
      %333 = vst.msk [vmem:[#allocation2 + $0x78] sm:$0x1] %vm327, 0.0
      %334 = vst.msk [vmem:[#allocation2 + $0x90] sm:$0x1] %vm327, 0.0
      %335 = vst.msk [vmem:[#allocation2 + $0xa8] sm:$0x1] %vm327, 0.0
      %336 = vst.msk [vmem:[#allocation2 + $0xc0] sm:$0x1] %vm327, 0.0
      %337 = vst.msk [vmem:[#allocation2 + $0xd8] sm:$0x1] %vm327, 0.0
      %338 = vst.msk [vmem:[#allocation2 + $0xf0] sm:$0x1] %vm327, 0.0
      %339 = vst.msk [vmem:[#allocation2 + $0x108] sm:$0x1] %vm327, 0.0
      %340 = vst.msk [vmem:[#allocation2 + $0x120] sm:$0x1] %vm327, 0.0
      %341 = vst.msk [vmem:[#allocation2 + $0x138] sm:$0x1] %vm327, 0.0
      %342 = vst.msk [vmem:[#allocation2 + $0x150] sm:$0x1] %vm327, 0.0
      %343 = vst.msk [vmem:[#allocation2 + $0x168] sm:$0x1] %vm327, 0.0
      %344 = vst.msk [vmem:[#allocation2 + $0x180] sm:$0x1] %vm327, 0.0
      %345 = vst.msk [vmem:[#allocation2 + $0x198] sm:$0x1] %vm327, 0.0
      %346 = vst.msk [vmem:[#allocation2 + $0x11] sm:$0x1] %vm327, 0.0
      %347 = vst.msk [vmem:[#allocation2 + $0x29] sm:$0x1] %vm327, 0.0
      %348 = vst.msk [vmem:[#allocation2 + $0x41] sm:$0x1] %vm327, 0.0
      %349 = vst.msk [vmem:[#allocation2 + $0x59] sm:$0x1] %vm327, 0.0
      %350 = vst.msk [vmem:[#allocation2 + $0x71] sm:$0x1] %vm327, 0.0
      %351 = vst.msk [vmem:[#allocation2 + $0x89] sm:$0x1] %vm327, 0.0
      %352 = vst.msk [vmem:[#allocation2 + $0xa1] sm:$0x1] %vm327, 0.0
      %353 = vst.msk [vmem:[#allocation2 + $0xb9] sm:$0x1] %vm327, 0.0
      %354 = vst.msk [vmem:[#allocation2 + $0xd1] sm:$0x1] %vm327, 0.0
      %355 = vst.msk [vmem:[#allocation2 + $0xe9] sm:$0x1] %vm327, 0.0
      %356 = vst.msk [vmem:[#allocation2 + $0x101] sm:$0x1] %vm327, 0.0
      %357 = vst.msk [vmem:[#allocation2 + $0x119] sm:$0x1] %vm327, 0.0
      %358 = vst.msk [vmem:[#allocation2 + $0x131] sm:$0x1] %vm327, 0.0
      %359 = vst.msk [vmem:[#allocation2 + $0x149] sm:$0x1] %vm327, 0.0
      %360 = vst.msk [vmem:[#allocation2 + $0x161] sm:$0x1] %vm327, 0.0
      %361 = vst.msk [vmem:[#allocation2 + $0x179] sm:$0x1] %vm327, 0.0
      %362 = vst.msk [vmem:[#allocation2 + $0x191] sm:$0x1] %vm327, 0.0
      %363 = vst.msk [vmem:[#allocation2 + $0x1a9] sm:$0x1] %vm327, 0.0
      %v364 = vld [vmem:[%s295] sm:$0xf]
      %v365 = vld [vmem:[%s295 + $0x4] sm:$0xf]
      %v366 = vld [vmem:[%s295 + $0x8] sm:$0xf]
      %v367 = vld [vmem:[%s295 + $0xc] sm:$0xf]
      %v368 = vld [vmem:[%s295 + $0x10] sm:$0xf]
      %v369 = vld [vmem:[%s295 + $0x14] sm:$0xf]
      %v370 = vld [vmem:[%s295 + $0x18] sm:$0xf]
      %v371 = vld [vmem:[%s295 + $0x1c] sm:$0xf]
      %v372 = vld [vmem:[%s295 + $0x20] sm:$0xf]
      %v373 = vld [vmem:[%s295 + $0x24] sm:$0xf]
      %v374 = vld [vmem:[%s295 + $0x28] sm:$0xf]
      %v375 = vld [vmem:[%s295 + $0x2c] sm:$0xf]
      %v376 = vld [vmem:[%s295 + $0x30] sm:$0xf]
      %v377 = vld [vmem:[%s295 + $0x34] sm:$0xf]
      %v378 = vld [vmem:[%s295 + $0x38] sm:$0xf]
      %v379 = vld [vmem:[%s295 + $0x3c] sm:$0xf]
      %v380 = vld [vmem:[%s295 + $0x40] sm:$0xf]
      %v381 = vld [vmem:[%s295 + $0x44] sm:$0xf]
      %v382 = vld [vmem:[%s295 + $0x48] sm:$0xf]
      %v383 = vld [vmem:[%s295 + $0x4c] sm:$0xf]
      %v384 = vld [vmem:[%s295 + $0x50] sm:$0xf]
      %v385 = vld [vmem:[%s295 + $0x54] sm:$0xf]
      %v386 = vld [vmem:[%s295 + $0x58] sm:$0xf]
      %v387 = vld [vmem:[%s295 + $0x5c] sm:$0xf]
      %v388 = vld [vmem:[%s295 + $0x60] sm:$0xf]
      %v389 = vld [vmem:[%s295 + $0x64] sm:$0xf]
      %v390 = vld [vmem:[%s295 + $0x68] sm:$0xf]
      %v391 = vld [vmem:[%s295 + $0x6c] sm:$0xf]
      %v392 = vld [vmem:[%s295 + $0x70] sm:$0xf]
      %v393 = vld [vmem:[%s295 + $0x74] sm:$0xf]
      %v394 = vld [vmem:[%s295 + $0x78] sm:$0xf]
      %v395 = vld [vmem:[%s295 + $0x7c] sm:$0xf]
      %v396 = vunpack.c.l.bf16 %v364
      %v397 = vunpack.c.l.bf16 %v365
      %v398 = vunpack.c.l.bf16 %v366
      %v399 = vunpack.c.l.bf16 %v367
      %v400 = vunpack.c.l.bf16 %v368
      %v401 = vunpack.c.l.bf16 %v369
      %v402 = vunpack.c.l.bf16 %v370
      %v403 = vunpack.c.l.bf16 %v371
      %v404 = vunpack.c.l.bf16 %v372
      %v405 = vunpack.c.l.bf16 %v373
      %v406 = vunpack.c.l.bf16 %v374
      %v407 = vunpack.c.l.bf16 %v375
      %v408 = vunpack.c.l.bf16 %v376
      %v409 = vunpack.c.l.bf16 %v377
      %v410 = vunpack.c.l.bf16 %v378
      %v411 = vunpack.c.l.bf16 %v379
      %v412 = vunpack.c.l.bf16 %v380
      %v413 = vunpack.c.l.bf16 %v381
      %v414 = vunpack.c.l.bf16 %v382
      %v415 = vunpack.c.l.bf16 %v383
      %v416 = vunpack.c.l.bf16 %v384
      %v417 = vunpack.c.l.bf16 %v385
      %v418 = vunpack.c.l.bf16 %v386
      %v419 = vunpack.c.l.bf16 %v387
      %v420 = vunpack.c.l.bf16 %v388
      %v421 = vunpack.c.l.bf16 %v389
      %v422 = vunpack.c.l.bf16 %v390
      %v423 = vunpack.c.l.bf16 %v391
      %v424 = vunpack.c.l.bf16 %v392
      %v425 = vunpack.c.l.bf16 %v393
      %v426 = vunpack.c.l.bf16 %v394
      %v427 = vunpack.c.l.bf16 %v395
      %s428 = scalar_lea.vmem [#allocation2], 24
      %429 = vst.msk [vmem:[%s428 + $0x1] sm:$0xff] %vm318, %v396
      %430 = vst.msk [vmem:[%s428 + $0x9] sm:$0xff] %vm318, %v397
      %431 = vst.msk [vmem:[%s428 + $0x19] sm:$0xff] %vm318, %v398
      %432 = vst.msk [vmem:[%s428 + $0x21] sm:$0xff] %vm318, %v399
      %433 = vst.msk [vmem:[%s428 + $0x31] sm:$0xff] %vm318, %v400
      %434 = vst.msk [vmem:[%s428 + $0x39] sm:$0xff] %vm318, %v401
      %435 = vst.msk [vmem:[%s428 + $0x49] sm:$0xff] %vm318, %v402
      %436 = vst.msk [vmem:[%s428 + $0x51] sm:$0xff] %vm318, %v403
      %437 = vst.msk [vmem:[%s428 + $0x61] sm:$0xff] %vm318, %v404
      %438 = vst.msk [vmem:[%s428 + $0x69] sm:$0xff] %vm318, %v405
      %439 = vst.msk [vmem:[%s428 + $0x79] sm:$0xff] %vm318, %v406
      %440 = vst.msk [vmem:[%s428 + $0x81] sm:$0xff] %vm318, %v407
      %441 = vst.msk [vmem:[%s428 + $0x91] sm:$0xff] %vm318, %v408
      %442 = vst.msk [vmem:[%s428 + $0x99] sm:$0xff] %vm318, %v409
      %443 = vst.msk [vmem:[%s428 + $0xa9] sm:$0xff] %vm318, %v410
      %444 = vst.msk [vmem:[%s428 + $0xb1] sm:$0xff] %vm318, %v411
      %445 = vst.msk [vmem:[%s428 + $0xc1] sm:$0xff] %vm318, %v412
      %446 = vst.msk [vmem:[%s428 + $0xc9] sm:$0xff] %vm318, %v413
      %447 = vst.msk [vmem:[%s428 + $0xd9] sm:$0xff] %vm318, %v414
      %448 = vst.msk [vmem:[%s428 + $0xe1] sm:$0xff] %vm318, %v415
      %449 = vst.msk [vmem:[%s428 + $0xf1] sm:$0xff] %vm318, %v416
      %450 = vst.msk [vmem:[%s428 + $0xf9] sm:$0xff] %vm318, %v417
      %451 = vst.msk [vmem:[%s428 + $0x109] sm:$0xff] %vm318, %v418
      %452 = vst.msk [vmem:[%s428 + $0x111] sm:$0xff] %vm318, %v419
      %453 = vst.msk [vmem:[%s428 + $0x121] sm:$0xff] %vm318, %v420
      %454 = vst.msk [vmem:[%s428 + $0x129] sm:$0xff] %vm318, %v421
      %455 = vst.msk [vmem:[%s428 + $0x139] sm:$0xff] %vm318, %v422
      %456 = vst.msk [vmem:[%s428 + $0x141] sm:$0xff] %vm318, %v423
      %457 = vst.msk [vmem:[%s428 + $0x151] sm:$0xff] %vm318, %v424
      %458 = vst.msk [vmem:[%s428 + $0x159] sm:$0xff] %vm318, %v425
      %459 = vst.msk [vmem:[%s428 + $0x169] sm:$0xff] %vm318, %v426
      %460 = vst.msk [vmem:[%s428 + $0x171] sm:$0xff] %vm318, %v427
      %v461 = vld [vmem:[#allocation2] sm:$0xff]
      %v462 = vld [vmem:[#allocation2 + $0x8] sm:$0xff]
      %v463 = vld [vmem:[#allocation2 + $0x18] sm:$0xff]
      %v464 = vld [vmem:[#allocation2 + $0x20] sm:$0xff]
      %v465 = vld [vmem:[#allocation2 + $0x30] sm:$0xff]
      %v466 = vld [vmem:[#allocation2 + $0x38] sm:$0xff]
      %v467 = vld [vmem:[#allocation2 + $0x48] sm:$0xff]
      %v468 = vld [vmem:[#allocation2 + $0x50] sm:$0xff]
      %v469 = vld [vmem:[#allocation2 + $0x60] sm:$0xff]
      %v470 = vld [vmem:[#allocation2 + $0x68] sm:$0xff]
      %v471 = vld [vmem:[#allocation2 + $0x78] sm:$0xff]
      %v472 = vld [vmem:[#allocation2 + $0x80] sm:$0xff]
      %v473 = vld [vmem:[#allocation2 + $0x90] sm:$0xff]
      %v474 = vld [vmem:[#allocation2 + $0x98] sm:$0xff]
      %v475 = vld [vmem:[#allocation2 + $0xa8] sm:$0xff]
      %v476 = vld [vmem:[#allocation2 + $0xb0] sm:$0xff]
      %v477 = vld [vmem:[#allocation2 + $0xc0] sm:$0xff]
      %v478 = vld [vmem:[#allocation2 + $0xc8] sm:$0xff]
      %v479 = vld [vmem:[#allocation2 + $0xd8] sm:$0xff]
      %v480 = vld [vmem:[#allocation2 + $0xe0] sm:$0xff]
      %v481 = vld [vmem:[#allocation2 + $0xf0] sm:$0xff]
      %v482 = vld [vmem:[#allocation2 + $0xf8] sm:$0xff]
      %v483 = vld [vmem:[#allocation2 + $0x108] sm:$0xff]
      %v484 = vld [vmem:[#allocation2 + $0x110] sm:$0xff]
      %v485 = vld [vmem:[#allocation2 + $0x120] sm:$0xff]
      %v486 = vld [vmem:[#allocation2 + $0x128] sm:$0xff]
      %v487 = vld [vmem:[#allocation2 + $0x138] sm:$0xff]
      %v488 = vld [vmem:[#allocation2 + $0x140] sm:$0xff]
      %v489 = vld [vmem:[#allocation2 + $0x150] sm:$0xff]
      %v490 = vld [vmem:[#allocation2 + $0x158] sm:$0xff]
      %v491 = vld [vmem:[#allocation2 + $0x168] sm:$0xff]
      %v492 = vld [vmem:[#allocation2 + $0x170] sm:$0xff]
      %v493 = vld [vmem:[#allocation2 + $0x180] sm:$0xff]
      %v494 = vld [vmem:[#allocation2 + $0x188] sm:$0xff]
      %v495 = vld [vmem:[#allocation2 + $0x198] sm:$0xff]
      %v496 = vld [vmem:[#allocation2 + $0x1a0] sm:$0xff]
      %v497 = vld [vmem:[%s299] sm:$0x1]
      %v498 = vlaneseq
      %v499 = vshrl.u32 %v498, 7
      %v500 = vsub.s32 0, %v499
      %v501 = vrot.slane %v497, %v500
      %v502 = vmul.f32 %v461, %v501
      %v503 = vmul.f32 %v462, %v501
      %v504 = vmul.f32 %v463, %v501
      %v505 = vmul.f32 %v464, %v501
      %v506 = vmul.f32 %v465, %v501
      %v507 = vmul.f32 %v466, %v501
      %v508 = vmul.f32 %v467, %v501
      %v509 = vmul.f32 %v468, %v501
      %v510 = vmul.f32 %v469, %v501
      %v511 = vmul.f32 %v470, %v501
      %v512 = vmul.f32 %v471, %v501
      %v513 = vmul.f32 %v472, %v501
      %v514 = vmul.f32 %v473, %v501
      %v515 = vmul.f32 %v474, %v501
      %v516 = vmul.f32 %v475, %v501
      %v517 = vmul.f32 %v476, %v501
      %v518 = vmul.f32 %v477, %v501
      %v519 = vmul.f32 %v478, %v501
      %v520 = vmul.f32 %v479, %v501
      %v521 = vmul.f32 %v480, %v501
      %v522 = vmul.f32 %v481, %v501
      %v523 = vmul.f32 %v482, %v501
      %v524 = vmul.f32 %v483, %v501
      %v525 = vmul.f32 %v484, %v501
      %v526 = vmul.f32 %v485, %v501
      %v527 = vmul.f32 %v486, %v501
      %v528 = vmul.f32 %v487, %v501
      %v529 = vmul.f32 %v488, %v501
      %v530 = vmul.f32 %v489, %v501
      %v531 = vmul.f32 %v490, %v501
      %v532 = vmul.f32 %v491, %v501
      %v533 = vmul.f32 %v492, %v501
      %v534 = vld [vmem:[%s299 + $0x3] sm:$0x1]
      %v535 = vlaneseq
      %v536 = vshrl.u32 %v535, 7
      %v537 = vsub.s32 0, %v536
      %v538 = vrot.slane %v534, %v537
      %v539 = vmul.f32 %v463, %v538
      %v540 = vmul.f32 %v464, %v538
      %v541 = vmul.f32 %v465, %v538
      %v542 = vmul.f32 %v466, %v538
      %v543 = vmul.f32 %v467, %v538
      %v544 = vmul.f32 %v468, %v538
      %v545 = vmul.f32 %v469, %v538
      %v546 = vmul.f32 %v470, %v538
      %v547 = vmul.f32 %v471, %v538
      %v548 = vmul.f32 %v472, %v538
      %v549 = vmul.f32 %v473, %v538
      %v550 = vmul.f32 %v474, %v538
      %v551 = vmul.f32 %v475, %v538
      %v552 = vmul.f32 %v476, %v538
      %v553 = vmul.f32 %v477, %v538
      %v554 = vmul.f32 %v478, %v538
      %v555 = vmul.f32 %v479, %v538
      %v556 = vmul.f32 %v480, %v538
      %v557 = vmul.f32 %v481, %v538
      %v558 = vmul.f32 %v482, %v538
      %v559 = vmul.f32 %v483, %v538
      %v560 = vmul.f32 %v484, %v538
      %v561 = vmul.f32 %v485, %v538
      %v562 = vmul.f32 %v486, %v538
      %v563 = vmul.f32 %v487, %v538
      %v564 = vmul.f32 %v488, %v538
      %v565 = vmul.f32 %v489, %v538
      %v566 = vmul.f32 %v490, %v538
      %v567 = vmul.f32 %v491, %v538
      %v568 = vmul.f32 %v492, %v538
      %v569 = vmul.f32 %v493, %v538
      %v570 = vmul.f32 %v494, %v538
      %v571 = vadd.f32 %v502, %v539
      %v572 = vadd.f32 %v503, %v540
      %v573 = vadd.f32 %v504, %v541
      %v574 = vadd.f32 %v505, %v542
      %v575 = vadd.f32 %v506, %v543
      %v576 = vadd.f32 %v507, %v544
      %v577 = vadd.f32 %v508, %v545
      %v578 = vadd.f32 %v509, %v546
      %v579 = vadd.f32 %v510, %v547
      %v580 = vadd.f32 %v511, %v548
      %v581 = vadd.f32 %v512, %v549
      %v582 = vadd.f32 %v513, %v550
      %v583 = vadd.f32 %v514, %v551
      %v584 = vadd.f32 %v515, %v552
      %v585 = vadd.f32 %v516, %v553
      %v586 = vadd.f32 %v517, %v554
      %v587 = vadd.f32 %v518, %v555
      %v588 = vadd.f32 %v519, %v556
      %v589 = vadd.f32 %v520, %v557
      %v590 = vadd.f32 %v521, %v558
      %v591 = vadd.f32 %v522, %v559
      %v592 = vadd.f32 %v523, %v560
      %v593 = vadd.f32 %v524, %v561
      %v594 = vadd.f32 %v525, %v562
      %v595 = vadd.f32 %v526, %v563
      %v596 = vadd.f32 %v527, %v564
      %v597 = vadd.f32 %v528, %v565
      %v598 = vadd.f32 %v529, %v566
      %v599 = vadd.f32 %v530, %v567
      %v600 = vadd.f32 %v531, %v568
      %v601 = vadd.f32 %v532, %v569
      %v602 = vadd.f32 %v533, %v570
      %v603 = vld [vmem:[%s299 + $0x6] sm:$0x1]
      %v604 = vlaneseq
      %v605 = vshrl.u32 %v604, 7
      %v606 = vsub.s32 0, %v605
      %v607 = vrot.slane %v603, %v606
      %v608 = vmul.f32 %v465, %v607
      %v609 = vmul.f32 %v466, %v607
      %v610 = vmul.f32 %v467, %v607
      %v611 = vmul.f32 %v468, %v607
      %v612 = vmul.f32 %v469, %v607
      %v613 = vmul.f32 %v470, %v607
      %v614 = vmul.f32 %v471, %v607
      %v615 = vmul.f32 %v472, %v607
      %v616 = vmul.f32 %v473, %v607
      %v617 = vmul.f32 %v474, %v607
      %v618 = vmul.f32 %v475, %v607
      %v619 = vmul.f32 %v476, %v607
      %v620 = vmul.f32 %v477, %v607
      %v621 = vmul.f32 %v478, %v607
      %v622 = vmul.f32 %v479, %v607
      %v623 = vmul.f32 %v480, %v607
      %v624 = vmul.f32 %v481, %v607
      %v625 = vmul.f32 %v482, %v607
      %v626 = vmul.f32 %v483, %v607
      %v627 = vmul.f32 %v484, %v607
      %v628 = vmul.f32 %v485, %v607
      %v629 = vmul.f32 %v486, %v607
      %v630 = vmul.f32 %v487, %v607
      %v631 = vmul.f32 %v488, %v607
      %v632 = vmul.f32 %v489, %v607
      %v633 = vmul.f32 %v490, %v607
      %v634 = vmul.f32 %v491, %v607
      %v635 = vmul.f32 %v492, %v607
      %v636 = vmul.f32 %v493, %v607
      %v637 = vmul.f32 %v494, %v607
      %v638 = vmul.f32 %v495, %v607
      %v639 = vmul.f32 %v496, %v607
      %v640 = vadd.f32 %v571, %v608
      %v641 = vadd.f32 %v572, %v609
      %v642 = vadd.f32 %v573, %v610
      %v643 = vadd.f32 %v574, %v611
      %v644 = vadd.f32 %v575, %v612
      %v645 = vadd.f32 %v576, %v613
      %v646 = vadd.f32 %v577, %v614
      %v647 = vadd.f32 %v578, %v615
      %v648 = vadd.f32 %v579, %v616
      %v649 = vadd.f32 %v580, %v617
      %v650 = vadd.f32 %v581, %v618
      %v651 = vadd.f32 %v582, %v619
      %v652 = vadd.f32 %v583, %v620
      %v653 = vadd.f32 %v584, %v621
      %v654 = vadd.f32 %v585, %v622
      %v655 = vadd.f32 %v586, %v623
      %v656 = vadd.f32 %v587, %v624
      %v657 = vadd.f32 %v588, %v625
      %v658 = vadd.f32 %v589, %v626
      %v659 = vadd.f32 %v590, %v627
      %v660 = vadd.f32 %v591, %v628
      %v661 = vadd.f32 %v592, %v629
      %v662 = vadd.f32 %v593, %v630
      %v663 = vadd.f32 %v594, %v631
      %v664 = vadd.f32 %v595, %v632
      %v665 = vadd.f32 %v596, %v633
      %v666 = vadd.f32 %v597, %v634
      %v667 = vadd.f32 %v598, %v635
      %v668 = vadd.f32 %v599, %v636
      %v669 = vadd.f32 %v600, %v637
      %v670 = vadd.f32 %v601, %v638
      %v671 = vadd.f32 %v602, %v639
      %v672 = vld [vmem:[#allocation2 + $0x1] sm:$0xff]
      %v673 = vld [vmem:[#allocation2 + $0x9] sm:$0xff]
      %v674 = vld [vmem:[#allocation2 + $0x19] sm:$0xff]
      %v675 = vld [vmem:[#allocation2 + $0x21] sm:$0xff]
      %v676 = vld [vmem:[#allocation2 + $0x31] sm:$0xff]
      %v677 = vld [vmem:[#allocation2 + $0x39] sm:$0xff]
      %v678 = vld [vmem:[#allocation2 + $0x49] sm:$0xff]
      %v679 = vld [vmem:[#allocation2 + $0x51] sm:$0xff]
      %v680 = vld [vmem:[#allocation2 + $0x61] sm:$0xff]
      %v681 = vld [vmem:[#allocation2 + $0x69] sm:$0xff]
      %v682 = vld [vmem:[#allocation2 + $0x79] sm:$0xff]
      %v683 = vld [vmem:[#allocation2 + $0x81] sm:$0xff]
      %v684 = vld [vmem:[#allocation2 + $0x91] sm:$0xff]
      %v685 = vld [vmem:[#allocation2 + $0x99] sm:$0xff]
      %v686 = vld [vmem:[#allocation2 + $0xa9] sm:$0xff]
      %v687 = vld [vmem:[#allocation2 + $0xb1] sm:$0xff]
      %v688 = vld [vmem:[#allocation2 + $0xc1] sm:$0xff]
      %v689 = vld [vmem:[#allocation2 + $0xc9] sm:$0xff]
      %v690 = vld [vmem:[#allocation2 + $0xd9] sm:$0xff]
      %v691 = vld [vmem:[#allocation2 + $0xe1] sm:$0xff]
      %v692 = vld [vmem:[#allocation2 + $0xf1] sm:$0xff]
      %v693 = vld [vmem:[#allocation2 + $0xf9] sm:$0xff]
      %v694 = vld [vmem:[#allocation2 + $0x109] sm:$0xff]
      %v695 = vld [vmem:[#allocation2 + $0x111] sm:$0xff]
      %v696 = vld [vmem:[#allocation2 + $0x121] sm:$0xff]
      %v697 = vld [vmem:[#allocation2 + $0x129] sm:$0xff]
      %v698 = vld [vmem:[#allocation2 + $0x139] sm:$0xff]
      %v699 = vld [vmem:[#allocation2 + $0x141] sm:$0xff]
      %v700 = vld [vmem:[#allocation2 + $0x151] sm:$0xff]
      %v701 = vld [vmem:[#allocation2 + $0x159] sm:$0xff]
      %v702 = vld [vmem:[#allocation2 + $0x169] sm:$0xff]
      %v703 = vld [vmem:[#allocation2 + $0x171] sm:$0xff]
      %v704 = vld [vmem:[#allocation2 + $0x181] sm:$0xff]
      %v705 = vld [vmem:[#allocation2 + $0x189] sm:$0xff]
      %v706 = vld [vmem:[#allocation2 + $0x199] sm:$0xff]
      %v707 = vld [vmem:[#allocation2 + $0x1a1] sm:$0xff]
      %v708 = vld [vmem:[%s299 + $0x1] sm:$0x1]
      %v709 = vlaneseq
      %v710 = vshrl.u32 %v709, 7
      %v711 = vsub.s32 0, %v710
      %v712 = vrot.slane %v708, %v711
      %v713 = vmul.f32 %v672, %v712
      %v714 = vmul.f32 %v673, %v712
      %v715 = vmul.f32 %v674, %v712
      %v716 = vmul.f32 %v675, %v712
      %v717 = vmul.f32 %v676, %v712
      %v718 = vmul.f32 %v677, %v712
      %v719 = vmul.f32 %v678, %v712
      %v720 = vmul.f32 %v679, %v712
      %v721 = vmul.f32 %v680, %v712
      %v722 = vmul.f32 %v681, %v712
      %v723 = vmul.f32 %v682, %v712
      %v724 = vmul.f32 %v683, %v712
      %v725 = vmul.f32 %v684, %v712
      %v726 = vmul.f32 %v685, %v712
      %v727 = vmul.f32 %v686, %v712
      %v728 = vmul.f32 %v687, %v712
      %v729 = vmul.f32 %v688, %v712
      %v730 = vmul.f32 %v689, %v712
      %v731 = vmul.f32 %v690, %v712
      %v732 = vmul.f32 %v691, %v712
      %v733 = vmul.f32 %v692, %v712
      %v734 = vmul.f32 %v693, %v712
      %v735 = vmul.f32 %v694, %v712
      %v736 = vmul.f32 %v695, %v712
      %v737 = vmul.f32 %v696, %v712
      %v738 = vmul.f32 %v697, %v712
      %v739 = vmul.f32 %v698, %v712
      %v740 = vmul.f32 %v699, %v712
      %v741 = vmul.f32 %v700, %v712
      %v742 = vmul.f32 %v701, %v712
      %v743 = vmul.f32 %v702, %v712
      %v744 = vmul.f32 %v703, %v712
      %v745 = vadd.f32 %v640, %v713
      %v746 = vadd.f32 %v641, %v714
      %v747 = vadd.f32 %v642, %v715
      %v748 = vadd.f32 %v643, %v716
      %v749 = vadd.f32 %v644, %v717
      %v750 = vadd.f32 %v645, %v718
      %v751 = vadd.f32 %v646, %v719
      %v752 = vadd.f32 %v647, %v720
      %v753 = vadd.f32 %v648, %v721
      %v754 = vadd.f32 %v649, %v722
      %v755 = vadd.f32 %v650, %v723
      %v756 = vadd.f32 %v651, %v724
      %v757 = vadd.f32 %v652, %v725
      %v758 = vadd.f32 %v653, %v726
      %v759 = vadd.f32 %v654, %v727
      %v760 = vadd.f32 %v655, %v728
      %v761 = vadd.f32 %v656, %v729
      %v762 = vadd.f32 %v657, %v730
      %v763 = vadd.f32 %v658, %v731
      %v764 = vadd.f32 %v659, %v732
      %v765 = vadd.f32 %v660, %v733
      %v766 = vadd.f32 %v661, %v734
      %v767 = vadd.f32 %v662, %v735
      %v768 = vadd.f32 %v663, %v736
      %v769 = vadd.f32 %v664, %v737
      %v770 = vadd.f32 %v665, %v738
      %v771 = vadd.f32 %v666, %v739
      %v772 = vadd.f32 %v667, %v740
      %v773 = vadd.f32 %v668, %v741
      %v774 = vadd.f32 %v669, %v742
      %v775 = vadd.f32 %v670, %v743
      %v776 = vadd.f32 %v671, %v744
      %v777 = vld [vmem:[%s299 + $0x4] sm:$0x1]
      %v778 = vlaneseq
      %v779 = vshrl.u32 %v778, 7
      %v780 = vsub.s32 0, %v779
      %v781 = vrot.slane %v777, %v780
      %v782 = vmul.f32 %v674, %v781
      %v783 = vmul.f32 %v675, %v781
      %v784 = vmul.f32 %v676, %v781
      %v785 = vmul.f32 %v677, %v781
      %v786 = vmul.f32 %v678, %v781
      %v787 = vmul.f32 %v679, %v781
      %v788 = vmul.f32 %v680, %v781
      %v789 = vmul.f32 %v681, %v781
      %v790 = vmul.f32 %v682, %v781
      %v791 = vmul.f32 %v683, %v781
      %v792 = vmul.f32 %v684, %v781
      %v793 = vmul.f32 %v685, %v781
      %v794 = vmul.f32 %v686, %v781
      %v795 = vmul.f32 %v687, %v781
      %v796 = vmul.f32 %v688, %v781
      %v797 = vmul.f32 %v689, %v781
      %v798 = vmul.f32 %v690, %v781
      %v799 = vmul.f32 %v691, %v781
      %v800 = vmul.f32 %v692, %v781
      %v801 = vmul.f32 %v693, %v781
      %v802 = vmul.f32 %v694, %v781
      %v803 = vmul.f32 %v695, %v781
      %v804 = vmul.f32 %v696, %v781
      %v805 = vmul.f32 %v697, %v781
      %v806 = vmul.f32 %v698, %v781
      %v807 = vmul.f32 %v699, %v781
      %v808 = vmul.f32 %v700, %v781
      %v809 = vmul.f32 %v701, %v781
      %v810 = vmul.f32 %v702, %v781
      %v811 = vmul.f32 %v703, %v781
      %v812 = vmul.f32 %v704, %v781
      %v813 = vmul.f32 %v705, %v781
      %v814 = vadd.f32 %v745, %v782
      %v815 = vadd.f32 %v746, %v783
      %v816 = vadd.f32 %v747, %v784
      %v817 = vadd.f32 %v748, %v785
      %v818 = vadd.f32 %v749, %v786
      %v819 = vadd.f32 %v750, %v787
      %v820 = vadd.f32 %v751, %v788
      %v821 = vadd.f32 %v752, %v789
      %v822 = vadd.f32 %v753, %v790
      %v823 = vadd.f32 %v754, %v791
      %v824 = vadd.f32 %v755, %v792
      %v825 = vadd.f32 %v756, %v793
      %v826 = vadd.f32 %v757, %v794
      %v827 = vadd.f32 %v758, %v795
      %v828 = vadd.f32 %v759, %v796
      %v829 = vadd.f32 %v760, %v797
      %v830 = vadd.f32 %v761, %v798
      %v831 = vadd.f32 %v762, %v799
      %v832 = vadd.f32 %v763, %v800
      %v833 = vadd.f32 %v764, %v801
      %v834 = vadd.f32 %v765, %v802
      %v835 = vadd.f32 %v766, %v803
      %v836 = vadd.f32 %v767, %v804
      %v837 = vadd.f32 %v768, %v805
      %v838 = vadd.f32 %v769, %v806
      %v839 = vadd.f32 %v770, %v807
      %v840 = vadd.f32 %v771, %v808
      %v841 = vadd.f32 %v772, %v809
      %v842 = vadd.f32 %v773, %v810
      %v843 = vadd.f32 %v774, %v811
      %v844 = vadd.f32 %v775, %v812
      %v845 = vadd.f32 %v776, %v813
      %v846 = vld [vmem:[%s299 + $0x7] sm:$0x1]
      %v847 = vlaneseq
      %v848 = vshrl.u32 %v847, 7
      %v849 = vsub.s32 0, %v848
      %v850 = vrot.slane %v846, %v849
      %v851 = vmul.f32 %v676, %v850
      %v852 = vmul.f32 %v677, %v850
      %v853 = vmul.f32 %v678, %v850
      %v854 = vmul.f32 %v679, %v850
      %v855 = vmul.f32 %v680, %v850
      %v856 = vmul.f32 %v681, %v850
      %v857 = vmul.f32 %v682, %v850
      %v858 = vmul.f32 %v683, %v850
      %v859 = vmul.f32 %v684, %v850
      %v860 = vmul.f32 %v685, %v850
      %v861 = vmul.f32 %v686, %v850
      %v862 = vmul.f32 %v687, %v850
      %v863 = vmul.f32 %v688, %v850
      %v864 = vmul.f32 %v689, %v850
      %v865 = vmul.f32 %v690, %v850
      %v866 = vmul.f32 %v691, %v850
      %v867 = vmul.f32 %v692, %v850
      %v868 = vmul.f32 %v693, %v850
      %v869 = vmul.f32 %v694, %v850
      %v870 = vmul.f32 %v695, %v850
      %v871 = vmul.f32 %v696, %v850
      %v872 = vmul.f32 %v697, %v850
      %v873 = vmul.f32 %v698, %v850
      %v874 = vmul.f32 %v699, %v850
      %v875 = vmul.f32 %v700, %v850
      %v876 = vmul.f32 %v701, %v850
      %v877 = vmul.f32 %v702, %v850
      %v878 = vmul.f32 %v703, %v850
      %v879 = vmul.f32 %v704, %v850
      %v880 = vmul.f32 %v705, %v850
      %v881 = vmul.f32 %v706, %v850
      %v882 = vmul.f32 %v707, %v850
      %v883 = vadd.f32 %v814, %v851
      %v884 = vadd.f32 %v815, %v852
      %v885 = vadd.f32 %v816, %v853
      %v886 = vadd.f32 %v817, %v854
      %v887 = vadd.f32 %v818, %v855
      %v888 = vadd.f32 %v819, %v856
      %v889 = vadd.f32 %v820, %v857
      %v890 = vadd.f32 %v821, %v858
      %v891 = vadd.f32 %v822, %v859
      %v892 = vadd.f32 %v823, %v860
      %v893 = vadd.f32 %v824, %v861
      %v894 = vadd.f32 %v825, %v862
      %v895 = vadd.f32 %v826, %v863
      %v896 = vadd.f32 %v827, %v864
      %v897 = vadd.f32 %v828, %v865
      %v898 = vadd.f32 %v829, %v866
      %v899 = vadd.f32 %v830, %v867
      %v900 = vadd.f32 %v831, %v868
      %v901 = vadd.f32 %v832, %v869
      %v902 = vadd.f32 %v833, %v870
      %v903 = vadd.f32 %v834, %v871
      %v904 = vadd.f32 %v835, %v872
      %v905 = vadd.f32 %v836, %v873
      %v906 = vadd.f32 %v837, %v874
      %v907 = vadd.f32 %v838, %v875
      %v908 = vadd.f32 %v839, %v876
      %v909 = vadd.f32 %v840, %v877
      %v910 = vadd.f32 %v841, %v878
      %v911 = vadd.f32 %v842, %v879
      %v912 = vadd.f32 %v843, %v880
      %v913 = vadd.f32 %v844, %v881
      %v914 = vadd.f32 %v845, %v882
      %v915 = vld [vmem:[#allocation2 + $0x2] sm:$0xff]
      %v916 = vld [vmem:[#allocation2 + $0xa] sm:$0xff]
      %v917 = vld [vmem:[#allocation2 + $0x1a] sm:$0xff]
      %v918 = vld [vmem:[#allocation2 + $0x22] sm:$0xff]
      %v919 = vld [vmem:[#allocation2 + $0x32] sm:$0xff]
      %v920 = vld [vmem:[#allocation2 + $0x3a] sm:$0xff]
      %v921 = vld [vmem:[#allocation2 + $0x4a] sm:$0xff]
      %v922 = vld [vmem:[#allocation2 + $0x52] sm:$0xff]
      %v923 = vld [vmem:[#allocation2 + $0x62] sm:$0xff]
      %v924 = vld [vmem:[#allocation2 + $0x6a] sm:$0xff]
      %v925 = vld [vmem:[#allocation2 + $0x7a] sm:$0xff]
      %v926 = vld [vmem:[#allocation2 + $0x82] sm:$0xff]
      %v927 = vld [vmem:[#allocation2 + $0x92] sm:$0xff]
      %v928 = vld [vmem:[#allocation2 + $0x9a] sm:$0xff]
      %v929 = vld [vmem:[#allocation2 + $0xaa] sm:$0xff]
      %v930 = vld [vmem:[#allocation2 + $0xb2] sm:$0xff]
      %v931 = vld [vmem:[#allocation2 + $0xc2] sm:$0xff]
      %v932 = vld [vmem:[#allocation2 + $0xca] sm:$0xff]
      %v933 = vld [vmem:[#allocation2 + $0xda] sm:$0xff]
      %v934 = vld [vmem:[#allocation2 + $0xe2] sm:$0xff]
      %v935 = vld [vmem:[#allocation2 + $0xf2] sm:$0xff]
      %v936 = vld [vmem:[#allocation2 + $0xfa] sm:$0xff]
      %v937 = vld [vmem:[#allocation2 + $0x10a] sm:$0xff]
      %v938 = vld [vmem:[#allocation2 + $0x112] sm:$0xff]
      %v939 = vld [vmem:[#allocation2 + $0x122] sm:$0xff]
      %v940 = vld [vmem:[#allocation2 + $0x12a] sm:$0xff]
      %v941 = vld [vmem:[#allocation2 + $0x13a] sm:$0xff]
      %v942 = vld [vmem:[#allocation2 + $0x142] sm:$0xff]
      %v943 = vld [vmem:[#allocation2 + $0x152] sm:$0xff]
      %v944 = vld [vmem:[#allocation2 + $0x15a] sm:$0xff]
      %v945 = vld [vmem:[#allocation2 + $0x16a] sm:$0xff]
      %v946 = vld [vmem:[#allocation2 + $0x172] sm:$0xff]
      %v947 = vld [vmem:[#allocation2 + $0x182] sm:$0xff]
      %v948 = vld [vmem:[#allocation2 + $0x18a] sm:$0xff]
      %v949 = vld [vmem:[#allocation2 + $0x19a] sm:$0xff]
      %v950 = vld [vmem:[#allocation2 + $0x1a2] sm:$0xff]
      %v951 = vld [vmem:[%s299 + $0x2] sm:$0x1]
      %v952 = vlaneseq
      %v953 = vshrl.u32 %v952, 7
      %v954 = vsub.s32 0, %v953
      %v955 = vrot.slane %v951, %v954
      %v956 = vmul.f32 %v915, %v955
      %v957 = vmul.f32 %v916, %v955
      %v958 = vmul.f32 %v917, %v955
      %v959 = vmul.f32 %v918, %v955
      %v960 = vmul.f32 %v919, %v955
      %v961 = vmul.f32 %v920, %v955
      %v962 = vmul.f32 %v921, %v955
      %v963 = vmul.f32 %v922, %v955
      %v964 = vmul.f32 %v923, %v955
      %v965 = vmul.f32 %v924, %v955
      %v966 = vmul.f32 %v925, %v955
      %v967 = vmul.f32 %v926, %v955
      %v968 = vmul.f32 %v927, %v955
      %v969 = vmul.f32 %v928, %v955
      %v970 = vmul.f32 %v929, %v955
      %v971 = vmul.f32 %v930, %v955
      %v972 = vmul.f32 %v931, %v955
      %v973 = vmul.f32 %v932, %v955
      %v974 = vmul.f32 %v933, %v955
      %v975 = vmul.f32 %v934, %v955
      %v976 = vmul.f32 %v935, %v955
      %v977 = vmul.f32 %v936, %v955
      %v978 = vmul.f32 %v937, %v955
      %v979 = vmul.f32 %v938, %v955
      %v980 = vmul.f32 %v939, %v955
      %v981 = vmul.f32 %v940, %v955
      %v982 = vmul.f32 %v941, %v955
      %v983 = vmul.f32 %v942, %v955
      %v984 = vmul.f32 %v943, %v955
      %v985 = vmul.f32 %v944, %v955
      %v986 = vmul.f32 %v945, %v955
      %v987 = vmul.f32 %v946, %v955
      %v988 = vadd.f32 %v883, %v956
      %v989 = vadd.f32 %v884, %v957
      %v990 = vadd.f32 %v885, %v958
      %v991 = vadd.f32 %v886, %v959
      %v992 = vadd.f32 %v887, %v960
      %v993 = vadd.f32 %v888, %v961
      %v994 = vadd.f32 %v889, %v962
      %v995 = vadd.f32 %v890, %v963
      %v996 = vadd.f32 %v891, %v964
      %v997 = vadd.f32 %v892, %v965
      %v998 = vadd.f32 %v893, %v966
      %v999 = vadd.f32 %v894, %v967
      %v1000 = vadd.f32 %v895, %v968
      %v1001 = vadd.f32 %v896, %v969
      %v1002 = vadd.f32 %v897, %v970
      %v1003 = vadd.f32 %v898, %v971
      %v1004 = vadd.f32 %v899, %v972
      %v1005 = vadd.f32 %v900, %v973
      %v1006 = vadd.f32 %v901, %v974
      %v1007 = vadd.f32 %v902, %v975
      %v1008 = vadd.f32 %v903, %v976
      %v1009 = vadd.f32 %v904, %v977
      %v1010 = vadd.f32 %v905, %v978
      %v1011 = vadd.f32 %v906, %v979
      %v1012 = vadd.f32 %v907, %v980
      %v1013 = vadd.f32 %v908, %v981
      %v1014 = vadd.f32 %v909, %v982
      %v1015 = vadd.f32 %v910, %v983
      %v1016 = vadd.f32 %v911, %v984
      %v1017 = vadd.f32 %v912, %v985
      %v1018 = vadd.f32 %v913, %v986
      %v1019 = vadd.f32 %v914, %v987
      %v1020 = vld [vmem:[%s299 + $0x5] sm:$0x1]
      %v1021 = vlaneseq
      %v1022 = vshrl.u32 %v1021, 7
      %v1023 = vsub.s32 0, %v1022
      %v1024 = vrot.slane %v1020, %v1023
      %v1025 = vmul.f32 %v917, %v1024
      %v1026 = vmul.f32 %v918, %v1024
      %v1027 = vmul.f32 %v919, %v1024
      %v1028 = vmul.f32 %v920, %v1024
      %v1029 = vmul.f32 %v921, %v1024
      %v1030 = vmul.f32 %v922, %v1024
      %v1031 = vmul.f32 %v923, %v1024
      %v1032 = vmul.f32 %v924, %v1024
      %v1033 = vmul.f32 %v925, %v1024
      %v1034 = vmul.f32 %v926, %v1024
      %v1035 = vmul.f32 %v927, %v1024
      %v1036 = vmul.f32 %v928, %v1024
      %v1037 = vmul.f32 %v929, %v1024
      %v1038 = vmul.f32 %v930, %v1024
      %v1039 = vmul.f32 %v931, %v1024
      %v1040 = vmul.f32 %v932, %v1024
      %v1041 = vmul.f32 %v933, %v1024
      %v1042 = vmul.f32 %v934, %v1024
      %v1043 = vmul.f32 %v935, %v1024
      %v1044 = vmul.f32 %v936, %v1024
      %v1045 = vmul.f32 %v937, %v1024
      %v1046 = vmul.f32 %v938, %v1024
      %v1047 = vmul.f32 %v939, %v1024
      %v1048 = vmul.f32 %v940, %v1024
      %v1049 = vmul.f32 %v941, %v1024
      %v1050 = vmul.f32 %v942, %v1024
      %v1051 = vmul.f32 %v943, %v1024
      %v1052 = vmul.f32 %v944, %v1024
      %v1053 = vmul.f32 %v945, %v1024
      %v1054 = vmul.f32 %v946, %v1024
      %v1055 = vmul.f32 %v947, %v1024
      %v1056 = vmul.f32 %v948, %v1024
      %v1057 = vadd.f32 %v988, %v1025
      %v1058 = vadd.f32 %v989, %v1026
      %v1059 = vadd.f32 %v990, %v1027
      %v1060 = vadd.f32 %v991, %v1028
      %v1061 = vadd.f32 %v992, %v1029
      %v1062 = vadd.f32 %v993, %v1030
      %v1063 = vadd.f32 %v994, %v1031
      %v1064 = vadd.f32 %v995, %v1032
      %v1065 = vadd.f32 %v996, %v1033
      %v1066 = vadd.f32 %v997, %v1034
      %v1067 = vadd.f32 %v998, %v1035
      %v1068 = vadd.f32 %v999, %v1036
      %v1069 = vadd.f32 %v1000, %v1037
      %v1070 = vadd.f32 %v1001, %v1038
      %v1071 = vadd.f32 %v1002, %v1039
      %v1072 = vadd.f32 %v1003, %v1040
      %v1073 = vadd.f32 %v1004, %v1041
      %v1074 = vadd.f32 %v1005, %v1042
      %v1075 = vadd.f32 %v1006, %v1043
      %v1076 = vadd.f32 %v1007, %v1044
      %v1077 = vadd.f32 %v1008, %v1045
      %v1078 = vadd.f32 %v1009, %v1046
      %v1079 = vadd.f32 %v1010, %v1047
      %v1080 = vadd.f32 %v1011, %v1048
      %v1081 = vadd.f32 %v1012, %v1049
      %v1082 = vadd.f32 %v1013, %v1050
      %v1083 = vadd.f32 %v1014, %v1051
      %v1084 = vadd.f32 %v1015, %v1052
      %v1085 = vadd.f32 %v1016, %v1053
      %v1086 = vadd.f32 %v1017, %v1054
      %v1087 = vadd.f32 %v1018, %v1055
      %v1088 = vadd.f32 %v1019, %v1056
      %v1089 = vld [vmem:[%s299 + $0x8] sm:$0x1]
      %v1090 = vlaneseq
      %v1091 = vshrl.u32 %v1090, 7
      %v1092 = vsub.s32 0, %v1091
      %v1093 = vrot.slane %v1089, %v1092
      %v1094 = vmul.f32 %v919, %v1093
      %v1095 = vmul.f32 %v920, %v1093
      %v1096 = vmul.f32 %v921, %v1093
      %v1097 = vmul.f32 %v922, %v1093
      %v1098 = vmul.f32 %v923, %v1093
      %v1099 = vmul.f32 %v924, %v1093
      %v1100 = vmul.f32 %v925, %v1093
      %v1101 = vmul.f32 %v926, %v1093
      %v1102 = vmul.f32 %v927, %v1093
      %v1103 = vmul.f32 %v928, %v1093
      %v1104 = vmul.f32 %v929, %v1093
      %v1105 = vmul.f32 %v930, %v1093
      %v1106 = vmul.f32 %v931, %v1093
      %v1107 = vmul.f32 %v932, %v1093
      %v1108 = vmul.f32 %v933, %v1093
      %v1109 = vmul.f32 %v934, %v1093
      %v1110 = vmul.f32 %v935, %v1093
      %v1111 = vmul.f32 %v936, %v1093
      %v1112 = vmul.f32 %v937, %v1093
      %v1113 = vmul.f32 %v938, %v1093
      %v1114 = vmul.f32 %v939, %v1093
      %v1115 = vmul.f32 %v940, %v1093
      %v1116 = vmul.f32 %v941, %v1093
      %v1117 = vmul.f32 %v942, %v1093
      %v1118 = vmul.f32 %v943, %v1093
      %v1119 = vmul.f32 %v944, %v1093
      %v1120 = vmul.f32 %v945, %v1093
      %v1121 = vmul.f32 %v946, %v1093
      %v1122 = vmul.f32 %v947, %v1093
      %v1123 = vmul.f32 %v948, %v1093
      %v1124 = vmul.f32 %v949, %v1093
      %v1125 = vmul.f32 %v950, %v1093
      %v1126 = vadd.f32 %v1057, %v1094
      %v1127 = vadd.f32 %v1058, %v1095
      %v1128 = vadd.f32 %v1059, %v1096
      %v1129 = vadd.f32 %v1060, %v1097
      %v1130 = vadd.f32 %v1061, %v1098
      %v1131 = vadd.f32 %v1062, %v1099
      %v1132 = vadd.f32 %v1063, %v1100
      %v1133 = vadd.f32 %v1064, %v1101
      %v1134 = vadd.f32 %v1065, %v1102
      %v1135 = vadd.f32 %v1066, %v1103
      %v1136 = vadd.f32 %v1067, %v1104
      %v1137 = vadd.f32 %v1068, %v1105
      %v1138 = vadd.f32 %v1069, %v1106
      %v1139 = vadd.f32 %v1070, %v1107
      %v1140 = vadd.f32 %v1071, %v1108
      %v1141 = vadd.f32 %v1072, %v1109
      %v1142 = vadd.f32 %v1073, %v1110
      %v1143 = vadd.f32 %v1074, %v1111
      %v1144 = vadd.f32 %v1075, %v1112
      %v1145 = vadd.f32 %v1076, %v1113
      %v1146 = vadd.f32 %v1077, %v1114
      %v1147 = vadd.f32 %v1078, %v1115
      %v1148 = vadd.f32 %v1079, %v1116
      %v1149 = vadd.f32 %v1080, %v1117
      %v1150 = vadd.f32 %v1081, %v1118
      %v1151 = vadd.f32 %v1082, %v1119
      %v1152 = vadd.f32 %v1083, %v1120
      %v1153 = vadd.f32 %v1084, %v1121
      %v1154 = vadd.f32 %v1085, %v1122
      %v1155 = vadd.f32 %v1086, %v1123
      %v1156 = vadd.f32 %v1087, %v1124
      %v1157 = vadd.f32 %v1088, %v1125
      %v1158 = vld [vmem:[%s302] sm:$0x1]
      %v1160 = vlaneseq
      %v1161 = vshrl.u32 %v1160, 7
      %v1162 = vsub.s32 0, %v1161
      %v1163 = vrot.slane %v1158, %v1162
      %v1165 = vadd.f32 %v1126, %v1163
      %v1166 = vadd.f32 %v1127, %v1163
      %v1167 = vadd.f32 %v1128, %v1163
      %v1168 = vadd.f32 %v1129, %v1163
      %v1169 = vadd.f32 %v1130, %v1163
      %v1170 = vadd.f32 %v1131, %v1163
      %v1171 = vadd.f32 %v1132, %v1163
      %v1172 = vadd.f32 %v1133, %v1163
      %v1173 = vadd.f32 %v1134, %v1163
      %v1174 = vadd.f32 %v1135, %v1163
      %v1175 = vadd.f32 %v1136, %v1163
      %v1176 = vadd.f32 %v1137, %v1163
      %v1177 = vadd.f32 %v1138, %v1163
      %v1178 = vadd.f32 %v1139, %v1163
      %v1179 = vadd.f32 %v1140, %v1163
      %v1180 = vadd.f32 %v1141, %v1163
      %v1181 = vadd.f32 %v1142, %v1163
      %v1182 = vadd.f32 %v1143, %v1163
      %v1183 = vadd.f32 %v1144, %v1163
      %v1184 = vadd.f32 %v1145, %v1163
      %v1185 = vadd.f32 %v1146, %v1163
      %v1186 = vadd.f32 %v1147, %v1163
      %v1187 = vadd.f32 %v1148, %v1163
      %v1188 = vadd.f32 %v1149, %v1163
      %v1189 = vadd.f32 %v1150, %v1163
      %v1190 = vadd.f32 %v1151, %v1163
      %v1191 = vadd.f32 %v1152, %v1163
      %v1192 = vadd.f32 %v1153, %v1163
      %v1193 = vadd.f32 %v1154, %v1163
      %v1194 = vadd.f32 %v1155, %v1163
      %v1195 = vadd.f32 %v1156, %v1163
      %v1196 = vadd.f32 %v1157, %v1163
      %1197 = vst.msk [vmem:[%s428 + $0x1] sm:$0xff] %vm318, %v1165
      %1198 = vst.msk [vmem:[%s428 + $0x9] sm:$0xff] %vm318, %v1166
      %1199 = vst.msk [vmem:[%s428 + $0x19] sm:$0xff] %vm318, %v1167
      %1200 = vst.msk [vmem:[%s428 + $0x21] sm:$0xff] %vm318, %v1168
      %1201 = vst.msk [vmem:[%s428 + $0x31] sm:$0xff] %vm318, %v1169
      %1202 = vst.msk [vmem:[%s428 + $0x39] sm:$0xff] %vm318, %v1170
      %1203 = vst.msk [vmem:[%s428 + $0x49] sm:$0xff] %vm318, %v1171
      %1204 = vst.msk [vmem:[%s428 + $0x51] sm:$0xff] %vm318, %v1172
      %1205 = vst.msk [vmem:[%s428 + $0x61] sm:$0xff] %vm318, %v1173
      %1206 = vst.msk [vmem:[%s428 + $0x69] sm:$0xff] %vm318, %v1174
      %1207 = vst.msk [vmem:[%s428 + $0x79] sm:$0xff] %vm318, %v1175
      %1208 = vst.msk [vmem:[%s428 + $0x81] sm:$0xff] %vm318, %v1176
      %1209 = vst.msk [vmem:[%s428 + $0x91] sm:$0xff] %vm318, %v1177
      %1210 = vst.msk [vmem:[%s428 + $0x99] sm:$0xff] %vm318, %v1178
      %1211 = vst.msk [vmem:[%s428 + $0xa9] sm:$0xff] %vm318, %v1179
      %1212 = vst.msk [vmem:[%s428 + $0xb1] sm:$0xff] %vm318, %v1180
      %1213 = vst.msk [vmem:[%s428 + $0xc1] sm:$0xff] %vm318, %v1181
      %1214 = vst.msk [vmem:[%s428 + $0xc9] sm:$0xff] %vm318, %v1182
      %1215 = vst.msk [vmem:[%s428 + $0xd9] sm:$0xff] %vm318, %v1183
      %1216 = vst.msk [vmem:[%s428 + $0xe1] sm:$0xff] %vm318, %v1184
      %1217 = vst.msk [vmem:[%s428 + $0xf1] sm:$0xff] %vm318, %v1185
      %1218 = vst.msk [vmem:[%s428 + $0xf9] sm:$0xff] %vm318, %v1186
      %1219 = vst.msk [vmem:[%s428 + $0x109] sm:$0xff] %vm318, %v1187
      %1220 = vst.msk [vmem:[%s428 + $0x111] sm:$0xff] %vm318, %v1188
      %1221 = vst.msk [vmem:[%s428 + $0x121] sm:$0xff] %vm318, %v1189
      %1222 = vst.msk [vmem:[%s428 + $0x129] sm:$0xff] %vm318, %v1190
      %1223 = vst.msk [vmem:[%s428 + $0x139] sm:$0xff] %vm318, %v1191
      %1224 = vst.msk [vmem:[%s428 + $0x141] sm:$0xff] %vm318, %v1192
      %1225 = vst.msk [vmem:[%s428 + $0x151] sm:$0xff] %vm318, %v1193
      %1226 = vst.msk [vmem:[%s428 + $0x159] sm:$0xff] %vm318, %v1194
      %1227 = vst.msk [vmem:[%s428 + $0x169] sm:$0xff] %vm318, %v1195
      %1228 = vst.msk [vmem:[%s428 + $0x171] sm:$0xff] %vm318, %v1196
      %v1229 = vld [vmem:[#allocation2] sm:$0xff]
      %v1230 = vld [vmem:[#allocation2 + $0x8] sm:$0xff]
      %v1231 = vld [vmem:[#allocation2 + $0x18] sm:$0xff]
      %v1232 = vld [vmem:[#allocation2 + $0x20] sm:$0xff]
      %v1233 = vld [vmem:[#allocation2 + $0x30] sm:$0xff]
      %v1234 = vld [vmem:[#allocation2 + $0x38] sm:$0xff]
      %v1235 = vld [vmem:[#allocation2 + $0x48] sm:$0xff]
      %v1236 = vld [vmem:[#allocation2 + $0x50] sm:$0xff]
      %v1237 = vld [vmem:[#allocation2 + $0x60] sm:$0xff]
      %v1238 = vld [vmem:[#allocation2 + $0x68] sm:$0xff]
      %v1239 = vld [vmem:[#allocation2 + $0x78] sm:$0xff]
      %v1240 = vld [vmem:[#allocation2 + $0x80] sm:$0xff]
      %v1241 = vld [vmem:[#allocation2 + $0x90] sm:$0xff]
      %v1242 = vld [vmem:[#allocation2 + $0x98] sm:$0xff]
      %v1243 = vld [vmem:[#allocation2 + $0xa8] sm:$0xff]
      %v1244 = vld [vmem:[#allocation2 + $0xb0] sm:$0xff]
      %v1245 = vld [vmem:[#allocation2 + $0xc0] sm:$0xff]
      %v1246 = vld [vmem:[#allocation2 + $0xc8] sm:$0xff]
      %v1247 = vld [vmem:[#allocation2 + $0xd8] sm:$0xff]
      %v1248 = vld [vmem:[#allocation2 + $0xe0] sm:$0xff]
      %v1249 = vld [vmem:[#allocation2 + $0xf0] sm:$0xff]
      %v1250 = vld [vmem:[#allocation2 + $0xf8] sm:$0xff]
      %v1251 = vld [vmem:[#allocation2 + $0x108] sm:$0xff]
      %v1252 = vld [vmem:[#allocation2 + $0x110] sm:$0xff]
      %v1253 = vld [vmem:[#allocation2 + $0x120] sm:$0xff]
      %v1254 = vld [vmem:[#allocation2 + $0x128] sm:$0xff]
      %v1255 = vld [vmem:[#allocation2 + $0x138] sm:$0xff]
      %v1256 = vld [vmem:[#allocation2 + $0x140] sm:$0xff]
      %v1257 = vld [vmem:[#allocation2 + $0x150] sm:$0xff]
      %v1258 = vld [vmem:[#allocation2 + $0x158] sm:$0xff]
      %v1259 = vld [vmem:[#allocation2 + $0x168] sm:$0xff]
      %v1260 = vld [vmem:[#allocation2 + $0x170] sm:$0xff]
      %v1261 = vld [vmem:[#allocation2 + $0x180] sm:$0xff]
      %v1262 = vld [vmem:[#allocation2 + $0x188] sm:$0xff]
      %v1263 = vld [vmem:[#allocation2 + $0x198] sm:$0xff]
      %v1264 = vld [vmem:[#allocation2 + $0x1a0] sm:$0xff]
      %v1265 = vld [vmem:[%s306] sm:$0x1]
      %v1266 = vlaneseq
      %v1267 = vshrl.u32 %v1266, 7
      %v1268 = vsub.s32 0, %v1267
      %v1269 = vrot.slane %v1265, %v1268
      %v1270 = vmul.f32 %v1229, %v1269
      %v1271 = vmul.f32 %v1230, %v1269
      %v1272 = vmul.f32 %v1231, %v1269
      %v1273 = vmul.f32 %v1232, %v1269
      %v1274 = vmul.f32 %v1233, %v1269
      %v1275 = vmul.f32 %v1234, %v1269
      %v1276 = vmul.f32 %v1235, %v1269
      %v1277 = vmul.f32 %v1236, %v1269
      %v1278 = vmul.f32 %v1237, %v1269
      %v1279 = vmul.f32 %v1238, %v1269
      %v1280 = vmul.f32 %v1239, %v1269
      %v1281 = vmul.f32 %v1240, %v1269
      %v1282 = vmul.f32 %v1241, %v1269
      %v1283 = vmul.f32 %v1242, %v1269
      %v1284 = vmul.f32 %v1243, %v1269
      %v1285 = vmul.f32 %v1244, %v1269
      %v1286 = vmul.f32 %v1245, %v1269
      %v1287 = vmul.f32 %v1246, %v1269
      %v1288 = vmul.f32 %v1247, %v1269
      %v1289 = vmul.f32 %v1248, %v1269
      %v1290 = vmul.f32 %v1249, %v1269
      %v1291 = vmul.f32 %v1250, %v1269
      %v1292 = vmul.f32 %v1251, %v1269
      %v1293 = vmul.f32 %v1252, %v1269
      %v1294 = vmul.f32 %v1253, %v1269
      %v1295 = vmul.f32 %v1254, %v1269
      %v1296 = vmul.f32 %v1255, %v1269
      %v1297 = vmul.f32 %v1256, %v1269
      %v1298 = vmul.f32 %v1257, %v1269
      %v1299 = vmul.f32 %v1258, %v1269
      %v1300 = vmul.f32 %v1259, %v1269
      %v1301 = vmul.f32 %v1260, %v1269
      %v1302 = vld [vmem:[%s306 + $0x3] sm:$0x1]
      %v1303 = vlaneseq
      %v1304 = vshrl.u32 %v1303, 7
      %v1305 = vsub.s32 0, %v1304
      %v1306 = vrot.slane %v1302, %v1305
      %v1307 = vmul.f32 %v1231, %v1306
      %v1308 = vmul.f32 %v1232, %v1306
      %v1309 = vmul.f32 %v1233, %v1306
      %v1310 = vmul.f32 %v1234, %v1306
      %v1311 = vmul.f32 %v1235, %v1306
      %v1312 = vmul.f32 %v1236, %v1306
      %v1313 = vmul.f32 %v1237, %v1306
      %v1314 = vmul.f32 %v1238, %v1306
      %v1315 = vmul.f32 %v1239, %v1306
      %v1316 = vmul.f32 %v1240, %v1306
      %v1317 = vmul.f32 %v1241, %v1306
      %v1318 = vmul.f32 %v1242, %v1306
      %v1319 = vmul.f32 %v1243, %v1306
      %v1320 = vmul.f32 %v1244, %v1306
      %v1321 = vmul.f32 %v1245, %v1306
      %v1322 = vmul.f32 %v1246, %v1306
      %v1323 = vmul.f32 %v1247, %v1306
      %v1324 = vmul.f32 %v1248, %v1306
      %v1325 = vmul.f32 %v1249, %v1306
      %v1326 = vmul.f32 %v1250, %v1306
      %v1327 = vmul.f32 %v1251, %v1306
      %v1328 = vmul.f32 %v1252, %v1306
      %v1329 = vmul.f32 %v1253, %v1306
      %v1330 = vmul.f32 %v1254, %v1306
      %v1331 = vmul.f32 %v1255, %v1306
      %v1332 = vmul.f32 %v1256, %v1306
      %v1333 = vmul.f32 %v1257, %v1306
      %v1334 = vmul.f32 %v1258, %v1306
      %v1335 = vmul.f32 %v1259, %v1306
      %v1336 = vmul.f32 %v1260, %v1306
      %v1337 = vmul.f32 %v1261, %v1306
      %v1338 = vmul.f32 %v1262, %v1306
      %v1339 = vadd.f32 %v1270, %v1307
      %v1340 = vadd.f32 %v1271, %v1308
      %v1341 = vadd.f32 %v1272, %v1309
      %v1342 = vadd.f32 %v1273, %v1310
      %v1343 = vadd.f32 %v1274, %v1311
      %v1344 = vadd.f32 %v1275, %v1312
      %v1345 = vadd.f32 %v1276, %v1313
      %v1346 = vadd.f32 %v1277, %v1314
      %v1347 = vadd.f32 %v1278, %v1315
      %v1348 = vadd.f32 %v1279, %v1316
      %v1349 = vadd.f32 %v1280, %v1317
      %v1350 = vadd.f32 %v1281, %v1318
      %v1351 = vadd.f32 %v1282, %v1319
      %v1352 = vadd.f32 %v1283, %v1320
      %v1353 = vadd.f32 %v1284, %v1321
      %v1354 = vadd.f32 %v1285, %v1322
      %v1355 = vadd.f32 %v1286, %v1323
      %v1356 = vadd.f32 %v1287, %v1324
      %v1357 = vadd.f32 %v1288, %v1325
      %v1358 = vadd.f32 %v1289, %v1326
      %v1359 = vadd.f32 %v1290, %v1327
      %v1360 = vadd.f32 %v1291, %v1328
      %v1361 = vadd.f32 %v1292, %v1329
      %v1362 = vadd.f32 %v1293, %v1330
      %v1363 = vadd.f32 %v1294, %v1331
      %v1364 = vadd.f32 %v1295, %v1332
      %v1365 = vadd.f32 %v1296, %v1333
      %v1366 = vadd.f32 %v1297, %v1334
      %v1367 = vadd.f32 %v1298, %v1335
      %v1368 = vadd.f32 %v1299, %v1336
      %v1369 = vadd.f32 %v1300, %v1337
      %v1370 = vadd.f32 %v1301, %v1338
      %v1371 = vld [vmem:[%s306 + $0x6] sm:$0x1]
      %v1372 = vlaneseq
      %v1373 = vshrl.u32 %v1372, 7
      %v1374 = vsub.s32 0, %v1373
      %v1375 = vrot.slane %v1371, %v1374
      %v1376 = vmul.f32 %v1233, %v1375
      %v1377 = vmul.f32 %v1234, %v1375
      %v1378 = vmul.f32 %v1235, %v1375
      %v1379 = vmul.f32 %v1236, %v1375
      %v1380 = vmul.f32 %v1237, %v1375
      %v1381 = vmul.f32 %v1238, %v1375
      %v1382 = vmul.f32 %v1239, %v1375
      %v1383 = vmul.f32 %v1240, %v1375
      %v1384 = vmul.f32 %v1241, %v1375
      %v1385 = vmul.f32 %v1242, %v1375
      %v1386 = vmul.f32 %v1243, %v1375
      %v1387 = vmul.f32 %v1244, %v1375
      %v1388 = vmul.f32 %v1245, %v1375
      %v1389 = vmul.f32 %v1246, %v1375
      %v1390 = vmul.f32 %v1247, %v1375
      %v1391 = vmul.f32 %v1248, %v1375
      %v1392 = vmul.f32 %v1249, %v1375
      %v1393 = vmul.f32 %v1250, %v1375
      %v1394 = vmul.f32 %v1251, %v1375
      %v1395 = vmul.f32 %v1252, %v1375
      %v1396 = vmul.f32 %v1253, %v1375
      %v1397 = vmul.f32 %v1254, %v1375
      %v1398 = vmul.f32 %v1255, %v1375
      %v1399 = vmul.f32 %v1256, %v1375
      %v1400 = vmul.f32 %v1257, %v1375
      %v1401 = vmul.f32 %v1258, %v1375
      %v1402 = vmul.f32 %v1259, %v1375
      %v1403 = vmul.f32 %v1260, %v1375
      %v1404 = vmul.f32 %v1261, %v1375
      %v1405 = vmul.f32 %v1262, %v1375
      %v1406 = vmul.f32 %v1263, %v1375
      %v1407 = vmul.f32 %v1264, %v1375
      %v1408 = vadd.f32 %v1339, %v1376
      %v1409 = vadd.f32 %v1340, %v1377
      %v1410 = vadd.f32 %v1341, %v1378
      %v1411 = vadd.f32 %v1342, %v1379
      %v1412 = vadd.f32 %v1343, %v1380
      %v1413 = vadd.f32 %v1344, %v1381
      %v1414 = vadd.f32 %v1345, %v1382
      %v1415 = vadd.f32 %v1346, %v1383
      %v1416 = vadd.f32 %v1347, %v1384
      %v1417 = vadd.f32 %v1348, %v1385
      %v1418 = vadd.f32 %v1349, %v1386
      %v1419 = vadd.f32 %v1350, %v1387
      %v1420 = vadd.f32 %v1351, %v1388
      %v1421 = vadd.f32 %v1352, %v1389
      %v1422 = vadd.f32 %v1353, %v1390
      %v1423 = vadd.f32 %v1354, %v1391
      %v1424 = vadd.f32 %v1355, %v1392
      %v1425 = vadd.f32 %v1356, %v1393
      %v1426 = vadd.f32 %v1357, %v1394
      %v1427 = vadd.f32 %v1358, %v1395
      %v1428 = vadd.f32 %v1359, %v1396
      %v1429 = vadd.f32 %v1360, %v1397
      %v1430 = vadd.f32 %v1361, %v1398
      %v1431 = vadd.f32 %v1362, %v1399
      %v1432 = vadd.f32 %v1363, %v1400
      %v1433 = vadd.f32 %v1364, %v1401
      %v1434 = vadd.f32 %v1365, %v1402
      %v1435 = vadd.f32 %v1366, %v1403
      %v1436 = vadd.f32 %v1367, %v1404
      %v1437 = vadd.f32 %v1368, %v1405
      %v1438 = vadd.f32 %v1369, %v1406
      %v1439 = vadd.f32 %v1370, %v1407
      %v1440 = vld [vmem:[#allocation2 + $0x1] sm:$0xff]
      %v1441 = vld [vmem:[#allocation2 + $0x9] sm:$0xff]
      %v1442 = vld [vmem:[#allocation2 + $0x19] sm:$0xff]
      %v1443 = vld [vmem:[#allocation2 + $0x21] sm:$0xff]
      %v1444 = vld [vmem:[#allocation2 + $0x31] sm:$0xff]
      %v1445 = vld [vmem:[#allocation2 + $0x39] sm:$0xff]
      %v1446 = vld [vmem:[#allocation2 + $0x49] sm:$0xff]
      %v1447 = vld [vmem:[#allocation2 + $0x51] sm:$0xff]
      %v1448 = vld [vmem:[#allocation2 + $0x61] sm:$0xff]
      %v1449 = vld [vmem:[#allocation2 + $0x69] sm:$0xff]
      %v1450 = vld [vmem:[#allocation2 + $0x79] sm:$0xff]
      %v1451 = vld [vmem:[#allocation2 + $0x81] sm:$0xff]
      %v1452 = vld [vmem:[#allocation2 + $0x91] sm:$0xff]
      %v1453 = vld [vmem:[#allocation2 + $0x99] sm:$0xff]
      %v1454 = vld [vmem:[#allocation2 + $0xa9] sm:$0xff]
      %v1455 = vld [vmem:[#allocation2 + $0xb1] sm:$0xff]
      %v1456 = vld [vmem:[#allocation2 + $0xc1] sm:$0xff]
      %v1457 = vld [vmem:[#allocation2 + $0xc9] sm:$0xff]
      %v1458 = vld [vmem:[#allocation2 + $0xd9] sm:$0xff]
      %v1459 = vld [vmem:[#allocation2 + $0xe1] sm:$0xff]
      %v1460 = vld [vmem:[#allocation2 + $0xf1] sm:$0xff]
      %v1461 = vld [vmem:[#allocation2 + $0xf9] sm:$0xff]
      %v1462 = vld [vmem:[#allocation2 + $0x109] sm:$0xff]
      %v1463 = vld [vmem:[#allocation2 + $0x111] sm:$0xff]
      %v1464 = vld [vmem:[#allocation2 + $0x121] sm:$0xff]
      %v1465 = vld [vmem:[#allocation2 + $0x129] sm:$0xff]
      %v1466 = vld [vmem:[#allocation2 + $0x139] sm:$0xff]
      %v1467 = vld [vmem:[#allocation2 + $0x141] sm:$0xff]
      %v1468 = vld [vmem:[#allocation2 + $0x151] sm:$0xff]
      %v1469 = vld [vmem:[#allocation2 + $0x159] sm:$0xff]
      %v1470 = vld [vmem:[#allocation2 + $0x169] sm:$0xff]
      %v1471 = vld [vmem:[#allocation2 + $0x171] sm:$0xff]
      %v1472 = vld [vmem:[#allocation2 + $0x181] sm:$0xff]
      %v1473 = vld [vmem:[#allocation2 + $0x189] sm:$0xff]
      %v1474 = vld [vmem:[#allocation2 + $0x199] sm:$0xff]
      %v1475 = vld [vmem:[#allocation2 + $0x1a1] sm:$0xff]
      %v1476 = vld [vmem:[%s306 + $0x1] sm:$0x1]
      %v1477 = vlaneseq
      %v1478 = vshrl.u32 %v1477, 7
      %v1479 = vsub.s32 0, %v1478
      %v1480 = vrot.slane %v1476, %v1479
      %v1481 = vmul.f32 %v1440, %v1480
      %v1482 = vmul.f32 %v1441, %v1480
      %v1483 = vmul.f32 %v1442, %v1480
      %v1484 = vmul.f32 %v1443, %v1480
      %v1485 = vmul.f32 %v1444, %v1480
      %v1486 = vmul.f32 %v1445, %v1480
      %v1487 = vmul.f32 %v1446, %v1480
      %v1488 = vmul.f32 %v1447, %v1480
      %v1489 = vmul.f32 %v1448, %v1480
      %v1490 = vmul.f32 %v1449, %v1480
      %v1491 = vmul.f32 %v1450, %v1480
      %v1492 = vmul.f32 %v1451, %v1480
      %v1493 = vmul.f32 %v1452, %v1480
      %v1494 = vmul.f32 %v1453, %v1480
      %v1495 = vmul.f32 %v1454, %v1480
      %v1496 = vmul.f32 %v1455, %v1480
      %v1497 = vmul.f32 %v1456, %v1480
      %v1498 = vmul.f32 %v1457, %v1480
      %v1499 = vmul.f32 %v1458, %v1480
      %v1500 = vmul.f32 %v1459, %v1480
      %v1501 = vmul.f32 %v1460, %v1480
      %v1502 = vmul.f32 %v1461, %v1480
      %v1503 = vmul.f32 %v1462, %v1480
      %v1504 = vmul.f32 %v1463, %v1480
      %v1505 = vmul.f32 %v1464, %v1480
      %v1506 = vmul.f32 %v1465, %v1480
      %v1507 = vmul.f32 %v1466, %v1480
      %v1508 = vmul.f32 %v1467, %v1480
      %v1509 = vmul.f32 %v1468, %v1480
      %v1510 = vmul.f32 %v1469, %v1480
      %v1511 = vmul.f32 %v1470, %v1480
      %v1512 = vmul.f32 %v1471, %v1480
      %v1513 = vadd.f32 %v1408, %v1481
      %v1514 = vadd.f32 %v1409, %v1482
      %v1515 = vadd.f32 %v1410, %v1483
      %v1516 = vadd.f32 %v1411, %v1484
      %v1517 = vadd.f32 %v1412, %v1485
      %v1518 = vadd.f32 %v1413, %v1486
      %v1519 = vadd.f32 %v1414, %v1487
      %v1520 = vadd.f32 %v1415, %v1488
      %v1521 = vadd.f32 %v1416, %v1489
      %v1522 = vadd.f32 %v1417, %v1490
      %v1523 = vadd.f32 %v1418, %v1491
      %v1524 = vadd.f32 %v1419, %v1492
      %v1525 = vadd.f32 %v1420, %v1493
      %v1526 = vadd.f32 %v1421, %v1494
      %v1527 = vadd.f32 %v1422, %v1495
      %v1528 = vadd.f32 %v1423, %v1496
      %v1529 = vadd.f32 %v1424, %v1497
      %v1530 = vadd.f32 %v1425, %v1498
      %v1531 = vadd.f32 %v1426, %v1499
      %v1532 = vadd.f32 %v1427, %v1500
      %v1533 = vadd.f32 %v1428, %v1501
      %v1534 = vadd.f32 %v1429, %v1502
      %v1535 = vadd.f32 %v1430, %v1503
      %v1536 = vadd.f32 %v1431, %v1504
      %v1537 = vadd.f32 %v1432, %v1505
      %v1538 = vadd.f32 %v1433, %v1506
      %v1539 = vadd.f32 %v1434, %v1507
      %v1540 = vadd.f32 %v1435, %v1508
      %v1541 = vadd.f32 %v1436, %v1509
      %v1542 = vadd.f32 %v1437, %v1510
      %v1543 = vadd.f32 %v1438, %v1511
      %v1544 = vadd.f32 %v1439, %v1512
      %v1545 = vld [vmem:[%s306 + $0x4] sm:$0x1]
      %v1546 = vlaneseq
      %v1547 = vshrl.u32 %v1546, 7
      %v1548 = vsub.s32 0, %v1547
      %v1549 = vrot.slane %v1545, %v1548
      %v1550 = vmul.f32 %v1442, %v1549
      %v1551 = vmul.f32 %v1443, %v1549
      %v1552 = vmul.f32 %v1444, %v1549
      %v1553 = vmul.f32 %v1445, %v1549
      %v1554 = vmul.f32 %v1446, %v1549
      %v1555 = vmul.f32 %v1447, %v1549
      %v1556 = vmul.f32 %v1448, %v1549
      %v1557 = vmul.f32 %v1449, %v1549
      %v1558 = vmul.f32 %v1450, %v1549
      %v1559 = vmul.f32 %v1451, %v1549
      %v1560 = vmul.f32 %v1452, %v1549
      %v1561 = vmul.f32 %v1453, %v1549
      %v1562 = vmul.f32 %v1454, %v1549
      %v1563 = vmul.f32 %v1455, %v1549
      %v1564 = vmul.f32 %v1456, %v1549
      %v1565 = vmul.f32 %v1457, %v1549
      %v1566 = vmul.f32 %v1458, %v1549
      %v1567 = vmul.f32 %v1459, %v1549
      %v1568 = vmul.f32 %v1460, %v1549
      %v1569 = vmul.f32 %v1461, %v1549
      %v1570 = vmul.f32 %v1462, %v1549
      %v1571 = vmul.f32 %v1463, %v1549
      %v1572 = vmul.f32 %v1464, %v1549
      %v1573 = vmul.f32 %v1465, %v1549
      %v1574 = vmul.f32 %v1466, %v1549
      %v1575 = vmul.f32 %v1467, %v1549
      %v1576 = vmul.f32 %v1468, %v1549
      %v1577 = vmul.f32 %v1469, %v1549
      %v1578 = vmul.f32 %v1470, %v1549
      %v1579 = vmul.f32 %v1471, %v1549
      %v1580 = vmul.f32 %v1472, %v1549
      %v1581 = vmul.f32 %v1473, %v1549
      %v1582 = vadd.f32 %v1513, %v1550
      %v1583 = vadd.f32 %v1514, %v1551
      %v1584 = vadd.f32 %v1515, %v1552
      %v1585 = vadd.f32 %v1516, %v1553
      %v1586 = vadd.f32 %v1517, %v1554
      %v1587 = vadd.f32 %v1518, %v1555
      %v1588 = vadd.f32 %v1519, %v1556
      %v1589 = vadd.f32 %v1520, %v1557
      %v1590 = vadd.f32 %v1521, %v1558
      %v1591 = vadd.f32 %v1522, %v1559
      %v1592 = vadd.f32 %v1523, %v1560
      %v1593 = vadd.f32 %v1524, %v1561
      %v1594 = vadd.f32 %v1525, %v1562
      %v1595 = vadd.f32 %v1526, %v1563
      %v1596 = vadd.f32 %v1527, %v1564
      %v1597 = vadd.f32 %v1528, %v1565
      %v1598 = vadd.f32 %v1529, %v1566
      %v1599 = vadd.f32 %v1530, %v1567
      %v1600 = vadd.f32 %v1531, %v1568
      %v1601 = vadd.f32 %v1532, %v1569
      %v1602 = vadd.f32 %v1533, %v1570
      %v1603 = vadd.f32 %v1534, %v1571
      %v1604 = vadd.f32 %v1535, %v1572
      %v1605 = vadd.f32 %v1536, %v1573
      %v1606 = vadd.f32 %v1537, %v1574
      %v1607 = vadd.f32 %v1538, %v1575
      %v1608 = vadd.f32 %v1539, %v1576
      %v1609 = vadd.f32 %v1540, %v1577
      %v1610 = vadd.f32 %v1541, %v1578
      %v1611 = vadd.f32 %v1542, %v1579
      %v1612 = vadd.f32 %v1543, %v1580
      %v1613 = vadd.f32 %v1544, %v1581
      %v1614 = vld [vmem:[%s306 + $0x7] sm:$0x1]
      %v1615 = vlaneseq
      %v1616 = vshrl.u32 %v1615, 7
      %v1617 = vsub.s32 0, %v1616
      %v1618 = vrot.slane %v1614, %v1617
      %v1619 = vmul.f32 %v1444, %v1618
      %v1620 = vmul.f32 %v1445, %v1618
      %v1621 = vmul.f32 %v1446, %v1618
      %v1622 = vmul.f32 %v1447, %v1618
      %v1623 = vmul.f32 %v1448, %v1618
      %v1624 = vmul.f32 %v1449, %v1618
      %v1625 = vmul.f32 %v1450, %v1618
      %v1626 = vmul.f32 %v1451, %v1618
      %v1627 = vmul.f32 %v1452, %v1618
      %v1628 = vmul.f32 %v1453, %v1618
      %v1629 = vmul.f32 %v1454, %v1618
      %v1630 = vmul.f32 %v1455, %v1618
      %v1631 = vmul.f32 %v1456, %v1618
      %v1632 = vmul.f32 %v1457, %v1618
      %v1633 = vmul.f32 %v1458, %v1618
      %v1634 = vmul.f32 %v1459, %v1618
      %v1635 = vmul.f32 %v1460, %v1618
      %v1636 = vmul.f32 %v1461, %v1618
      %v1637 = vmul.f32 %v1462, %v1618
      %v1638 = vmul.f32 %v1463, %v1618
      %v1639 = vmul.f32 %v1464, %v1618
      %v1640 = vmul.f32 %v1465, %v1618
      %v1641 = vmul.f32 %v1466, %v1618
      %v1642 = vmul.f32 %v1467, %v1618
      %v1643 = vmul.f32 %v1468, %v1618
      %v1644 = vmul.f32 %v1469, %v1618
      %v1645 = vmul.f32 %v1470, %v1618
      %v1646 = vmul.f32 %v1471, %v1618
      %v1647 = vmul.f32 %v1472, %v1618
      %v1648 = vmul.f32 %v1473, %v1618
      %v1649 = vmul.f32 %v1474, %v1618
      %v1650 = vmul.f32 %v1475, %v1618
      %v1651 = vadd.f32 %v1582, %v1619
      %v1652 = vadd.f32 %v1583, %v1620
      %v1653 = vadd.f32 %v1584, %v1621
      %v1654 = vadd.f32 %v1585, %v1622
      %v1655 = vadd.f32 %v1586, %v1623
      %v1656 = vadd.f32 %v1587, %v1624
      %v1657 = vadd.f32 %v1588, %v1625
      %v1658 = vadd.f32 %v1589, %v1626
      %v1659 = vadd.f32 %v1590, %v1627
      %v1660 = vadd.f32 %v1591, %v1628
      %v1661 = vadd.f32 %v1592, %v1629
      %v1662 = vadd.f32 %v1593, %v1630
      %v1663 = vadd.f32 %v1594, %v1631
      %v1664 = vadd.f32 %v1595, %v1632
      %v1665 = vadd.f32 %v1596, %v1633
      %v1666 = vadd.f32 %v1597, %v1634
      %v1667 = vadd.f32 %v1598, %v1635
      %v1668 = vadd.f32 %v1599, %v1636
      %v1669 = vadd.f32 %v1600, %v1637
      %v1670 = vadd.f32 %v1601, %v1638
      %v1671 = vadd.f32 %v1602, %v1639
      %v1672 = vadd.f32 %v1603, %v1640
      %v1673 = vadd.f32 %v1604, %v1641
      %v1674 = vadd.f32 %v1605, %v1642
      %v1675 = vadd.f32 %v1606, %v1643
      %v1676 = vadd.f32 %v1607, %v1644
      %v1677 = vadd.f32 %v1608, %v1645
      %v1678 = vadd.f32 %v1609, %v1646
      %v1679 = vadd.f32 %v1610, %v1647
      %v1680 = vadd.f32 %v1611, %v1648
      %v1681 = vadd.f32 %v1612, %v1649
      %v1682 = vadd.f32 %v1613, %v1650
      %v1683 = vld [vmem:[#allocation2 + $0x2] sm:$0xff]
      %v1684 = vld [vmem:[#allocation2 + $0xa] sm:$0xff]
      %v1685 = vld [vmem:[#allocation2 + $0x1a] sm:$0xff]
      %v1686 = vld [vmem:[#allocation2 + $0x22] sm:$0xff]
      %v1687 = vld [vmem:[#allocation2 + $0x32] sm:$0xff]
      %v1688 = vld [vmem:[#allocation2 + $0x3a] sm:$0xff]
      %v1689 = vld [vmem:[#allocation2 + $0x4a] sm:$0xff]
      %v1690 = vld [vmem:[#allocation2 + $0x52] sm:$0xff]
      %v1691 = vld [vmem:[#allocation2 + $0x62] sm:$0xff]
      %v1692 = vld [vmem:[#allocation2 + $0x6a] sm:$0xff]
      %v1693 = vld [vmem:[#allocation2 + $0x7a] sm:$0xff]
      %v1694 = vld [vmem:[#allocation2 + $0x82] sm:$0xff]
      %v1695 = vld [vmem:[#allocation2 + $0x92] sm:$0xff]
      %v1696 = vld [vmem:[#allocation2 + $0x9a] sm:$0xff]
      %v1697 = vld [vmem:[#allocation2 + $0xaa] sm:$0xff]
      %v1698 = vld [vmem:[#allocation2 + $0xb2] sm:$0xff]
      %v1699 = vld [vmem:[#allocation2 + $0xc2] sm:$0xff]
      %v1700 = vld [vmem:[#allocation2 + $0xca] sm:$0xff]
      %v1701 = vld [vmem:[#allocation2 + $0xda] sm:$0xff]
      %v1702 = vld [vmem:[#allocation2 + $0xe2] sm:$0xff]
      %v1703 = vld [vmem:[#allocation2 + $0xf2] sm:$0xff]
      %v1704 = vld [vmem:[#allocation2 + $0xfa] sm:$0xff]
      %v1705 = vld [vmem:[#allocation2 + $0x10a] sm:$0xff]
      %v1706 = vld [vmem:[#allocation2 + $0x112] sm:$0xff]
      %v1707 = vld [vmem:[#allocation2 + $0x122] sm:$0xff]
      %v1708 = vld [vmem:[#allocation2 + $0x12a] sm:$0xff]
      %v1709 = vld [vmem:[#allocation2 + $0x13a] sm:$0xff]
      %v1710 = vld [vmem:[#allocation2 + $0x142] sm:$0xff]
      %v1711 = vld [vmem:[#allocation2 + $0x152] sm:$0xff]
      %v1712 = vld [vmem:[#allocation2 + $0x15a] sm:$0xff]
      %v1713 = vld [vmem:[#allocation2 + $0x16a] sm:$0xff]
      %v1714 = vld [vmem:[#allocation2 + $0x172] sm:$0xff]
      %v1715 = vld [vmem:[#allocation2 + $0x182] sm:$0xff]
      %v1716 = vld [vmem:[#allocation2 + $0x18a] sm:$0xff]
      %v1717 = vld [vmem:[#allocation2 + $0x19a] sm:$0xff]
      %v1718 = vld [vmem:[#allocation2 + $0x1a2] sm:$0xff]
      %v1719 = vld [vmem:[%s306 + $0x2] sm:$0x1]
      %v1720 = vlaneseq
      %v1721 = vshrl.u32 %v1720, 7
      %v1722 = vsub.s32 0, %v1721
      %v1723 = vrot.slane %v1719, %v1722
      %v1724 = vmul.f32 %v1683, %v1723
      %v1725 = vmul.f32 %v1684, %v1723
      %v1726 = vmul.f32 %v1685, %v1723
      %v1727 = vmul.f32 %v1686, %v1723
      %v1728 = vmul.f32 %v1687, %v1723
      %v1729 = vmul.f32 %v1688, %v1723
      %v1730 = vmul.f32 %v1689, %v1723
      %v1731 = vmul.f32 %v1690, %v1723
      %v1732 = vmul.f32 %v1691, %v1723
      %v1733 = vmul.f32 %v1692, %v1723
      %v1734 = vmul.f32 %v1693, %v1723
      %v1735 = vmul.f32 %v1694, %v1723
      %v1736 = vmul.f32 %v1695, %v1723
      %v1737 = vmul.f32 %v1696, %v1723
      %v1738 = vmul.f32 %v1697, %v1723
      %v1739 = vmul.f32 %v1698, %v1723
      %v1740 = vmul.f32 %v1699, %v1723
      %v1741 = vmul.f32 %v1700, %v1723
      %v1742 = vmul.f32 %v1701, %v1723
      %v1743 = vmul.f32 %v1702, %v1723
      %v1744 = vmul.f32 %v1703, %v1723
      %v1745 = vmul.f32 %v1704, %v1723
      %v1746 = vmul.f32 %v1705, %v1723
      %v1747 = vmul.f32 %v1706, %v1723
      %v1748 = vmul.f32 %v1707, %v1723
      %v1749 = vmul.f32 %v1708, %v1723
      %v1750 = vmul.f32 %v1709, %v1723
      %v1751 = vmul.f32 %v1710, %v1723
      %v1752 = vmul.f32 %v1711, %v1723
      %v1753 = vmul.f32 %v1712, %v1723
      %v1754 = vmul.f32 %v1713, %v1723
      %v1755 = vmul.f32 %v1714, %v1723
      %v1756 = vadd.f32 %v1651, %v1724
      %v1757 = vadd.f32 %v1652, %v1725
      %v1758 = vadd.f32 %v1653, %v1726
      %v1759 = vadd.f32 %v1654, %v1727
      %v1760 = vadd.f32 %v1655, %v1728
      %v1761 = vadd.f32 %v1656, %v1729
      %v1762 = vadd.f32 %v1657, %v1730
      %v1763 = vadd.f32 %v1658, %v1731
      %v1764 = vadd.f32 %v1659, %v1732
      %v1765 = vadd.f32 %v1660, %v1733
      %v1766 = vadd.f32 %v1661, %v1734
      %v1767 = vadd.f32 %v1662, %v1735
      %v1768 = vadd.f32 %v1663, %v1736
      %v1769 = vadd.f32 %v1664, %v1737
      %v1770 = vadd.f32 %v1665, %v1738
      %v1771 = vadd.f32 %v1666, %v1739
      %v1772 = vadd.f32 %v1667, %v1740
      %v1773 = vadd.f32 %v1668, %v1741
      %v1774 = vadd.f32 %v1669, %v1742
      %v1775 = vadd.f32 %v1670, %v1743
      %v1776 = vadd.f32 %v1671, %v1744
      %v1777 = vadd.f32 %v1672, %v1745
      %v1778 = vadd.f32 %v1673, %v1746
      %v1779 = vadd.f32 %v1674, %v1747
      %v1780 = vadd.f32 %v1675, %v1748
      %v1781 = vadd.f32 %v1676, %v1749
      %v1782 = vadd.f32 %v1677, %v1750
      %v1783 = vadd.f32 %v1678, %v1751
      %v1784 = vadd.f32 %v1679, %v1752
      %v1785 = vadd.f32 %v1680, %v1753
      %v1786 = vadd.f32 %v1681, %v1754
      %v1787 = vadd.f32 %v1682, %v1755
      %v1788 = vld [vmem:[%s306 + $0x5] sm:$0x1]
      %v1789 = vlaneseq
      %v1790 = vshrl.u32 %v1789, 7
      %v1791 = vsub.s32 0, %v1790
      %v1792 = vrot.slane %v1788, %v1791
      %v1793 = vmul.f32 %v1685, %v1792
      %v1794 = vmul.f32 %v1686, %v1792
      %v1795 = vmul.f32 %v1687, %v1792
      %v1796 = vmul.f32 %v1688, %v1792
      %v1797 = vmul.f32 %v1689, %v1792
      %v1798 = vmul.f32 %v1690, %v1792
      %v1799 = vmul.f32 %v1691, %v1792
      %v1800 = vmul.f32 %v1692, %v1792
      %v1801 = vmul.f32 %v1693, %v1792
      %v1802 = vmul.f32 %v1694, %v1792
      %v1803 = vmul.f32 %v1695, %v1792
      %v1804 = vmul.f32 %v1696, %v1792
      %v1805 = vmul.f32 %v1697, %v1792
      %v1806 = vmul.f32 %v1698, %v1792
      %v1807 = vmul.f32 %v1699, %v1792
      %v1808 = vmul.f32 %v1700, %v1792
      %v1809 = vmul.f32 %v1701, %v1792
      %v1810 = vmul.f32 %v1702, %v1792
      %v1811 = vmul.f32 %v1703, %v1792
      %v1812 = vmul.f32 %v1704, %v1792
      %v1813 = vmul.f32 %v1705, %v1792
      %v1814 = vmul.f32 %v1706, %v1792
      %v1815 = vmul.f32 %v1707, %v1792
      %v1816 = vmul.f32 %v1708, %v1792
      %v1817 = vmul.f32 %v1709, %v1792
      %v1818 = vmul.f32 %v1710, %v1792
      %v1819 = vmul.f32 %v1711, %v1792
      %v1820 = vmul.f32 %v1712, %v1792
      %v1821 = vmul.f32 %v1713, %v1792
      %v1822 = vmul.f32 %v1714, %v1792
      %v1823 = vmul.f32 %v1715, %v1792
      %v1824 = vmul.f32 %v1716, %v1792
      %v1825 = vadd.f32 %v1756, %v1793
      %v1826 = vadd.f32 %v1757, %v1794
      %v1827 = vadd.f32 %v1758, %v1795
      %v1828 = vadd.f32 %v1759, %v1796
      %v1829 = vadd.f32 %v1760, %v1797
      %v1830 = vadd.f32 %v1761, %v1798
      %v1831 = vadd.f32 %v1762, %v1799
      %v1832 = vadd.f32 %v1763, %v1800
      %v1833 = vadd.f32 %v1764, %v1801
      %v1834 = vadd.f32 %v1765, %v1802
      %v1835 = vadd.f32 %v1766, %v1803
      %v1836 = vadd.f32 %v1767, %v1804
      %v1837 = vadd.f32 %v1768, %v1805
      %v1838 = vadd.f32 %v1769, %v1806
      %v1839 = vadd.f32 %v1770, %v1807
      %v1840 = vadd.f32 %v1771, %v1808
      %v1841 = vadd.f32 %v1772, %v1809
      %v1842 = vadd.f32 %v1773, %v1810
      %v1843 = vadd.f32 %v1774, %v1811
      %v1844 = vadd.f32 %v1775, %v1812
      %v1845 = vadd.f32 %v1776, %v1813
      %v1846 = vadd.f32 %v1777, %v1814
      %v1847 = vadd.f32 %v1778, %v1815
      %v1848 = vadd.f32 %v1779, %v1816
      %v1849 = vadd.f32 %v1780, %v1817
      %v1850 = vadd.f32 %v1781, %v1818
      %v1851 = vadd.f32 %v1782, %v1819
      %v1852 = vadd.f32 %v1783, %v1820
      %v1853 = vadd.f32 %v1784, %v1821
      %v1854 = vadd.f32 %v1785, %v1822
      %v1855 = vadd.f32 %v1786, %v1823
      %v1856 = vadd.f32 %v1787, %v1824
      %v1857 = vld [vmem:[%s306 + $0x8] sm:$0x1]
      %v1858 = vlaneseq
      %v1859 = vshrl.u32 %v1858, 7
      %v1860 = vsub.s32 0, %v1859
      %v1861 = vrot.slane %v1857, %v1860
      %v1862 = vmul.f32 %v1687, %v1861
      %v1863 = vmul.f32 %v1688, %v1861
      %v1864 = vmul.f32 %v1689, %v1861
      %v1865 = vmul.f32 %v1690, %v1861
      %v1866 = vmul.f32 %v1691, %v1861
      %v1867 = vmul.f32 %v1692, %v1861
      %v1868 = vmul.f32 %v1693, %v1861
      %v1869 = vmul.f32 %v1694, %v1861
      %v1870 = vmul.f32 %v1695, %v1861
      %v1871 = vmul.f32 %v1696, %v1861
      %v1872 = vmul.f32 %v1697, %v1861
      %v1873 = vmul.f32 %v1698, %v1861
      %v1874 = vmul.f32 %v1699, %v1861
      %v1875 = vmul.f32 %v1700, %v1861
      %v1876 = vmul.f32 %v1701, %v1861
      %v1877 = vmul.f32 %v1702, %v1861
      %v1878 = vmul.f32 %v1703, %v1861
      %v1879 = vmul.f32 %v1704, %v1861
      %v1880 = vmul.f32 %v1705, %v1861
      %v1881 = vmul.f32 %v1706, %v1861
      %v1882 = vmul.f32 %v1707, %v1861
      %v1883 = vmul.f32 %v1708, %v1861
      %v1884 = vmul.f32 %v1709, %v1861
      %v1885 = vmul.f32 %v1710, %v1861
      %v1886 = vmul.f32 %v1711, %v1861
      %v1887 = vmul.f32 %v1712, %v1861
      %v1888 = vmul.f32 %v1713, %v1861
      %v1889 = vmul.f32 %v1714, %v1861
      %v1890 = vmul.f32 %v1715, %v1861
      %v1891 = vmul.f32 %v1716, %v1861
      %v1892 = vmul.f32 %v1717, %v1861
      %v1893 = vmul.f32 %v1718, %v1861
      %v1894 = vadd.f32 %v1825, %v1862
      %v1895 = vadd.f32 %v1826, %v1863
      %v1896 = vadd.f32 %v1827, %v1864
      %v1897 = vadd.f32 %v1828, %v1865
      %v1898 = vadd.f32 %v1829, %v1866
      %v1899 = vadd.f32 %v1830, %v1867
      %v1900 = vadd.f32 %v1831, %v1868
      %v1901 = vadd.f32 %v1832, %v1869
      %v1902 = vadd.f32 %v1833, %v1870
      %v1903 = vadd.f32 %v1834, %v1871
      %v1904 = vadd.f32 %v1835, %v1872
      %v1905 = vadd.f32 %v1836, %v1873
      %v1906 = vadd.f32 %v1837, %v1874
      %v1907 = vadd.f32 %v1838, %v1875
      %v1908 = vadd.f32 %v1839, %v1876
      %v1909 = vadd.f32 %v1840, %v1877
      %v1910 = vadd.f32 %v1841, %v1878
      %v1911 = vadd.f32 %v1842, %v1879
      %v1912 = vadd.f32 %v1843, %v1880
      %v1913 = vadd.f32 %v1844, %v1881
      %v1914 = vadd.f32 %v1845, %v1882
      %v1915 = vadd.f32 %v1846, %v1883
      %v1916 = vadd.f32 %v1847, %v1884
      %v1917 = vadd.f32 %v1848, %v1885
      %v1918 = vadd.f32 %v1849, %v1886
      %v1919 = vadd.f32 %v1850, %v1887
      %v1920 = vadd.f32 %v1851, %v1888
      %v1921 = vadd.f32 %v1852, %v1889
      %v1922 = vadd.f32 %v1853, %v1890
      %v1923 = vadd.f32 %v1854, %v1891
      %v1924 = vadd.f32 %v1855, %v1892
      %v1925 = vadd.f32 %v1856, %v1893
      %v1926 = vld [vmem:[%s309] sm:$0x1]
      %v1928 = vlaneseq
      %v1929 = vshrl.u32 %v1928, 7
      %v1930 = vsub.s32 0, %v1929
      %v1931 = vrot.slane %v1926, %v1930
      %v1933 = vadd.f32 %v1894, %v1931
      %v1934 = vadd.f32 %v1895, %v1931
      %v1935 = vadd.f32 %v1896, %v1931
      %v1936 = vadd.f32 %v1897, %v1931
      %v1937 = vadd.f32 %v1898, %v1931
      %v1938 = vadd.f32 %v1899, %v1931
      %v1939 = vadd.f32 %v1900, %v1931
      %v1940 = vadd.f32 %v1901, %v1931
      %v1941 = vadd.f32 %v1902, %v1931
      %v1942 = vadd.f32 %v1903, %v1931
      %v1943 = vadd.f32 %v1904, %v1931
      %v1944 = vadd.f32 %v1905, %v1931
      %v1945 = vadd.f32 %v1906, %v1931
      %v1946 = vadd.f32 %v1907, %v1931
      %v1947 = vadd.f32 %v1908, %v1931
      %v1948 = vadd.f32 %v1909, %v1931
      %v1949 = vadd.f32 %v1910, %v1931
      %v1950 = vadd.f32 %v1911, %v1931
      %v1951 = vadd.f32 %v1912, %v1931
      %v1952 = vadd.f32 %v1913, %v1931
      %v1953 = vadd.f32 %v1914, %v1931
      %v1954 = vadd.f32 %v1915, %v1931
      %v1955 = vadd.f32 %v1916, %v1931
      %v1956 = vadd.f32 %v1917, %v1931
      %v1957 = vadd.f32 %v1918, %v1931
      %v1958 = vadd.f32 %v1919, %v1931
      %v1959 = vadd.f32 %v1920, %v1931
      %v1960 = vadd.f32 %v1921, %v1931
      %v1961 = vadd.f32 %v1922, %v1931
      %v1962 = vadd.f32 %v1923, %v1931
      %v1963 = vadd.f32 %v1924, %v1931
      %v1964 = vadd.f32 %v1925, %v1931
      %v1965 = vpack.c.bf16 %v1934, %v1933
      %v1966 = vpack.c.bf16 %v1936, %v1935
      %v1967 = vpack.c.bf16 %v1938, %v1937
      %v1968 = vpack.c.bf16 %v1940, %v1939
      %v1969 = vpack.c.bf16 %v1942, %v1941
      %v1970 = vpack.c.bf16 %v1944, %v1943
      %v1971 = vpack.c.bf16 %v1946, %v1945
      %v1972 = vpack.c.bf16 %v1948, %v1947
      %v1973 = vpack.c.bf16 %v1950, %v1949
      %v1974 = vpack.c.bf16 %v1952, %v1951
      %v1975 = vpack.c.bf16 %v1954, %v1953
      %v1976 = vpack.c.bf16 %v1956, %v1955
      %v1977 = vpack.c.bf16 %v1958, %v1957
      %v1978 = vpack.c.bf16 %v1960, %v1959
      %v1979 = vpack.c.bf16 %v1962, %v1961
      %v1980 = vpack.c.bf16 %v1964, %v1963
      %v1997 = vunpack.c.l.b16 %v1965
      %v1998 = vunpack.c.h.b16 %v1965
      %v1999 = vunpack.c.l.b16 %v1966
      %v2000 = vunpack.c.h.b16 %v1966
      %v2001 = vunpack.c.l.b16 %v1967
      %v2002 = vunpack.c.h.b16 %v1967
      %v2003 = vunpack.c.l.b16 %v1968
      %v2004 = vunpack.c.h.b16 %v1968
      %v2005 = vunpack.c.l.b16 %v1969
      %v2006 = vunpack.c.h.b16 %v1969
      %v2007 = vunpack.c.l.b16 %v1970
      %v2008 = vunpack.c.h.b16 %v1970
      %v2009 = vunpack.c.l.b16 %v1971
      %v2010 = vunpack.c.h.b16 %v1971
      %v2011 = vunpack.c.l.b16 %v1972
      %v2012 = vunpack.c.h.b16 %v1972
      %v2013 = vunpack.c.l.b16 %v1973
      %v2014 = vunpack.c.h.b16 %v1973
      %v2015 = vunpack.c.l.b16 %v1974
      %v2016 = vunpack.c.h.b16 %v1974
      %v2017 = vunpack.c.l.b16 %v1975
      %v2018 = vunpack.c.h.b16 %v1975
      %v2019 = vunpack.c.l.b16 %v1976
      %v2020 = vunpack.c.h.b16 %v1976
      %v2021 = vunpack.c.l.b16 %v1977
      %v2022 = vunpack.c.h.b16 %v1977
      %v2023 = vunpack.c.l.b16 %v1978
      %v2024 = vunpack.c.h.b16 %v1978
      %v2025 = vunpack.c.l.b16 %v1979
      %v2026 = vunpack.c.h.b16 %v1979
      %v2027 = vunpack.c.l.b16 %v1980
      %v2028 = vunpack.c.h.b16 %v1980
      %v2029 = vpack.c.b16 %v1997, %v1997
      %v2030 = vpack.c.b16 %v1998, %v1998
      %v2031 = vpack.c.b16 %v1999, %v1999
      %v2032 = vpack.c.b16 %v2000, %v2000
      %v2033 = vpack.c.b16 %v2001, %v2001
      %v2034 = vpack.c.b16 %v2002, %v2002
      %v2035 = vpack.c.b16 %v2003, %v2003
      %v2036 = vpack.c.b16 %v2004, %v2004
      %v2037 = vpack.c.b16 %v2005, %v2005
      %v2038 = vpack.c.b16 %v2006, %v2006
      %v2039 = vpack.c.b16 %v2007, %v2007
      %v2040 = vpack.c.b16 %v2008, %v2008
      %v2041 = vpack.c.b16 %v2009, %v2009
      %v2042 = vpack.c.b16 %v2010, %v2010
      %v2043 = vpack.c.b16 %v2011, %v2011
      %v2044 = vpack.c.b16 %v2012, %v2012
      %v2045 = vpack.c.b16 %v2013, %v2013
      %v2046 = vpack.c.b16 %v2014, %v2014
      %v2047 = vpack.c.b16 %v2015, %v2015
      %v2048 = vpack.c.b16 %v2016, %v2016
      %v2049 = vpack.c.b16 %v2017, %v2017
      %v2050 = vpack.c.b16 %v2018, %v2018
      %v2051 = vpack.c.b16 %v2019, %v2019
      %v2052 = vpack.c.b16 %v2020, %v2020
      %v2053 = vpack.c.b16 %v2021, %v2021
      %v2054 = vpack.c.b16 %v2022, %v2022
      %v2055 = vpack.c.b16 %v2023, %v2023
      %v2056 = vpack.c.b16 %v2024, %v2024
      %v2057 = vpack.c.b16 %v2025, %v2025
      %v2058 = vpack.c.b16 %v2026, %v2026
      %v2059 = vpack.c.b16 %v2027, %v2027
      %v2060 = vpack.c.b16 %v2028, %v2028
      %vm2093 = vcmask 781312
      %2094 = vst.msk [vmem:[%s317] sm:$0xf] %vm2093, %v2029
      %2095 = vst.msk [vmem:[%s317 + $0x4] sm:$0xf] %vm2093, %v2030
      %2096 = vst.msk [vmem:[%s317 + $0x8] sm:$0xf] %vm2093, %v2031
      %2097 = vst.msk [vmem:[%s317 + $0xc] sm:$0xf] %vm2093, %v2032
      %2098 = vst.msk [vmem:[%s317 + $0x10] sm:$0xf] %vm2093, %v2033
      %2099 = vst.msk [vmem:[%s317 + $0x14] sm:$0xf] %vm2093, %v2034
      %2100 = vst.msk [vmem:[%s317 + $0x18] sm:$0xf] %vm2093, %v2035
      %2101 = vst.msk [vmem:[%s317 + $0x1c] sm:$0xf] %vm2093, %v2036
      %2102 = vst.msk [vmem:[%s317 + $0x20] sm:$0xf] %vm2093, %v2037
      %2103 = vst.msk [vmem:[%s317 + $0x24] sm:$0xf] %vm2093, %v2038
      %2104 = vst.msk [vmem:[%s317 + $0x28] sm:$0xf] %vm2093, %v2039
      %2105 = vst.msk [vmem:[%s317 + $0x2c] sm:$0xf] %vm2093, %v2040
      %2106 = vst.msk [vmem:[%s317 + $0x30] sm:$0xf] %vm2093, %v2041
      %2107 = vst.msk [vmem:[%s317 + $0x34] sm:$0xf] %vm2093, %v2042
      %2108 = vst.msk [vmem:[%s317 + $0x38] sm:$0xf] %vm2093, %v2043
      %2109 = vst.msk [vmem:[%s317 + $0x3c] sm:$0xf] %vm2093, %v2044
      %2110 = vst.msk [vmem:[%s317 + $0x40] sm:$0xf] %vm2093, %v2045
      %2111 = vst.msk [vmem:[%s317 + $0x44] sm:$0xf] %vm2093, %v2046
      %2112 = vst.msk [vmem:[%s317 + $0x48] sm:$0xf] %vm2093, %v2047
      %2113 = vst.msk [vmem:[%s317 + $0x4c] sm:$0xf] %vm2093, %v2048
      %2114 = vst.msk [vmem:[%s317 + $0x50] sm:$0xf] %vm2093, %v2049
      %2115 = vst.msk [vmem:[%s317 + $0x54] sm:$0xf] %vm2093, %v2050
      %2116 = vst.msk [vmem:[%s317 + $0x58] sm:$0xf] %vm2093, %v2051
      %2117 = vst.msk [vmem:[%s317 + $0x5c] sm:$0xf] %vm2093, %v2052
      %2118 = vst.msk [vmem:[%s317 + $0x60] sm:$0xf] %vm2093, %v2053
      %2119 = vst.msk [vmem:[%s317 + $0x64] sm:$0xf] %vm2093, %v2054
      %2120 = vst.msk [vmem:[%s317 + $0x68] sm:$0xf] %vm2093, %v2055
      %2121 = vst.msk [vmem:[%s317 + $0x6c] sm:$0xf] %vm2093, %v2056
      %2122 = vst.msk [vmem:[%s317 + $0x70] sm:$0xf] %vm2093, %v2057
      %2123 = vst.msk [vmem:[%s317 + $0x74] sm:$0xf] %vm2093, %v2058
      %2124 = vst.msk [vmem:[%s317 + $0x78] sm:$0xf] %vm2093, %v2059
      %2125 = vst.msk [vmem:[%s317 + $0x7c] sm:$0xf] %vm2093, %v2060
      %p2126 = scmp.lt.s32.totalorder %s20, 1
      %s2127 = scalar_select %p2126, %s20, 1
      %p2128 = scmp.lt.s32.totalorder %s21, 0
      %s2129 = scalar_select %p2128, %s21, 0
      %s2130 = smul.addr %s2127, 32
      %s2131 = sadd.s32 %s2129, %s2130
      %s2132 = smul.addr %s2131, 4
      %s2133 = scalar_lea.vmem %s5, %s2132
      // Predicated region
      $region41: #{_lambda_.6} parent=39 // pred_check
        %p2134 = pneg %p180
      $region42: #{_lambda_.6} parent=39 // pred_check_branch
        %2136 = sbr.rel (%p2134) target = $region44
      $region43: #{_lambda_.6} parent=39 // pred_region
        _
      $region44: #{_lambda_.6} parent=39 // pred_fallthru
        _
    $region40: #{_lambda_.6} parent=5 // pred_fallthru
      _
    %p2137 = scmp.le.s32.totalorder 2, %s11
    // Predicated region
    $region45: #{_lambda_.6} parent=5 // pred_check
      %p2138 = pneg %p2137
    $region46: #{_lambda_.6} parent=5 // pred_check_branch
      %2140 = sbr.rel (%p2138) target = $region48
    $region47: #{_lambda_.6} parent=5 // pred_region
      %s2141 = ssub.s32 %s11, 2
      // Predicated region
      $region49: #{_lambda_.6} parent=47 // pred_check
        %p2142 = pneg %p186
      $region50: #{_lambda_.6} parent=47 // pred_check_branch
        %2144 = sbr.rel (%p2142) target = $region52
      $region51: #{_lambda_.6} parent=47 // pred_region
        %p2145 = scmp.lt.s32.totalorder %s22, 1
        %s2146 = scalar_select %p2145, %s22, 1
        %p2147 = scmp.lt.s32.totalorder %s23, 0
        %s2148 = scalar_select %p2147, %s23, 0
        %s2149 = smul.addr %s2146, 32
        %s2150 = sadd.s32 %s2148, %s2149
        %s2151 = smul.addr %s2150, 4
        %s2152 = scalar_lea.vmem %s5, %s2151
      $region52: #{_lambda_.6} parent=47 // pred_fallthru
        _
    $region48: #{_lambda_.6} parent=5 // pred_fallthru
      _
  $region6: #{_lambda_.6} parent=0 // loop_footer
    %s15 = sadd.s32 1, %s11
  $region7: #{_lambda_.6} parent=0 // loop_footer_branch
    %10 = sbr.rel target = $region3
  $region8: #{_lambda_.6} parent=0 // loop_exit
    _

// kernel: _lambda_.8
$region0: #{_lambda_.8}
  #allocation0 [shape = 'u32[]', space=smem, size = 0x4, offset = 0x4, fixed_abs, tag = 'smem constant byte address 0x4 - core index']
  #allocation1 [shape = 'u32[144,128]{1,0:T(1,128)}', space=vmem, size = 0x12000, scoped, tag = 'internal scratch']
  #allocation2 [shape = 'f32[18,18,32]{2,1,0:T(8,128)}', space=vmem, size = 0x36000, scoped, tag = 'scratch operand']
  %s0 = inlined_call_operand.vmem [shape: bf16[2,16,16,32], index: 0, kind: input, shape index: {}]
  %s1 = inlined_call_operand.vmem [shape: f32[9,32], index: 1, kind: input, shape index: {}]
  %s2 = inlined_call_operand.vmem [shape: f32[1,32], index: 2, kind: input, shape index: {}]
  %s3 = inlined_call_operand.vmem [shape: f32[1,32], index: 3, kind: input, shape index: {}]
  %s4 = inlined_call_operand.vmem [shape: f32[1,32], index: 4, kind: input, shape index: {}]
  %s5 = inlined_call_operand.vmem [shape: bf16[2,16,16,32], index: 5, kind: output, shape index: {}]
  %s6 = sld [smem:[#allocation0]]
  $region53: #{_lambda_.8} parent=0
    _
  %s8 = ssub.s32 1, %s6
  %s9 = scalar_select 0, %s8, %s6
  loop: start=0, step=1, limit=4
  $region2: #{_lambda_.8} parent=0 // loop_pre_header
    _
  $region3: #{_lambda_.8} parent=0 // loop_header
    %s11 = sphi 0, %s15
    %p12 = scmp.ge.s32.totalorder %s11, 4
    %s18 = sphi 0, %s30
    %s19 = sphi 0, %s26
    %s20 = sphi 0, %s18
    %s21 = sphi 0, %s19
    %s22 = sphi 0, %s20
    %s23 = sphi 0, %s21
    %s35 = sphi 0, %s37
    %s38 = sphi 0, %s35
    %s39 = sphi 0, %s38
    %s55 = sphi 0, %s39
    %s61 = sphi 0, %s63
    %s64 = sphi 0, %s61
    %s65 = sphi 0, %s64
    %s81 = sphi 0, %s65
    %s87 = sphi 0, %s89
    %s90 = sphi 0, %s87
    %s91 = sphi 0, %s90
    %s107 = sphi 0, %s91
    %s113 = sphi 0, %s115
    %s116 = sphi 0, %s113
    %s117 = sphi 0, %s116
    %s133 = sphi 0, %s117
    %s139 = sphi 0, %s141
    %s142 = sphi 0, %s139
    %s143 = sphi 0, %s142
    %s159 = sphi 0, %s143
    %s167 = sphi 0, %s169
    %s170 = sphi 0, %s167
    %s171 = sphi 0, %s170
    %s187 = sphi 0, %s171
  $region4: #{_lambda_.8} parent=0 // loop_header_branch
    %14 = sbr.rel (%p12) target = $region8
  $region5: #{_lambda_.8} parent=0 // loop_body
    %s16 = ssub.s32 %s11, 1
    %s17 = ssub.s32 %s11, 2
    %s24 = sadd.s32 1, %s19
    %p25 = scmp.ge.s32.totalorder %s24, 1
    %s26 = scalar_select %p25, 0, %s24
    %s27 = sadd.s32 1, %s18
    %s28 = scalar_select %p25, %s27, %s18
    %p29 = scmp.ge.s32.totalorder %s28, 2
    %s30 = scalar_select %p29, 0, %s28
    %s31 = ssub.s32 %s18, %s30
    %s32 = ssub.s32 %s19, %s26
    %s33 = sor.u32 %s31, %s32
    %p34 = scmp.eq.s32.totalorder %s33, 0
    %s36 = sadd.s32 %s35, 1
    %s37 = scalar_select %p34, %s35, %s36
    %p40 = pneg %p34
    %p41 = scmp.eq.s32.totalorder %s11, 1
    %p42 = por %p40, %p41
    %p43 = scmp.ne.s32.totalorder %s35, %s38
    %p44 = scmp.eq.s32.totalorder %s11, 0
    %p45 = por %p43, %p44
    %p46 = scmp.ne.s32.totalorder %s35, %s38
    %p47 = scmp.eq.s32.totalorder %s16, 1
    %p48 = por %p46, %p47
    %p49 = scmp.ne.s32.totalorder %s38, %s39
    %p50 = scmp.eq.s32.totalorder %s16, 0
    %p51 = por %p49, %p50
    %p52 = scmp.ne.s32.totalorder %s38, %s39
    %p53 = scmp.eq.s32.totalorder %s17, 1
    %p54 = por %p52, %p53
    %p56 = scmp.ne.s32.totalorder %s39, %s55
    %p57 = scmp.eq.s32.totalorder %s17, 0
    %p58 = por %p56, %p57
    %s59 = ssub.s32 %s19, %s26
    %p60 = scmp.eq.s32.totalorder %s59, 0
    %s62 = sadd.s32 %s61, 1
    %s63 = scalar_select %p60, %s61, %s62
    %p66 = pneg %p60
    %p67 = scmp.eq.s32.totalorder %s11, 1
    %p68 = por %p66, %p67
    %p69 = scmp.ne.s32.totalorder %s61, %s64
    %p70 = scmp.eq.s32.totalorder %s11, 0
    %p71 = por %p69, %p70
    %p72 = scmp.ne.s32.totalorder %s61, %s64
    %p73 = scmp.eq.s32.totalorder %s16, 1
    %p74 = por %p72, %p73
    %p75 = scmp.ne.s32.totalorder %s64, %s65
    %p76 = scmp.eq.s32.totalorder %s16, 0
    %p77 = por %p75, %p76
    %p78 = scmp.ne.s32.totalorder %s64, %s65
    %p79 = scmp.eq.s32.totalorder %s17, 1
    %p80 = por %p78, %p79
    %p82 = scmp.ne.s32.totalorder %s65, %s81
    %p83 = scmp.eq.s32.totalorder %s17, 0
    %p84 = por %p82, %p83
    %s85 = ssub.s32 %s19, %s26
    %p86 = scmp.eq.s32.totalorder %s85, 0
    %s88 = sadd.s32 %s87, 1
    %s89 = scalar_select %p86, %s87, %s88
    %p92 = pneg %p86
    %p93 = scmp.eq.s32.totalorder %s11, 1
    %p94 = por %p92, %p93
    %p95 = scmp.ne.s32.totalorder %s87, %s90
    %p96 = scmp.eq.s32.totalorder %s11, 0
    %p97 = por %p95, %p96
    %p98 = scmp.ne.s32.totalorder %s87, %s90
    %p99 = scmp.eq.s32.totalorder %s16, 1
    %p100 = por %p98, %p99
    %p101 = scmp.ne.s32.totalorder %s90, %s91
    %p102 = scmp.eq.s32.totalorder %s16, 0
    %p103 = por %p101, %p102
    %p104 = scmp.ne.s32.totalorder %s90, %s91
    %p105 = scmp.eq.s32.totalorder %s17, 1
    %p106 = por %p104, %p105
    %p108 = scmp.ne.s32.totalorder %s91, %s107
    %p109 = scmp.eq.s32.totalorder %s17, 0
    %p110 = por %p108, %p109
    %s111 = ssub.s32 %s19, %s26
    %p112 = scmp.eq.s32.totalorder %s111, 0
    %s114 = sadd.s32 %s113, 1
    %s115 = scalar_select %p112, %s113, %s114
    %p118 = pneg %p112
    %p119 = scmp.eq.s32.totalorder %s11, 1
    %p120 = por %p118, %p119
    %p121 = scmp.ne.s32.totalorder %s113, %s116
    %p122 = scmp.eq.s32.totalorder %s11, 0
    %p123 = por %p121, %p122
    %p124 = scmp.ne.s32.totalorder %s113, %s116
    %p125 = scmp.eq.s32.totalorder %s16, 1
    %p126 = por %p124, %p125
    %p127 = scmp.ne.s32.totalorder %s116, %s117
    %p128 = scmp.eq.s32.totalorder %s16, 0
    %p129 = por %p127, %p128
    %p130 = scmp.ne.s32.totalorder %s116, %s117
    %p131 = scmp.eq.s32.totalorder %s17, 1
    %p132 = por %p130, %p131
    %p134 = scmp.ne.s32.totalorder %s117, %s133
    %p135 = scmp.eq.s32.totalorder %s17, 0
    %p136 = por %p134, %p135
    %s137 = ssub.s32 %s19, %s26
    %p138 = scmp.eq.s32.totalorder %s137, 0
    %s140 = sadd.s32 %s139, 1
    %s141 = scalar_select %p138, %s139, %s140
    %p144 = pneg %p138
    %p145 = scmp.eq.s32.totalorder %s11, 1
    %p146 = por %p144, %p145
    %p147 = scmp.ne.s32.totalorder %s139, %s142
    %p148 = scmp.eq.s32.totalorder %s11, 0
    %p149 = por %p147, %p148
    %p150 = scmp.ne.s32.totalorder %s139, %s142
    %p151 = scmp.eq.s32.totalorder %s16, 1
    %p152 = por %p150, %p151
    %p153 = scmp.ne.s32.totalorder %s142, %s143
    %p154 = scmp.eq.s32.totalorder %s16, 0
    %p155 = por %p153, %p154
    %p156 = scmp.ne.s32.totalorder %s142, %s143
    %p157 = scmp.eq.s32.totalorder %s17, 1
    %p158 = por %p156, %p157
    %p160 = scmp.ne.s32.totalorder %s143, %s159
    %p161 = scmp.eq.s32.totalorder %s17, 0
    %p162 = por %p160, %p161
    %s163 = ssub.s32 %s18, %s30
    %s164 = ssub.s32 %s19, %s26
    %s165 = sor.u32 %s163, %s164
    %p166 = scmp.eq.s32.totalorder %s165, 0
    %s168 = sadd.s32 %s167, 1
    %s169 = scalar_select %p166, %s167, %s168
    %p172 = pneg %p166
    %p173 = scmp.eq.s32.totalorder %s11, 1
    %p174 = por %p172, %p173
    %p175 = scmp.ne.s32.totalorder %s167, %s170
    %p176 = scmp.eq.s32.totalorder %s11, 0
    %p177 = por %p175, %p176
    %p178 = scmp.ne.s32.totalorder %s167, %s170
    %p179 = scmp.eq.s32.totalorder %s16, 1
    %p180 = por %p178, %p179
    %p181 = scmp.ne.s32.totalorder %s170, %s171
    %p182 = scmp.eq.s32.totalorder %s16, 0
    %p183 = por %p181, %p182
    %p184 = scmp.ne.s32.totalorder %s170, %s171
    %p185 = scmp.eq.s32.totalorder %s17, 1
    %p186 = por %p184, %p185
    %p188 = scmp.ne.s32.totalorder %s171, %s187
    %p189 = scmp.eq.s32.totalorder %s17, 0
    %p190 = por %p188, %p189
    %p191 = scmp.le.s32.totalorder 1, %s11
    %p192 = scmp.lt.s32.totalorder %s11, 3
    %p193 = pnand %p191, %p192
    %p194 = pneg %p193
    // Predicated region
    $region9: #{_lambda_.8} parent=5 // pred_check
      _
    $region10: #{_lambda_.8} parent=5 // pred_check_branch
      %196 = sbr.rel (%p193) target = $region12
    $region11: #{_lambda_.8} parent=5 // pred_region
      %s197 = ssub.s32 %s11, 1
      // Predicated region
      $region13: #{_lambda_.8} parent=11 // pred_check
        %p198 = pneg %p77
      $region14: #{_lambda_.8} parent=11 // pred_check_branch
        %200 = sbr.rel (%p198) target = $region16
      $region15: #{_lambda_.8} parent=11 // pred_region
        %p201 = scmp.lt.s32.totalorder %s21, 0
        %s202 = scalar_select %p201, %s21, 0
        %s203 = smul.addr %s202, 8
        %s204 = scalar_lea.vmem %s1, %s203
      $region16: #{_lambda_.8} parent=11 // pred_fallthru
        _
      // Predicated region
      $region17: #{_lambda_.8} parent=11 // pred_check
        %p205 = pneg %p103
      $region18: #{_lambda_.8} parent=11 // pred_check_branch
        %207 = sbr.rel (%p205) target = $region20
      $region19: #{_lambda_.8} parent=11 // pred_region
        %p208 = scmp.lt.s32.totalorder %s21, 0
        %s209 = scalar_select %p208, %s21, 0
        %s210 = scalar_lea.vmem %s2, %s209
      $region20: #{_lambda_.8} parent=11 // pred_fallthru
        _
      // Predicated region
      $region21: #{_lambda_.8} parent=11 // pred_check
        %p211 = pneg %p129
      $region22: #{_lambda_.8} parent=11 // pred_check_branch
        %213 = sbr.rel (%p211) target = $region24
      $region23: #{_lambda_.8} parent=11 // pred_region
        %p214 = scmp.lt.s32.totalorder %s21, 0
        %s215 = scalar_select %p214, %s21, 0
        %s216 = scalar_lea.vmem %s3, %s215
      $region24: #{_lambda_.8} parent=11 // pred_fallthru
        _
      // Predicated region
      $region25: #{_lambda_.8} parent=11 // pred_check
        %p217 = pneg %p155
      $region26: #{_lambda_.8} parent=11 // pred_check_branch
        %219 = sbr.rel (%p217) target = $region28
      $region27: #{_lambda_.8} parent=11 // pred_region
        %p220 = scmp.lt.s32.totalorder %s21, 0
        %s221 = scalar_select %p220, %s21, 0
        %s222 = scalar_lea.vmem %s4, %s221
      $region28: #{_lambda_.8} parent=11 // pred_fallthru
        _
    $region12: #{_lambda_.8} parent=5 // pred_fallthru
      _
    %p223 = scmp.lt.s32.totalorder %s11, 2
    // Predicated region
    $region29: #{_lambda_.8} parent=5 // pred_check
      %p224 = pneg %p223
    $region30: #{_lambda_.8} parent=5 // pred_check_branch
      %226 = sbr.rel (%p224) target = $region32
    $region31: #{_lambda_.8} parent=5 // pred_region
      // Predicated region
      $region33: #{_lambda_.8} parent=31 // pred_check
        %p227 = pneg %p45
      $region34: #{_lambda_.8} parent=31 // pred_check_branch
        %229 = sbr.rel (%p227) target = $region36
      $region35: #{_lambda_.8} parent=31 // pred_region
        %p230 = scmp.lt.s32.totalorder %s18, 1
        %s231 = scalar_select %p230, %s18, 1
        %p232 = scmp.lt.s32.totalorder %s19, 0
        %s233 = scalar_select %p232, %s19, 0
        %s234 = smul.addr %s231, 32
        %s235 = sadd.s32 %s233, %s234
        %s236 = smul.addr %s235, 4
        %s237 = scalar_lea.vmem %s0, %s236
      $region36: #{_lambda_.8} parent=31 // pred_fallthru
        _
    $region32: #{_lambda_.8} parent=5 // pred_fallthru
      _
    %p238 = scmp.le.s32.totalorder 1, %s11
    %p239 = scmp.lt.s32.totalorder %s11, 3
    %p240 = pnand %p238, %p239
    %p241 = pneg %p240
    // Predicated region
    $region37: #{_lambda_.8} parent=5 // pred_check
      _
    $region38: #{_lambda_.8} parent=5 // pred_check_branch
      %243 = sbr.rel (%p240) target = $region40
    $region39: #{_lambda_.8} parent=5 // pred_region
      %s244 = ssub.s32 %s11, 1
      %p245 = scmp.lt.s32.totalorder %s20, 1
      %s246 = scalar_select %p245, %s20, 1
      %p247 = scmp.lt.s32.totalorder %s21, 0
      %s248 = scalar_select %p247, %s21, 0
      %s249 = smul.addr %s246, 32
      %s250 = sadd.s32 %s248, %s249
      %s251 = smul.addr %s250, 4
      %s252 = scalar_lea.vmem %s0, %s251
      %p253 = pneg %p51
      %p254 = pneg %p48
      %p255 = scmp.lt.s32.totalorder %s21, 0
      %s256 = scalar_select %p255, %s21, 0
      %s257 = smul.addr %s256, 8
      %s258 = scalar_lea.vmem %s1, %s257
      %p259 = pneg %p77
      %p260 = pneg %p74
      %p261 = scmp.lt.s32.totalorder %s21, 0
      %s262 = scalar_select %p261, %s21, 0
      %s263 = scalar_lea.vmem %s2, %s262
      %p264 = pneg %p103
      %p265 = pneg %p100
      %p266 = scmp.lt.s32.totalorder %s21, 0
      %s267 = scalar_select %p266, %s21, 0
      %s268 = scalar_lea.vmem %s3, %s267
      %p269 = pneg %p129
      %p270 = pneg %p126
      %p271 = scmp.lt.s32.totalorder %s21, 0
      %s272 = scalar_select %p271, %s21, 0
      %s273 = scalar_lea.vmem %s4, %s272
      %p274 = pneg %p155
      %p275 = pneg %p152
      %p276 = pneg %p183
      %p277 = pneg %p180
      %p278 = scmp.lt.s32.totalorder %s20, 1
      %s279 = scalar_select %p278, %s20, 1
      %p280 = scmp.lt.s32.totalorder %s21, 0
      %s281 = scalar_select %p280, %s21, 0
      %s282 = smul.addr %s279, 32
      %s283 = sadd.s32 %s281, %s282
      %s284 = smul.addr %s283, 4
      %s285 = scalar_lea.vmem %s5, %s284
      %p286 = scmp.lt.s32.totalorder %s20, 1
      %s287 = scalar_select %p286, %s20, 1
      %p288 = scmp.lt.s32.totalorder %s21, 0
      %s289 = scalar_select %p288, %s21, 0
      %s290 = smul.addr %s287, 32
      %s291 = sadd.s32 %s289, %s290
      %s292 = smul.addr %s291, 4
      %s293 = scalar_lea.vmem %s0, %s292
      %p294 = scmp.lt.s32.totalorder %s21, 0
      %s295 = scalar_select %p294, %s21, 0
      %s296 = smul.addr %s295, 8
      %s297 = scalar_lea.vmem %s1, %s296
      %p298 = scmp.lt.s32.totalorder %s21, 0
      %s299 = scalar_select %p298, %s21, 0
      %s300 = scalar_lea.vmem %s2, %s299
      %p301 = scmp.lt.s32.totalorder %s21, 0
      %s302 = scalar_select %p301, %s21, 0
      %s303 = scalar_lea.vmem %s3, %s302
      %p304 = scmp.lt.s32.totalorder %s21, 0
      %s305 = scalar_select %p304, %s21, 0
      %s306 = scalar_lea.vmem %s4, %s305
      %p307 = scmp.lt.s32.totalorder %s20, 1
      %s308 = scalar_select %p307, %s20, 1
      %p309 = scmp.lt.s32.totalorder %s21, 0
      %s310 = scalar_select %p309, %s21, 0
      %s311 = smul.addr %s308, 32
      %s312 = sadd.s32 %s310, %s311
      %s313 = smul.addr %s312, 4
      %s314 = scalar_lea.vmem %s5, %s313
      %vm315 = vcmask 261120
      %316 = vst.msk [vmem:[#allocation2] sm:$0xff] %vm315, 0.0
      %317 = vst.msk [vmem:[#allocation2 + $0x8] sm:$0xff] %vm315, 0.0
      %vm318 = vcmask 254976
      %319 = vst.msk [vmem:[#allocation2 + $0x10] sm:$0x3] %vm318, 0.0
      %s320 = scalar_lea.vmem [#allocation2], 408
      %321 = vst.msk [vmem:[%s320] sm:$0xff] %vm315, 0.0
      %322 = vst.msk [vmem:[%s320 + $0x8] sm:$0xff] %vm315, 0.0
      %323 = vst.msk [vmem:[%s320 + $0x10] sm:$0x3] %vm318, 0.0
      %vm324 = vcmask 253952
      %325 = vst.msk [vmem:[#allocation2] sm:$0x1] %vm324, 0.0
      %326 = vst.msk [vmem:[#allocation2 + $0x18] sm:$0x1] %vm324, 0.0
      %327 = vst.msk [vmem:[#allocation2 + $0x30] sm:$0x1] %vm324, 0.0
      %328 = vst.msk [vmem:[#allocation2 + $0x48] sm:$0x1] %vm324, 0.0
      %329 = vst.msk [vmem:[#allocation2 + $0x60] sm:$0x1] %vm324, 0.0
      %330 = vst.msk [vmem:[#allocation2 + $0x78] sm:$0x1] %vm324, 0.0
      %331 = vst.msk [vmem:[#allocation2 + $0x90] sm:$0x1] %vm324, 0.0
      %332 = vst.msk [vmem:[#allocation2 + $0xa8] sm:$0x1] %vm324, 0.0
      %333 = vst.msk [vmem:[#allocation2 + $0xc0] sm:$0x1] %vm324, 0.0
      %334 = vst.msk [vmem:[#allocation2 + $0xd8] sm:$0x1] %vm324, 0.0
      %335 = vst.msk [vmem:[#allocation2 + $0xf0] sm:$0x1] %vm324, 0.0
      %336 = vst.msk [vmem:[#allocation2 + $0x108] sm:$0x1] %vm324, 0.0
      %337 = vst.msk [vmem:[#allocation2 + $0x120] sm:$0x1] %vm324, 0.0
      %338 = vst.msk [vmem:[#allocation2 + $0x138] sm:$0x1] %vm324, 0.0
      %339 = vst.msk [vmem:[#allocation2 + $0x150] sm:$0x1] %vm324, 0.0
      %340 = vst.msk [vmem:[#allocation2 + $0x168] sm:$0x1] %vm324, 0.0
      %341 = vst.msk [vmem:[#allocation2 + $0x180] sm:$0x1] %vm324, 0.0
      %342 = vst.msk [vmem:[#allocation2 + $0x198] sm:$0x1] %vm324, 0.0
      %343 = vst.msk [vmem:[#allocation2 + $0x11] sm:$0x1] %vm324, 0.0
      %344 = vst.msk [vmem:[#allocation2 + $0x29] sm:$0x1] %vm324, 0.0
      %345 = vst.msk [vmem:[#allocation2 + $0x41] sm:$0x1] %vm324, 0.0
      %346 = vst.msk [vmem:[#allocation2 + $0x59] sm:$0x1] %vm324, 0.0
      %347 = vst.msk [vmem:[#allocation2 + $0x71] sm:$0x1] %vm324, 0.0
      %348 = vst.msk [vmem:[#allocation2 + $0x89] sm:$0x1] %vm324, 0.0
      %349 = vst.msk [vmem:[#allocation2 + $0xa1] sm:$0x1] %vm324, 0.0
      %350 = vst.msk [vmem:[#allocation2 + $0xb9] sm:$0x1] %vm324, 0.0
      %351 = vst.msk [vmem:[#allocation2 + $0xd1] sm:$0x1] %vm324, 0.0
      %352 = vst.msk [vmem:[#allocation2 + $0xe9] sm:$0x1] %vm324, 0.0
      %353 = vst.msk [vmem:[#allocation2 + $0x101] sm:$0x1] %vm324, 0.0
      %354 = vst.msk [vmem:[#allocation2 + $0x119] sm:$0x1] %vm324, 0.0
      %355 = vst.msk [vmem:[#allocation2 + $0x131] sm:$0x1] %vm324, 0.0
      %356 = vst.msk [vmem:[#allocation2 + $0x149] sm:$0x1] %vm324, 0.0
      %357 = vst.msk [vmem:[#allocation2 + $0x161] sm:$0x1] %vm324, 0.0
      %358 = vst.msk [vmem:[#allocation2 + $0x179] sm:$0x1] %vm324, 0.0
      %359 = vst.msk [vmem:[#allocation2 + $0x191] sm:$0x1] %vm324, 0.0
      %360 = vst.msk [vmem:[#allocation2 + $0x1a9] sm:$0x1] %vm324, 0.0
      %v361 = vld [vmem:[%s293] sm:$0xf]
      %v362 = vld [vmem:[%s293 + $0x4] sm:$0xf]
      %v363 = vld [vmem:[%s293 + $0x8] sm:$0xf]
      %v364 = vld [vmem:[%s293 + $0xc] sm:$0xf]
      %v365 = vld [vmem:[%s293 + $0x10] sm:$0xf]
      %v366 = vld [vmem:[%s293 + $0x14] sm:$0xf]
      %v367 = vld [vmem:[%s293 + $0x18] sm:$0xf]
      %v368 = vld [vmem:[%s293 + $0x1c] sm:$0xf]
      %v369 = vld [vmem:[%s293 + $0x20] sm:$0xf]
      %v370 = vld [vmem:[%s293 + $0x24] sm:$0xf]
      %v371 = vld [vmem:[%s293 + $0x28] sm:$0xf]
      %v372 = vld [vmem:[%s293 + $0x2c] sm:$0xf]
      %v373 = vld [vmem:[%s293 + $0x30] sm:$0xf]
      %v374 = vld [vmem:[%s293 + $0x34] sm:$0xf]
      %v375 = vld [vmem:[%s293 + $0x38] sm:$0xf]
      %v376 = vld [vmem:[%s293 + $0x3c] sm:$0xf]
      %v377 = vld [vmem:[%s293 + $0x40] sm:$0xf]
      %v378 = vld [vmem:[%s293 + $0x44] sm:$0xf]
      %v379 = vld [vmem:[%s293 + $0x48] sm:$0xf]
      %v380 = vld [vmem:[%s293 + $0x4c] sm:$0xf]
      %v381 = vld [vmem:[%s293 + $0x50] sm:$0xf]
      %v382 = vld [vmem:[%s293 + $0x54] sm:$0xf]
      %v383 = vld [vmem:[%s293 + $0x58] sm:$0xf]
      %v384 = vld [vmem:[%s293 + $0x5c] sm:$0xf]
      %v385 = vld [vmem:[%s293 + $0x60] sm:$0xf]
      %v386 = vld [vmem:[%s293 + $0x64] sm:$0xf]
      %v387 = vld [vmem:[%s293 + $0x68] sm:$0xf]
      %v388 = vld [vmem:[%s293 + $0x6c] sm:$0xf]
      %v389 = vld [vmem:[%s293 + $0x70] sm:$0xf]
      %v390 = vld [vmem:[%s293 + $0x74] sm:$0xf]
      %v391 = vld [vmem:[%s293 + $0x78] sm:$0xf]
      %v392 = vld [vmem:[%s293 + $0x7c] sm:$0xf]
      %v393 = vunpack.c.l.bf16 %v361
      %v394 = vunpack.c.l.bf16 %v362
      %v395 = vunpack.c.l.bf16 %v363
      %v396 = vunpack.c.l.bf16 %v364
      %v397 = vunpack.c.l.bf16 %v365
      %v398 = vunpack.c.l.bf16 %v366
      %v399 = vunpack.c.l.bf16 %v367
      %v400 = vunpack.c.l.bf16 %v368
      %v401 = vunpack.c.l.bf16 %v369
      %v402 = vunpack.c.l.bf16 %v370
      %v403 = vunpack.c.l.bf16 %v371
      %v404 = vunpack.c.l.bf16 %v372
      %v405 = vunpack.c.l.bf16 %v373
      %v406 = vunpack.c.l.bf16 %v374
      %v407 = vunpack.c.l.bf16 %v375
      %v408 = vunpack.c.l.bf16 %v376
      %v409 = vunpack.c.l.bf16 %v377
      %v410 = vunpack.c.l.bf16 %v378
      %v411 = vunpack.c.l.bf16 %v379
      %v412 = vunpack.c.l.bf16 %v380
      %v413 = vunpack.c.l.bf16 %v381
      %v414 = vunpack.c.l.bf16 %v382
      %v415 = vunpack.c.l.bf16 %v383
      %v416 = vunpack.c.l.bf16 %v384
      %v417 = vunpack.c.l.bf16 %v385
      %v418 = vunpack.c.l.bf16 %v386
      %v419 = vunpack.c.l.bf16 %v387
      %v420 = vunpack.c.l.bf16 %v388
      %v421 = vunpack.c.l.bf16 %v389
      %v422 = vunpack.c.l.bf16 %v390
      %v423 = vunpack.c.l.bf16 %v391
      %v424 = vunpack.c.l.bf16 %v392
      %s425 = scalar_lea.vmem [#allocation2], 24
      %426 = vst.msk [vmem:[%s425 + $0x1] sm:$0xff] %vm315, %v393
      %427 = vst.msk [vmem:[%s425 + $0x9] sm:$0xff] %vm315, %v394
      %428 = vst.msk [vmem:[%s425 + $0x19] sm:$0xff] %vm315, %v395
      %429 = vst.msk [vmem:[%s425 + $0x21] sm:$0xff] %vm315, %v396
      %430 = vst.msk [vmem:[%s425 + $0x31] sm:$0xff] %vm315, %v397
      %431 = vst.msk [vmem:[%s425 + $0x39] sm:$0xff] %vm315, %v398
      %432 = vst.msk [vmem:[%s425 + $0x49] sm:$0xff] %vm315, %v399
      %433 = vst.msk [vmem:[%s425 + $0x51] sm:$0xff] %vm315, %v400
      %434 = vst.msk [vmem:[%s425 + $0x61] sm:$0xff] %vm315, %v401
      %435 = vst.msk [vmem:[%s425 + $0x69] sm:$0xff] %vm315, %v402
      %436 = vst.msk [vmem:[%s425 + $0x79] sm:$0xff] %vm315, %v403
      %437 = vst.msk [vmem:[%s425 + $0x81] sm:$0xff] %vm315, %v404
      %438 = vst.msk [vmem:[%s425 + $0x91] sm:$0xff] %vm315, %v405
      %439 = vst.msk [vmem:[%s425 + $0x99] sm:$0xff] %vm315, %v406
      %440 = vst.msk [vmem:[%s425 + $0xa9] sm:$0xff] %vm315, %v407
      %441 = vst.msk [vmem:[%s425 + $0xb1] sm:$0xff] %vm315, %v408
      %442 = vst.msk [vmem:[%s425 + $0xc1] sm:$0xff] %vm315, %v409
      %443 = vst.msk [vmem:[%s425 + $0xc9] sm:$0xff] %vm315, %v410
      %444 = vst.msk [vmem:[%s425 + $0xd9] sm:$0xff] %vm315, %v411
      %445 = vst.msk [vmem:[%s425 + $0xe1] sm:$0xff] %vm315, %v412
      %446 = vst.msk [vmem:[%s425 + $0xf1] sm:$0xff] %vm315, %v413
      %447 = vst.msk [vmem:[%s425 + $0xf9] sm:$0xff] %vm315, %v414
      %448 = vst.msk [vmem:[%s425 + $0x109] sm:$0xff] %vm315, %v415
      %449 = vst.msk [vmem:[%s425 + $0x111] sm:$0xff] %vm315, %v416
      %450 = vst.msk [vmem:[%s425 + $0x121] sm:$0xff] %vm315, %v417
      %451 = vst.msk [vmem:[%s425 + $0x129] sm:$0xff] %vm315, %v418
      %452 = vst.msk [vmem:[%s425 + $0x139] sm:$0xff] %vm315, %v419
      %453 = vst.msk [vmem:[%s425 + $0x141] sm:$0xff] %vm315, %v420
      %454 = vst.msk [vmem:[%s425 + $0x151] sm:$0xff] %vm315, %v421
      %455 = vst.msk [vmem:[%s425 + $0x159] sm:$0xff] %vm315, %v422
      %456 = vst.msk [vmem:[%s425 + $0x169] sm:$0xff] %vm315, %v423
      %457 = vst.msk [vmem:[%s425 + $0x171] sm:$0xff] %vm315, %v424
      %v458 = vld [vmem:[#allocation2] sm:$0xff]
      %v459 = vld [vmem:[#allocation2 + $0x8] sm:$0xff]
      %v460 = vld [vmem:[#allocation2 + $0x18] sm:$0xff]
      %v461 = vld [vmem:[#allocation2 + $0x20] sm:$0xff]
      %v462 = vld [vmem:[#allocation2 + $0x30] sm:$0xff]
      %v463 = vld [vmem:[#allocation2 + $0x38] sm:$0xff]
      %v464 = vld [vmem:[#allocation2 + $0x48] sm:$0xff]
      %v465 = vld [vmem:[#allocation2 + $0x50] sm:$0xff]
      %v466 = vld [vmem:[#allocation2 + $0x60] sm:$0xff]
      %v467 = vld [vmem:[#allocation2 + $0x68] sm:$0xff]
      %v468 = vld [vmem:[#allocation2 + $0x78] sm:$0xff]
      %v469 = vld [vmem:[#allocation2 + $0x80] sm:$0xff]
      %v470 = vld [vmem:[#allocation2 + $0x90] sm:$0xff]
      %v471 = vld [vmem:[#allocation2 + $0x98] sm:$0xff]
      %v472 = vld [vmem:[#allocation2 + $0xa8] sm:$0xff]
      %v473 = vld [vmem:[#allocation2 + $0xb0] sm:$0xff]
      %v474 = vld [vmem:[#allocation2 + $0xc0] sm:$0xff]
      %v475 = vld [vmem:[#allocation2 + $0xc8] sm:$0xff]
      %v476 = vld [vmem:[#allocation2 + $0xd8] sm:$0xff]
      %v477 = vld [vmem:[#allocation2 + $0xe0] sm:$0xff]
      %v478 = vld [vmem:[#allocation2 + $0xf0] sm:$0xff]
      %v479 = vld [vmem:[#allocation2 + $0xf8] sm:$0xff]
      %v480 = vld [vmem:[#allocation2 + $0x108] sm:$0xff]
      %v481 = vld [vmem:[#allocation2 + $0x110] sm:$0xff]
      %v482 = vld [vmem:[#allocation2 + $0x120] sm:$0xff]
      %v483 = vld [vmem:[#allocation2 + $0x128] sm:$0xff]
      %v484 = vld [vmem:[#allocation2 + $0x138] sm:$0xff]
      %v485 = vld [vmem:[#allocation2 + $0x140] sm:$0xff]
      %v486 = vld [vmem:[#allocation2 + $0x150] sm:$0xff]
      %v487 = vld [vmem:[#allocation2 + $0x158] sm:$0xff]
      %v488 = vld [vmem:[#allocation2 + $0x168] sm:$0xff]
      %v489 = vld [vmem:[#allocation2 + $0x170] sm:$0xff]
      %v490 = vld [vmem:[#allocation2 + $0x180] sm:$0xff]
      %v491 = vld [vmem:[#allocation2 + $0x188] sm:$0xff]
      %v492 = vld [vmem:[#allocation2 + $0x198] sm:$0xff]
      %v493 = vld [vmem:[#allocation2 + $0x1a0] sm:$0xff]
      %v494 = vld [vmem:[%s297] sm:$0x1]
      %v495 = vlaneseq
      %v496 = vshrl.u32 %v495, 7
      %v497 = vsub.s32 0, %v496
      %v498 = vrot.slane %v494, %v497
      %v499 = vmul.f32 %v458, %v498
      %v500 = vmul.f32 %v459, %v498
      %v501 = vmul.f32 %v460, %v498
      %v502 = vmul.f32 %v461, %v498
      %v503 = vmul.f32 %v462, %v498
      %v504 = vmul.f32 %v463, %v498
      %v505 = vmul.f32 %v464, %v498
      %v506 = vmul.f32 %v465, %v498
      %v507 = vmul.f32 %v466, %v498
      %v508 = vmul.f32 %v467, %v498
      %v509 = vmul.f32 %v468, %v498
      %v510 = vmul.f32 %v469, %v498
      %v511 = vmul.f32 %v470, %v498
      %v512 = vmul.f32 %v471, %v498
      %v513 = vmul.f32 %v472, %v498
      %v514 = vmul.f32 %v473, %v498
      %v515 = vmul.f32 %v474, %v498
      %v516 = vmul.f32 %v475, %v498
      %v517 = vmul.f32 %v476, %v498
      %v518 = vmul.f32 %v477, %v498
      %v519 = vmul.f32 %v478, %v498
      %v520 = vmul.f32 %v479, %v498
      %v521 = vmul.f32 %v480, %v498
      %v522 = vmul.f32 %v481, %v498
      %v523 = vmul.f32 %v482, %v498
      %v524 = vmul.f32 %v483, %v498
      %v525 = vmul.f32 %v484, %v498
      %v526 = vmul.f32 %v485, %v498
      %v527 = vmul.f32 %v486, %v498
      %v528 = vmul.f32 %v487, %v498
      %v529 = vmul.f32 %v488, %v498
      %v530 = vmul.f32 %v489, %v498
      %v531 = vld [vmem:[%s297 + $0x3] sm:$0x1]
      %v532 = vlaneseq
      %v533 = vshrl.u32 %v532, 7
      %v534 = vsub.s32 0, %v533
      %v535 = vrot.slane %v531, %v534
      %v536 = vmul.f32 %v460, %v535
      %v537 = vmul.f32 %v461, %v535
      %v538 = vmul.f32 %v462, %v535
      %v539 = vmul.f32 %v463, %v535
      %v540 = vmul.f32 %v464, %v535
      %v541 = vmul.f32 %v465, %v535
      %v542 = vmul.f32 %v466, %v535
      %v543 = vmul.f32 %v467, %v535
      %v544 = vmul.f32 %v468, %v535
      %v545 = vmul.f32 %v469, %v535
      %v546 = vmul.f32 %v470, %v535
      %v547 = vmul.f32 %v471, %v535
      %v548 = vmul.f32 %v472, %v535
      %v549 = vmul.f32 %v473, %v535
      %v550 = vmul.f32 %v474, %v535
      %v551 = vmul.f32 %v475, %v535
      %v552 = vmul.f32 %v476, %v535
      %v553 = vmul.f32 %v477, %v535
      %v554 = vmul.f32 %v478, %v535
      %v555 = vmul.f32 %v479, %v535
      %v556 = vmul.f32 %v480, %v535
      %v557 = vmul.f32 %v481, %v535
      %v558 = vmul.f32 %v482, %v535
      %v559 = vmul.f32 %v483, %v535
      %v560 = vmul.f32 %v484, %v535
      %v561 = vmul.f32 %v485, %v535
      %v562 = vmul.f32 %v486, %v535
      %v563 = vmul.f32 %v487, %v535
      %v564 = vmul.f32 %v488, %v535
      %v565 = vmul.f32 %v489, %v535
      %v566 = vmul.f32 %v490, %v535
      %v567 = vmul.f32 %v491, %v535
      %v568 = vadd.f32 %v499, %v536
      %v569 = vadd.f32 %v500, %v537
      %v570 = vadd.f32 %v501, %v538
      %v571 = vadd.f32 %v502, %v539
      %v572 = vadd.f32 %v503, %v540
      %v573 = vadd.f32 %v504, %v541
      %v574 = vadd.f32 %v505, %v542
      %v575 = vadd.f32 %v506, %v543
      %v576 = vadd.f32 %v507, %v544
      %v577 = vadd.f32 %v508, %v545
      %v578 = vadd.f32 %v509, %v546
      %v579 = vadd.f32 %v510, %v547
      %v580 = vadd.f32 %v511, %v548
      %v581 = vadd.f32 %v512, %v549
      %v582 = vadd.f32 %v513, %v550
      %v583 = vadd.f32 %v514, %v551
      %v584 = vadd.f32 %v515, %v552
      %v585 = vadd.f32 %v516, %v553
      %v586 = vadd.f32 %v517, %v554
      %v587 = vadd.f32 %v518, %v555
      %v588 = vadd.f32 %v519, %v556
      %v589 = vadd.f32 %v520, %v557
      %v590 = vadd.f32 %v521, %v558
      %v591 = vadd.f32 %v522, %v559
      %v592 = vadd.f32 %v523, %v560
      %v593 = vadd.f32 %v524, %v561
      %v594 = vadd.f32 %v525, %v562
      %v595 = vadd.f32 %v526, %v563
      %v596 = vadd.f32 %v527, %v564
      %v597 = vadd.f32 %v528, %v565
      %v598 = vadd.f32 %v529, %v566
      %v599 = vadd.f32 %v530, %v567
      %v600 = vld [vmem:[%s297 + $0x6] sm:$0x1]
      %v601 = vlaneseq
      %v602 = vshrl.u32 %v601, 7
      %v603 = vsub.s32 0, %v602
      %v604 = vrot.slane %v600, %v603
      %v605 = vmul.f32 %v462, %v604
      %v606 = vmul.f32 %v463, %v604
      %v607 = vmul.f32 %v464, %v604
      %v608 = vmul.f32 %v465, %v604
      %v609 = vmul.f32 %v466, %v604
      %v610 = vmul.f32 %v467, %v604
      %v611 = vmul.f32 %v468, %v604
      %v612 = vmul.f32 %v469, %v604
      %v613 = vmul.f32 %v470, %v604
      %v614 = vmul.f32 %v471, %v604
      %v615 = vmul.f32 %v472, %v604
      %v616 = vmul.f32 %v473, %v604
      %v617 = vmul.f32 %v474, %v604
      %v618 = vmul.f32 %v475, %v604
      %v619 = vmul.f32 %v476, %v604
      %v620 = vmul.f32 %v477, %v604
      %v621 = vmul.f32 %v478, %v604
      %v622 = vmul.f32 %v479, %v604
      %v623 = vmul.f32 %v480, %v604
      %v624 = vmul.f32 %v481, %v604
      %v625 = vmul.f32 %v482, %v604
      %v626 = vmul.f32 %v483, %v604
      %v627 = vmul.f32 %v484, %v604
      %v628 = vmul.f32 %v485, %v604
      %v629 = vmul.f32 %v486, %v604
      %v630 = vmul.f32 %v487, %v604
      %v631 = vmul.f32 %v488, %v604
      %v632 = vmul.f32 %v489, %v604
      %v633 = vmul.f32 %v490, %v604
      %v634 = vmul.f32 %v491, %v604
      %v635 = vmul.f32 %v492, %v604
      %v636 = vmul.f32 %v493, %v604
      %v637 = vadd.f32 %v568, %v605
      %v638 = vadd.f32 %v569, %v606
      %v639 = vadd.f32 %v570, %v607
      %v640 = vadd.f32 %v571, %v608
      %v641 = vadd.f32 %v572, %v609
      %v642 = vadd.f32 %v573, %v610
      %v643 = vadd.f32 %v574, %v611
      %v644 = vadd.f32 %v575, %v612
      %v645 = vadd.f32 %v576, %v613
      %v646 = vadd.f32 %v577, %v614
      %v647 = vadd.f32 %v578, %v615
      %v648 = vadd.f32 %v579, %v616
      %v649 = vadd.f32 %v580, %v617
      %v650 = vadd.f32 %v581, %v618
      %v651 = vadd.f32 %v582, %v619
      %v652 = vadd.f32 %v583, %v620
      %v653 = vadd.f32 %v584, %v621
      %v654 = vadd.f32 %v585, %v622
      %v655 = vadd.f32 %v586, %v623
      %v656 = vadd.f32 %v587, %v624
      %v657 = vadd.f32 %v588, %v625
      %v658 = vadd.f32 %v589, %v626
      %v659 = vadd.f32 %v590, %v627
      %v660 = vadd.f32 %v591, %v628
      %v661 = vadd.f32 %v592, %v629
      %v662 = vadd.f32 %v593, %v630
      %v663 = vadd.f32 %v594, %v631
      %v664 = vadd.f32 %v595, %v632
      %v665 = vadd.f32 %v596, %v633
      %v666 = vadd.f32 %v597, %v634
      %v667 = vadd.f32 %v598, %v635
      %v668 = vadd.f32 %v599, %v636
      %v669 = vld [vmem:[#allocation2 + $0x1] sm:$0xff]
      %v670 = vld [vmem:[#allocation2 + $0x9] sm:$0xff]
      %v671 = vld [vmem:[#allocation2 + $0x19] sm:$0xff]
      %v672 = vld [vmem:[#allocation2 + $0x21] sm:$0xff]
      %v673 = vld [vmem:[#allocation2 + $0x31] sm:$0xff]
      %v674 = vld [vmem:[#allocation2 + $0x39] sm:$0xff]
      %v675 = vld [vmem:[#allocation2 + $0x49] sm:$0xff]
      %v676 = vld [vmem:[#allocation2 + $0x51] sm:$0xff]
      %v677 = vld [vmem:[#allocation2 + $0x61] sm:$0xff]
      %v678 = vld [vmem:[#allocation2 + $0x69] sm:$0xff]
      %v679 = vld [vmem:[#allocation2 + $0x79] sm:$0xff]
      %v680 = vld [vmem:[#allocation2 + $0x81] sm:$0xff]
      %v681 = vld [vmem:[#allocation2 + $0x91] sm:$0xff]
      %v682 = vld [vmem:[#allocation2 + $0x99] sm:$0xff]
      %v683 = vld [vmem:[#allocation2 + $0xa9] sm:$0xff]
      %v684 = vld [vmem:[#allocation2 + $0xb1] sm:$0xff]
      %v685 = vld [vmem:[#allocation2 + $0xc1] sm:$0xff]
      %v686 = vld [vmem:[#allocation2 + $0xc9] sm:$0xff]
      %v687 = vld [vmem:[#allocation2 + $0xd9] sm:$0xff]
      %v688 = vld [vmem:[#allocation2 + $0xe1] sm:$0xff]
      %v689 = vld [vmem:[#allocation2 + $0xf1] sm:$0xff]
      %v690 = vld [vmem:[#allocation2 + $0xf9] sm:$0xff]
      %v691 = vld [vmem:[#allocation2 + $0x109] sm:$0xff]
      %v692 = vld [vmem:[#allocation2 + $0x111] sm:$0xff]
      %v693 = vld [vmem:[#allocation2 + $0x121] sm:$0xff]
      %v694 = vld [vmem:[#allocation2 + $0x129] sm:$0xff]
      %v695 = vld [vmem:[#allocation2 + $0x139] sm:$0xff]
      %v696 = vld [vmem:[#allocation2 + $0x141] sm:$0xff]
      %v697 = vld [vmem:[#allocation2 + $0x151] sm:$0xff]
      %v698 = vld [vmem:[#allocation2 + $0x159] sm:$0xff]
      %v699 = vld [vmem:[#allocation2 + $0x169] sm:$0xff]
      %v700 = vld [vmem:[#allocation2 + $0x171] sm:$0xff]
      %v701 = vld [vmem:[#allocation2 + $0x181] sm:$0xff]
      %v702 = vld [vmem:[#allocation2 + $0x189] sm:$0xff]
      %v703 = vld [vmem:[#allocation2 + $0x199] sm:$0xff]
      %v704 = vld [vmem:[#allocation2 + $0x1a1] sm:$0xff]
      %v705 = vld [vmem:[%s297 + $0x1] sm:$0x1]
      %v706 = vlaneseq
      %v707 = vshrl.u32 %v706, 7
      %v708 = vsub.s32 0, %v707
      %v709 = vrot.slane %v705, %v708
      %v710 = vmul.f32 %v669, %v709
      %v711 = vmul.f32 %v670, %v709
      %v712 = vmul.f32 %v671, %v709
      %v713 = vmul.f32 %v672, %v709
      %v714 = vmul.f32 %v673, %v709
      %v715 = vmul.f32 %v674, %v709
      %v716 = vmul.f32 %v675, %v709
      %v717 = vmul.f32 %v676, %v709
      %v718 = vmul.f32 %v677, %v709
      %v719 = vmul.f32 %v678, %v709
      %v720 = vmul.f32 %v679, %v709
      %v721 = vmul.f32 %v680, %v709
      %v722 = vmul.f32 %v681, %v709
      %v723 = vmul.f32 %v682, %v709
      %v724 = vmul.f32 %v683, %v709
      %v725 = vmul.f32 %v684, %v709
      %v726 = vmul.f32 %v685, %v709
      %v727 = vmul.f32 %v686, %v709
      %v728 = vmul.f32 %v687, %v709
      %v729 = vmul.f32 %v688, %v709
      %v730 = vmul.f32 %v689, %v709
      %v731 = vmul.f32 %v690, %v709
      %v732 = vmul.f32 %v691, %v709
      %v733 = vmul.f32 %v692, %v709
      %v734 = vmul.f32 %v693, %v709
      %v735 = vmul.f32 %v694, %v709
      %v736 = vmul.f32 %v695, %v709
      %v737 = vmul.f32 %v696, %v709
      %v738 = vmul.f32 %v697, %v709
      %v739 = vmul.f32 %v698, %v709
      %v740 = vmul.f32 %v699, %v709
      %v741 = vmul.f32 %v700, %v709
      %v742 = vadd.f32 %v637, %v710
      %v743 = vadd.f32 %v638, %v711
      %v744 = vadd.f32 %v639, %v712
      %v745 = vadd.f32 %v640, %v713
      %v746 = vadd.f32 %v641, %v714
      %v747 = vadd.f32 %v642, %v715
      %v748 = vadd.f32 %v643, %v716
      %v749 = vadd.f32 %v644, %v717
      %v750 = vadd.f32 %v645, %v718
      %v751 = vadd.f32 %v646, %v719
      %v752 = vadd.f32 %v647, %v720
      %v753 = vadd.f32 %v648, %v721
      %v754 = vadd.f32 %v649, %v722
      %v755 = vadd.f32 %v650, %v723
      %v756 = vadd.f32 %v651, %v724
      %v757 = vadd.f32 %v652, %v725
      %v758 = vadd.f32 %v653, %v726
      %v759 = vadd.f32 %v654, %v727
      %v760 = vadd.f32 %v655, %v728
      %v761 = vadd.f32 %v656, %v729
      %v762 = vadd.f32 %v657, %v730
      %v763 = vadd.f32 %v658, %v731
      %v764 = vadd.f32 %v659, %v732
      %v765 = vadd.f32 %v660, %v733
      %v766 = vadd.f32 %v661, %v734
      %v767 = vadd.f32 %v662, %v735
      %v768 = vadd.f32 %v663, %v736
      %v769 = vadd.f32 %v664, %v737
      %v770 = vadd.f32 %v665, %v738
      %v771 = vadd.f32 %v666, %v739
      %v772 = vadd.f32 %v667, %v740
      %v773 = vadd.f32 %v668, %v741
      %v774 = vld [vmem:[%s297 + $0x4] sm:$0x1]
      %v775 = vlaneseq
      %v776 = vshrl.u32 %v775, 7
      %v777 = vsub.s32 0, %v776
      %v778 = vrot.slane %v774, %v777
      %v779 = vmul.f32 %v671, %v778
      %v780 = vmul.f32 %v672, %v778
      %v781 = vmul.f32 %v673, %v778
      %v782 = vmul.f32 %v674, %v778
      %v783 = vmul.f32 %v675, %v778
      %v784 = vmul.f32 %v676, %v778
      %v785 = vmul.f32 %v677, %v778
      %v786 = vmul.f32 %v678, %v778
      %v787 = vmul.f32 %v679, %v778
      %v788 = vmul.f32 %v680, %v778
      %v789 = vmul.f32 %v681, %v778
      %v790 = vmul.f32 %v682, %v778
      %v791 = vmul.f32 %v683, %v778
      %v792 = vmul.f32 %v684, %v778
      %v793 = vmul.f32 %v685, %v778
      %v794 = vmul.f32 %v686, %v778
      %v795 = vmul.f32 %v687, %v778
      %v796 = vmul.f32 %v688, %v778
      %v797 = vmul.f32 %v689, %v778
      %v798 = vmul.f32 %v690, %v778
      %v799 = vmul.f32 %v691, %v778
      %v800 = vmul.f32 %v692, %v778
      %v801 = vmul.f32 %v693, %v778
      %v802 = vmul.f32 %v694, %v778
      %v803 = vmul.f32 %v695, %v778
      %v804 = vmul.f32 %v696, %v778
      %v805 = vmul.f32 %v697, %v778
      %v806 = vmul.f32 %v698, %v778
      %v807 = vmul.f32 %v699, %v778
      %v808 = vmul.f32 %v700, %v778
      %v809 = vmul.f32 %v701, %v778
      %v810 = vmul.f32 %v702, %v778
      %v811 = vadd.f32 %v742, %v779
      %v812 = vadd.f32 %v743, %v780
      %v813 = vadd.f32 %v744, %v781
      %v814 = vadd.f32 %v745, %v782
      %v815 = vadd.f32 %v746, %v783
      %v816 = vadd.f32 %v747, %v784
      %v817 = vadd.f32 %v748, %v785
      %v818 = vadd.f32 %v749, %v786
      %v819 = vadd.f32 %v750, %v787
      %v820 = vadd.f32 %v751, %v788
      %v821 = vadd.f32 %v752, %v789
      %v822 = vadd.f32 %v753, %v790
      %v823 = vadd.f32 %v754, %v791
      %v824 = vadd.f32 %v755, %v792
      %v825 = vadd.f32 %v756, %v793
      %v826 = vadd.f32 %v757, %v794
      %v827 = vadd.f32 %v758, %v795
      %v828 = vadd.f32 %v759, %v796
      %v829 = vadd.f32 %v760, %v797
      %v830 = vadd.f32 %v761, %v798
      %v831 = vadd.f32 %v762, %v799
      %v832 = vadd.f32 %v763, %v800
      %v833 = vadd.f32 %v764, %v801
      %v834 = vadd.f32 %v765, %v802
      %v835 = vadd.f32 %v766, %v803
      %v836 = vadd.f32 %v767, %v804
      %v837 = vadd.f32 %v768, %v805
      %v838 = vadd.f32 %v769, %v806
      %v839 = vadd.f32 %v770, %v807
      %v840 = vadd.f32 %v771, %v808
      %v841 = vadd.f32 %v772, %v809
      %v842 = vadd.f32 %v773, %v810
      %v843 = vld [vmem:[%s297 + $0x7] sm:$0x1]
      %v844 = vlaneseq
      %v845 = vshrl.u32 %v844, 7
      %v846 = vsub.s32 0, %v845
      %v847 = vrot.slane %v843, %v846
      %v848 = vmul.f32 %v673, %v847
      %v849 = vmul.f32 %v674, %v847
      %v850 = vmul.f32 %v675, %v847
      %v851 = vmul.f32 %v676, %v847
      %v852 = vmul.f32 %v677, %v847
      %v853 = vmul.f32 %v678, %v847
      %v854 = vmul.f32 %v679, %v847
      %v855 = vmul.f32 %v680, %v847
      %v856 = vmul.f32 %v681, %v847
      %v857 = vmul.f32 %v682, %v847
      %v858 = vmul.f32 %v683, %v847
      %v859 = vmul.f32 %v684, %v847
      %v860 = vmul.f32 %v685, %v847
      %v861 = vmul.f32 %v686, %v847
      %v862 = vmul.f32 %v687, %v847
      %v863 = vmul.f32 %v688, %v847
      %v864 = vmul.f32 %v689, %v847
      %v865 = vmul.f32 %v690, %v847
      %v866 = vmul.f32 %v691, %v847
      %v867 = vmul.f32 %v692, %v847
      %v868 = vmul.f32 %v693, %v847
      %v869 = vmul.f32 %v694, %v847
      %v870 = vmul.f32 %v695, %v847
      %v871 = vmul.f32 %v696, %v847
      %v872 = vmul.f32 %v697, %v847
      %v873 = vmul.f32 %v698, %v847
      %v874 = vmul.f32 %v699, %v847
      %v875 = vmul.f32 %v700, %v847
      %v876 = vmul.f32 %v701, %v847
      %v877 = vmul.f32 %v702, %v847
      %v878 = vmul.f32 %v703, %v847
      %v879 = vmul.f32 %v704, %v847
      %v880 = vadd.f32 %v811, %v848
      %v881 = vadd.f32 %v812, %v849
      %v882 = vadd.f32 %v813, %v850
      %v883 = vadd.f32 %v814, %v851
      %v884 = vadd.f32 %v815, %v852
      %v885 = vadd.f32 %v816, %v853
      %v886 = vadd.f32 %v817, %v854
      %v887 = vadd.f32 %v818, %v855
      %v888 = vadd.f32 %v819, %v856
      %v889 = vadd.f32 %v820, %v857
      %v890 = vadd.f32 %v821, %v858
      %v891 = vadd.f32 %v822, %v859
      %v892 = vadd.f32 %v823, %v860
      %v893 = vadd.f32 %v824, %v861
      %v894 = vadd.f32 %v825, %v862
      %v895 = vadd.f32 %v826, %v863
      %v896 = vadd.f32 %v827, %v864
      %v897 = vadd.f32 %v828, %v865
      %v898 = vadd.f32 %v829, %v866
      %v899 = vadd.f32 %v830, %v867
      %v900 = vadd.f32 %v831, %v868
      %v901 = vadd.f32 %v832, %v869
      %v902 = vadd.f32 %v833, %v870
      %v903 = vadd.f32 %v834, %v871
      %v904 = vadd.f32 %v835, %v872
      %v905 = vadd.f32 %v836, %v873
      %v906 = vadd.f32 %v837, %v874
      %v907 = vadd.f32 %v838, %v875
      %v908 = vadd.f32 %v839, %v876
      %v909 = vadd.f32 %v840, %v877
      %v910 = vadd.f32 %v841, %v878
      %v911 = vadd.f32 %v842, %v879
      %v912 = vld [vmem:[#allocation2 + $0x2] sm:$0xff]
      %v913 = vld [vmem:[#allocation2 + $0xa] sm:$0xff]
      %v914 = vld [vmem:[#allocation2 + $0x1a] sm:$0xff]
      %v915 = vld [vmem:[#allocation2 + $0x22] sm:$0xff]
      %v916 = vld [vmem:[#allocation2 + $0x32] sm:$0xff]
      %v917 = vld [vmem:[#allocation2 + $0x3a] sm:$0xff]
      %v918 = vld [vmem:[#allocation2 + $0x4a] sm:$0xff]
      %v919 = vld [vmem:[#allocation2 + $0x52] sm:$0xff]
      %v920 = vld [vmem:[#allocation2 + $0x62] sm:$0xff]
      %v921 = vld [vmem:[#allocation2 + $0x6a] sm:$0xff]
      %v922 = vld [vmem:[#allocation2 + $0x7a] sm:$0xff]
      %v923 = vld [vmem:[#allocation2 + $0x82] sm:$0xff]
      %v924 = vld [vmem:[#allocation2 + $0x92] sm:$0xff]
      %v925 = vld [vmem:[#allocation2 + $0x9a] sm:$0xff]
      %v926 = vld [vmem:[#allocation2 + $0xaa] sm:$0xff]
      %v927 = vld [vmem:[#allocation2 + $0xb2] sm:$0xff]
      %v928 = vld [vmem:[#allocation2 + $0xc2] sm:$0xff]
      %v929 = vld [vmem:[#allocation2 + $0xca] sm:$0xff]
      %v930 = vld [vmem:[#allocation2 + $0xda] sm:$0xff]
      %v931 = vld [vmem:[#allocation2 + $0xe2] sm:$0xff]
      %v932 = vld [vmem:[#allocation2 + $0xf2] sm:$0xff]
      %v933 = vld [vmem:[#allocation2 + $0xfa] sm:$0xff]
      %v934 = vld [vmem:[#allocation2 + $0x10a] sm:$0xff]
      %v935 = vld [vmem:[#allocation2 + $0x112] sm:$0xff]
      %v936 = vld [vmem:[#allocation2 + $0x122] sm:$0xff]
      %v937 = vld [vmem:[#allocation2 + $0x12a] sm:$0xff]
      %v938 = vld [vmem:[#allocation2 + $0x13a] sm:$0xff]
      %v939 = vld [vmem:[#allocation2 + $0x142] sm:$0xff]
      %v940 = vld [vmem:[#allocation2 + $0x152] sm:$0xff]
      %v941 = vld [vmem:[#allocation2 + $0x15a] sm:$0xff]
      %v942 = vld [vmem:[#allocation2 + $0x16a] sm:$0xff]
      %v943 = vld [vmem:[#allocation2 + $0x172] sm:$0xff]
      %v944 = vld [vmem:[#allocation2 + $0x182] sm:$0xff]
      %v945 = vld [vmem:[#allocation2 + $0x18a] sm:$0xff]
      %v946 = vld [vmem:[#allocation2 + $0x19a] sm:$0xff]
      %v947 = vld [vmem:[#allocation2 + $0x1a2] sm:$0xff]
      %v948 = vld [vmem:[%s297 + $0x2] sm:$0x1]
      %v949 = vlaneseq
      %v950 = vshrl.u32 %v949, 7
      %v951 = vsub.s32 0, %v950
      %v952 = vrot.slane %v948, %v951
      %v953 = vmul.f32 %v912, %v952
      %v954 = vmul.f32 %v913, %v952
      %v955 = vmul.f32 %v914, %v952
      %v956 = vmul.f32 %v915, %v952
      %v957 = vmul.f32 %v916, %v952
      %v958 = vmul.f32 %v917, %v952
      %v959 = vmul.f32 %v918, %v952
      %v960 = vmul.f32 %v919, %v952
      %v961 = vmul.f32 %v920, %v952
      %v962 = vmul.f32 %v921, %v952
      %v963 = vmul.f32 %v922, %v952
      %v964 = vmul.f32 %v923, %v952
      %v965 = vmul.f32 %v924, %v952
      %v966 = vmul.f32 %v925, %v952
      %v967 = vmul.f32 %v926, %v952
      %v968 = vmul.f32 %v927, %v952
      %v969 = vmul.f32 %v928, %v952
      %v970 = vmul.f32 %v929, %v952
      %v971 = vmul.f32 %v930, %v952
      %v972 = vmul.f32 %v931, %v952
      %v973 = vmul.f32 %v932, %v952
      %v974 = vmul.f32 %v933, %v952
      %v975 = vmul.f32 %v934, %v952
      %v976 = vmul.f32 %v935, %v952
      %v977 = vmul.f32 %v936, %v952
      %v978 = vmul.f32 %v937, %v952
      %v979 = vmul.f32 %v938, %v952
      %v980 = vmul.f32 %v939, %v952
      %v981 = vmul.f32 %v940, %v952
      %v982 = vmul.f32 %v941, %v952
      %v983 = vmul.f32 %v942, %v952
      %v984 = vmul.f32 %v943, %v952
      %v985 = vadd.f32 %v880, %v953
      %v986 = vadd.f32 %v881, %v954
      %v987 = vadd.f32 %v882, %v955
      %v988 = vadd.f32 %v883, %v956
      %v989 = vadd.f32 %v884, %v957
      %v990 = vadd.f32 %v885, %v958
      %v991 = vadd.f32 %v886, %v959
      %v992 = vadd.f32 %v887, %v960
      %v993 = vadd.f32 %v888, %v961
      %v994 = vadd.f32 %v889, %v962
      %v995 = vadd.f32 %v890, %v963
      %v996 = vadd.f32 %v891, %v964
      %v997 = vadd.f32 %v892, %v965
      %v998 = vadd.f32 %v893, %v966
      %v999 = vadd.f32 %v894, %v967
      %v1000 = vadd.f32 %v895, %v968
      %v1001 = vadd.f32 %v896, %v969
      %v1002 = vadd.f32 %v897, %v970
      %v1003 = vadd.f32 %v898, %v971
      %v1004 = vadd.f32 %v899, %v972
      %v1005 = vadd.f32 %v900, %v973
      %v1006 = vadd.f32 %v901, %v974
      %v1007 = vadd.f32 %v902, %v975
      %v1008 = vadd.f32 %v903, %v976
      %v1009 = vadd.f32 %v904, %v977
      %v1010 = vadd.f32 %v905, %v978
      %v1011 = vadd.f32 %v906, %v979
      %v1012 = vadd.f32 %v907, %v980
      %v1013 = vadd.f32 %v908, %v981
      %v1014 = vadd.f32 %v909, %v982
      %v1015 = vadd.f32 %v910, %v983
      %v1016 = vadd.f32 %v911, %v984
      %v1017 = vld [vmem:[%s297 + $0x5] sm:$0x1]
      %v1018 = vlaneseq
      %v1019 = vshrl.u32 %v1018, 7
      %v1020 = vsub.s32 0, %v1019
      %v1021 = vrot.slane %v1017, %v1020
      %v1022 = vmul.f32 %v914, %v1021
      %v1023 = vmul.f32 %v915, %v1021
      %v1024 = vmul.f32 %v916, %v1021
      %v1025 = vmul.f32 %v917, %v1021
      %v1026 = vmul.f32 %v918, %v1021
      %v1027 = vmul.f32 %v919, %v1021
      %v1028 = vmul.f32 %v920, %v1021
      %v1029 = vmul.f32 %v921, %v1021
      %v1030 = vmul.f32 %v922, %v1021
      %v1031 = vmul.f32 %v923, %v1021
      %v1032 = vmul.f32 %v924, %v1021
      %v1033 = vmul.f32 %v925, %v1021
      %v1034 = vmul.f32 %v926, %v1021
      %v1035 = vmul.f32 %v927, %v1021
      %v1036 = vmul.f32 %v928, %v1021
      %v1037 = vmul.f32 %v929, %v1021
      %v1038 = vmul.f32 %v930, %v1021
      %v1039 = vmul.f32 %v931, %v1021
      %v1040 = vmul.f32 %v932, %v1021
      %v1041 = vmul.f32 %v933, %v1021
      %v1042 = vmul.f32 %v934, %v1021
      %v1043 = vmul.f32 %v935, %v1021
      %v1044 = vmul.f32 %v936, %v1021
      %v1045 = vmul.f32 %v937, %v1021
      %v1046 = vmul.f32 %v938, %v1021
      %v1047 = vmul.f32 %v939, %v1021
      %v1048 = vmul.f32 %v940, %v1021
      %v1049 = vmul.f32 %v941, %v1021
      %v1050 = vmul.f32 %v942, %v1021
      %v1051 = vmul.f32 %v943, %v1021
      %v1052 = vmul.f32 %v944, %v1021
      %v1053 = vmul.f32 %v945, %v1021
      %v1054 = vadd.f32 %v985, %v1022
      %v1055 = vadd.f32 %v986, %v1023
      %v1056 = vadd.f32 %v987, %v1024
      %v1057 = vadd.f32 %v988, %v1025
      %v1058 = vadd.f32 %v989, %v1026
      %v1059 = vadd.f32 %v990, %v1027
      %v1060 = vadd.f32 %v991, %v1028
      %v1061 = vadd.f32 %v992, %v1029
      %v1062 = vadd.f32 %v993, %v1030
      %v1063 = vadd.f32 %v994, %v1031
      %v1064 = vadd.f32 %v995, %v1032
      %v1065 = vadd.f32 %v996, %v1033
      %v1066 = vadd.f32 %v997, %v1034
      %v1067 = vadd.f32 %v998, %v1035
      %v1068 = vadd.f32 %v999, %v1036
      %v1069 = vadd.f32 %v1000, %v1037
      %v1070 = vadd.f32 %v1001, %v1038
      %v1071 = vadd.f32 %v1002, %v1039
      %v1072 = vadd.f32 %v1003, %v1040
      %v1073 = vadd.f32 %v1004, %v1041
      %v1074 = vadd.f32 %v1005, %v1042
      %v1075 = vadd.f32 %v1006, %v1043
      %v1076 = vadd.f32 %v1007, %v1044
      %v1077 = vadd.f32 %v1008, %v1045
      %v1078 = vadd.f32 %v1009, %v1046
      %v1079 = vadd.f32 %v1010, %v1047
      %v1080 = vadd.f32 %v1011, %v1048
      %v1081 = vadd.f32 %v1012, %v1049
      %v1082 = vadd.f32 %v1013, %v1050
      %v1083 = vadd.f32 %v1014, %v1051
      %v1084 = vadd.f32 %v1015, %v1052
      %v1085 = vadd.f32 %v1016, %v1053
      %v1086 = vld [vmem:[%s297 + $0x8] sm:$0x1]
      %v1087 = vlaneseq
      %v1088 = vshrl.u32 %v1087, 7
      %v1089 = vsub.s32 0, %v1088
      %v1090 = vrot.slane %v1086, %v1089
      %v1091 = vmul.f32 %v916, %v1090
      %v1092 = vmul.f32 %v917, %v1090
      %v1093 = vmul.f32 %v918, %v1090
      %v1094 = vmul.f32 %v919, %v1090
      %v1095 = vmul.f32 %v920, %v1090
      %v1096 = vmul.f32 %v921, %v1090
      %v1097 = vmul.f32 %v922, %v1090
      %v1098 = vmul.f32 %v923, %v1090
      %v1099 = vmul.f32 %v924, %v1090
      %v1100 = vmul.f32 %v925, %v1090
      %v1101 = vmul.f32 %v926, %v1090
      %v1102 = vmul.f32 %v927, %v1090
      %v1103 = vmul.f32 %v928, %v1090
      %v1104 = vmul.f32 %v929, %v1090
      %v1105 = vmul.f32 %v930, %v1090
      %v1106 = vmul.f32 %v931, %v1090
      %v1107 = vmul.f32 %v932, %v1090
      %v1108 = vmul.f32 %v933, %v1090
      %v1109 = vmul.f32 %v934, %v1090
      %v1110 = vmul.f32 %v935, %v1090
      %v1111 = vmul.f32 %v936, %v1090
      %v1112 = vmul.f32 %v937, %v1090
      %v1113 = vmul.f32 %v938, %v1090
      %v1114 = vmul.f32 %v939, %v1090
      %v1115 = vmul.f32 %v940, %v1090
      %v1116 = vmul.f32 %v941, %v1090
      %v1117 = vmul.f32 %v942, %v1090
      %v1118 = vmul.f32 %v943, %v1090
      %v1119 = vmul.f32 %v944, %v1090
      %v1120 = vmul.f32 %v945, %v1090
      %v1121 = vmul.f32 %v946, %v1090
      %v1122 = vmul.f32 %v947, %v1090
      %v1123 = vadd.f32 %v1054, %v1091
      %v1124 = vadd.f32 %v1055, %v1092
      %v1125 = vadd.f32 %v1056, %v1093
      %v1126 = vadd.f32 %v1057, %v1094
      %v1127 = vadd.f32 %v1058, %v1095
      %v1128 = vadd.f32 %v1059, %v1096
      %v1129 = vadd.f32 %v1060, %v1097
      %v1130 = vadd.f32 %v1061, %v1098
      %v1131 = vadd.f32 %v1062, %v1099
      %v1132 = vadd.f32 %v1063, %v1100
      %v1133 = vadd.f32 %v1064, %v1101
      %v1134 = vadd.f32 %v1065, %v1102
      %v1135 = vadd.f32 %v1066, %v1103
      %v1136 = vadd.f32 %v1067, %v1104
      %v1137 = vadd.f32 %v1068, %v1105
      %v1138 = vadd.f32 %v1069, %v1106
      %v1139 = vadd.f32 %v1070, %v1107
      %v1140 = vadd.f32 %v1071, %v1108
      %v1141 = vadd.f32 %v1072, %v1109
      %v1142 = vadd.f32 %v1073, %v1110
      %v1143 = vadd.f32 %v1074, %v1111
      %v1144 = vadd.f32 %v1075, %v1112
      %v1145 = vadd.f32 %v1076, %v1113
      %v1146 = vadd.f32 %v1077, %v1114
      %v1147 = vadd.f32 %v1078, %v1115
      %v1148 = vadd.f32 %v1079, %v1116
      %v1149 = vadd.f32 %v1080, %v1117
      %v1150 = vadd.f32 %v1081, %v1118
      %v1151 = vadd.f32 %v1082, %v1119
      %v1152 = vadd.f32 %v1083, %v1120
      %v1153 = vadd.f32 %v1084, %v1121
      %v1154 = vadd.f32 %v1085, %v1122
      %v1155 = vld [vmem:[%s300] sm:$0x1]
      %v1157 = vlaneseq
      %v1158 = vshrl.u32 %v1157, 7
      %v1159 = vsub.s32 0, %v1158
      %v1160 = vrot.slane %v1155, %v1159
      %v1162 = vadd.f32 %v1123, %v1160
      %v1163 = vadd.f32 %v1124, %v1160
      %v1164 = vadd.f32 %v1125, %v1160
      %v1165 = vadd.f32 %v1126, %v1160
      %v1166 = vadd.f32 %v1127, %v1160
      %v1167 = vadd.f32 %v1128, %v1160
      %v1168 = vadd.f32 %v1129, %v1160
      %v1169 = vadd.f32 %v1130, %v1160
      %v1170 = vadd.f32 %v1131, %v1160
      %v1171 = vadd.f32 %v1132, %v1160
      %v1172 = vadd.f32 %v1133, %v1160
      %v1173 = vadd.f32 %v1134, %v1160
      %v1174 = vadd.f32 %v1135, %v1160
      %v1175 = vadd.f32 %v1136, %v1160
      %v1176 = vadd.f32 %v1137, %v1160
      %v1177 = vadd.f32 %v1138, %v1160
      %v1178 = vadd.f32 %v1139, %v1160
      %v1179 = vadd.f32 %v1140, %v1160
      %v1180 = vadd.f32 %v1141, %v1160
      %v1181 = vadd.f32 %v1142, %v1160
      %v1182 = vadd.f32 %v1143, %v1160
      %v1183 = vadd.f32 %v1144, %v1160
      %v1184 = vadd.f32 %v1145, %v1160
      %v1185 = vadd.f32 %v1146, %v1160
      %v1186 = vadd.f32 %v1147, %v1160
      %v1187 = vadd.f32 %v1148, %v1160
      %v1188 = vadd.f32 %v1149, %v1160
      %v1189 = vadd.f32 %v1150, %v1160
      %v1190 = vadd.f32 %v1151, %v1160
      %v1191 = vadd.f32 %v1152, %v1160
      %v1192 = vadd.f32 %v1153, %v1160
      %v1193 = vadd.f32 %v1154, %v1160
      %v1194 = vsel %vm315, %v1162, 0.0
      %1195 = vadd.xlane.f32.xlu0 %v1194
      %v1196 = vpop.xlane.xlu0 %1195
      %v1197 = vsel %vm315, %v1163, 0.0
      %1198 = vadd.xlane.f32.xlu0 %v1197
      %v1199 = vpop.xlane.xlu0 %1198
      %v1200 = vsel %vm315, %v1164, 0.0
      %1201 = vadd.xlane.f32.xlu0 %v1200
      %v1202 = vpop.xlane.xlu0 %1201
      %v1203 = vsel %vm315, %v1165, 0.0
      %1204 = vadd.xlane.f32.xlu0 %v1203
      %v1205 = vpop.xlane.xlu0 %1204
      %v1206 = vsel %vm315, %v1166, 0.0
      %1207 = vadd.xlane.f32.xlu0 %v1206
      %v1208 = vpop.xlane.xlu0 %1207
      %v1209 = vsel %vm315, %v1167, 0.0
      %1210 = vadd.xlane.f32.xlu0 %v1209
      %v1211 = vpop.xlane.xlu0 %1210
      %v1212 = vsel %vm315, %v1168, 0.0
      %1213 = vadd.xlane.f32.xlu0 %v1212
      %v1214 = vpop.xlane.xlu0 %1213
      %v1215 = vsel %vm315, %v1169, 0.0
      %1216 = vadd.xlane.f32.xlu0 %v1215
      %v1217 = vpop.xlane.xlu0 %1216
      %v1218 = vsel %vm315, %v1170, 0.0
      %1219 = vadd.xlane.f32.xlu0 %v1218
      %v1220 = vpop.xlane.xlu0 %1219
      %v1221 = vsel %vm315, %v1171, 0.0
      %1222 = vadd.xlane.f32.xlu0 %v1221
      %v1223 = vpop.xlane.xlu0 %1222
      %v1224 = vsel %vm315, %v1172, 0.0
      %1225 = vadd.xlane.f32.xlu0 %v1224
      %v1226 = vpop.xlane.xlu0 %1225
      %v1227 = vsel %vm315, %v1173, 0.0
      %1228 = vadd.xlane.f32.xlu0 %v1227
      %v1229 = vpop.xlane.xlu0 %1228
      %v1230 = vsel %vm315, %v1174, 0.0
      %1231 = vadd.xlane.f32.xlu0 %v1230
      %v1232 = vpop.xlane.xlu0 %1231
      %v1233 = vsel %vm315, %v1175, 0.0
      %1234 = vadd.xlane.f32.xlu0 %v1233
      %v1235 = vpop.xlane.xlu0 %1234
      %v1236 = vsel %vm315, %v1176, 0.0
      %1237 = vadd.xlane.f32.xlu0 %v1236
      %v1238 = vpop.xlane.xlu0 %1237
      %v1239 = vsel %vm315, %v1177, 0.0
      %1240 = vadd.xlane.f32.xlu0 %v1239
      %v1241 = vpop.xlane.xlu0 %1240
      %v1242 = vsel %vm315, %v1178, 0.0
      %1243 = vadd.xlane.f32.xlu0 %v1242
      %v1244 = vpop.xlane.xlu0 %1243
      %v1245 = vsel %vm315, %v1179, 0.0
      %1246 = vadd.xlane.f32.xlu0 %v1245
      %v1247 = vpop.xlane.xlu0 %1246
      %v1248 = vsel %vm315, %v1180, 0.0
      %1249 = vadd.xlane.f32.xlu0 %v1248
      %v1250 = vpop.xlane.xlu0 %1249
      %v1251 = vsel %vm315, %v1181, 0.0
      %1252 = vadd.xlane.f32.xlu0 %v1251
      %v1253 = vpop.xlane.xlu0 %1252
      %v1254 = vsel %vm315, %v1182, 0.0
      %1255 = vadd.xlane.f32.xlu0 %v1254
      %v1256 = vpop.xlane.xlu0 %1255
      %v1257 = vsel %vm315, %v1183, 0.0
      %1258 = vadd.xlane.f32.xlu0 %v1257
      %v1259 = vpop.xlane.xlu0 %1258
      %v1260 = vsel %vm315, %v1184, 0.0
      %1261 = vadd.xlane.f32.xlu0 %v1260
      %v1262 = vpop.xlane.xlu0 %1261
      %v1263 = vsel %vm315, %v1185, 0.0
      %1264 = vadd.xlane.f32.xlu0 %v1263
      %v1265 = vpop.xlane.xlu0 %1264
      %v1266 = vsel %vm315, %v1186, 0.0
      %1267 = vadd.xlane.f32.xlu0 %v1266
      %v1268 = vpop.xlane.xlu0 %1267
      %v1269 = vsel %vm315, %v1187, 0.0
      %1270 = vadd.xlane.f32.xlu0 %v1269
      %v1271 = vpop.xlane.xlu0 %1270
      %v1272 = vsel %vm315, %v1188, 0.0
      %1273 = vadd.xlane.f32.xlu0 %v1272
      %v1274 = vpop.xlane.xlu0 %1273
      %v1275 = vsel %vm315, %v1189, 0.0
      %1276 = vadd.xlane.f32.xlu0 %v1275
      %v1277 = vpop.xlane.xlu0 %1276
      %v1278 = vsel %vm315, %v1190, 0.0
      %1279 = vadd.xlane.f32.xlu0 %v1278
      %v1280 = vpop.xlane.xlu0 %1279
      %v1281 = vsel %vm315, %v1191, 0.0
      %1282 = vadd.xlane.f32.xlu0 %v1281
      %v1283 = vpop.xlane.xlu0 %1282
      %v1284 = vsel %vm315, %v1192, 0.0
      %1285 = vadd.xlane.f32.xlu0 %v1284
      %v1286 = vpop.xlane.xlu0 %1285
      %v1287 = vsel %vm315, %v1193, 0.0
      %1288 = vadd.xlane.f32.xlu0 %v1287
      %v1289 = vpop.xlane.xlu0 %1288
      %v1290 = vrcp.pop 32.0
      %v1291 = vmul.f32 %v1196, %v1290
      %v1292 = vmul.f32 %v1199, %v1290
      %v1293 = vmul.f32 %v1202, %v1290
      %v1294 = vmul.f32 %v1205, %v1290
      %v1295 = vmul.f32 %v1208, %v1290
      %v1296 = vmul.f32 %v1211, %v1290
      %v1297 = vmul.f32 %v1214, %v1290
      %v1298 = vmul.f32 %v1217, %v1290
      %v1299 = vmul.f32 %v1220, %v1290
      %v1300 = vmul.f32 %v1223, %v1290
      %v1301 = vmul.f32 %v1226, %v1290
      %v1302 = vmul.f32 %v1229, %v1290
      %v1303 = vmul.f32 %v1232, %v1290
      %v1304 = vmul.f32 %v1235, %v1290
      %v1305 = vmul.f32 %v1238, %v1290
      %v1306 = vmul.f32 %v1241, %v1290
      %v1307 = vmul.f32 %v1244, %v1290
      %v1308 = vmul.f32 %v1247, %v1290
      %v1309 = vmul.f32 %v1250, %v1290
      %v1310 = vmul.f32 %v1253, %v1290
      %v1311 = vmul.f32 %v1256, %v1290
      %v1312 = vmul.f32 %v1259, %v1290
      %v1313 = vmul.f32 %v1262, %v1290
      %v1314 = vmul.f32 %v1265, %v1290
      %v1315 = vmul.f32 %v1268, %v1290
      %v1316 = vmul.f32 %v1271, %v1290
      %v1317 = vmul.f32 %v1274, %v1290
      %v1318 = vmul.f32 %v1277, %v1290
      %v1319 = vmul.f32 %v1280, %v1290
      %v1320 = vmul.f32 %v1283, %v1290
      %v1321 = vmul.f32 %v1286, %v1290
      %v1322 = vmul.f32 %v1289, %v1290
      %v1323 = vsub.f32 %v1162, %v1291
      %v1324 = vsub.f32 %v1163, %v1292
      %v1325 = vsub.f32 %v1164, %v1293
      %v1326 = vsub.f32 %v1165, %v1294
      %v1327 = vsub.f32 %v1166, %v1295
      %v1328 = vsub.f32 %v1167, %v1296
      %v1329 = vsub.f32 %v1168, %v1297
      %v1330 = vsub.f32 %v1169, %v1298
      %v1331 = vsub.f32 %v1170, %v1299
      %v1332 = vsub.f32 %v1171, %v1300
      %v1333 = vsub.f32 %v1172, %v1301
      %v1334 = vsub.f32 %v1173, %v1302
      %v1335 = vsub.f32 %v1174, %v1303
      %v1336 = vsub.f32 %v1175, %v1304
      %v1337 = vsub.f32 %v1176, %v1305
      %v1338 = vsub.f32 %v1177, %v1306
      %v1339 = vsub.f32 %v1178, %v1307
      %v1340 = vsub.f32 %v1179, %v1308
      %v1341 = vsub.f32 %v1180, %v1309
      %v1342 = vsub.f32 %v1181, %v1310
      %v1343 = vsub.f32 %v1182, %v1311
      %v1344 = vsub.f32 %v1183, %v1312
      %v1345 = vsub.f32 %v1184, %v1313
      %v1346 = vsub.f32 %v1185, %v1314
      %v1347 = vsub.f32 %v1186, %v1315
      %v1348 = vsub.f32 %v1187, %v1316
      %v1349 = vsub.f32 %v1188, %v1317
      %v1350 = vsub.f32 %v1189, %v1318
      %v1351 = vsub.f32 %v1190, %v1319
      %v1352 = vsub.f32 %v1191, %v1320
      %v1353 = vsub.f32 %v1192, %v1321
      %v1354 = vsub.f32 %v1193, %v1322
      %v1355 = vmul.f32 %v1323, %v1323
      %v1356 = vmul.f32 %v1324, %v1324
      %v1357 = vmul.f32 %v1325, %v1325
      %v1358 = vmul.f32 %v1326, %v1326
      %v1359 = vmul.f32 %v1327, %v1327
      %v1360 = vmul.f32 %v1328, %v1328
      %v1361 = vmul.f32 %v1329, %v1329
      %v1362 = vmul.f32 %v1330, %v1330
      %v1363 = vmul.f32 %v1331, %v1331
      %v1364 = vmul.f32 %v1332, %v1332
      %v1365 = vmul.f32 %v1333, %v1333
      %v1366 = vmul.f32 %v1334, %v1334
      %v1367 = vmul.f32 %v1335, %v1335
      %v1368 = vmul.f32 %v1336, %v1336
      %v1369 = vmul.f32 %v1337, %v1337
      %v1370 = vmul.f32 %v1338, %v1338
      %v1371 = vmul.f32 %v1339, %v1339
      %v1372 = vmul.f32 %v1340, %v1340
      %v1373 = vmul.f32 %v1341, %v1341
      %v1374 = vmul.f32 %v1342, %v1342
      %v1375 = vmul.f32 %v1343, %v1343
      %v1376 = vmul.f32 %v1344, %v1344
      %v1377 = vmul.f32 %v1345, %v1345
      %v1378 = vmul.f32 %v1346, %v1346
      %v1379 = vmul.f32 %v1347, %v1347
      %v1380 = vmul.f32 %v1348, %v1348
      %v1381 = vmul.f32 %v1349, %v1349
      %v1382 = vmul.f32 %v1350, %v1350
      %v1383 = vmul.f32 %v1351, %v1351
      %v1384 = vmul.f32 %v1352, %v1352
      %v1385 = vmul.f32 %v1353, %v1353
      %v1386 = vmul.f32 %v1354, %v1354
      %v1387 = vsel %vm315, %v1355, 0.0
      %1388 = vadd.xlane.f32.xlu0 %v1387
      %v1389 = vpop.xlane.xlu0 %1388
      %v1390 = vsel %vm315, %v1356, 0.0
      %1391 = vadd.xlane.f32.xlu0 %v1390
      %v1392 = vpop.xlane.xlu0 %1391
      %v1393 = vsel %vm315, %v1357, 0.0
      %1394 = vadd.xlane.f32.xlu0 %v1393
      %v1395 = vpop.xlane.xlu0 %1394
      %v1396 = vsel %vm315, %v1358, 0.0
      %1397 = vadd.xlane.f32.xlu0 %v1396
      %v1398 = vpop.xlane.xlu0 %1397
      %v1399 = vsel %vm315, %v1359, 0.0
      %1400 = vadd.xlane.f32.xlu0 %v1399
      %v1401 = vpop.xlane.xlu0 %1400
      %v1402 = vsel %vm315, %v1360, 0.0
      %1403 = vadd.xlane.f32.xlu0 %v1402
      %v1404 = vpop.xlane.xlu0 %1403
      %v1405 = vsel %vm315, %v1361, 0.0
      %1406 = vadd.xlane.f32.xlu0 %v1405
      %v1407 = vpop.xlane.xlu0 %1406
      %v1408 = vsel %vm315, %v1362, 0.0
      %1409 = vadd.xlane.f32.xlu0 %v1408
      %v1410 = vpop.xlane.xlu0 %1409
      %v1411 = vsel %vm315, %v1363, 0.0
      %1412 = vadd.xlane.f32.xlu0 %v1411
      %v1413 = vpop.xlane.xlu0 %1412
      %v1414 = vsel %vm315, %v1364, 0.0
      %1415 = vadd.xlane.f32.xlu0 %v1414
      %v1416 = vpop.xlane.xlu0 %1415
      %v1417 = vsel %vm315, %v1365, 0.0
      %1418 = vadd.xlane.f32.xlu0 %v1417
      %v1419 = vpop.xlane.xlu0 %1418
      %v1420 = vsel %vm315, %v1366, 0.0
      %1421 = vadd.xlane.f32.xlu0 %v1420
      %v1422 = vpop.xlane.xlu0 %1421
      %v1423 = vsel %vm315, %v1367, 0.0
      %1424 = vadd.xlane.f32.xlu0 %v1423
      %v1425 = vpop.xlane.xlu0 %1424
      %v1426 = vsel %vm315, %v1368, 0.0
      %1427 = vadd.xlane.f32.xlu0 %v1426
      %v1428 = vpop.xlane.xlu0 %1427
      %v1429 = vsel %vm315, %v1369, 0.0
      %1430 = vadd.xlane.f32.xlu0 %v1429
      %v1431 = vpop.xlane.xlu0 %1430
      %v1432 = vsel %vm315, %v1370, 0.0
      %1433 = vadd.xlane.f32.xlu0 %v1432
      %v1434 = vpop.xlane.xlu0 %1433
      %v1435 = vsel %vm315, %v1371, 0.0
      %1436 = vadd.xlane.f32.xlu0 %v1435
      %v1437 = vpop.xlane.xlu0 %1436
      %v1438 = vsel %vm315, %v1372, 0.0
      %1439 = vadd.xlane.f32.xlu0 %v1438
      %v1440 = vpop.xlane.xlu0 %1439
      %v1441 = vsel %vm315, %v1373, 0.0
      %1442 = vadd.xlane.f32.xlu0 %v1441
      %v1443 = vpop.xlane.xlu0 %1442
      %v1444 = vsel %vm315, %v1374, 0.0
      %1445 = vadd.xlane.f32.xlu0 %v1444
      %v1446 = vpop.xlane.xlu0 %1445
      %v1447 = vsel %vm315, %v1375, 0.0
      %1448 = vadd.xlane.f32.xlu0 %v1447
      %v1449 = vpop.xlane.xlu0 %1448
      %v1450 = vsel %vm315, %v1376, 0.0
      %1451 = vadd.xlane.f32.xlu0 %v1450
      %v1452 = vpop.xlane.xlu0 %1451
      %v1453 = vsel %vm315, %v1377, 0.0
      %1454 = vadd.xlane.f32.xlu0 %v1453
      %v1455 = vpop.xlane.xlu0 %1454
      %v1456 = vsel %vm315, %v1378, 0.0
      %1457 = vadd.xlane.f32.xlu0 %v1456
      %v1458 = vpop.xlane.xlu0 %1457
      %v1459 = vsel %vm315, %v1379, 0.0
      %1460 = vadd.xlane.f32.xlu0 %v1459
      %v1461 = vpop.xlane.xlu0 %1460
      %v1462 = vsel %vm315, %v1380, 0.0
      %1463 = vadd.xlane.f32.xlu0 %v1462
      %v1464 = vpop.xlane.xlu0 %1463
      %v1465 = vsel %vm315, %v1381, 0.0
      %1466 = vadd.xlane.f32.xlu0 %v1465
      %v1467 = vpop.xlane.xlu0 %1466
      %v1468 = vsel %vm315, %v1382, 0.0
      %1469 = vadd.xlane.f32.xlu0 %v1468
      %v1470 = vpop.xlane.xlu0 %1469
      %v1471 = vsel %vm315, %v1383, 0.0
      %1472 = vadd.xlane.f32.xlu0 %v1471
      %v1473 = vpop.xlane.xlu0 %1472
      %v1474 = vsel %vm315, %v1384, 0.0
      %1475 = vadd.xlane.f32.xlu0 %v1474
      %v1476 = vpop.xlane.xlu0 %1475
      %v1477 = vsel %vm315, %v1385, 0.0
      %1478 = vadd.xlane.f32.xlu0 %v1477
      %v1479 = vpop.xlane.xlu0 %1478
      %v1480 = vsel %vm315, %v1386, 0.0
      %1481 = vadd.xlane.f32.xlu0 %v1480
      %v1482 = vpop.xlane.xlu0 %1481
      %v1483 = vmul.f32 %v1389, %v1290
      %v1484 = vmul.f32 %v1392, %v1290
      %v1485 = vmul.f32 %v1395, %v1290
      %v1486 = vmul.f32 %v1398, %v1290
      %v1487 = vmul.f32 %v1401, %v1290
      %v1488 = vmul.f32 %v1404, %v1290
      %v1489 = vmul.f32 %v1407, %v1290
      %v1490 = vmul.f32 %v1410, %v1290
      %v1491 = vmul.f32 %v1413, %v1290
      %v1492 = vmul.f32 %v1416, %v1290
      %v1493 = vmul.f32 %v1419, %v1290
      %v1494 = vmul.f32 %v1422, %v1290
      %v1495 = vmul.f32 %v1425, %v1290
      %v1496 = vmul.f32 %v1428, %v1290
      %v1497 = vmul.f32 %v1431, %v1290
      %v1498 = vmul.f32 %v1434, %v1290
      %v1499 = vmul.f32 %v1437, %v1290
      %v1500 = vmul.f32 %v1440, %v1290
      %v1501 = vmul.f32 %v1443, %v1290
      %v1502 = vmul.f32 %v1446, %v1290
      %v1503 = vmul.f32 %v1449, %v1290
      %v1504 = vmul.f32 %v1452, %v1290
      %v1505 = vmul.f32 %v1455, %v1290
      %v1506 = vmul.f32 %v1458, %v1290
      %v1507 = vmul.f32 %v1461, %v1290
      %v1508 = vmul.f32 %v1464, %v1290
      %v1509 = vmul.f32 %v1467, %v1290
      %v1510 = vmul.f32 %v1470, %v1290
      %v1511 = vmul.f32 %v1473, %v1290
      %v1512 = vmul.f32 %v1476, %v1290
      %v1513 = vmul.f32 %v1479, %v1290
      %v1514 = vmul.f32 %v1482, %v1290
      %v1515 = vadd.f32 %v1483, 1e-05
      %v1516 = vadd.f32 %v1484, 1e-05
      %v1517 = vadd.f32 %v1485, 1e-05
      %v1518 = vadd.f32 %v1486, 1e-05
      %v1519 = vadd.f32 %v1487, 1e-05
      %v1520 = vadd.f32 %v1488, 1e-05
      %v1521 = vadd.f32 %v1489, 1e-05
      %v1522 = vadd.f32 %v1490, 1e-05
      %v1523 = vadd.f32 %v1491, 1e-05
      %v1524 = vadd.f32 %v1492, 1e-05
      %v1525 = vadd.f32 %v1493, 1e-05
      %v1526 = vadd.f32 %v1494, 1e-05
      %v1527 = vadd.f32 %v1495, 1e-05
      %v1528 = vadd.f32 %v1496, 1e-05
      %v1529 = vadd.f32 %v1497, 1e-05
      %v1530 = vadd.f32 %v1498, 1e-05
      %v1531 = vadd.f32 %v1499, 1e-05
      %v1532 = vadd.f32 %v1500, 1e-05
      %v1533 = vadd.f32 %v1501, 1e-05
      %v1534 = vadd.f32 %v1502, 1e-05
      %v1535 = vadd.f32 %v1503, 1e-05
      %v1536 = vadd.f32 %v1504, 1e-05
      %v1537 = vadd.f32 %v1505, 1e-05
      %v1538 = vadd.f32 %v1506, 1e-05
      %v1539 = vadd.f32 %v1507, 1e-05
      %v1540 = vadd.f32 %v1508, 1e-05
      %v1541 = vadd.f32 %v1509, 1e-05
      %v1542 = vadd.f32 %v1510, 1e-05
      %v1543 = vadd.f32 %v1511, 1e-05
      %v1544 = vadd.f32 %v1512, 1e-05
      %v1545 = vadd.f32 %v1513, 1e-05
      %v1546 = vadd.f32 %v1514, 1e-05
      %v1547 = vrsqrt.pop %v1515
      %v1548 = vrsqrt.pop %v1516
      %v1549 = vrsqrt.pop %v1517
      %v1550 = vrsqrt.pop %v1518
      %v1551 = vrsqrt.pop %v1519
      %v1552 = vrsqrt.pop %v1520
      %v1553 = vrsqrt.pop %v1521
      %v1554 = vrsqrt.pop %v1522
      %v1555 = vrsqrt.pop %v1523
      %v1556 = vrsqrt.pop %v1524
      %v1557 = vrsqrt.pop %v1525
      %v1558 = vrsqrt.pop %v1526
      %v1559 = vrsqrt.pop %v1527
      %v1560 = vrsqrt.pop %v1528
      %v1561 = vrsqrt.pop %v1529
      %v1562 = vrsqrt.pop %v1530
      %v1563 = vrsqrt.pop %v1531
      %v1564 = vrsqrt.pop %v1532
      %v1565 = vrsqrt.pop %v1533
      %v1566 = vrsqrt.pop %v1534
      %v1567 = vrsqrt.pop %v1535
      %v1568 = vrsqrt.pop %v1536
      %v1569 = vrsqrt.pop %v1537
      %v1570 = vrsqrt.pop %v1538
      %v1571 = vrsqrt.pop %v1539
      %v1572 = vrsqrt.pop %v1540
      %v1573 = vrsqrt.pop %v1541
      %v1574 = vrsqrt.pop %v1542
      %v1575 = vrsqrt.pop %v1543
      %v1576 = vrsqrt.pop %v1544
      %v1577 = vrsqrt.pop %v1545
      %v1578 = vrsqrt.pop %v1546
      %v1579 = vmul.f32 %v1323, %v1547
      %v1580 = vmul.f32 %v1324, %v1548
      %v1581 = vmul.f32 %v1325, %v1549
      %v1582 = vmul.f32 %v1326, %v1550
      %v1583 = vmul.f32 %v1327, %v1551
      %v1584 = vmul.f32 %v1328, %v1552
      %v1585 = vmul.f32 %v1329, %v1553
      %v1586 = vmul.f32 %v1330, %v1554
      %v1587 = vmul.f32 %v1331, %v1555
      %v1588 = vmul.f32 %v1332, %v1556
      %v1589 = vmul.f32 %v1333, %v1557
      %v1590 = vmul.f32 %v1334, %v1558
      %v1591 = vmul.f32 %v1335, %v1559
      %v1592 = vmul.f32 %v1336, %v1560
      %v1593 = vmul.f32 %v1337, %v1561
      %v1594 = vmul.f32 %v1338, %v1562
      %v1595 = vmul.f32 %v1339, %v1563
      %v1596 = vmul.f32 %v1340, %v1564
      %v1597 = vmul.f32 %v1341, %v1565
      %v1598 = vmul.f32 %v1342, %v1566
      %v1599 = vmul.f32 %v1343, %v1567
      %v1600 = vmul.f32 %v1344, %v1568
      %v1601 = vmul.f32 %v1345, %v1569
      %v1602 = vmul.f32 %v1346, %v1570
      %v1603 = vmul.f32 %v1347, %v1571
      %v1604 = vmul.f32 %v1348, %v1572
      %v1605 = vmul.f32 %v1349, %v1573
      %v1606 = vmul.f32 %v1350, %v1574
      %v1607 = vmul.f32 %v1351, %v1575
      %v1608 = vmul.f32 %v1352, %v1576
      %v1609 = vmul.f32 %v1353, %v1577
      %v1610 = vmul.f32 %v1354, %v1578
      %v1611 = vld [vmem:[%s303] sm:$0x1]
      %v1613 = vlaneseq
      %v1614 = vshrl.u32 %v1613, 7
      %v1615 = vsub.s32 0, %v1614
      %v1616 = vrot.slane %v1611, %v1615
      %v1618 = vmul.f32 %v1579, %v1616
      %v1619 = vmul.f32 %v1580, %v1616
      %v1620 = vmul.f32 %v1581, %v1616
      %v1621 = vmul.f32 %v1582, %v1616
      %v1622 = vmul.f32 %v1583, %v1616
      %v1623 = vmul.f32 %v1584, %v1616
      %v1624 = vmul.f32 %v1585, %v1616
      %v1625 = vmul.f32 %v1586, %v1616
      %v1626 = vmul.f32 %v1587, %v1616
      %v1627 = vmul.f32 %v1588, %v1616
      %v1628 = vmul.f32 %v1589, %v1616
      %v1629 = vmul.f32 %v1590, %v1616
      %v1630 = vmul.f32 %v1591, %v1616
      %v1631 = vmul.f32 %v1592, %v1616
      %v1632 = vmul.f32 %v1593, %v1616
      %v1633 = vmul.f32 %v1594, %v1616
      %v1634 = vmul.f32 %v1595, %v1616
      %v1635 = vmul.f32 %v1596, %v1616
      %v1636 = vmul.f32 %v1597, %v1616
      %v1637 = vmul.f32 %v1598, %v1616
      %v1638 = vmul.f32 %v1599, %v1616
      %v1639 = vmul.f32 %v1600, %v1616
      %v1640 = vmul.f32 %v1601, %v1616
      %v1641 = vmul.f32 %v1602, %v1616
      %v1642 = vmul.f32 %v1603, %v1616
      %v1643 = vmul.f32 %v1604, %v1616
      %v1644 = vmul.f32 %v1605, %v1616
      %v1645 = vmul.f32 %v1606, %v1616
      %v1646 = vmul.f32 %v1607, %v1616
      %v1647 = vmul.f32 %v1608, %v1616
      %v1648 = vmul.f32 %v1609, %v1616
      %v1649 = vmul.f32 %v1610, %v1616
      %v1650 = vld [vmem:[%s306] sm:$0x1]
      %v1652 = vlaneseq
      %v1653 = vshrl.u32 %v1652, 7
      %v1654 = vsub.s32 0, %v1653
      %v1655 = vrot.slane %v1650, %v1654
      %v1657 = vadd.f32 %v1618, %v1655
      %v1658 = vadd.f32 %v1619, %v1655
      %v1659 = vadd.f32 %v1620, %v1655
      %v1660 = vadd.f32 %v1621, %v1655
      %v1661 = vadd.f32 %v1622, %v1655
      %v1662 = vadd.f32 %v1623, %v1655
      %v1663 = vadd.f32 %v1624, %v1655
      %v1664 = vadd.f32 %v1625, %v1655
      %v1665 = vadd.f32 %v1626, %v1655
      %v1666 = vadd.f32 %v1627, %v1655
      %v1667 = vadd.f32 %v1628, %v1655
      %v1668 = vadd.f32 %v1629, %v1655
      %v1669 = vadd.f32 %v1630, %v1655
      %v1670 = vadd.f32 %v1631, %v1655
      %v1671 = vadd.f32 %v1632, %v1655
      %v1672 = vadd.f32 %v1633, %v1655
      %v1673 = vadd.f32 %v1634, %v1655
      %v1674 = vadd.f32 %v1635, %v1655
      %v1675 = vadd.f32 %v1636, %v1655
      %v1676 = vadd.f32 %v1637, %v1655
      %v1677 = vadd.f32 %v1638, %v1655
      %v1678 = vadd.f32 %v1639, %v1655
      %v1679 = vadd.f32 %v1640, %v1655
      %v1680 = vadd.f32 %v1641, %v1655
      %v1681 = vadd.f32 %v1642, %v1655
      %v1682 = vadd.f32 %v1643, %v1655
      %v1683 = vadd.f32 %v1644, %v1655
      %v1684 = vadd.f32 %v1645, %v1655
      %v1685 = vadd.f32 %v1646, %v1655
      %v1686 = vadd.f32 %v1647, %v1655
      %v1687 = vadd.f32 %v1648, %v1655
      %v1688 = vadd.f32 %v1649, %v1655
      %v1689 = vmul.f32 %v1657, 0.5
      %v1690 = vmul.f32 %v1658, 0.5
      %v1691 = vmul.f32 %v1659, 0.5
      %v1692 = vmul.f32 %v1660, 0.5
      %v1693 = vmul.f32 %v1661, 0.5
      %v1694 = vmul.f32 %v1662, 0.5
      %v1695 = vmul.f32 %v1663, 0.5
      %v1696 = vmul.f32 %v1664, 0.5
      %v1697 = vmul.f32 %v1665, 0.5
      %v1698 = vmul.f32 %v1666, 0.5
      %v1699 = vmul.f32 %v1667, 0.5
      %v1700 = vmul.f32 %v1668, 0.5
      %v1701 = vmul.f32 %v1669, 0.5
      %v1702 = vmul.f32 %v1670, 0.5
      %v1703 = vmul.f32 %v1671, 0.5
      %v1704 = vmul.f32 %v1672, 0.5
      %v1705 = vmul.f32 %v1673, 0.5
      %v1706 = vmul.f32 %v1674, 0.5
      %v1707 = vmul.f32 %v1675, 0.5
      %v1708 = vmul.f32 %v1676, 0.5
      %v1709 = vmul.f32 %v1677, 0.5
      %v1710 = vmul.f32 %v1678, 0.5
      %v1711 = vmul.f32 %v1679, 0.5
      %v1712 = vmul.f32 %v1680, 0.5
      %v1713 = vmul.f32 %v1681, 0.5
      %v1714 = vmul.f32 %v1682, 0.5
      %v1715 = vmul.f32 %v1683, 0.5
      %v1716 = vmul.f32 %v1684, 0.5
      %v1717 = vmul.f32 %v1685, 0.5
      %v1718 = vmul.f32 %v1686, 0.5
      %v1719 = vmul.f32 %v1687, 0.5
      %v1720 = vmul.f32 %v1688, 0.5
      %v1721 = vmul.f32 %v1657, 0.70710677
      %v1722 = vmul.f32 %v1658, 0.70710677
      %v1723 = vmul.f32 %v1659, 0.70710677
      %v1724 = vmul.f32 %v1660, 0.70710677
      %v1725 = vmul.f32 %v1661, 0.70710677
      %v1726 = vmul.f32 %v1662, 0.70710677
      %v1727 = vmul.f32 %v1663, 0.70710677
      %v1728 = vmul.f32 %v1664, 0.70710677
      %v1729 = vmul.f32 %v1665, 0.70710677
      %v1730 = vmul.f32 %v1666, 0.70710677
      %v1731 = vmul.f32 %v1667, 0.70710677
      %v1732 = vmul.f32 %v1668, 0.70710677
      %v1733 = vmul.f32 %v1669, 0.70710677
      %v1734 = vmul.f32 %v1670, 0.70710677
      %v1735 = vmul.f32 %v1671, 0.70710677
      %v1736 = vmul.f32 %v1672, 0.70710677
      %v1737 = vmul.f32 %v1673, 0.70710677
      %v1738 = vmul.f32 %v1674, 0.70710677
      %v1739 = vmul.f32 %v1675, 0.70710677
      %v1740 = vmul.f32 %v1676, 0.70710677
      %v1741 = vmul.f32 %v1677, 0.70710677
      %v1742 = vmul.f32 %v1678, 0.70710677
      %v1743 = vmul.f32 %v1679, 0.70710677
      %v1744 = vmul.f32 %v1680, 0.70710677
      %v1745 = vmul.f32 %v1681, 0.70710677
      %v1746 = vmul.f32 %v1682, 0.70710677
      %v1747 = vmul.f32 %v1683, 0.70710677
      %v1748 = vmul.f32 %v1684, 0.70710677
      %v1749 = vmul.f32 %v1685, 0.70710677
      %v1750 = vmul.f32 %v1686, 0.70710677
      %v1751 = vmul.f32 %v1687, 0.70710677
      %v1752 = vmul.f32 %v1688, 0.70710677
      %v1753 = vmax.f32 %v1721, -4.0
      %v1754 = vmax.f32 %v1722, -4.0
      %v1755 = vmax.f32 %v1723, -4.0
      %v1756 = vmax.f32 %v1724, -4.0
      %v1757 = vmax.f32 %v1725, -4.0
      %v1758 = vmax.f32 %v1726, -4.0
      %v1759 = vmax.f32 %v1727, -4.0
      %v1760 = vmax.f32 %v1728, -4.0
      %v1761 = vmax.f32 %v1729, -4.0
      %v1762 = vmax.f32 %v1730, -4.0
      %v1763 = vmax.f32 %v1731, -4.0
      %v1764 = vmax.f32 %v1732, -4.0
      %v1765 = vmax.f32 %v1733, -4.0
      %v1766 = vmax.f32 %v1734, -4.0
      %v1767 = vmax.f32 %v1735, -4.0
      %v1768 = vmax.f32 %v1736, -4.0
      %v1769 = vmax.f32 %v1737, -4.0
      %v1770 = vmax.f32 %v1738, -4.0
      %v1771 = vmax.f32 %v1739, -4.0
      %v1772 = vmax.f32 %v1740, -4.0
      %v1773 = vmax.f32 %v1741, -4.0
      %v1774 = vmax.f32 %v1742, -4.0
      %v1775 = vmax.f32 %v1743, -4.0
      %v1776 = vmax.f32 %v1744, -4.0
      %v1777 = vmax.f32 %v1745, -4.0
      %v1778 = vmax.f32 %v1746, -4.0
      %v1779 = vmax.f32 %v1747, -4.0
      %v1780 = vmax.f32 %v1748, -4.0
      %v1781 = vmax.f32 %v1749, -4.0
      %v1782 = vmax.f32 %v1750, -4.0
      %v1783 = vmax.f32 %v1751, -4.0
      %v1784 = vmax.f32 %v1752, -4.0
      %v1785 = vmin.f32 %v1753, 4.0
      %v1786 = vmin.f32 %v1754, 4.0
      %v1787 = vmin.f32 %v1755, 4.0
      %v1788 = vmin.f32 %v1756, 4.0
      %v1789 = vmin.f32 %v1757, 4.0
      %v1790 = vmin.f32 %v1758, 4.0
      %v1791 = vmin.f32 %v1759, 4.0
      %v1792 = vmin.f32 %v1760, 4.0
      %v1793 = vmin.f32 %v1761, 4.0
      %v1794 = vmin.f32 %v1762, 4.0
      %v1795 = vmin.f32 %v1763, 4.0
      %v1796 = vmin.f32 %v1764, 4.0
      %v1797 = vmin.f32 %v1765, 4.0
      %v1798 = vmin.f32 %v1766, 4.0
      %v1799 = vmin.f32 %v1767, 4.0
      %v1800 = vmin.f32 %v1768, 4.0
      %v1801 = vmin.f32 %v1769, 4.0
      %v1802 = vmin.f32 %v1770, 4.0
      %v1803 = vmin.f32 %v1771, 4.0
      %v1804 = vmin.f32 %v1772, 4.0
      %v1805 = vmin.f32 %v1773, 4.0
      %v1806 = vmin.f32 %v1774, 4.0
      %v1807 = vmin.f32 %v1775, 4.0
      %v1808 = vmin.f32 %v1776, 4.0
      %v1809 = vmin.f32 %v1777, 4.0
      %v1810 = vmin.f32 %v1778, 4.0
      %v1811 = vmin.f32 %v1779, 4.0
      %v1812 = vmin.f32 %v1780, 4.0
      %v1813 = vmin.f32 %v1781, 4.0
      %v1814 = vmin.f32 %v1782, 4.0
      %v1815 = vmin.f32 %v1783, 4.0
      %v1816 = vmin.f32 %v1784, 4.0
      %v1817 = vmul.f32 %v1785, %v1785
      %v1818 = vmul.f32 %v1786, %v1786
      %v1819 = vmul.f32 %v1787, %v1787
      %v1820 = vmul.f32 %v1788, %v1788
      %v1821 = vmul.f32 %v1789, %v1789
      %v1822 = vmul.f32 %v1790, %v1790
      %v1823 = vmul.f32 %v1791, %v1791
      %v1824 = vmul.f32 %v1792, %v1792
      %v1825 = vmul.f32 %v1793, %v1793
      %v1826 = vmul.f32 %v1794, %v1794
      %v1827 = vmul.f32 %v1795, %v1795
      %v1828 = vmul.f32 %v1796, %v1796
      %v1829 = vmul.f32 %v1797, %v1797
      %v1830 = vmul.f32 %v1798, %v1798
      %v1831 = vmul.f32 %v1799, %v1799
      %v1832 = vmul.f32 %v1800, %v1800
      %v1833 = vmul.f32 %v1801, %v1801
      %v1834 = vmul.f32 %v1802, %v1802
      %v1835 = vmul.f32 %v1803, %v1803
      %v1836 = vmul.f32 %v1804, %v1804
      %v1837 = vmul.f32 %v1805, %v1805
      %v1838 = vmul.f32 %v1806, %v1806
      %v1839 = vmul.f32 %v1807, %v1807
      %v1840 = vmul.f32 %v1808, %v1808
      %v1841 = vmul.f32 %v1809, %v1809
      %v1842 = vmul.f32 %v1810, %v1810
      %v1843 = vmul.f32 %v1811, %v1811
      %v1844 = vmul.f32 %v1812, %v1812
      %v1845 = vmul.f32 %v1813, %v1813
      %v1846 = vmul.f32 %v1814, %v1814
      %v1847 = vmul.f32 %v1815, %v1815
      %v1848 = vmul.f32 %v1816, %v1816
      %v1849 = vmul.f32 %v1817, 0.00022905065
      %v1850 = vmul.f32 %v1818, 0.00022905065
      %v1851 = vmul.f32 %v1819, 0.00022905065
      %v1852 = vmul.f32 %v1820, 0.00022905065
      %v1853 = vmul.f32 %v1821, 0.00022905065
      %v1854 = vmul.f32 %v1822, 0.00022905065
      %v1855 = vmul.f32 %v1823, 0.00022905065
      %v1856 = vmul.f32 %v1824, 0.00022905065
      %v1857 = vmul.f32 %v1825, 0.00022905065
      %v1858 = vmul.f32 %v1826, 0.00022905065
      %v1859 = vmul.f32 %v1827, 0.00022905065
      %v1860 = vmul.f32 %v1828, 0.00022905065
      %v1861 = vmul.f32 %v1829, 0.00022905065
      %v1862 = vmul.f32 %v1830, 0.00022905065
      %v1863 = vmul.f32 %v1831, 0.00022905065
      %v1864 = vmul.f32 %v1832, 0.00022905065
      %v1865 = vmul.f32 %v1833, 0.00022905065
      %v1866 = vmul.f32 %v1834, 0.00022905065
      %v1867 = vmul.f32 %v1835, 0.00022905065
      %v1868 = vmul.f32 %v1836, 0.00022905065
      %v1869 = vmul.f32 %v1837, 0.00022905065
      %v1870 = vmul.f32 %v1838, 0.00022905065
      %v1871 = vmul.f32 %v1839, 0.00022905065
      %v1872 = vmul.f32 %v1840, 0.00022905065
      %v1873 = vmul.f32 %v1841, 0.00022905065
      %v1874 = vmul.f32 %v1842, 0.00022905065
      %v1875 = vmul.f32 %v1843, 0.00022905065
      %v1876 = vmul.f32 %v1844, 0.00022905065
      %v1877 = vmul.f32 %v1845, 0.00022905065
      %v1878 = vmul.f32 %v1846, 0.00022905065
      %v1879 = vmul.f32 %v1847, 0.00022905065
      %v1880 = vmul.f32 %v1848, 0.00022905065
      %v1881 = vadd.f32 %v1849, 0.003408291
      %v1882 = vadd.f32 %v1850, 0.003408291
      %v1883 = vadd.f32 %v1851, 0.003408291
      %v1884 = vadd.f32 %v1852, 0.003408291
      %v1885 = vadd.f32 %v1853, 0.003408291
      %v1886 = vadd.f32 %v1854, 0.003408291
      %v1887 = vadd.f32 %v1855, 0.003408291
      %v1888 = vadd.f32 %v1856, 0.003408291
      %v1889 = vadd.f32 %v1857, 0.003408291
      %v1890 = vadd.f32 %v1858, 0.003408291
      %v1891 = vadd.f32 %v1859, 0.003408291
      %v1892 = vadd.f32 %v1860, 0.003408291
      %v1893 = vadd.f32 %v1861, 0.003408291
      %v1894 = vadd.f32 %v1862, 0.003408291
      %v1895 = vadd.f32 %v1863, 0.003408291
      %v1896 = vadd.f32 %v1864, 0.003408291
      %v1897 = vadd.f32 %v1865, 0.003408291
      %v1898 = vadd.f32 %v1866, 0.003408291
      %v1899 = vadd.f32 %v1867, 0.003408291
      %v1900 = vadd.f32 %v1868, 0.003408291
      %v1901 = vadd.f32 %v1869, 0.003408291
      %v1902 = vadd.f32 %v1870, 0.003408291
      %v1903 = vadd.f32 %v1871, 0.003408291
      %v1904 = vadd.f32 %v1872, 0.003408291
      %v1905 = vadd.f32 %v1873, 0.003408291
      %v1906 = vadd.f32 %v1874, 0.003408291
      %v1907 = vadd.f32 %v1875, 0.003408291
      %v1908 = vadd.f32 %v1876, 0.003408291
      %v1909 = vadd.f32 %v1877, 0.003408291
      %v1910 = vadd.f32 %v1878, 0.003408291
      %v1911 = vadd.f32 %v1879, 0.003408291
      %v1912 = vadd.f32 %v1880, 0.003408291
      %v1913 = vmul.f32 %v1881, %v1817
      %v1914 = vmul.f32 %v1882, %v1818
      %v1915 = vmul.f32 %v1883, %v1819
      %v1916 = vmul.f32 %v1884, %v1820
      %v1917 = vmul.f32 %v1885, %v1821
      %v1918 = vmul.f32 %v1886, %v1822
      %v1919 = vmul.f32 %v1887, %v1823
      %v1920 = vmul.f32 %v1888, %v1824
      %v1921 = vmul.f32 %v1889, %v1825
      %v1922 = vmul.f32 %v1890, %v1826
      %v1923 = vmul.f32 %v1891, %v1827
      %v1924 = vmul.f32 %v1892, %v1828
      %v1925 = vmul.f32 %v1893, %v1829
      %v1926 = vmul.f32 %v1894, %v1830
      %v1927 = vmul.f32 %v1895, %v1831
      %v1928 = vmul.f32 %v1896, %v1832
      %v1929 = vmul.f32 %v1897, %v1833
      %v1930 = vmul.f32 %v1898, %v1834
      %v1931 = vmul.f32 %v1899, %v1835
      %v1932 = vmul.f32 %v1900, %v1836
      %v1933 = vmul.f32 %v1901, %v1837
      %v1934 = vmul.f32 %v1902, %v1838
      %v1935 = vmul.f32 %v1903, %v1839
      %v1936 = vmul.f32 %v1904, %v1840
      %v1937 = vmul.f32 %v1905, %v1841
      %v1938 = vmul.f32 %v1906, %v1842
      %v1939 = vmul.f32 %v1907, %v1843
      %v1940 = vmul.f32 %v1908, %v1844
      %v1941 = vmul.f32 %v1909, %v1845
      %v1942 = vmul.f32 %v1910, %v1846
      %v1943 = vmul.f32 %v1911, %v1847
      %v1944 = vmul.f32 %v1912, %v1848
      %v1945 = vadd.f32 %v1913, 0.050955694
      %v1946 = vadd.f32 %v1914, 0.050955694
      %v1947 = vadd.f32 %v1915, 0.050955694
      %v1948 = vadd.f32 %v1916, 0.050955694
      %v1949 = vadd.f32 %v1917, 0.050955694
      %v1950 = vadd.f32 %v1918, 0.050955694
      %v1951 = vadd.f32 %v1919, 0.050955694
      %v1952 = vadd.f32 %v1920, 0.050955694
      %v1953 = vadd.f32 %v1921, 0.050955694
      %v1954 = vadd.f32 %v1922, 0.050955694
      %v1955 = vadd.f32 %v1923, 0.050955694
      %v1956 = vadd.f32 %v1924, 0.050955694
      %v1957 = vadd.f32 %v1925, 0.050955694
      %v1958 = vadd.f32 %v1926, 0.050955694
      %v1959 = vadd.f32 %v1927, 0.050955694
      %v1960 = vadd.f32 %v1928, 0.050955694
      %v1961 = vadd.f32 %v1929, 0.050955694
      %v1962 = vadd.f32 %v1930, 0.050955694
      %v1963 = vadd.f32 %v1931, 0.050955694
      %v1964 = vadd.f32 %v1932, 0.050955694
      %v1965 = vadd.f32 %v1933, 0.050955694
      %v1966 = vadd.f32 %v1934, 0.050955694
      %v1967 = vadd.f32 %v1935, 0.050955694
      %v1968 = vadd.f32 %v1936, 0.050955694
      %v1969 = vadd.f32 %v1937, 0.050955694
      %v1970 = vadd.f32 %v1938, 0.050955694
      %v1971 = vadd.f32 %v1939, 0.050955694
      %v1972 = vadd.f32 %v1940, 0.050955694
      %v1973 = vadd.f32 %v1941, 0.050955694
      %v1974 = vadd.f32 %v1942, 0.050955694
      %v1975 = vadd.f32 %v1943, 0.050955694
      %v1976 = vadd.f32 %v1944, 0.050955694
      %v1977 = vmul.f32 %v1945, %v1817
      %v1978 = vmul.f32 %v1946, %v1818
      %v1979 = vmul.f32 %v1947, %v1819
      %v1980 = vmul.f32 %v1948, %v1820
      %v1981 = vmul.f32 %v1949, %v1821
      %v1982 = vmul.f32 %v1950, %v1822
      %v1983 = vmul.f32 %v1951, %v1823
      %v1984 = vmul.f32 %v1952, %v1824
      %v1985 = vmul.f32 %v1953, %v1825
      %v1986 = vmul.f32 %v1954, %v1826
      %v1987 = vmul.f32 %v1955, %v1827
      %v1988 = vmul.f32 %v1956, %v1828
      %v1989 = vmul.f32 %v1957, %v1829
      %v1990 = vmul.f32 %v1958, %v1830
      %v1991 = vmul.f32 %v1959, %v1831
      %v1992 = vmul.f32 %v1960, %v1832
      %v1993 = vmul.f32 %v1961, %v1833
      %v1994 = vmul.f32 %v1962, %v1834
      %v1995 = vmul.f32 %v1963, %v1835
      %v1996 = vmul.f32 %v1964, %v1836
      %v1997 = vmul.f32 %v1965, %v1837
      %v1998 = vmul.f32 %v1966, %v1838
      %v1999 = vmul.f32 %v1967, %v1839
      %v2000 = vmul.f32 %v1968, %v1840
      %v2001 = vmul.f32 %v1969, %v1841
      %v2002 = vmul.f32 %v1970, %v1842
      %v2003 = vmul.f32 %v1971, %v1843
      %v2004 = vmul.f32 %v1972, %v1844
      %v2005 = vmul.f32 %v1973, %v1845
      %v2006 = vmul.f32 %v1974, %v1846
      %v2007 = vmul.f32 %v1975, %v1847
      %v2008 = vmul.f32 %v1976, %v1848
      %v2009 = vadd.f32 %v1977, 0.18520832
      %v2010 = vadd.f32 %v1978, 0.18520832
      %v2011 = vadd.f32 %v1979, 0.18520832
      %v2012 = vadd.f32 %v1980, 0.18520832
      %v2013 = vadd.f32 %v1981, 0.18520832
      %v2014 = vadd.f32 %v1982, 0.18520832
      %v2015 = vadd.f32 %v1983, 0.18520832
      %v2016 = vadd.f32 %v1984, 0.18520832
      %v2017 = vadd.f32 %v1985, 0.18520832
      %v2018 = vadd.f32 %v1986, 0.18520832
      %v2019 = vadd.f32 %v1987, 0.18520832
      %v2020 = vadd.f32 %v1988, 0.18520832
      %v2021 = vadd.f32 %v1989, 0.18520832
      %v2022 = vadd.f32 %v1990, 0.18520832
      %v2023 = vadd.f32 %v1991, 0.18520832
      %v2024 = vadd.f32 %v1992, 0.18520832
      %v2025 = vadd.f32 %v1993, 0.18520832
      %v2026 = vadd.f32 %v1994, 0.18520832
      %v2027 = vadd.f32 %v1995, 0.18520832
      %v2028 = vadd.f32 %v1996, 0.18520832
      %v2029 = vadd.f32 %v1997, 0.18520832
      %v2030 = vadd.f32 %v1998, 0.18520832
      %v2031 = vadd.f32 %v1999, 0.18520832
      %v2032 = vadd.f32 %v2000, 0.18520832
      %v2033 = vadd.f32 %v2001, 0.18520832
      %v2034 = vadd.f32 %v2002, 0.18520832
      %v2035 = vadd.f32 %v2003, 0.18520832
      %v2036 = vadd.f32 %v2004, 0.18520832
      %v2037 = vadd.f32 %v2005, 0.18520832
      %v2038 = vadd.f32 %v2006, 0.18520832
      %v2039 = vadd.f32 %v2007, 0.18520832
      %v2040 = vadd.f32 %v2008, 0.18520832
      %v2041 = vmul.f32 %v2009, %v1817
      %v2042 = vmul.f32 %v2010, %v1818
      %v2043 = vmul.f32 %v2011, %v1819
      %v2044 = vmul.f32 %v2012, %v1820
      %v2045 = vmul.f32 %v2013, %v1821
      %v2046 = vmul.f32 %v2014, %v1822
      %v2047 = vmul.f32 %v2015, %v1823
      %v2048 = vmul.f32 %v2016, %v1824
      %v2049 = vmul.f32 %v2017, %v1825
      %v2050 = vmul.f32 %v2018, %v1826
      %v2051 = vmul.f32 %v2019, %v1827
      %v2052 = vmul.f32 %v2020, %v1828
      %v2053 = vmul.f32 %v2021, %v1829
      %v2054 = vmul.f32 %v2022, %v1830
      %v2055 = vmul.f32 %v2023, %v1831
      %v2056 = vmul.f32 %v2024, %v1832
      %v2057 = vmul.f32 %v2025, %v1833
      %v2058 = vmul.f32 %v2026, %v1834
      %v2059 = vmul.f32 %v2027, %v1835
      %v2060 = vmul.f32 %v2028, %v1836
      %v2061 = vmul.f32 %v2029, %v1837
      %v2062 = vmul.f32 %v2030, %v1838
      %v2063 = vmul.f32 %v2031, %v1839
      %v2064 = vmul.f32 %v2032, %v1840
      %v2065 = vmul.f32 %v2033, %v1841
      %v2066 = vmul.f32 %v2034, %v1842
      %v2067 = vmul.f32 %v2035, %v1843
      %v2068 = vmul.f32 %v2036, %v1844
      %v2069 = vmul.f32 %v2037, %v1845
      %v2070 = vmul.f32 %v2038, %v1846
      %v2071 = vmul.f32 %v2039, %v1847
      %v2072 = vmul.f32 %v2040, %v1848
      %v2073 = vadd.f32 %v2041, 1.1283791
      %v2074 = vadd.f32 %v2042, 1.1283791
      %v2075 = vadd.f32 %v2043, 1.1283791
      %v2076 = vadd.f32 %v2044, 1.1283791
      %v2077 = vadd.f32 %v2045, 1.1283791
      %v2078 = vadd.f32 %v2046, 1.1283791
      %v2079 = vadd.f32 %v2047, 1.1283791
      %v2080 = vadd.f32 %v2048, 1.1283791
      %v2081 = vadd.f32 %v2049, 1.1283791
      %v2082 = vadd.f32 %v2050, 1.1283791
      %v2083 = vadd.f32 %v2051, 1.1283791
      %v2084 = vadd.f32 %v2052, 1.1283791
      %v2085 = vadd.f32 %v2053, 1.1283791
      %v2086 = vadd.f32 %v2054, 1.1283791
      %v2087 = vadd.f32 %v2055, 1.1283791
      %v2088 = vadd.f32 %v2056, 1.1283791
      %v2089 = vadd.f32 %v2057, 1.1283791
      %v2090 = vadd.f32 %v2058, 1.1283791
      %v2091 = vadd.f32 %v2059, 1.1283791
      %v2092 = vadd.f32 %v2060, 1.1283791
      %v2093 = vadd.f32 %v2061, 1.1283791
      %v2094 = vadd.f32 %v2062, 1.1283791
      %v2095 = vadd.f32 %v2063, 1.1283791
      %v2096 = vadd.f32 %v2064, 1.1283791
      %v2097 = vadd.f32 %v2065, 1.1283791
      %v2098 = vadd.f32 %v2066, 1.1283791
      %v2099 = vadd.f32 %v2067, 1.1283791
      %v2100 = vadd.f32 %v2068, 1.1283791
      %v2101 = vadd.f32 %v2069, 1.1283791
      %v2102 = vadd.f32 %v2070, 1.1283791
      %v2103 = vadd.f32 %v2071, 1.1283791
      %v2104 = vadd.f32 %v2072, 1.1283791
      %v2105 = vmul.f32 %v1817, -1.1791603e-07
      %v2106 = vmul.f32 %v1818, -1.1791603e-07
      %v2107 = vmul.f32 %v1819, -1.1791603e-07
      %v2108 = vmul.f32 %v1820, -1.1791603e-07
      %v2109 = vmul.f32 %v1821, -1.1791603e-07
      %v2110 = vmul.f32 %v1822, -1.1791603e-07
      %v2111 = vmul.f32 %v1823, -1.1791603e-07
      %v2112 = vmul.f32 %v1824, -1.1791603e-07
      %v2113 = vmul.f32 %v1825, -1.1791603e-07
      %v2114 = vmul.f32 %v1826, -1.1791603e-07
      %v2115 = vmul.f32 %v1827, -1.1791603e-07
      %v2116 = vmul.f32 %v1828, -1.1791603e-07
      %v2117 = vmul.f32 %v1829, -1.1791603e-07
      %v2118 = vmul.f32 %v1830, -1.1791603e-07
      %v2119 = vmul.f32 %v1831, -1.1791603e-07
      %v2120 = vmul.f32 %v1832, -1.1791603e-07
      %v2121 = vmul.f32 %v1833, -1.1791603e-07
      %v2122 = vmul.f32 %v1834, -1.1791603e-07
      %v2123 = vmul.f32 %v1835, -1.1791603e-07
      %v2124 = vmul.f32 %v1836, -1.1791603e-07
      %v2125 = vmul.f32 %v1837, -1.1791603e-07
      %v2126 = vmul.f32 %v1838, -1.1791603e-07
      %v2127 = vmul.f32 %v1839, -1.1791603e-07
      %v2128 = vmul.f32 %v1840, -1.1791603e-07
      %v2129 = vmul.f32 %v1841, -1.1791603e-07
      %v2130 = vmul.f32 %v1842, -1.1791603e-07
      %v2131 = vmul.f32 %v1843, -1.1791603e-07
      %v2132 = vmul.f32 %v1844, -1.1791603e-07
      %v2133 = vmul.f32 %v1845, -1.1791603e-07
      %v2134 = vmul.f32 %v1846, -1.1791603e-07
      %v2135 = vmul.f32 %v1847, -1.1791603e-07
      %v2136 = vmul.f32 %v1848, -1.1791603e-07
      %v2137 = vadd.f32 %v2105, 2.3547966e-05
      %v2138 = vadd.f32 %v2106, 2.3547966e-05
      %v2139 = vadd.f32 %v2107, 2.3547966e-05
      %v2140 = vadd.f32 %v2108, 2.3547966e-05
      %v2141 = vadd.f32 %v2109, 2.3547966e-05
      %v2142 = vadd.f32 %v2110, 2.3547966e-05
      %v2143 = vadd.f32 %v2111, 2.3547966e-05
      %v2144 = vadd.f32 %v2112, 2.3547966e-05
      %v2145 = vadd.f32 %v2113, 2.3547966e-05
      %v2146 = vadd.f32 %v2114, 2.3547966e-05
      %v2147 = vadd.f32 %v2115, 2.3547966e-05
      %v2148 = vadd.f32 %v2116, 2.3547966e-05
      %v2149 = vadd.f32 %v2117, 2.3547966e-05
      %v2150 = vadd.f32 %v2118, 2.3547966e-05
      %v2151 = vadd.f32 %v2119, 2.3547966e-05
      %v2152 = vadd.f32 %v2120, 2.3547966e-05
      %v2153 = vadd.f32 %v2121, 2.3547966e-05
      %v2154 = vadd.f32 %v2122, 2.3547966e-05
      %v2155 = vadd.f32 %v2123, 2.3547966e-05
      %v2156 = vadd.f32 %v2124, 2.3547966e-05
      %v2157 = vadd.f32 %v2125, 2.3547966e-05
      %v2158 = vadd.f32 %v2126, 2.3547966e-05
      %v2159 = vadd.f32 %v2127, 2.3547966e-05
      %v2160 = vadd.f32 %v2128, 2.3547966e-05
      %v2161 = vadd.f32 %v2129, 2.3547966e-05
      %v2162 = vadd.f32 %v2130, 2.3547966e-05
      %v2163 = vadd.f32 %v2131, 2.3547966e-05
      %v2164 = vadd.f32 %v2132, 2.3547966e-05
      %v2165 = vadd.f32 %v2133, 2.3547966e-05
      %v2166 = vadd.f32 %v2134, 2.3547966e-05
      %v2167 = vadd.f32 %v2135, 2.3547966e-05
      %v2168 = vadd.f32 %v2136, 2.3547966e-05
      %v2169 = vmul.f32 %v2137, %v1817
      %v2170 = vmul.f32 %v2138, %v1818
      %v2171 = vmul.f32 %v2139, %v1819
      %v2172 = vmul.f32 %v2140, %v1820
      %v2173 = vmul.f32 %v2141, %v1821
      %v2174 = vmul.f32 %v2142, %v1822
      %v2175 = vmul.f32 %v2143, %v1823
      %v2176 = vmul.f32 %v2144, %v1824
      %v2177 = vmul.f32 %v2145, %v1825
      %v2178 = vmul.f32 %v2146, %v1826
      %v2179 = vmul.f32 %v2147, %v1827
      %v2180 = vmul.f32 %v2148, %v1828
      %v2181 = vmul.f32 %v2149, %v1829
      %v2182 = vmul.f32 %v2150, %v1830
      %v2183 = vmul.f32 %v2151, %v1831
      %v2184 = vmul.f32 %v2152, %v1832
      %v2185 = vmul.f32 %v2153, %v1833
      %v2186 = vmul.f32 %v2154, %v1834
      %v2187 = vmul.f32 %v2155, %v1835
      %v2188 = vmul.f32 %v2156, %v1836
      %v2189 = vmul.f32 %v2157, %v1837
      %v2190 = vmul.f32 %v2158, %v1838
      %v2191 = vmul.f32 %v2159, %v1839
      %v2192 = vmul.f32 %v2160, %v1840
      %v2193 = vmul.f32 %v2161, %v1841
      %v2194 = vmul.f32 %v2162, %v1842
      %v2195 = vmul.f32 %v2163, %v1843
      %v2196 = vmul.f32 %v2164, %v1844
      %v2197 = vmul.f32 %v2165, %v1845
      %v2198 = vmul.f32 %v2166, %v1846
      %v2199 = vmul.f32 %v2167, %v1847
      %v2200 = vmul.f32 %v2168, %v1848
      %v2201 = vadd.f32 %v2169, 0.0010179626
      %v2202 = vadd.f32 %v2170, 0.0010179626
      %v2203 = vadd.f32 %v2171, 0.0010179626
      %v2204 = vadd.f32 %v2172, 0.0010179626
      %v2205 = vadd.f32 %v2173, 0.0010179626
      %v2206 = vadd.f32 %v2174, 0.0010179626
      %v2207 = vadd.f32 %v2175, 0.0010179626
      %v2208 = vadd.f32 %v2176, 0.0010179626
      %v2209 = vadd.f32 %v2177, 0.0010179626
      %v2210 = vadd.f32 %v2178, 0.0010179626
      %v2211 = vadd.f32 %v2179, 0.0010179626
      %v2212 = vadd.f32 %v2180, 0.0010179626
      %v2213 = vadd.f32 %v2181, 0.0010179626
      %v2214 = vadd.f32 %v2182, 0.0010179626
      %v2215 = vadd.f32 %v2183, 0.0010179626
      %v2216 = vadd.f32 %v2184, 0.0010179626
      %v2217 = vadd.f32 %v2185, 0.0010179626
      %v2218 = vadd.f32 %v2186, 0.0010179626
      %v2219 = vadd.f32 %v2187, 0.0010179626
      %v2220 = vadd.f32 %v2188, 0.0010179626
      %v2221 = vadd.f32 %v2189, 0.0010179626
      %v2222 = vadd.f32 %v2190, 0.0010179626
      %v2223 = vadd.f32 %v2191, 0.0010179626
      %v2224 = vadd.f32 %v2192, 0.0010179626
      %v2225 = vadd.f32 %v2193, 0.0010179626
      %v2226 = vadd.f32 %v2194, 0.0010179626
      %v2227 = vadd.f32 %v2195, 0.0010179626
      %v2228 = vadd.f32 %v2196, 0.0010179626
      %v2229 = vadd.f32 %v2197, 0.0010179626
      %v2230 = vadd.f32 %v2198, 0.0010179626
      %v2231 = vadd.f32 %v2199, 0.0010179626
      %v2232 = vadd.f32 %v2200, 0.0010179626
      %v2233 = vmul.f32 %v2201, %v1817
      %v2234 = vmul.f32 %v2202, %v1818
      %v2235 = vmul.f32 %v2203, %v1819
      %v2236 = vmul.f32 %v2204, %v1820
      %v2237 = vmul.f32 %v2205, %v1821
      %v2238 = vmul.f32 %v2206, %v1822
      %v2239 = vmul.f32 %v2207, %v1823
      %v2240 = vmul.f32 %v2208, %v1824
      %v2241 = vmul.f32 %v2209, %v1825
      %v2242 = vmul.f32 %v2210, %v1826
      %v2243 = vmul.f32 %v2211, %v1827
      %v2244 = vmul.f32 %v2212, %v1828
      %v2245 = vmul.f32 %v2213, %v1829
      %v2246 = vmul.f32 %v2214, %v1830
      %v2247 = vmul.f32 %v2215, %v1831
      %v2248 = vmul.f32 %v2216, %v1832
      %v2249 = vmul.f32 %v2217, %v1833
      %v2250 = vmul.f32 %v2218, %v1834
      %v2251 = vmul.f32 %v2219, %v1835
      %v2252 = vmul.f32 %v2220, %v1836
      %v2253 = vmul.f32 %v2221, %v1837
      %v2254 = vmul.f32 %v2222, %v1838
      %v2255 = vmul.f32 %v2223, %v1839
      %v2256 = vmul.f32 %v2224, %v1840
      %v2257 = vmul.f32 %v2225, %v1841
      %v2258 = vmul.f32 %v2226, %v1842
      %v2259 = vmul.f32 %v2227, %v1843
      %v2260 = vmul.f32 %v2228, %v1844
      %v2261 = vmul.f32 %v2229, %v1845
      %v2262 = vmul.f32 %v2230, %v1846
      %v2263 = vmul.f32 %v2231, %v1847
      %v2264 = vmul.f32 %v2232, %v1848
      %v2265 = vadd.f32 %v2233, 0.01407047
      %v2266 = vadd.f32 %v2234, 0.01407047
      %v2267 = vadd.f32 %v2235, 0.01407047
      %v2268 = vadd.f32 %v2236, 0.01407047
      %v2269 = vadd.f32 %v2237, 0.01407047
      %v2270 = vadd.f32 %v2238, 0.01407047
      %v2271 = vadd.f32 %v2239, 0.01407047
      %v2272 = vadd.f32 %v2240, 0.01407047
      %v2273 = vadd.f32 %v2241, 0.01407047
      %v2274 = vadd.f32 %v2242, 0.01407047
      %v2275 = vadd.f32 %v2243, 0.01407047
      %v2276 = vadd.f32 %v2244, 0.01407047
      %v2277 = vadd.f32 %v2245, 0.01407047
      %v2278 = vadd.f32 %v2246, 0.01407047
      %v2279 = vadd.f32 %v2247, 0.01407047
      %v2280 = vadd.f32 %v2248, 0.01407047
      %v2281 = vadd.f32 %v2249, 0.01407047
      %v2282 = vadd.f32 %v2250, 0.01407047
      %v2283 = vadd.f32 %v2251, 0.01407047
      %v2284 = vadd.f32 %v2252, 0.01407047
      %v2285 = vadd.f32 %v2253, 0.01407047
      %v2286 = vadd.f32 %v2254, 0.01407047
      %v2287 = vadd.f32 %v2255, 0.01407047
      %v2288 = vadd.f32 %v2256, 0.01407047
      %v2289 = vadd.f32 %v2257, 0.01407047
      %v2290 = vadd.f32 %v2258, 0.01407047
      %v2291 = vadd.f32 %v2259, 0.01407047
      %v2292 = vadd.f32 %v2260, 0.01407047
      %v2293 = vadd.f32 %v2261, 0.01407047
      %v2294 = vadd.f32 %v2262, 0.01407047
      %v2295 = vadd.f32 %v2263, 0.01407047
      %v2296 = vadd.f32 %v2264, 0.01407047
      %v2297 = vmul.f32 %v2265, %v1817
      %v2298 = vmul.f32 %v2266, %v1818
      %v2299 = vmul.f32 %v2267, %v1819
      %v2300 = vmul.f32 %v2268, %v1820
      %v2301 = vmul.f32 %v2269, %v1821
      %v2302 = vmul.f32 %v2270, %v1822
      %v2303 = vmul.f32 %v2271, %v1823
      %v2304 = vmul.f32 %v2272, %v1824
      %v2305 = vmul.f32 %v2273, %v1825
      %v2306 = vmul.f32 %v2274, %v1826
      %v2307 = vmul.f32 %v2275, %v1827
      %v2308 = vmul.f32 %v2276, %v1828
      %v2309 = vmul.f32 %v2277, %v1829
      %v2310 = vmul.f32 %v2278, %v1830
      %v2311 = vmul.f32 %v2279, %v1831
      %v2312 = vmul.f32 %v2280, %v1832
      %v2313 = vmul.f32 %v2281, %v1833
      %v2314 = vmul.f32 %v2282, %v1834
      %v2315 = vmul.f32 %v2283, %v1835
      %v2316 = vmul.f32 %v2284, %v1836
      %v2317 = vmul.f32 %v2285, %v1837
      %v2318 = vmul.f32 %v2286, %v1838
      %v2319 = vmul.f32 %v2287, %v1839
      %v2320 = vmul.f32 %v2288, %v1840
      %v2321 = vmul.f32 %v2289, %v1841
      %v2322 = vmul.f32 %v2290, %v1842
      %v2323 = vmul.f32 %v2291, %v1843
      %v2324 = vmul.f32 %v2292, %v1844
      %v2325 = vmul.f32 %v2293, %v1845
      %v2326 = vmul.f32 %v2294, %v1846
      %v2327 = vmul.f32 %v2295, %v1847
      %v2328 = vmul.f32 %v2296, %v1848
      %v2329 = vadd.f32 %v2297, 0.11098505
      %v2330 = vadd.f32 %v2298, 0.11098505
      %v2331 = vadd.f32 %v2299, 0.11098505
      %v2332 = vadd.f32 %v2300, 0.11098505
      %v2333 = vadd.f32 %v2301, 0.11098505
      %v2334 = vadd.f32 %v2302, 0.11098505
      %v2335 = vadd.f32 %v2303, 0.11098505
      %v2336 = vadd.f32 %v2304, 0.11098505
      %v2337 = vadd.f32 %v2305, 0.11098505
      %v2338 = vadd.f32 %v2306, 0.11098505
      %v2339 = vadd.f32 %v2307, 0.11098505
      %v2340 = vadd.f32 %v2308, 0.11098505
      %v2341 = vadd.f32 %v2309, 0.11098505
      %v2342 = vadd.f32 %v2310, 0.11098505
      %v2343 = vadd.f32 %v2311, 0.11098505
      %v2344 = vadd.f32 %v2312, 0.11098505
      %v2345 = vadd.f32 %v2313, 0.11098505
      %v2346 = vadd.f32 %v2314, 0.11098505
      %v2347 = vadd.f32 %v2315, 0.11098505
      %v2348 = vadd.f32 %v2316, 0.11098505
      %v2349 = vadd.f32 %v2317, 0.11098505
      %v2350 = vadd.f32 %v2318, 0.11098505
      %v2351 = vadd.f32 %v2319, 0.11098505
      %v2352 = vadd.f32 %v2320, 0.11098505
      %v2353 = vadd.f32 %v2321, 0.11098505
      %v2354 = vadd.f32 %v2322, 0.11098505
      %v2355 = vadd.f32 %v2323, 0.11098505
      %v2356 = vadd.f32 %v2324, 0.11098505
      %v2357 = vadd.f32 %v2325, 0.11098505
      %v2358 = vadd.f32 %v2326, 0.11098505
      %v2359 = vadd.f32 %v2327, 0.11098505
      %v2360 = vadd.f32 %v2328, 0.11098505
      %v2361 = vmul.f32 %v2329, %v1817
      %v2362 = vmul.f32 %v2330, %v1818
      %v2363 = vmul.f32 %v2331, %v1819
      %v2364 = vmul.f32 %v2332, %v1820
      %v2365 = vmul.f32 %v2333, %v1821
      %v2366 = vmul.f32 %v2334, %v1822
      %v2367 = vmul.f32 %v2335, %v1823
      %v2368 = vmul.f32 %v2336, %v1824
      %v2369 = vmul.f32 %v2337, %v1825
      %v2370 = vmul.f32 %v2338, %v1826
      %v2371 = vmul.f32 %v2339, %v1827
      %v2372 = vmul.f32 %v2340, %v1828
      %v2373 = vmul.f32 %v2341, %v1829
      %v2374 = vmul.f32 %v2342, %v1830
      %v2375 = vmul.f32 %v2343, %v1831
      %v2376 = vmul.f32 %v2344, %v1832
      %v2377 = vmul.f32 %v2345, %v1833
      %v2378 = vmul.f32 %v2346, %v1834
      %v2379 = vmul.f32 %v2347, %v1835
      %v2380 = vmul.f32 %v2348, %v1836
      %v2381 = vmul.f32 %v2349, %v1837
      %v2382 = vmul.f32 %v2350, %v1838
      %v2383 = vmul.f32 %v2351, %v1839
      %v2384 = vmul.f32 %v2352, %v1840
      %v2385 = vmul.f32 %v2353, %v1841
      %v2386 = vmul.f32 %v2354, %v1842
      %v2387 = vmul.f32 %v2355, %v1843
      %v2388 = vmul.f32 %v2356, %v1844
      %v2389 = vmul.f32 %v2357, %v1845
      %v2390 = vmul.f32 %v2358, %v1846
      %v2391 = vmul.f32 %v2359, %v1847
      %v2392 = vmul.f32 %v2360, %v1848
      %v2393 = vadd.f32 %v2361, 0.49746925
      %v2394 = vadd.f32 %v2362, 0.49746925
      %v2395 = vadd.f32 %v2363, 0.49746925
      %v2396 = vadd.f32 %v2364, 0.49746925
      %v2397 = vadd.f32 %v2365, 0.49746925
      %v2398 = vadd.f32 %v2366, 0.49746925
      %v2399 = vadd.f32 %v2367, 0.49746925
      %v2400 = vadd.f32 %v2368, 0.49746925
      %v2401 = vadd.f32 %v2369, 0.49746925
      %v2402 = vadd.f32 %v2370, 0.49746925
      %v2403 = vadd.f32 %v2371, 0.49746925
      %v2404 = vadd.f32 %v2372, 0.49746925
      %v2405 = vadd.f32 %v2373, 0.49746925
      %v2406 = vadd.f32 %v2374, 0.49746925
      %v2407 = vadd.f32 %v2375, 0.49746925
      %v2408 = vadd.f32 %v2376, 0.49746925
      %v2409 = vadd.f32 %v2377, 0.49746925
      %v2410 = vadd.f32 %v2378, 0.49746925
      %v2411 = vadd.f32 %v2379, 0.49746925
      %v2412 = vadd.f32 %v2380, 0.49746925
      %v2413 = vadd.f32 %v2381, 0.49746925
      %v2414 = vadd.f32 %v2382, 0.49746925
      %v2415 = vadd.f32 %v2383, 0.49746925
      %v2416 = vadd.f32 %v2384, 0.49746925
      %v2417 = vadd.f32 %v2385, 0.49746925
      %v2418 = vadd.f32 %v2386, 0.49746925
      %v2419 = vadd.f32 %v2387, 0.49746925
      %v2420 = vadd.f32 %v2388, 0.49746925
      %v2421 = vadd.f32 %v2389, 0.49746925
      %v2422 = vadd.f32 %v2390, 0.49746925
      %v2423 = vadd.f32 %v2391, 0.49746925
      %v2424 = vadd.f32 %v2392, 0.49746925
      %v2425 = vmul.f32 %v2393, %v1817
      %v2426 = vmul.f32 %v2394, %v1818
      %v2427 = vmul.f32 %v2395, %v1819
      %v2428 = vmul.f32 %v2396, %v1820
      %v2429 = vmul.f32 %v2397, %v1821
      %v2430 = vmul.f32 %v2398, %v1822
      %v2431 = vmul.f32 %v2399, %v1823
      %v2432 = vmul.f32 %v2400, %v1824
      %v2433 = vmul.f32 %v2401, %v1825
      %v2434 = vmul.f32 %v2402, %v1826
      %v2435 = vmul.f32 %v2403, %v1827
      %v2436 = vmul.f32 %v2404, %v1828
      %v2437 = vmul.f32 %v2405, %v1829
      %v2438 = vmul.f32 %v2406, %v1830
      %v2439 = vmul.f32 %v2407, %v1831
      %v2440 = vmul.f32 %v2408, %v1832
      %v2441 = vmul.f32 %v2409, %v1833
      %v2442 = vmul.f32 %v2410, %v1834
      %v2443 = vmul.f32 %v2411, %v1835
      %v2444 = vmul.f32 %v2412, %v1836
      %v2445 = vmul.f32 %v2413, %v1837
      %v2446 = vmul.f32 %v2414, %v1838
      %v2447 = vmul.f32 %v2415, %v1839
      %v2448 = vmul.f32 %v2416, %v1840
      %v2449 = vmul.f32 %v2417, %v1841
      %v2450 = vmul.f32 %v2418, %v1842
      %v2451 = vmul.f32 %v2419, %v1843
      %v2452 = vmul.f32 %v2420, %v1844
      %v2453 = vmul.f32 %v2421, %v1845
      %v2454 = vmul.f32 %v2422, %v1846
      %v2455 = vmul.f32 %v2423, %v1847
      %v2456 = vmul.f32 %v2424, %v1848
      %v2457 = vadd.f32 %v2425, 1.0
      %v2458 = vadd.f32 %v2426, 1.0
      %v2459 = vadd.f32 %v2427, 1.0
      %v2460 = vadd.f32 %v2428, 1.0
      %v2461 = vadd.f32 %v2429, 1.0
      %v2462 = vadd.f32 %v2430, 1.0
      %v2463 = vadd.f32 %v2431, 1.0
      %v2464 = vadd.f32 %v2432, 1.0
      %v2465 = vadd.f32 %v2433, 1.0
      %v2466 = vadd.f32 %v2434, 1.0
      %v2467 = vadd.f32 %v2435, 1.0
      %v2468 = vadd.f32 %v2436, 1.0
      %v2469 = vadd.f32 %v2437, 1.0
      %v2470 = vadd.f32 %v2438, 1.0
      %v2471 = vadd.f32 %v2439, 1.0
      %v2472 = vadd.f32 %v2440, 1.0
      %v2473 = vadd.f32 %v2441, 1.0
      %v2474 = vadd.f32 %v2442, 1.0
      %v2475 = vadd.f32 %v2443, 1.0
      %v2476 = vadd.f32 %v2444, 1.0
      %v2477 = vadd.f32 %v2445, 1.0
      %v2478 = vadd.f32 %v2446, 1.0
      %v2479 = vadd.f32 %v2447, 1.0
      %v2480 = vadd.f32 %v2448, 1.0
      %v2481 = vadd.f32 %v2449, 1.0
      %v2482 = vadd.f32 %v2450, 1.0
      %v2483 = vadd.f32 %v2451, 1.0
      %v2484 = vadd.f32 %v2452, 1.0
      %v2485 = vadd.f32 %v2453, 1.0
      %v2486 = vadd.f32 %v2454, 1.0
      %v2487 = vadd.f32 %v2455, 1.0
      %v2488 = vadd.f32 %v2456, 1.0
      %v2489 = vmul.f32 %v1785, %v2073
      %v2490 = vmul.f32 %v1786, %v2074
      %v2491 = vmul.f32 %v1787, %v2075
      %v2492 = vmul.f32 %v1788, %v2076
      %v2493 = vmul.f32 %v1789, %v2077
      %v2494 = vmul.f32 %v1790, %v2078
      %v2495 = vmul.f32 %v1791, %v2079
      %v2496 = vmul.f32 %v1792, %v2080
      %v2497 = vmul.f32 %v1793, %v2081
      %v2498 = vmul.f32 %v1794, %v2082
      %v2499 = vmul.f32 %v1795, %v2083
      %v2500 = vmul.f32 %v1796, %v2084
      %v2501 = vmul.f32 %v1797, %v2085
      %v2502 = vmul.f32 %v1798, %v2086
      %v2503 = vmul.f32 %v1799, %v2087
      %v2504 = vmul.f32 %v1800, %v2088
      %v2505 = vmul.f32 %v1801, %v2089
      %v2506 = vmul.f32 %v1802, %v2090
      %v2507 = vmul.f32 %v1803, %v2091
      %v2508 = vmul.f32 %v1804, %v2092
      %v2509 = vmul.f32 %v1805, %v2093
      %v2510 = vmul.f32 %v1806, %v2094
      %v2511 = vmul.f32 %v1807, %v2095
      %v2512 = vmul.f32 %v1808, %v2096
      %v2513 = vmul.f32 %v1809, %v2097
      %v2514 = vmul.f32 %v1810, %v2098
      %v2515 = vmul.f32 %v1811, %v2099
      %v2516 = vmul.f32 %v1812, %v2100
      %v2517 = vmul.f32 %v1813, %v2101
      %v2518 = vmul.f32 %v1814, %v2102
      %v2519 = vmul.f32 %v1815, %v2103
      %v2520 = vmul.f32 %v1816, %v2104
      %v2521 = vrcp.pop %v2457
      %v2522 = vmul.f32 %v2489, %v2521
      %v2523 = vrcp.pop %v2458
      %v2524 = vmul.f32 %v2490, %v2523
      %v2525 = vrcp.pop %v2459
      %v2526 = vmul.f32 %v2491, %v2525
      %v2527 = vrcp.pop %v2460
      %v2528 = vmul.f32 %v2492, %v2527
      %v2529 = vrcp.pop %v2461
      %v2530 = vmul.f32 %v2493, %v2529
      %v2531 = vrcp.pop %v2462
      %v2532 = vmul.f32 %v2494, %v2531
      %v2533 = vrcp.pop %v2463
      %v2534 = vmul.f32 %v2495, %v2533
      %v2535 = vrcp.pop %v2464
      %v2536 = vmul.f32 %v2496, %v2535
      %v2537 = vrcp.pop %v2465
      %v2538 = vmul.f32 %v2497, %v2537
      %v2539 = vrcp.pop %v2466
      %v2540 = vmul.f32 %v2498, %v2539
      %v2541 = vrcp.pop %v2467
      %v2542 = vmul.f32 %v2499, %v2541
      %v2543 = vrcp.pop %v2468
      %v2544 = vmul.f32 %v2500, %v2543
      %v2545 = vrcp.pop %v2469
      %v2546 = vmul.f32 %v2501, %v2545
      %v2547 = vrcp.pop %v2470
      %v2548 = vmul.f32 %v2502, %v2547
      %v2549 = vrcp.pop %v2471
      %v2550 = vmul.f32 %v2503, %v2549
      %v2551 = vrcp.pop %v2472
      %v2552 = vmul.f32 %v2504, %v2551
      %v2553 = vrcp.pop %v2473
      %v2554 = vmul.f32 %v2505, %v2553
      %v2555 = vrcp.pop %v2474
      %v2556 = vmul.f32 %v2506, %v2555
      %v2557 = vrcp.pop %v2475
      %v2558 = vmul.f32 %v2507, %v2557
      %v2559 = vrcp.pop %v2476
      %v2560 = vmul.f32 %v2508, %v2559
      %v2561 = vrcp.pop %v2477
      %v2562 = vmul.f32 %v2509, %v2561
      %v2563 = vrcp.pop %v2478
      %v2564 = vmul.f32 %v2510, %v2563
      %v2565 = vrcp.pop %v2479
      %v2566 = vmul.f32 %v2511, %v2565
      %v2567 = vrcp.pop %v2480
      %v2568 = vmul.f32 %v2512, %v2567
      %v2569 = vrcp.pop %v2481
      %v2570 = vmul.f32 %v2513, %v2569
      %v2571 = vrcp.pop %v2482
      %v2572 = vmul.f32 %v2514, %v2571
      %v2573 = vrcp.pop %v2483
      %v2574 = vmul.f32 %v2515, %v2573
      %v2575 = vrcp.pop %v2484
      %v2576 = vmul.f32 %v2516, %v2575
      %v2577 = vrcp.pop %v2485
      %v2578 = vmul.f32 %v2517, %v2577
      %v2579 = vrcp.pop %v2486
      %v2580 = vmul.f32 %v2518, %v2579
      %v2581 = vrcp.pop %v2487
      %v2582 = vmul.f32 %v2519, %v2581
      %v2583 = vrcp.pop %v2488
      %v2584 = vmul.f32 %v2520, %v2583
      %v2585 = vadd.f32 %v2522, 1.0
      %v2586 = vadd.f32 %v2524, 1.0
      %v2587 = vadd.f32 %v2526, 1.0
      %v2588 = vadd.f32 %v2528, 1.0
      %v2589 = vadd.f32 %v2530, 1.0
      %v2590 = vadd.f32 %v2532, 1.0
      %v2591 = vadd.f32 %v2534, 1.0
      %v2592 = vadd.f32 %v2536, 1.0
      %v2593 = vadd.f32 %v2538, 1.0
      %v2594 = vadd.f32 %v2540, 1.0
      %v2595 = vadd.f32 %v2542, 1.0
      %v2596 = vadd.f32 %v2544, 1.0
      %v2597 = vadd.f32 %v2546, 1.0
      %v2598 = vadd.f32 %v2548, 1.0
      %v2599 = vadd.f32 %v2550, 1.0
      %v2600 = vadd.f32 %v2552, 1.0
      %v2601 = vadd.f32 %v2554, 1.0
      %v2602 = vadd.f32 %v2556, 1.0
      %v2603 = vadd.f32 %v2558, 1.0
      %v2604 = vadd.f32 %v2560, 1.0
      %v2605 = vadd.f32 %v2562, 1.0
      %v2606 = vadd.f32 %v2564, 1.0
      %v2607 = vadd.f32 %v2566, 1.0
      %v2608 = vadd.f32 %v2568, 1.0
      %v2609 = vadd.f32 %v2570, 1.0
      %v2610 = vadd.f32 %v2572, 1.0
      %v2611 = vadd.f32 %v2574, 1.0
      %v2612 = vadd.f32 %v2576, 1.0
      %v2613 = vadd.f32 %v2578, 1.0
      %v2614 = vadd.f32 %v2580, 1.0
      %v2615 = vadd.f32 %v2582, 1.0
      %v2616 = vadd.f32 %v2584, 1.0
      %v2617 = vmul.f32 %v1689, %v2585
      %v2618 = vmul.f32 %v1690, %v2586
      %v2619 = vmul.f32 %v1691, %v2587
      %v2620 = vmul.f32 %v1692, %v2588
      %v2621 = vmul.f32 %v1693, %v2589
      %v2622 = vmul.f32 %v1694, %v2590
      %v2623 = vmul.f32 %v1695, %v2591
      %v2624 = vmul.f32 %v1696, %v2592
      %v2625 = vmul.f32 %v1697, %v2593
      %v2626 = vmul.f32 %v1698, %v2594
      %v2627 = vmul.f32 %v1699, %v2595
      %v2628 = vmul.f32 %v1700, %v2596
      %v2629 = vmul.f32 %v1701, %v2597
      %v2630 = vmul.f32 %v1702, %v2598
      %v2631 = vmul.f32 %v1703, %v2599
      %v2632 = vmul.f32 %v1704, %v2600
      %v2633 = vmul.f32 %v1705, %v2601
      %v2634 = vmul.f32 %v1706, %v2602
      %v2635 = vmul.f32 %v1707, %v2603
      %v2636 = vmul.f32 %v1708, %v2604
      %v2637 = vmul.f32 %v1709, %v2605
      %v2638 = vmul.f32 %v1710, %v2606
      %v2639 = vmul.f32 %v1711, %v2607
      %v2640 = vmul.f32 %v1712, %v2608
      %v2641 = vmul.f32 %v1713, %v2609
      %v2642 = vmul.f32 %v1714, %v2610
      %v2643 = vmul.f32 %v1715, %v2611
      %v2644 = vmul.f32 %v1716, %v2612
      %v2645 = vmul.f32 %v1717, %v2613
      %v2646 = vmul.f32 %v1718, %v2614
      %v2647 = vmul.f32 %v1719, %v2615
      %v2648 = vmul.f32 %v1720, %v2616
      %v2649 = vpack.c.bf16 %v2618, %v2617
      %v2650 = vpack.c.bf16 %v2620, %v2619
      %v2651 = vpack.c.bf16 %v2622, %v2621
      %v2652 = vpack.c.bf16 %v2624, %v2623
      %v2653 = vpack.c.bf16 %v2626, %v2625
      %v2654 = vpack.c.bf16 %v2628, %v2627
      %v2655 = vpack.c.bf16 %v2630, %v2629
      %v2656 = vpack.c.bf16 %v2632, %v2631
      %v2657 = vpack.c.bf16 %v2634, %v2633
      %v2658 = vpack.c.bf16 %v2636, %v2635
      %v2659 = vpack.c.bf16 %v2638, %v2637
      %v2660 = vpack.c.bf16 %v2640, %v2639
      %v2661 = vpack.c.bf16 %v2642, %v2641
      %v2662 = vpack.c.bf16 %v2644, %v2643
      %v2663 = vpack.c.bf16 %v2646, %v2645
      %v2664 = vpack.c.bf16 %v2648, %v2647
      %v2681 = vunpack.c.l.b16 %v2649
      %v2682 = vunpack.c.h.b16 %v2649
      %v2683 = vunpack.c.l.b16 %v2650
      %v2684 = vunpack.c.h.b16 %v2650
      %v2685 = vunpack.c.l.b16 %v2651
      %v2686 = vunpack.c.h.b16 %v2651
      %v2687 = vunpack.c.l.b16 %v2652
      %v2688 = vunpack.c.h.b16 %v2652
      %v2689 = vunpack.c.l.b16 %v2653
      %v2690 = vunpack.c.h.b16 %v2653
      %v2691 = vunpack.c.l.b16 %v2654
      %v2692 = vunpack.c.h.b16 %v2654
      %v2693 = vunpack.c.l.b16 %v2655
      %v2694 = vunpack.c.h.b16 %v2655
      %v2695 = vunpack.c.l.b16 %v2656
      %v2696 = vunpack.c.h.b16 %v2656
      %v2697 = vunpack.c.l.b16 %v2657
      %v2698 = vunpack.c.h.b16 %v2657
      %v2699 = vunpack.c.l.b16 %v2658
      %v2700 = vunpack.c.h.b16 %v2658
      %v2701 = vunpack.c.l.b16 %v2659
      %v2702 = vunpack.c.h.b16 %v2659
      %v2703 = vunpack.c.l.b16 %v2660
      %v2704 = vunpack.c.h.b16 %v2660
      %v2705 = vunpack.c.l.b16 %v2661
      %v2706 = vunpack.c.h.b16 %v2661
      %v2707 = vunpack.c.l.b16 %v2662
      %v2708 = vunpack.c.h.b16 %v2662
      %v2709 = vunpack.c.l.b16 %v2663
      %v2710 = vunpack.c.h.b16 %v2663
      %v2711 = vunpack.c.l.b16 %v2664
      %v2712 = vunpack.c.h.b16 %v2664
      %v2713 = vpack.c.b16 %v2681, %v2681
      %v2714 = vpack.c.b16 %v2682, %v2682
      %v2715 = vpack.c.b16 %v2683, %v2683
      %v2716 = vpack.c.b16 %v2684, %v2684
      %v2717 = vpack.c.b16 %v2685, %v2685
      %v2718 = vpack.c.b16 %v2686, %v2686
      %v2719 = vpack.c.b16 %v2687, %v2687
      %v2720 = vpack.c.b16 %v2688, %v2688
      %v2721 = vpack.c.b16 %v2689, %v2689
      %v2722 = vpack.c.b16 %v2690, %v2690
      %v2723 = vpack.c.b16 %v2691, %v2691
      %v2724 = vpack.c.b16 %v2692, %v2692
      %v2725 = vpack.c.b16 %v2693, %v2693
      %v2726 = vpack.c.b16 %v2694, %v2694
      %v2727 = vpack.c.b16 %v2695, %v2695
      %v2728 = vpack.c.b16 %v2696, %v2696
      %v2729 = vpack.c.b16 %v2697, %v2697
      %v2730 = vpack.c.b16 %v2698, %v2698
      %v2731 = vpack.c.b16 %v2699, %v2699
      %v2732 = vpack.c.b16 %v2700, %v2700
      %v2733 = vpack.c.b16 %v2701, %v2701
      %v2734 = vpack.c.b16 %v2702, %v2702
      %v2735 = vpack.c.b16 %v2703, %v2703
      %v2736 = vpack.c.b16 %v2704, %v2704
      %v2737 = vpack.c.b16 %v2705, %v2705
      %v2738 = vpack.c.b16 %v2706, %v2706
      %v2739 = vpack.c.b16 %v2707, %v2707
      %v2740 = vpack.c.b16 %v2708, %v2708
      %v2741 = vpack.c.b16 %v2709, %v2709
      %v2742 = vpack.c.b16 %v2710, %v2710
      %v2743 = vpack.c.b16 %v2711, %v2711
      %v2744 = vpack.c.b16 %v2712, %v2712
      %vm2777 = vcmask 257024
      %2778 = vst.msk [vmem:[%s314] sm:$0xf] %vm2777, %v2713
      %2779 = vst.msk [vmem:[%s314 + $0x4] sm:$0xf] %vm2777, %v2714
      %2780 = vst.msk [vmem:[%s314 + $0x8] sm:$0xf] %vm2777, %v2715
      %2781 = vst.msk [vmem:[%s314 + $0xc] sm:$0xf] %vm2777, %v2716
      %2782 = vst.msk [vmem:[%s314 + $0x10] sm:$0xf] %vm2777, %v2717
      %2783 = vst.msk [vmem:[%s314 + $0x14] sm:$0xf] %vm2777, %v2718
      %2784 = vst.msk [vmem:[%s314 + $0x18] sm:$0xf] %vm2777, %v2719
      %2785 = vst.msk [vmem:[%s314 + $0x1c] sm:$0xf] %vm2777, %v2720
      %2786 = vst.msk [vmem:[%s314 + $0x20] sm:$0xf] %vm2777, %v2721
      %2787 = vst.msk [vmem:[%s314 + $0x24] sm:$0xf] %vm2777, %v2722
      %2788 = vst.msk [vmem:[%s314 + $0x28] sm:$0xf] %vm2777, %v2723
      %2789 = vst.msk [vmem:[%s314 + $0x2c] sm:$0xf] %vm2777, %v2724
      %2790 = vst.msk [vmem:[%s314 + $0x30] sm:$0xf] %vm2777, %v2725
      %2791 = vst.msk [vmem:[%s314 + $0x34] sm:$0xf] %vm2777, %v2726
      %2792 = vst.msk [vmem:[%s314 + $0x38] sm:$0xf] %vm2777, %v2727
      %2793 = vst.msk [vmem:[%s314 + $0x3c] sm:$0xf] %vm2777, %v2728
      %2794 = vst.msk [vmem:[%s314 + $0x40] sm:$0xf] %vm2777, %v2729
      %2795 = vst.msk [vmem:[%s314 + $0x44] sm:$0xf] %vm2777, %v2730
      %2796 = vst.msk [vmem:[%s314 + $0x48] sm:$0xf] %vm2777, %v2731
      %2797 = vst.msk [vmem:[%s314 + $0x4c] sm:$0xf] %vm2777, %v2732
      %2798 = vst.msk [vmem:[%s314 + $0x50] sm:$0xf] %vm2777, %v2733
      %2799 = vst.msk [vmem:[%s314 + $0x54] sm:$0xf] %vm2777, %v2734
      %2800 = vst.msk [vmem:[%s314 + $0x58] sm:$0xf] %vm2777, %v2735
      %2801 = vst.msk [vmem:[%s314 + $0x5c] sm:$0xf] %vm2777, %v2736
      %2802 = vst.msk [vmem:[%s314 + $0x60] sm:$0xf] %vm2777, %v2737
      %2803 = vst.msk [vmem:[%s314 + $0x64] sm:$0xf] %vm2777, %v2738
      %2804 = vst.msk [vmem:[%s314 + $0x68] sm:$0xf] %vm2777, %v2739
      %2805 = vst.msk [vmem:[%s314 + $0x6c] sm:$0xf] %vm2777, %v2740
      %2806 = vst.msk [vmem:[%s314 + $0x70] sm:$0xf] %vm2777, %v2741
      %2807 = vst.msk [vmem:[%s314 + $0x74] sm:$0xf] %vm2777, %v2742
      %2808 = vst.msk [vmem:[%s314 + $0x78] sm:$0xf] %vm2777, %v2743
      %2809 = vst.msk [vmem:[%s314 + $0x7c] sm:$0xf] %vm2777, %v2744
      %p2810 = scmp.lt.s32.totalorder %s20, 1
      %s2811 = scalar_select %p2810, %s20, 1
      %p2812 = scmp.lt.s32.totalorder %s21, 0
      %s2813 = scalar_select %p2812, %s21, 0
      %s2814 = smul.addr %s2811, 32
      %s2815 = sadd.s32 %s2813, %s2814
      %s2816 = smul.addr %s2815, 4
      %s2817 = scalar_lea.vmem %s5, %s2816
      // Predicated region
      $region41: #{_lambda_.8} parent=39 // pred_check
        %p2818 = pneg %p180
      $region42: #{_lambda_.8} parent=39 // pred_check_branch
        %2820 = sbr.rel (%p2818) target = $region44
      $region43: #{_lambda_.8} parent=39 // pred_region
        _
      $region44: #{_lambda_.8} parent=39 // pred_fallthru
        _
    $region40: #{_lambda_.8} parent=5 // pred_fallthru
      _
    %p2821 = scmp.le.s32.totalorder 2, %s11
    // Predicated region
    $region45: #{_lambda_.8} parent=5 // pred_check
      %p2822 = pneg %p2821
    $region46: #{_lambda_.8} parent=5 // pred_check_branch
      %2824 = sbr.rel (%p2822) target = $region48
    $region47: #{_lambda_.8} parent=5 // pred_region
      %s2825 = ssub.s32 %s11, 2
      // Predicated region
      $region49: #{_lambda_.8} parent=47 // pred_check
        %p2826 = pneg %p186
      $region50: #{_lambda_.8} parent=47 // pred_check_branch
        %2828 = sbr.rel (%p2826) target = $region52
      $region51: #{_lambda_.8} parent=47 // pred_region
        %p2829 = scmp.lt.s32.totalorder %s22, 1
        %s2830 = scalar_select %p2829, %s22, 1
        %p2831 = scmp.lt.s32.totalorder %s23, 0
        %s2832 = scalar_select %p2831, %s23, 0
        %s2833 = smul.addr %s2830, 32
        %s2834 = sadd.s32 %s2832, %s2833
        %s2835 = smul.addr %s2834, 4
        %s2836 = scalar_lea.vmem %s5, %s2835
      $region52: #{_lambda_.8} parent=47 // pred_fallthru
        _
    $region48: #{_lambda_.8} parent=5 // pred_fallthru
      _
  $region6: #{_lambda_.8} parent=0 // loop_footer
    %s15 = sadd.s32 1, %s11
  $region7: #{_lambda_.8} parent=0 // loop_footer_branch
    %10 = sbr.rel target = $region3
  $region8: #{_lambda_.8} parent=0 // loop_exit
    _

// kernel: _lambda_.7
$region0: #{_lambda_.7}
  #allocation0 [shape = 'u32[]', space=smem, size = 0x4, offset = 0x4, fixed_abs, tag = 'smem constant byte address 0x4 - core index']
  #allocation1 [shape = 'u32[144,128]{1,0:T(1,128)}', space=vmem, size = 0x12000, scoped, tag = 'internal scratch']
  #allocation2 [shape = 'f32[1]{0:T(128)S(6)}', space=smem, size = 0x200, scoped, tag = 'scoped memory for _lambda_.7']
  %s0 = inlined_call_operand.<no memory space> [shape: f32[1], index: 0, kind: input, shape index: {}]
  %s1 = inlined_call_operand.vmem [shape: bf16[16,8,128], index: 1, kind: input, shape index: {}]
  %s2 = inlined_call_operand.vmem [shape: bf16[16,8,128], index: 2, kind: input, shape index: {}]
  %s3 = inlined_call_operand.vmem [shape: bf16[16,8,128], index: 3, kind: input, shape index: {}]
  %s4 = inlined_call_operand.vmem [shape: bf16[16,8,128], index: 4, kind: output, shape index: {}]
  %s5 = sld [smem:[#allocation0]]
  $region26: #{_lambda_.7} parent=0
    _
  %s7 = ssub.s32 1, %s5
  %s8 = scalar_select 0, %s7, %s5
  %9 = sst [smem:[#allocation2]] %s0
  // Predicated region
  $region2: #{_lambda_.7} parent=0 // pred_check
    _
  $region3: #{_lambda_.7} parent=0 // pred_check_branch
    %11 = sbr.rel (0) target = $region5
  $region4: #{_lambda_.7} parent=0 // pred_region
    _
  $region5: #{_lambda_.7} parent=0 // pred_fallthru
    _
  // Predicated region
  $region6: #{_lambda_.7} parent=0 // pred_check
    _
  $region7: #{_lambda_.7} parent=0 // pred_check_branch
    %13 = sbr.rel (0) target = $region9
  $region8: #{_lambda_.7} parent=0 // pred_region
    _
  $region9: #{_lambda_.7} parent=0 // pred_fallthru
    _
  // Predicated region
  $region10: #{_lambda_.7} parent=0 // pred_check
    _
  $region11: #{_lambda_.7} parent=0 // pred_check_branch
    %15 = sbr.rel (0) target = $region13
  $region12: #{_lambda_.7} parent=0 // pred_region
    _
  $region13: #{_lambda_.7} parent=0 // pred_fallthru
    _
  // Predicated region
  $region14: #{_lambda_.7} parent=0 // pred_check
    _
  $region15: #{_lambda_.7} parent=0 // pred_check_branch
    %17 = sbr.rel (0) target = $region17
  $region16: #{_lambda_.7} parent=0 // pred_region
    _
  $region17: #{_lambda_.7} parent=0 // pred_fallthru
    _
  %v18 = vld [vmem:[%s1] sm:$0xf]
  %v19 = vld [vmem:[%s1 + $0x4] sm:$0xf]
  %v20 = vld [vmem:[%s1 + $0x8] sm:$0xf]
  %v21 = vld [vmem:[%s1 + $0xc] sm:$0xf]
  %v22 = vld [vmem:[%s1 + $0x10] sm:$0xf]
  %v23 = vld [vmem:[%s1 + $0x14] sm:$0xf]
  %v24 = vld [vmem:[%s1 + $0x18] sm:$0xf]
  %v25 = vld [vmem:[%s1 + $0x1c] sm:$0xf]
  %v26 = vld [vmem:[%s1 + $0x20] sm:$0xf]
  %v27 = vld [vmem:[%s1 + $0x24] sm:$0xf]
  %v28 = vld [vmem:[%s1 + $0x28] sm:$0xf]
  %v29 = vld [vmem:[%s1 + $0x2c] sm:$0xf]
  %v30 = vld [vmem:[%s1 + $0x30] sm:$0xf]
  %v31 = vld [vmem:[%s1 + $0x34] sm:$0xf]
  %v32 = vld [vmem:[%s1 + $0x38] sm:$0xf]
  %v33 = vld [vmem:[%s1 + $0x3c] sm:$0xf]
  %v34 = vunpack.c.l.bf16 %v18
  %v35 = vunpack.c.l.bf16 %v19
  %v36 = vunpack.c.l.bf16 %v20
  %v37 = vunpack.c.l.bf16 %v21
  %v38 = vunpack.c.l.bf16 %v22
  %v39 = vunpack.c.l.bf16 %v23
  %v40 = vunpack.c.l.bf16 %v24
  %v41 = vunpack.c.l.bf16 %v25
  %v42 = vunpack.c.l.bf16 %v26
  %v43 = vunpack.c.l.bf16 %v27
  %v44 = vunpack.c.l.bf16 %v28
  %v45 = vunpack.c.l.bf16 %v29
  %v46 = vunpack.c.l.bf16 %v30
  %v47 = vunpack.c.l.bf16 %v31
  %v48 = vunpack.c.l.bf16 %v32
  %v49 = vunpack.c.l.bf16 %v33
  %v50 = vld [vmem:[%s2] sm:$0xf]
  %v51 = vld [vmem:[%s2 + $0x4] sm:$0xf]
  %v52 = vld [vmem:[%s2 + $0x8] sm:$0xf]
  %v53 = vld [vmem:[%s2 + $0xc] sm:$0xf]
  %v54 = vld [vmem:[%s2 + $0x10] sm:$0xf]
  %v55 = vld [vmem:[%s2 + $0x14] sm:$0xf]
  %v56 = vld [vmem:[%s2 + $0x18] sm:$0xf]
  %v57 = vld [vmem:[%s2 + $0x1c] sm:$0xf]
  %v58 = vld [vmem:[%s2 + $0x20] sm:$0xf]
  %v59 = vld [vmem:[%s2 + $0x24] sm:$0xf]
  %v60 = vld [vmem:[%s2 + $0x28] sm:$0xf]
  %v61 = vld [vmem:[%s2 + $0x2c] sm:$0xf]
  %v62 = vld [vmem:[%s2 + $0x30] sm:$0xf]
  %v63 = vld [vmem:[%s2 + $0x34] sm:$0xf]
  %v64 = vld [vmem:[%s2 + $0x38] sm:$0xf]
  %v65 = vld [vmem:[%s2 + $0x3c] sm:$0xf]
  %v66 = vunpack.c.l.bf16 %v50
  %v67 = vunpack.c.l.bf16 %v51
  %v68 = vunpack.c.l.bf16 %v52
  %v69 = vunpack.c.l.bf16 %v53
  %v70 = vunpack.c.l.bf16 %v54
  %v71 = vunpack.c.l.bf16 %v55
  %v72 = vunpack.c.l.bf16 %v56
  %v73 = vunpack.c.l.bf16 %v57
  %v74 = vunpack.c.l.bf16 %v58
  %v75 = vunpack.c.l.bf16 %v59
  %v76 = vunpack.c.l.bf16 %v60
  %v77 = vunpack.c.l.bf16 %v61
  %v78 = vunpack.c.l.bf16 %v62
  %v79 = vunpack.c.l.bf16 %v63
  %v80 = vunpack.c.l.bf16 %v64
  %v81 = vunpack.c.l.bf16 %v65
  %v82 = vld [vmem:[%s3] sm:$0xf]
  %v83 = vld [vmem:[%s3 + $0x4] sm:$0xf]
  %v84 = vld [vmem:[%s3 + $0x8] sm:$0xf]
  %v85 = vld [vmem:[%s3 + $0xc] sm:$0xf]
  %v86 = vld [vmem:[%s3 + $0x10] sm:$0xf]
  %v87 = vld [vmem:[%s3 + $0x14] sm:$0xf]
  %v88 = vld [vmem:[%s3 + $0x18] sm:$0xf]
  %v89 = vld [vmem:[%s3 + $0x1c] sm:$0xf]
  %v90 = vld [vmem:[%s3 + $0x20] sm:$0xf]
  %v91 = vld [vmem:[%s3 + $0x24] sm:$0xf]
  %v92 = vld [vmem:[%s3 + $0x28] sm:$0xf]
  %v93 = vld [vmem:[%s3 + $0x2c] sm:$0xf]
  %v94 = vld [vmem:[%s3 + $0x30] sm:$0xf]
  %v95 = vld [vmem:[%s3 + $0x34] sm:$0xf]
  %v96 = vld [vmem:[%s3 + $0x38] sm:$0xf]
  %v97 = vld [vmem:[%s3 + $0x3c] sm:$0xf]
  %v98 = vunpack.c.l.bf16 %v82
  %v99 = vunpack.c.l.bf16 %v83
  %v100 = vunpack.c.l.bf16 %v84
  %v101 = vunpack.c.l.bf16 %v85
  %v102 = vunpack.c.l.bf16 %v86
  %v103 = vunpack.c.l.bf16 %v87
  %v104 = vunpack.c.l.bf16 %v88
  %v105 = vunpack.c.l.bf16 %v89
  %v106 = vunpack.c.l.bf16 %v90
  %v107 = vunpack.c.l.bf16 %v91
  %v108 = vunpack.c.l.bf16 %v92
  %v109 = vunpack.c.l.bf16 %v93
  %v110 = vunpack.c.l.bf16 %v94
  %v111 = vunpack.c.l.bf16 %v95
  %v112 = vunpack.c.l.bf16 %v96
  %v113 = vunpack.c.l.bf16 %v97
  %v114 = vmul.f32 %v34, %v34
  %v115 = vmul.f32 %v35, %v35
  %v116 = vmul.f32 %v36, %v36
  %v117 = vmul.f32 %v37, %v37
  %v118 = vmul.f32 %v38, %v38
  %v119 = vmul.f32 %v39, %v39
  %v120 = vmul.f32 %v40, %v40
  %v121 = vmul.f32 %v41, %v41
  %v122 = vmul.f32 %v42, %v42
  %v123 = vmul.f32 %v43, %v43
  %v124 = vmul.f32 %v44, %v44
  %v125 = vmul.f32 %v45, %v45
  %v126 = vmul.f32 %v46, %v46
  %v127 = vmul.f32 %v47, %v47
  %v128 = vmul.f32 %v48, %v48
  %v129 = vmul.f32 %v49, %v49
  %v130 = vrot.slane %v114, 4
  %v131 = vadd.f32 %v114, %v130
  %v132 = vrot.slane %v131, 2
  %v133 = vadd.f32 %v131, %v132
  %v134 = vrot.slane %v133, 1
  %v135 = vadd.f32 %v133, %v134
  %v136 = vrot.slane %v115, 4
  %v137 = vadd.f32 %v115, %v136
  %v138 = vrot.slane %v137, 2
  %v139 = vadd.f32 %v137, %v138
  %v140 = vrot.slane %v139, 1
  %v141 = vadd.f32 %v139, %v140
  %v142 = vrot.slane %v116, 4
  %v143 = vadd.f32 %v116, %v142
  %v144 = vrot.slane %v143, 2
  %v145 = vadd.f32 %v143, %v144
  %v146 = vrot.slane %v145, 1
  %v147 = vadd.f32 %v145, %v146
  %v148 = vrot.slane %v117, 4
  %v149 = vadd.f32 %v117, %v148
  %v150 = vrot.slane %v149, 2
  %v151 = vadd.f32 %v149, %v150
  %v152 = vrot.slane %v151, 1
  %v153 = vadd.f32 %v151, %v152
  %v154 = vrot.slane %v118, 4
  %v155 = vadd.f32 %v118, %v154
  %v156 = vrot.slane %v155, 2
  %v157 = vadd.f32 %v155, %v156
  %v158 = vrot.slane %v157, 1
  %v159 = vadd.f32 %v157, %v158
  %v160 = vrot.slane %v119, 4
  %v161 = vadd.f32 %v119, %v160
  %v162 = vrot.slane %v161, 2
  %v163 = vadd.f32 %v161, %v162
  %v164 = vrot.slane %v163, 1
  %v165 = vadd.f32 %v163, %v164
  %v166 = vrot.slane %v120, 4
  %v167 = vadd.f32 %v120, %v166
  %v168 = vrot.slane %v167, 2
  %v169 = vadd.f32 %v167, %v168
  %v170 = vrot.slane %v169, 1
  %v171 = vadd.f32 %v169, %v170
  %v172 = vrot.slane %v121, 4
  %v173 = vadd.f32 %v121, %v172
  %v174 = vrot.slane %v173, 2
  %v175 = vadd.f32 %v173, %v174
  %v176 = vrot.slane %v175, 1
  %v177 = vadd.f32 %v175, %v176
  %v178 = vrot.slane %v122, 4
  %v179 = vadd.f32 %v122, %v178
  %v180 = vrot.slane %v179, 2
  %v181 = vadd.f32 %v179, %v180
  %v182 = vrot.slane %v181, 1
  %v183 = vadd.f32 %v181, %v182
  %v184 = vrot.slane %v123, 4
  %v185 = vadd.f32 %v123, %v184
  %v186 = vrot.slane %v185, 2
  %v187 = vadd.f32 %v185, %v186
  %v188 = vrot.slane %v187, 1
  %v189 = vadd.f32 %v187, %v188
  %v190 = vrot.slane %v124, 4
  %v191 = vadd.f32 %v124, %v190
  %v192 = vrot.slane %v191, 2
  %v193 = vadd.f32 %v191, %v192
  %v194 = vrot.slane %v193, 1
  %v195 = vadd.f32 %v193, %v194
  %v196 = vrot.slane %v125, 4
  %v197 = vadd.f32 %v125, %v196
  %v198 = vrot.slane %v197, 2
  %v199 = vadd.f32 %v197, %v198
  %v200 = vrot.slane %v199, 1
  %v201 = vadd.f32 %v199, %v200
  %v202 = vrot.slane %v126, 4
  %v203 = vadd.f32 %v126, %v202
  %v204 = vrot.slane %v203, 2
  %v205 = vadd.f32 %v203, %v204
  %v206 = vrot.slane %v205, 1
  %v207 = vadd.f32 %v205, %v206
  %v208 = vrot.slane %v127, 4
  %v209 = vadd.f32 %v127, %v208
  %v210 = vrot.slane %v209, 2
  %v211 = vadd.f32 %v209, %v210
  %v212 = vrot.slane %v211, 1
  %v213 = vadd.f32 %v211, %v212
  %v214 = vrot.slane %v128, 4
  %v215 = vadd.f32 %v128, %v214
  %v216 = vrot.slane %v215, 2
  %v217 = vadd.f32 %v215, %v216
  %v218 = vrot.slane %v217, 1
  %v219 = vadd.f32 %v217, %v218
  %v220 = vrot.slane %v129, 4
  %v221 = vadd.f32 %v129, %v220
  %v222 = vrot.slane %v221, 2
  %v223 = vadd.f32 %v221, %v222
  %v224 = vrot.slane %v223, 1
  %v225 = vadd.f32 %v223, %v224
  %v226 = vmax.f32 %v135, 1e-24
  %v227 = vmax.f32 %v141, 1e-24
  %v228 = vmax.f32 %v147, 1e-24
  %v229 = vmax.f32 %v153, 1e-24
  %v230 = vmax.f32 %v159, 1e-24
  %v231 = vmax.f32 %v165, 1e-24
  %v232 = vmax.f32 %v171, 1e-24
  %v233 = vmax.f32 %v177, 1e-24
  %v234 = vmax.f32 %v183, 1e-24
  %v235 = vmax.f32 %v189, 1e-24
  %v236 = vmax.f32 %v195, 1e-24
  %v237 = vmax.f32 %v201, 1e-24
  %v238 = vmax.f32 %v207, 1e-24
  %v239 = vmax.f32 %v213, 1e-24
  %v240 = vmax.f32 %v219, 1e-24
  %v241 = vmax.f32 %v225, 1e-24
  %v242 = vrsqrt.pop %v226
  %v243 = vrsqrt.pop %v227
  %v244 = vrsqrt.pop %v228
  %v245 = vrsqrt.pop %v229
  %v246 = vrsqrt.pop %v230
  %v247 = vrsqrt.pop %v231
  %v248 = vrsqrt.pop %v232
  %v249 = vrsqrt.pop %v233
  %v250 = vrsqrt.pop %v234
  %v251 = vrsqrt.pop %v235
  %v252 = vrsqrt.pop %v236
  %v253 = vrsqrt.pop %v237
  %v254 = vrsqrt.pop %v238
  %v255 = vrsqrt.pop %v239
  %v256 = vrsqrt.pop %v240
  %v257 = vrsqrt.pop %v241
  %v258 = vmul.f32 %v34, %v242
  %v259 = vmul.f32 %v35, %v243
  %v260 = vmul.f32 %v36, %v244
  %v261 = vmul.f32 %v37, %v245
  %v262 = vmul.f32 %v38, %v246
  %v263 = vmul.f32 %v39, %v247
  %v264 = vmul.f32 %v40, %v248
  %v265 = vmul.f32 %v41, %v249
  %v266 = vmul.f32 %v42, %v250
  %v267 = vmul.f32 %v43, %v251
  %v268 = vmul.f32 %v44, %v252
  %v269 = vmul.f32 %v45, %v253
  %v270 = vmul.f32 %v46, %v254
  %v271 = vmul.f32 %v47, %v255
  %v272 = vmul.f32 %v48, %v256
  %v273 = vmul.f32 %v49, %v257
  %v274 = vmul.f32 %v66, %v66
  %v275 = vmul.f32 %v67, %v67
  %v276 = vmul.f32 %v68, %v68
  %v277 = vmul.f32 %v69, %v69
  %v278 = vmul.f32 %v70, %v70
  %v279 = vmul.f32 %v71, %v71
  %v280 = vmul.f32 %v72, %v72
  %v281 = vmul.f32 %v73, %v73
  %v282 = vmul.f32 %v74, %v74
  %v283 = vmul.f32 %v75, %v75
  %v284 = vmul.f32 %v76, %v76
  %v285 = vmul.f32 %v77, %v77
  %v286 = vmul.f32 %v78, %v78
  %v287 = vmul.f32 %v79, %v79
  %v288 = vmul.f32 %v80, %v80
  %v289 = vmul.f32 %v81, %v81
  %v290 = vrot.slane %v274, 4
  %v291 = vadd.f32 %v274, %v290
  %v292 = vrot.slane %v291, 2
  %v293 = vadd.f32 %v291, %v292
  %v294 = vrot.slane %v293, 1
  %v295 = vadd.f32 %v293, %v294
  %v296 = vrot.slane %v275, 4
  %v297 = vadd.f32 %v275, %v296
  %v298 = vrot.slane %v297, 2
  %v299 = vadd.f32 %v297, %v298
  %v300 = vrot.slane %v299, 1
  %v301 = vadd.f32 %v299, %v300
  %v302 = vrot.slane %v276, 4
  %v303 = vadd.f32 %v276, %v302
  %v304 = vrot.slane %v303, 2
  %v305 = vadd.f32 %v303, %v304
  %v306 = vrot.slane %v305, 1
  %v307 = vadd.f32 %v305, %v306
  %v308 = vrot.slane %v277, 4
  %v309 = vadd.f32 %v277, %v308
  %v310 = vrot.slane %v309, 2
  %v311 = vadd.f32 %v309, %v310
  %v312 = vrot.slane %v311, 1
  %v313 = vadd.f32 %v311, %v312
  %v314 = vrot.slane %v278, 4
  %v315 = vadd.f32 %v278, %v314
  %v316 = vrot.slane %v315, 2
  %v317 = vadd.f32 %v315, %v316
  %v318 = vrot.slane %v317, 1
  %v319 = vadd.f32 %v317, %v318
  %v320 = vrot.slane %v279, 4
  %v321 = vadd.f32 %v279, %v320
  %v322 = vrot.slane %v321, 2
  %v323 = vadd.f32 %v321, %v322
  %v324 = vrot.slane %v323, 1
  %v325 = vadd.f32 %v323, %v324
  %v326 = vrot.slane %v280, 4
  %v327 = vadd.f32 %v280, %v326
  %v328 = vrot.slane %v327, 2
  %v329 = vadd.f32 %v327, %v328
  %v330 = vrot.slane %v329, 1
  %v331 = vadd.f32 %v329, %v330
  %v332 = vrot.slane %v281, 4
  %v333 = vadd.f32 %v281, %v332
  %v334 = vrot.slane %v333, 2
  %v335 = vadd.f32 %v333, %v334
  %v336 = vrot.slane %v335, 1
  %v337 = vadd.f32 %v335, %v336
  %v338 = vrot.slane %v282, 4
  %v339 = vadd.f32 %v282, %v338
  %v340 = vrot.slane %v339, 2
  %v341 = vadd.f32 %v339, %v340
  %v342 = vrot.slane %v341, 1
  %v343 = vadd.f32 %v341, %v342
  %v344 = vrot.slane %v283, 4
  %v345 = vadd.f32 %v283, %v344
  %v346 = vrot.slane %v345, 2
  %v347 = vadd.f32 %v345, %v346
  %v348 = vrot.slane %v347, 1
  %v349 = vadd.f32 %v347, %v348
  %v350 = vrot.slane %v284, 4
  %v351 = vadd.f32 %v284, %v350
  %v352 = vrot.slane %v351, 2
  %v353 = vadd.f32 %v351, %v352
  %v354 = vrot.slane %v353, 1
  %v355 = vadd.f32 %v353, %v354
  %v356 = vrot.slane %v285, 4
  %v357 = vadd.f32 %v285, %v356
  %v358 = vrot.slane %v357, 2
  %v359 = vadd.f32 %v357, %v358
  %v360 = vrot.slane %v359, 1
  %v361 = vadd.f32 %v359, %v360
  %v362 = vrot.slane %v286, 4
  %v363 = vadd.f32 %v286, %v362
  %v364 = vrot.slane %v363, 2
  %v365 = vadd.f32 %v363, %v364
  %v366 = vrot.slane %v365, 1
  %v367 = vadd.f32 %v365, %v366
  %v368 = vrot.slane %v287, 4
  %v369 = vadd.f32 %v287, %v368
  %v370 = vrot.slane %v369, 2
  %v371 = vadd.f32 %v369, %v370
  %v372 = vrot.slane %v371, 1
  %v373 = vadd.f32 %v371, %v372
  %v374 = vrot.slane %v288, 4
  %v375 = vadd.f32 %v288, %v374
  %v376 = vrot.slane %v375, 2
  %v377 = vadd.f32 %v375, %v376
  %v378 = vrot.slane %v377, 1
  %v379 = vadd.f32 %v377, %v378
  %v380 = vrot.slane %v289, 4
  %v381 = vadd.f32 %v289, %v380
  %v382 = vrot.slane %v381, 2
  %v383 = vadd.f32 %v381, %v382
  %v384 = vrot.slane %v383, 1
  %v385 = vadd.f32 %v383, %v384
  %v386 = vmax.f32 %v295, 1e-24
  %v387 = vmax.f32 %v301, 1e-24
  %v388 = vmax.f32 %v307, 1e-24
  %v389 = vmax.f32 %v313, 1e-24
  %v390 = vmax.f32 %v319, 1e-24
  %v391 = vmax.f32 %v325, 1e-24
  %v392 = vmax.f32 %v331, 1e-24
  %v393 = vmax.f32 %v337, 1e-24
  %v394 = vmax.f32 %v343, 1e-24
  %v395 = vmax.f32 %v349, 1e-24
  %v396 = vmax.f32 %v355, 1e-24
  %v397 = vmax.f32 %v361, 1e-24
  %v398 = vmax.f32 %v367, 1e-24
  %v399 = vmax.f32 %v373, 1e-24
  %v400 = vmax.f32 %v379, 1e-24
  %v401 = vmax.f32 %v385, 1e-24
  %v402 = vrsqrt.pop %v386
  %v403 = vrsqrt.pop %v387
  %v404 = vrsqrt.pop %v388
  %v405 = vrsqrt.pop %v389
  %v406 = vrsqrt.pop %v390
  %v407 = vrsqrt.pop %v391
  %v408 = vrsqrt.pop %v392
  %v409 = vrsqrt.pop %v393
  %v410 = vrsqrt.pop %v394
  %v411 = vrsqrt.pop %v395
  %v412 = vrsqrt.pop %v396
  %v413 = vrsqrt.pop %v397
  %v414 = vrsqrt.pop %v398
  %v415 = vrsqrt.pop %v399
  %v416 = vrsqrt.pop %v400
  %v417 = vrsqrt.pop %v401
  %v418 = vmul.f32 %v66, %v402
  %v419 = vmul.f32 %v67, %v403
  %v420 = vmul.f32 %v68, %v404
  %v421 = vmul.f32 %v69, %v405
  %v422 = vmul.f32 %v70, %v406
  %v423 = vmul.f32 %v71, %v407
  %v424 = vmul.f32 %v72, %v408
  %v425 = vmul.f32 %v73, %v409
  %v426 = vmul.f32 %v74, %v410
  %v427 = vmul.f32 %v75, %v411
  %v428 = vmul.f32 %v76, %v412
  %v429 = vmul.f32 %v77, %v413
  %v430 = vmul.f32 %v78, %v414
  %v431 = vmul.f32 %v79, %v415
  %v432 = vmul.f32 %v80, %v416
  %v433 = vmul.f32 %v81, %v417
  %s434 = sld [smem:[#allocation2]]
  %v435 = vstv %s434
  %v436 = vmul.f32 %v258, %v435
  %v437 = vmul.f32 %v259, %v435
  %v438 = vmul.f32 %v260, %v435
  %v439 = vmul.f32 %v261, %v435
  %v440 = vmul.f32 %v262, %v435
  %v441 = vmul.f32 %v263, %v435
  %v442 = vmul.f32 %v264, %v435
  %v443 = vmul.f32 %v265, %v435
  %v444 = vmul.f32 %v266, %v435
  %v445 = vmul.f32 %v267, %v435
  %v446 = vmul.f32 %v268, %v435
  %v447 = vmul.f32 %v269, %v435
  %v448 = vmul.f32 %v270, %v435
  %v449 = vmul.f32 %v271, %v435
  %v450 = vmul.f32 %v272, %v435
  %v451 = vmul.f32 %v273, %v435
  %v452 = vlaneseq
  %v453 = vshrl.u32 %v452, 7
  %v454 = vsub.s32 0, %v453
  %v455 = vrot.slane %v436, %v454
  %v456 = vlaneseq
  %v457 = vshrl.u32 %v456, 7
  %v458 = vsub.s32 0, %v457
  %v459 = vrot.slane %v437, %v458
  %v460 = vlaneseq
  %v461 = vshrl.u32 %v460, 7
  %v462 = vsub.s32 0, %v461
  %v463 = vrot.slane %v438, %v462
  %v464 = vlaneseq
  %v465 = vshrl.u32 %v464, 7
  %v466 = vsub.s32 0, %v465
  %v467 = vrot.slane %v439, %v466
  %v468 = vlaneseq
  %v469 = vshrl.u32 %v468, 7
  %v470 = vsub.s32 0, %v469
  %v471 = vrot.slane %v440, %v470
  %v472 = vlaneseq
  %v473 = vshrl.u32 %v472, 7
  %v474 = vsub.s32 0, %v473
  %v475 = vrot.slane %v441, %v474
  %v476 = vlaneseq
  %v477 = vshrl.u32 %v476, 7
  %v478 = vsub.s32 0, %v477
  %v479 = vrot.slane %v442, %v478
  %v480 = vlaneseq
  %v481 = vshrl.u32 %v480, 7
  %v482 = vsub.s32 0, %v481
  %v483 = vrot.slane %v443, %v482
  %v484 = vlaneseq
  %v485 = vshrl.u32 %v484, 7
  %v486 = vsub.s32 0, %v485
  %v487 = vrot.slane %v444, %v486
  %v488 = vlaneseq
  %v489 = vshrl.u32 %v488, 7
  %v490 = vsub.s32 0, %v489
  %v491 = vrot.slane %v445, %v490
  %v492 = vlaneseq
  %v493 = vshrl.u32 %v492, 7
  %v494 = vsub.s32 0, %v493
  %v495 = vrot.slane %v446, %v494
  %v496 = vlaneseq
  %v497 = vshrl.u32 %v496, 7
  %v498 = vsub.s32 0, %v497
  %v499 = vrot.slane %v447, %v498
  %v500 = vlaneseq
  %v501 = vshrl.u32 %v500, 7
  %v502 = vsub.s32 0, %v501
  %v503 = vrot.slane %v448, %v502
  %v504 = vlaneseq
  %v505 = vshrl.u32 %v504, 7
  %v506 = vsub.s32 0, %v505
  %v507 = vrot.slane %v449, %v506
  %v508 = vlaneseq
  %v509 = vshrl.u32 %v508, 7
  %v510 = vsub.s32 0, %v509
  %v511 = vrot.slane %v450, %v510
  %v512 = vlaneseq
  %v513 = vshrl.u32 %v512, 7
  %v514 = vsub.s32 0, %v513
  %v515 = vrot.slane %v451, %v514
  %v532 = vrot.slane %v419, 7
  %vm533 = vcmask 1041409
  %v534 = vsel %vm533, %v532, %v418
  %v535 = vrot.slane %v420, 6
  %vm536 = vcmask 1042434
  %v537 = vsel %vm536, %v535, %v534
  %v538 = vrot.slane %v421, 5
  %vm539 = vcmask 1043459
  %v540 = vsel %vm539, %v538, %v537
  %v541 = vrot.slane %v422, 4
  %vm542 = vcmask 1044484
  %v543 = vsel %vm542, %v541, %v540
  %v544 = vrot.slane %v423, 3
  %vm545 = vcmask 1045509
  %v546 = vsel %vm545, %v544, %v543
  %v547 = vrot.slane %v424, 2
  %vm548 = vcmask 1046534
  %v549 = vsel %vm548, %v547, %v546
  %v550 = vrot.slane %v425, 1
  %vm551 = vcmask 1047559
  %v552 = vsel %vm551, %v550, %v549
  %v553 = vrot.slane %v427, 7
  %v554 = vsel %vm533, %v553, %v426
  %v555 = vrot.slane %v428, 6
  %v556 = vsel %vm536, %v555, %v554
  %v557 = vrot.slane %v429, 5
  %v558 = vsel %vm539, %v557, %v556
  %v559 = vrot.slane %v430, 4
  %v560 = vsel %vm542, %v559, %v558
  %v561 = vrot.slane %v431, 3
  %v562 = vsel %vm545, %v561, %v560
  %v563 = vrot.slane %v432, 2
  %v564 = vsel %vm548, %v563, %v562
  %v565 = vrot.slane %v433, 1
  %v566 = vsel %vm551, %v565, %v564
  %v569 = vmul.f32 %v455, %v552
  %v570 = vmul.f32 %v455, %v566
  %v571 = vmul.f32 %v459, %v552
  %v572 = vmul.f32 %v459, %v566
  %v573 = vmul.f32 %v463, %v552
  %v574 = vmul.f32 %v463, %v566
  %v575 = vmul.f32 %v467, %v552
  %v576 = vmul.f32 %v467, %v566
  %v577 = vmul.f32 %v471, %v552
  %v578 = vmul.f32 %v471, %v566
  %v579 = vmul.f32 %v475, %v552
  %v580 = vmul.f32 %v475, %v566
  %v581 = vmul.f32 %v479, %v552
  %v582 = vmul.f32 %v479, %v566
  %v583 = vmul.f32 %v483, %v552
  %v584 = vmul.f32 %v483, %v566
  %v585 = vmul.f32 %v487, %v552
  %v586 = vmul.f32 %v487, %v566
  %v587 = vmul.f32 %v491, %v552
  %v588 = vmul.f32 %v491, %v566
  %v589 = vmul.f32 %v495, %v552
  %v590 = vmul.f32 %v495, %v566
  %v591 = vmul.f32 %v499, %v552
  %v592 = vmul.f32 %v499, %v566
  %v593 = vmul.f32 %v503, %v552
  %v594 = vmul.f32 %v503, %v566
  %v595 = vmul.f32 %v507, %v552
  %v596 = vmul.f32 %v507, %v566
  %v597 = vmul.f32 %v511, %v552
  %v598 = vmul.f32 %v511, %v566
  %v599 = vmul.f32 %v515, %v552
  %v600 = vmul.f32 %v515, %v566
  %v601 = vadd.f32 %v569, 0.0
  %v602 = vadd.f32 %v570, 0.0
  %v603 = vadd.f32 %v571, 0.0
  %v604 = vadd.f32 %v572, 0.0
  %v605 = vadd.f32 %v573, 0.0
  %v606 = vadd.f32 %v574, 0.0
  %v607 = vadd.f32 %v575, 0.0
  %v608 = vadd.f32 %v576, 0.0
  %v609 = vadd.f32 %v577, 0.0
  %v610 = vadd.f32 %v578, 0.0
  %v611 = vadd.f32 %v579, 0.0
  %v612 = vadd.f32 %v580, 0.0
  %v613 = vadd.f32 %v581, 0.0
  %v614 = vadd.f32 %v582, 0.0
  %v615 = vadd.f32 %v583, 0.0
  %v616 = vadd.f32 %v584, 0.0
  %v617 = vadd.f32 %v585, 0.0
  %v618 = vadd.f32 %v586, 0.0
  %v619 = vadd.f32 %v587, 0.0
  %v620 = vadd.f32 %v588, 0.0
  %v621 = vadd.f32 %v589, 0.0
  %v622 = vadd.f32 %v590, 0.0
  %v623 = vadd.f32 %v591, 0.0
  %v624 = vadd.f32 %v592, 0.0
  %v625 = vadd.f32 %v593, 0.0
  %v626 = vadd.f32 %v594, 0.0
  %v627 = vadd.f32 %v595, 0.0
  %v628 = vadd.f32 %v596, 0.0
  %v629 = vadd.f32 %v597, 0.0
  %v630 = vadd.f32 %v598, 0.0
  %v631 = vadd.f32 %v599, 0.0
  %v632 = vadd.f32 %v600, 0.0
  %v633 = vlaneseq
  %v634 = vshrl.u32 %v633, 7
  %v635 = vsub.s32 1, %v634
  %v636 = vrot.slane %v436, %v635
  %v637 = vlaneseq
  %v638 = vshrl.u32 %v637, 7
  %v639 = vsub.s32 1, %v638
  %v640 = vrot.slane %v437, %v639
  %v641 = vlaneseq
  %v642 = vshrl.u32 %v641, 7
  %v643 = vsub.s32 1, %v642
  %v644 = vrot.slane %v438, %v643
  %v645 = vlaneseq
  %v646 = vshrl.u32 %v645, 7
  %v647 = vsub.s32 1, %v646
  %v648 = vrot.slane %v439, %v647
  %v649 = vlaneseq
  %v650 = vshrl.u32 %v649, 7
  %v651 = vsub.s32 1, %v650
  %v652 = vrot.slane %v440, %v651
  %v653 = vlaneseq
  %v654 = vshrl.u32 %v653, 7
  %v655 = vsub.s32 1, %v654
  %v656 = vrot.slane %v441, %v655
  %v657 = vlaneseq
  %v658 = vshrl.u32 %v657, 7
  %v659 = vsub.s32 1, %v658
  %v660 = vrot.slane %v442, %v659
  %v661 = vlaneseq
  %v662 = vshrl.u32 %v661, 7
  %v663 = vsub.s32 1, %v662
  %v664 = vrot.slane %v443, %v663
  %v665 = vlaneseq
  %v666 = vshrl.u32 %v665, 7
  %v667 = vsub.s32 1, %v666
  %v668 = vrot.slane %v444, %v667
  %v669 = vlaneseq
  %v670 = vshrl.u32 %v669, 7
  %v671 = vsub.s32 1, %v670
  %v672 = vrot.slane %v445, %v671
  %v673 = vlaneseq
  %v674 = vshrl.u32 %v673, 7
  %v675 = vsub.s32 1, %v674
  %v676 = vrot.slane %v446, %v675
  %v677 = vlaneseq
  %v678 = vshrl.u32 %v677, 7
  %v679 = vsub.s32 1, %v678
  %v680 = vrot.slane %v447, %v679
  %v681 = vlaneseq
  %v682 = vshrl.u32 %v681, 7
  %v683 = vsub.s32 1, %v682
  %v684 = vrot.slane %v448, %v683
  %v685 = vlaneseq
  %v686 = vshrl.u32 %v685, 7
  %v687 = vsub.s32 1, %v686
  %v688 = vrot.slane %v449, %v687
  %v689 = vlaneseq
  %v690 = vshrl.u32 %v689, 7
  %v691 = vsub.s32 1, %v690
  %v692 = vrot.slane %v450, %v691
  %v693 = vlaneseq
  %v694 = vshrl.u32 %v693, 7
  %v695 = vsub.s32 1, %v694
  %v696 = vrot.slane %v451, %v695
  %v697 = vrot.slane %v418, 1
  %v698 = vsel %vm533, %v419, %v697
  %v699 = vrot.slane %v420, 7
  %v700 = vsel %vm536, %v699, %v698
  %v701 = vrot.slane %v421, 6
  %v702 = vsel %vm539, %v701, %v700
  %v703 = vrot.slane %v422, 5
  %v704 = vsel %vm542, %v703, %v702
  %v705 = vrot.slane %v423, 4
  %v706 = vsel %vm545, %v705, %v704
  %v707 = vrot.slane %v424, 3
  %v708 = vsel %vm548, %v707, %v706
  %v709 = vrot.slane %v425, 2
  %v710 = vsel %vm551, %v709, %v708
  %v711 = vrot.slane %v426, 1
  %v712 = vsel %vm533, %v427, %v711
  %v713 = vrot.slane %v428, 7
  %v714 = vsel %vm536, %v713, %v712
  %v715 = vrot.slane %v429, 6
  %v716 = vsel %vm539, %v715, %v714
  %v717 = vrot.slane %v430, 5
  %v718 = vsel %vm542, %v717, %v716
  %v719 = vrot.slane %v431, 4
  %v720 = vsel %vm545, %v719, %v718
  %v721 = vrot.slane %v432, 3
  %v722 = vsel %vm548, %v721, %v720
  %v723 = vrot.slane %v433, 2
  %v724 = vsel %vm551, %v723, %v722
  %v727 = vmul.f32 %v636, %v710
  %v728 = vmul.f32 %v636, %v724
  %v729 = vmul.f32 %v640, %v710
  %v730 = vmul.f32 %v640, %v724
  %v731 = vmul.f32 %v644, %v710
  %v732 = vmul.f32 %v644, %v724
  %v733 = vmul.f32 %v648, %v710
  %v734 = vmul.f32 %v648, %v724
  %v735 = vmul.f32 %v652, %v710
  %v736 = vmul.f32 %v652, %v724
  %v737 = vmul.f32 %v656, %v710
  %v738 = vmul.f32 %v656, %v724
  %v739 = vmul.f32 %v660, %v710
  %v740 = vmul.f32 %v660, %v724
  %v741 = vmul.f32 %v664, %v710
  %v742 = vmul.f32 %v664, %v724
  %v743 = vmul.f32 %v668, %v710
  %v744 = vmul.f32 %v668, %v724
  %v745 = vmul.f32 %v672, %v710
  %v746 = vmul.f32 %v672, %v724
  %v747 = vmul.f32 %v676, %v710
  %v748 = vmul.f32 %v676, %v724
  %v749 = vmul.f32 %v680, %v710
  %v750 = vmul.f32 %v680, %v724
  %v751 = vmul.f32 %v684, %v710
  %v752 = vmul.f32 %v684, %v724
  %v753 = vmul.f32 %v688, %v710
  %v754 = vmul.f32 %v688, %v724
  %v755 = vmul.f32 %v692, %v710
  %v756 = vmul.f32 %v692, %v724
  %v757 = vmul.f32 %v696, %v710
  %v758 = vmul.f32 %v696, %v724
  %v759 = vadd.f32 %v601, %v727
  %v760 = vadd.f32 %v602, %v728
  %v761 = vadd.f32 %v603, %v729
  %v762 = vadd.f32 %v604, %v730
  %v763 = vadd.f32 %v605, %v731
  %v764 = vadd.f32 %v606, %v732
  %v765 = vadd.f32 %v607, %v733
  %v766 = vadd.f32 %v608, %v734
  %v767 = vadd.f32 %v609, %v735
  %v768 = vadd.f32 %v610, %v736
  %v769 = vadd.f32 %v611, %v737
  %v770 = vadd.f32 %v612, %v738
  %v771 = vadd.f32 %v613, %v739
  %v772 = vadd.f32 %v614, %v740
  %v773 = vadd.f32 %v615, %v741
  %v774 = vadd.f32 %v616, %v742
  %v775 = vadd.f32 %v617, %v743
  %v776 = vadd.f32 %v618, %v744
  %v777 = vadd.f32 %v619, %v745
  %v778 = vadd.f32 %v620, %v746
  %v779 = vadd.f32 %v621, %v747
  %v780 = vadd.f32 %v622, %v748
  %v781 = vadd.f32 %v623, %v749
  %v782 = vadd.f32 %v624, %v750
  %v783 = vadd.f32 %v625, %v751
  %v784 = vadd.f32 %v626, %v752
  %v785 = vadd.f32 %v627, %v753
  %v786 = vadd.f32 %v628, %v754
  %v787 = vadd.f32 %v629, %v755
  %v788 = vadd.f32 %v630, %v756
  %v789 = vadd.f32 %v631, %v757
  %v790 = vadd.f32 %v632, %v758
  %v791 = vlaneseq
  %v792 = vshrl.u32 %v791, 7
  %v793 = vsub.s32 2, %v792
  %v794 = vrot.slane %v436, %v793
  %v795 = vlaneseq
  %v796 = vshrl.u32 %v795, 7
  %v797 = vsub.s32 2, %v796
  %v798 = vrot.slane %v437, %v797
  %v799 = vlaneseq
  %v800 = vshrl.u32 %v799, 7
  %v801 = vsub.s32 2, %v800
  %v802 = vrot.slane %v438, %v801
  %v803 = vlaneseq
  %v804 = vshrl.u32 %v803, 7
  %v805 = vsub.s32 2, %v804
  %v806 = vrot.slane %v439, %v805
  %v807 = vlaneseq
  %v808 = vshrl.u32 %v807, 7
  %v809 = vsub.s32 2, %v808
  %v810 = vrot.slane %v440, %v809
  %v811 = vlaneseq
  %v812 = vshrl.u32 %v811, 7
  %v813 = vsub.s32 2, %v812
  %v814 = vrot.slane %v441, %v813
  %v815 = vlaneseq
  %v816 = vshrl.u32 %v815, 7
  %v817 = vsub.s32 2, %v816
  %v818 = vrot.slane %v442, %v817
  %v819 = vlaneseq
  %v820 = vshrl.u32 %v819, 7
  %v821 = vsub.s32 2, %v820
  %v822 = vrot.slane %v443, %v821
  %v823 = vlaneseq
  %v824 = vshrl.u32 %v823, 7
  %v825 = vsub.s32 2, %v824
  %v826 = vrot.slane %v444, %v825
  %v827 = vlaneseq
  %v828 = vshrl.u32 %v827, 7
  %v829 = vsub.s32 2, %v828
  %v830 = vrot.slane %v445, %v829
  %v831 = vlaneseq
  %v832 = vshrl.u32 %v831, 7
  %v833 = vsub.s32 2, %v832
  %v834 = vrot.slane %v446, %v833
  %v835 = vlaneseq
  %v836 = vshrl.u32 %v835, 7
  %v837 = vsub.s32 2, %v836
  %v838 = vrot.slane %v447, %v837
  %v839 = vlaneseq
  %v840 = vshrl.u32 %v839, 7
  %v841 = vsub.s32 2, %v840
  %v842 = vrot.slane %v448, %v841
  %v843 = vlaneseq
  %v844 = vshrl.u32 %v843, 7
  %v845 = vsub.s32 2, %v844
  %v846 = vrot.slane %v449, %v845
  %v847 = vlaneseq
  %v848 = vshrl.u32 %v847, 7
  %v849 = vsub.s32 2, %v848
  %v850 = vrot.slane %v450, %v849
  %v851 = vlaneseq
  %v852 = vshrl.u32 %v851, 7
  %v853 = vsub.s32 2, %v852
  %v854 = vrot.slane %v451, %v853
  %v855 = vrot.slane %v418, 2
  %v856 = vrot.slane %v419, 1
  %v857 = vsel %vm533, %v856, %v855
  %v858 = vsel %vm536, %v420, %v857
  %v859 = vrot.slane %v421, 7
  %v860 = vsel %vm539, %v859, %v858
  %v861 = vrot.slane %v422, 6
  %v862 = vsel %vm542, %v861, %v860
  %v863 = vrot.slane %v423, 5
  %v864 = vsel %vm545, %v863, %v862
  %v865 = vrot.slane %v424, 4
  %v866 = vsel %vm548, %v865, %v864
  %v867 = vrot.slane %v425, 3
  %v868 = vsel %vm551, %v867, %v866
  %v869 = vrot.slane %v426, 2
  %v870 = vrot.slane %v427, 1
  %v871 = vsel %vm533, %v870, %v869
  %v872 = vsel %vm536, %v428, %v871
  %v873 = vrot.slane %v429, 7
  %v874 = vsel %vm539, %v873, %v872
  %v875 = vrot.slane %v430, 6
  %v876 = vsel %vm542, %v875, %v874
  %v877 = vrot.slane %v431, 5
  %v878 = vsel %vm545, %v877, %v876
  %v879 = vrot.slane %v432, 4
  %v880 = vsel %vm548, %v879, %v878
  %v881 = vrot.slane %v433, 3
  %v882 = vsel %vm551, %v881, %v880
  %v885 = vmul.f32 %v794, %v868
  %v886 = vmul.f32 %v794, %v882
  %v887 = vmul.f32 %v798, %v868
  %v888 = vmul.f32 %v798, %v882
  %v889 = vmul.f32 %v802, %v868
  %v890 = vmul.f32 %v802, %v882
  %v891 = vmul.f32 %v806, %v868
  %v892 = vmul.f32 %v806, %v882
  %v893 = vmul.f32 %v810, %v868
  %v894 = vmul.f32 %v810, %v882
  %v895 = vmul.f32 %v814, %v868
  %v896 = vmul.f32 %v814, %v882
  %v897 = vmul.f32 %v818, %v868
  %v898 = vmul.f32 %v818, %v882
  %v899 = vmul.f32 %v822, %v868
  %v900 = vmul.f32 %v822, %v882
  %v901 = vmul.f32 %v826, %v868
  %v902 = vmul.f32 %v826, %v882
  %v903 = vmul.f32 %v830, %v868
  %v904 = vmul.f32 %v830, %v882
  %v905 = vmul.f32 %v834, %v868
  %v906 = vmul.f32 %v834, %v882
  %v907 = vmul.f32 %v838, %v868
  %v908 = vmul.f32 %v838, %v882
  %v909 = vmul.f32 %v842, %v868
  %v910 = vmul.f32 %v842, %v882
  %v911 = vmul.f32 %v846, %v868
  %v912 = vmul.f32 %v846, %v882
  %v913 = vmul.f32 %v850, %v868
  %v914 = vmul.f32 %v850, %v882
  %v915 = vmul.f32 %v854, %v868
  %v916 = vmul.f32 %v854, %v882
  %v917 = vadd.f32 %v759, %v885
  %v918 = vadd.f32 %v760, %v886
  %v919 = vadd.f32 %v761, %v887
  %v920 = vadd.f32 %v762, %v888
  %v921 = vadd.f32 %v763, %v889
  %v922 = vadd.f32 %v764, %v890
  %v923 = vadd.f32 %v765, %v891
  %v924 = vadd.f32 %v766, %v892
  %v925 = vadd.f32 %v767, %v893
  %v926 = vadd.f32 %v768, %v894
  %v927 = vadd.f32 %v769, %v895
  %v928 = vadd.f32 %v770, %v896
  %v929 = vadd.f32 %v771, %v897
  %v930 = vadd.f32 %v772, %v898
  %v931 = vadd.f32 %v773, %v899
  %v932 = vadd.f32 %v774, %v900
  %v933 = vadd.f32 %v775, %v901
  %v934 = vadd.f32 %v776, %v902
  %v935 = vadd.f32 %v777, %v903
  %v936 = vadd.f32 %v778, %v904
  %v937 = vadd.f32 %v779, %v905
  %v938 = vadd.f32 %v780, %v906
  %v939 = vadd.f32 %v781, %v907
  %v940 = vadd.f32 %v782, %v908
  %v941 = vadd.f32 %v783, %v909
  %v942 = vadd.f32 %v784, %v910
  %v943 = vadd.f32 %v785, %v911
  %v944 = vadd.f32 %v786, %v912
  %v945 = vadd.f32 %v787, %v913
  %v946 = vadd.f32 %v788, %v914
  %v947 = vadd.f32 %v789, %v915
  %v948 = vadd.f32 %v790, %v916
  %v949 = vlaneseq
  %v950 = vshrl.u32 %v949, 7
  %v951 = vsub.s32 3, %v950
  %v952 = vrot.slane %v436, %v951
  %v953 = vlaneseq
  %v954 = vshrl.u32 %v953, 7
  %v955 = vsub.s32 3, %v954
  %v956 = vrot.slane %v437, %v955
  %v957 = vlaneseq
  %v958 = vshrl.u32 %v957, 7
  %v959 = vsub.s32 3, %v958
  %v960 = vrot.slane %v438, %v959
  %v961 = vlaneseq
  %v962 = vshrl.u32 %v961, 7
  %v963 = vsub.s32 3, %v962
  %v964 = vrot.slane %v439, %v963
  %v965 = vlaneseq
  %v966 = vshrl.u32 %v965, 7
  %v967 = vsub.s32 3, %v966
  %v968 = vrot.slane %v440, %v967
  %v969 = vlaneseq
  %v970 = vshrl.u32 %v969, 7
  %v971 = vsub.s32 3, %v970
  %v972 = vrot.slane %v441, %v971
  %v973 = vlaneseq
  %v974 = vshrl.u32 %v973, 7
  %v975 = vsub.s32 3, %v974
  %v976 = vrot.slane %v442, %v975
  %v977 = vlaneseq
  %v978 = vshrl.u32 %v977, 7
  %v979 = vsub.s32 3, %v978
  %v980 = vrot.slane %v443, %v979
  %v981 = vlaneseq
  %v982 = vshrl.u32 %v981, 7
  %v983 = vsub.s32 3, %v982
  %v984 = vrot.slane %v444, %v983
  %v985 = vlaneseq
  %v986 = vshrl.u32 %v985, 7
  %v987 = vsub.s32 3, %v986
  %v988 = vrot.slane %v445, %v987
  %v989 = vlaneseq
  %v990 = vshrl.u32 %v989, 7
  %v991 = vsub.s32 3, %v990
  %v992 = vrot.slane %v446, %v991
  %v993 = vlaneseq
  %v994 = vshrl.u32 %v993, 7
  %v995 = vsub.s32 3, %v994
  %v996 = vrot.slane %v447, %v995
  %v997 = vlaneseq
  %v998 = vshrl.u32 %v997, 7
  %v999 = vsub.s32 3, %v998
  %v1000 = vrot.slane %v448, %v999
  %v1001 = vlaneseq
  %v1002 = vshrl.u32 %v1001, 7
  %v1003 = vsub.s32 3, %v1002
  %v1004 = vrot.slane %v449, %v1003
  %v1005 = vlaneseq
  %v1006 = vshrl.u32 %v1005, 7
  %v1007 = vsub.s32 3, %v1006
  %v1008 = vrot.slane %v450, %v1007
  %v1009 = vlaneseq
  %v1010 = vshrl.u32 %v1009, 7
  %v1011 = vsub.s32 3, %v1010
  %v1012 = vrot.slane %v451, %v1011
  %v1013 = vrot.slane %v418, 3
  %v1014 = vrot.slane %v419, 2
  %v1015 = vsel %vm533, %v1014, %v1013
  %v1016 = vrot.slane %v420, 1
  %v1017 = vsel %vm536, %v1016, %v1015
  %v1018 = vsel %vm539, %v421, %v1017
  %v1019 = vrot.slane %v422, 7
  %v1020 = vsel %vm542, %v1019, %v1018
  %v1021 = vrot.slane %v423, 6
  %v1022 = vsel %vm545, %v1021, %v1020
  %v1023 = vrot.slane %v424, 5
  %v1024 = vsel %vm548, %v1023, %v1022
  %v1025 = vrot.slane %v425, 4
  %v1026 = vsel %vm551, %v1025, %v1024
  %v1027 = vrot.slane %v426, 3
  %v1028 = vrot.slane %v427, 2
  %v1029 = vsel %vm533, %v1028, %v1027
  %v1030 = vrot.slane %v428, 1
  %v1031 = vsel %vm536, %v1030, %v1029
  %v1032 = vsel %vm539, %v429, %v1031
  %v1033 = vrot.slane %v430, 7
  %v1034 = vsel %vm542, %v1033, %v1032
  %v1035 = vrot.slane %v431, 6
  %v1036 = vsel %vm545, %v1035, %v1034
  %v1037 = vrot.slane %v432, 5
  %v1038 = vsel %vm548, %v1037, %v1036
  %v1039 = vrot.slane %v433, 4
  %v1040 = vsel %vm551, %v1039, %v1038
  %v1043 = vmul.f32 %v952, %v1026
  %v1044 = vmul.f32 %v952, %v1040
  %v1045 = vmul.f32 %v956, %v1026
  %v1046 = vmul.f32 %v956, %v1040
  %v1047 = vmul.f32 %v960, %v1026
  %v1048 = vmul.f32 %v960, %v1040
  %v1049 = vmul.f32 %v964, %v1026
  %v1050 = vmul.f32 %v964, %v1040
  %v1051 = vmul.f32 %v968, %v1026
  %v1052 = vmul.f32 %v968, %v1040
  %v1053 = vmul.f32 %v972, %v1026
  %v1054 = vmul.f32 %v972, %v1040
  %v1055 = vmul.f32 %v976, %v1026
  %v1056 = vmul.f32 %v976, %v1040
  %v1057 = vmul.f32 %v980, %v1026
  %v1058 = vmul.f32 %v980, %v1040
  %v1059 = vmul.f32 %v984, %v1026
  %v1060 = vmul.f32 %v984, %v1040
  %v1061 = vmul.f32 %v988, %v1026
  %v1062 = vmul.f32 %v988, %v1040
  %v1063 = vmul.f32 %v992, %v1026
  %v1064 = vmul.f32 %v992, %v1040
  %v1065 = vmul.f32 %v996, %v1026
  %v1066 = vmul.f32 %v996, %v1040
  %v1067 = vmul.f32 %v1000, %v1026
  %v1068 = vmul.f32 %v1000, %v1040
  %v1069 = vmul.f32 %v1004, %v1026
  %v1070 = vmul.f32 %v1004, %v1040
  %v1071 = vmul.f32 %v1008, %v1026
  %v1072 = vmul.f32 %v1008, %v1040
  %v1073 = vmul.f32 %v1012, %v1026
  %v1074 = vmul.f32 %v1012, %v1040
  %v1075 = vadd.f32 %v917, %v1043
  %v1076 = vadd.f32 %v918, %v1044
  %v1077 = vadd.f32 %v919, %v1045
  %v1078 = vadd.f32 %v920, %v1046
  %v1079 = vadd.f32 %v921, %v1047
  %v1080 = vadd.f32 %v922, %v1048
  %v1081 = vadd.f32 %v923, %v1049
  %v1082 = vadd.f32 %v924, %v1050
  %v1083 = vadd.f32 %v925, %v1051
  %v1084 = vadd.f32 %v926, %v1052
  %v1085 = vadd.f32 %v927, %v1053
  %v1086 = vadd.f32 %v928, %v1054
  %v1087 = vadd.f32 %v929, %v1055
  %v1088 = vadd.f32 %v930, %v1056
  %v1089 = vadd.f32 %v931, %v1057
  %v1090 = vadd.f32 %v932, %v1058
  %v1091 = vadd.f32 %v933, %v1059
  %v1092 = vadd.f32 %v934, %v1060
  %v1093 = vadd.f32 %v935, %v1061
  %v1094 = vadd.f32 %v936, %v1062
  %v1095 = vadd.f32 %v937, %v1063
  %v1096 = vadd.f32 %v938, %v1064
  %v1097 = vadd.f32 %v939, %v1065
  %v1098 = vadd.f32 %v940, %v1066
  %v1099 = vadd.f32 %v941, %v1067
  %v1100 = vadd.f32 %v942, %v1068
  %v1101 = vadd.f32 %v943, %v1069
  %v1102 = vadd.f32 %v944, %v1070
  %v1103 = vadd.f32 %v945, %v1071
  %v1104 = vadd.f32 %v946, %v1072
  %v1105 = vadd.f32 %v947, %v1073
  %v1106 = vadd.f32 %v948, %v1074
  %v1107 = vlaneseq
  %v1108 = vshrl.u32 %v1107, 7
  %v1109 = vsub.s32 4, %v1108
  %v1110 = vrot.slane %v436, %v1109
  %v1111 = vlaneseq
  %v1112 = vshrl.u32 %v1111, 7
  %v1113 = vsub.s32 4, %v1112
  %v1114 = vrot.slane %v437, %v1113
  %v1115 = vlaneseq
  %v1116 = vshrl.u32 %v1115, 7
  %v1117 = vsub.s32 4, %v1116
  %v1118 = vrot.slane %v438, %v1117
  %v1119 = vlaneseq
  %v1120 = vshrl.u32 %v1119, 7
  %v1121 = vsub.s32 4, %v1120
  %v1122 = vrot.slane %v439, %v1121
  %v1123 = vlaneseq
  %v1124 = vshrl.u32 %v1123, 7
  %v1125 = vsub.s32 4, %v1124
  %v1126 = vrot.slane %v440, %v1125
  %v1127 = vlaneseq
  %v1128 = vshrl.u32 %v1127, 7
  %v1129 = vsub.s32 4, %v1128
  %v1130 = vrot.slane %v441, %v1129
  %v1131 = vlaneseq
  %v1132 = vshrl.u32 %v1131, 7
  %v1133 = vsub.s32 4, %v1132
  %v1134 = vrot.slane %v442, %v1133
  %v1135 = vlaneseq
  %v1136 = vshrl.u32 %v1135, 7
  %v1137 = vsub.s32 4, %v1136
  %v1138 = vrot.slane %v443, %v1137
  %v1139 = vlaneseq
  %v1140 = vshrl.u32 %v1139, 7
  %v1141 = vsub.s32 4, %v1140
  %v1142 = vrot.slane %v444, %v1141
  %v1143 = vlaneseq
  %v1144 = vshrl.u32 %v1143, 7
  %v1145 = vsub.s32 4, %v1144
  %v1146 = vrot.slane %v445, %v1145
  %v1147 = vlaneseq
  %v1148 = vshrl.u32 %v1147, 7
  %v1149 = vsub.s32 4, %v1148
  %v1150 = vrot.slane %v446, %v1149
  %v1151 = vlaneseq
  %v1152 = vshrl.u32 %v1151, 7
  %v1153 = vsub.s32 4, %v1152
  %v1154 = vrot.slane %v447, %v1153
  %v1155 = vlaneseq
  %v1156 = vshrl.u32 %v1155, 7
  %v1157 = vsub.s32 4, %v1156
  %v1158 = vrot.slane %v448, %v1157
  %v1159 = vlaneseq
  %v1160 = vshrl.u32 %v1159, 7
  %v1161 = vsub.s32 4, %v1160
  %v1162 = vrot.slane %v449, %v1161
  %v1163 = vlaneseq
  %v1164 = vshrl.u32 %v1163, 7
  %v1165 = vsub.s32 4, %v1164
  %v1166 = vrot.slane %v450, %v1165
  %v1167 = vlaneseq
  %v1168 = vshrl.u32 %v1167, 7
  %v1169 = vsub.s32 4, %v1168
  %v1170 = vrot.slane %v451, %v1169
  %v1171 = vrot.slane %v418, 4
  %v1172 = vrot.slane %v419, 3
  %v1173 = vsel %vm533, %v1172, %v1171
  %v1174 = vrot.slane %v420, 2
  %v1175 = vsel %vm536, %v1174, %v1173
  %v1176 = vrot.slane %v421, 1
  %v1177 = vsel %vm539, %v1176, %v1175
  %v1178 = vsel %vm542, %v422, %v1177
  %v1179 = vrot.slane %v423, 7
  %v1180 = vsel %vm545, %v1179, %v1178
  %v1181 = vrot.slane %v424, 6
  %v1182 = vsel %vm548, %v1181, %v1180
  %v1183 = vrot.slane %v425, 5
  %v1184 = vsel %vm551, %v1183, %v1182
  %v1185 = vrot.slane %v426, 4
  %v1186 = vrot.slane %v427, 3
  %v1187 = vsel %vm533, %v1186, %v1185
  %v1188 = vrot.slane %v428, 2
  %v1189 = vsel %vm536, %v1188, %v1187
  %v1190 = vrot.slane %v429, 1
  %v1191 = vsel %vm539, %v1190, %v1189
  %v1192 = vsel %vm542, %v430, %v1191
  %v1193 = vrot.slane %v431, 7
  %v1194 = vsel %vm545, %v1193, %v1192
  %v1195 = vrot.slane %v432, 6
  %v1196 = vsel %vm548, %v1195, %v1194
  %v1197 = vrot.slane %v433, 5
  %v1198 = vsel %vm551, %v1197, %v1196
  %v1201 = vmul.f32 %v1110, %v1184
  %v1202 = vmul.f32 %v1110, %v1198
  %v1203 = vmul.f32 %v1114, %v1184
  %v1204 = vmul.f32 %v1114, %v1198
  %v1205 = vmul.f32 %v1118, %v1184
  %v1206 = vmul.f32 %v1118, %v1198
  %v1207 = vmul.f32 %v1122, %v1184
  %v1208 = vmul.f32 %v1122, %v1198
  %v1209 = vmul.f32 %v1126, %v1184
  %v1210 = vmul.f32 %v1126, %v1198
  %v1211 = vmul.f32 %v1130, %v1184
  %v1212 = vmul.f32 %v1130, %v1198
  %v1213 = vmul.f32 %v1134, %v1184
  %v1214 = vmul.f32 %v1134, %v1198
  %v1215 = vmul.f32 %v1138, %v1184
  %v1216 = vmul.f32 %v1138, %v1198
  %v1217 = vmul.f32 %v1142, %v1184
  %v1218 = vmul.f32 %v1142, %v1198
  %v1219 = vmul.f32 %v1146, %v1184
  %v1220 = vmul.f32 %v1146, %v1198
  %v1221 = vmul.f32 %v1150, %v1184
  %v1222 = vmul.f32 %v1150, %v1198
  %v1223 = vmul.f32 %v1154, %v1184
  %v1224 = vmul.f32 %v1154, %v1198
  %v1225 = vmul.f32 %v1158, %v1184
  %v1226 = vmul.f32 %v1158, %v1198
  %v1227 = vmul.f32 %v1162, %v1184
  %v1228 = vmul.f32 %v1162, %v1198
  %v1229 = vmul.f32 %v1166, %v1184
  %v1230 = vmul.f32 %v1166, %v1198
  %v1231 = vmul.f32 %v1170, %v1184
  %v1232 = vmul.f32 %v1170, %v1198
  %v1233 = vadd.f32 %v1075, %v1201
  %v1234 = vadd.f32 %v1076, %v1202
  %v1235 = vadd.f32 %v1077, %v1203
  %v1236 = vadd.f32 %v1078, %v1204
  %v1237 = vadd.f32 %v1079, %v1205
  %v1238 = vadd.f32 %v1080, %v1206
  %v1239 = vadd.f32 %v1081, %v1207
  %v1240 = vadd.f32 %v1082, %v1208
  %v1241 = vadd.f32 %v1083, %v1209
  %v1242 = vadd.f32 %v1084, %v1210
  %v1243 = vadd.f32 %v1085, %v1211
  %v1244 = vadd.f32 %v1086, %v1212
  %v1245 = vadd.f32 %v1087, %v1213
  %v1246 = vadd.f32 %v1088, %v1214
  %v1247 = vadd.f32 %v1089, %v1215
  %v1248 = vadd.f32 %v1090, %v1216
  %v1249 = vadd.f32 %v1091, %v1217
  %v1250 = vadd.f32 %v1092, %v1218
  %v1251 = vadd.f32 %v1093, %v1219
  %v1252 = vadd.f32 %v1094, %v1220
  %v1253 = vadd.f32 %v1095, %v1221
  %v1254 = vadd.f32 %v1096, %v1222
  %v1255 = vadd.f32 %v1097, %v1223
  %v1256 = vadd.f32 %v1098, %v1224
  %v1257 = vadd.f32 %v1099, %v1225
  %v1258 = vadd.f32 %v1100, %v1226
  %v1259 = vadd.f32 %v1101, %v1227
  %v1260 = vadd.f32 %v1102, %v1228
  %v1261 = vadd.f32 %v1103, %v1229
  %v1262 = vadd.f32 %v1104, %v1230
  %v1263 = vadd.f32 %v1105, %v1231
  %v1264 = vadd.f32 %v1106, %v1232
  %v1265 = vlaneseq
  %v1266 = vshrl.u32 %v1265, 7
  %v1267 = vsub.s32 5, %v1266
  %v1268 = vrot.slane %v436, %v1267
  %v1269 = vlaneseq
  %v1270 = vshrl.u32 %v1269, 7
  %v1271 = vsub.s32 5, %v1270
  %v1272 = vrot.slane %v437, %v1271
  %v1273 = vlaneseq
  %v1274 = vshrl.u32 %v1273, 7
  %v1275 = vsub.s32 5, %v1274
  %v1276 = vrot.slane %v438, %v1275
  %v1277 = vlaneseq
  %v1278 = vshrl.u32 %v1277, 7
  %v1279 = vsub.s32 5, %v1278
  %v1280 = vrot.slane %v439, %v1279
  %v1281 = vlaneseq
  %v1282 = vshrl.u32 %v1281, 7
  %v1283 = vsub.s32 5, %v1282
  %v1284 = vrot.slane %v440, %v1283
  %v1285 = vlaneseq
  %v1286 = vshrl.u32 %v1285, 7
  %v1287 = vsub.s32 5, %v1286
  %v1288 = vrot.slane %v441, %v1287
  %v1289 = vlaneseq
  %v1290 = vshrl.u32 %v1289, 7
  %v1291 = vsub.s32 5, %v1290
  %v1292 = vrot.slane %v442, %v1291
  %v1293 = vlaneseq
  %v1294 = vshrl.u32 %v1293, 7
  %v1295 = vsub.s32 5, %v1294
  %v1296 = vrot.slane %v443, %v1295
  %v1297 = vlaneseq
  %v1298 = vshrl.u32 %v1297, 7
  %v1299 = vsub.s32 5, %v1298
  %v1300 = vrot.slane %v444, %v1299
  %v1301 = vlaneseq
  %v1302 = vshrl.u32 %v1301, 7
  %v1303 = vsub.s32 5, %v1302
  %v1304 = vrot.slane %v445, %v1303
  %v1305 = vlaneseq
  %v1306 = vshrl.u32 %v1305, 7
  %v1307 = vsub.s32 5, %v1306
  %v1308 = vrot.slane %v446, %v1307
  %v1309 = vlaneseq
  %v1310 = vshrl.u32 %v1309, 7
  %v1311 = vsub.s32 5, %v1310
  %v1312 = vrot.slane %v447, %v1311
  %v1313 = vlaneseq
  %v1314 = vshrl.u32 %v1313, 7
  %v1315 = vsub.s32 5, %v1314
  %v1316 = vrot.slane %v448, %v1315
  %v1317 = vlaneseq
  %v1318 = vshrl.u32 %v1317, 7
  %v1319 = vsub.s32 5, %v1318
  %v1320 = vrot.slane %v449, %v1319
  %v1321 = vlaneseq
  %v1322 = vshrl.u32 %v1321, 7
  %v1323 = vsub.s32 5, %v1322
  %v1324 = vrot.slane %v450, %v1323
  %v1325 = vlaneseq
  %v1326 = vshrl.u32 %v1325, 7
  %v1327 = vsub.s32 5, %v1326
  %v1328 = vrot.slane %v451, %v1327
  %v1329 = vrot.slane %v418, 5
  %v1330 = vrot.slane %v419, 4
  %v1331 = vsel %vm533, %v1330, %v1329
  %v1332 = vrot.slane %v420, 3
  %v1333 = vsel %vm536, %v1332, %v1331
  %v1334 = vrot.slane %v421, 2
  %v1335 = vsel %vm539, %v1334, %v1333
  %v1336 = vrot.slane %v422, 1
  %v1337 = vsel %vm542, %v1336, %v1335
  %v1338 = vsel %vm545, %v423, %v1337
  %v1339 = vrot.slane %v424, 7
  %v1340 = vsel %vm548, %v1339, %v1338
  %v1341 = vrot.slane %v425, 6
  %v1342 = vsel %vm551, %v1341, %v1340
  %v1343 = vrot.slane %v426, 5
  %v1344 = vrot.slane %v427, 4
  %v1345 = vsel %vm533, %v1344, %v1343
  %v1346 = vrot.slane %v428, 3
  %v1347 = vsel %vm536, %v1346, %v1345
  %v1348 = vrot.slane %v429, 2
  %v1349 = vsel %vm539, %v1348, %v1347
  %v1350 = vrot.slane %v430, 1
  %v1351 = vsel %vm542, %v1350, %v1349
  %v1352 = vsel %vm545, %v431, %v1351
  %v1353 = vrot.slane %v432, 7
  %v1354 = vsel %vm548, %v1353, %v1352
  %v1355 = vrot.slane %v433, 6
  %v1356 = vsel %vm551, %v1355, %v1354
  %v1359 = vmul.f32 %v1268, %v1342
  %v1360 = vmul.f32 %v1268, %v1356
  %v1361 = vmul.f32 %v1272, %v1342
  %v1362 = vmul.f32 %v1272, %v1356
  %v1363 = vmul.f32 %v1276, %v1342
  %v1364 = vmul.f32 %v1276, %v1356
  %v1365 = vmul.f32 %v1280, %v1342
  %v1366 = vmul.f32 %v1280, %v1356
  %v1367 = vmul.f32 %v1284, %v1342
  %v1368 = vmul.f32 %v1284, %v1356
  %v1369 = vmul.f32 %v1288, %v1342
  %v1370 = vmul.f32 %v1288, %v1356
  %v1371 = vmul.f32 %v1292, %v1342
  %v1372 = vmul.f32 %v1292, %v1356
  %v1373 = vmul.f32 %v1296, %v1342
  %v1374 = vmul.f32 %v1296, %v1356
  %v1375 = vmul.f32 %v1300, %v1342
  %v1376 = vmul.f32 %v1300, %v1356
  %v1377 = vmul.f32 %v1304, %v1342
  %v1378 = vmul.f32 %v1304, %v1356
  %v1379 = vmul.f32 %v1308, %v1342
  %v1380 = vmul.f32 %v1308, %v1356
  %v1381 = vmul.f32 %v1312, %v1342
  %v1382 = vmul.f32 %v1312, %v1356
  %v1383 = vmul.f32 %v1316, %v1342
  %v1384 = vmul.f32 %v1316, %v1356
  %v1385 = vmul.f32 %v1320, %v1342
  %v1386 = vmul.f32 %v1320, %v1356
  %v1387 = vmul.f32 %v1324, %v1342
  %v1388 = vmul.f32 %v1324, %v1356
  %v1389 = vmul.f32 %v1328, %v1342
  %v1390 = vmul.f32 %v1328, %v1356
  %v1391 = vadd.f32 %v1233, %v1359
  %v1392 = vadd.f32 %v1234, %v1360
  %v1393 = vadd.f32 %v1235, %v1361
  %v1394 = vadd.f32 %v1236, %v1362
  %v1395 = vadd.f32 %v1237, %v1363
  %v1396 = vadd.f32 %v1238, %v1364
  %v1397 = vadd.f32 %v1239, %v1365
  %v1398 = vadd.f32 %v1240, %v1366
  %v1399 = vadd.f32 %v1241, %v1367
  %v1400 = vadd.f32 %v1242, %v1368
  %v1401 = vadd.f32 %v1243, %v1369
  %v1402 = vadd.f32 %v1244, %v1370
  %v1403 = vadd.f32 %v1245, %v1371
  %v1404 = vadd.f32 %v1246, %v1372
  %v1405 = vadd.f32 %v1247, %v1373
  %v1406 = vadd.f32 %v1248, %v1374
  %v1407 = vadd.f32 %v1249, %v1375
  %v1408 = vadd.f32 %v1250, %v1376
  %v1409 = vadd.f32 %v1251, %v1377
  %v1410 = vadd.f32 %v1252, %v1378
  %v1411 = vadd.f32 %v1253, %v1379
  %v1412 = vadd.f32 %v1254, %v1380
  %v1413 = vadd.f32 %v1255, %v1381
  %v1414 = vadd.f32 %v1256, %v1382
  %v1415 = vadd.f32 %v1257, %v1383
  %v1416 = vadd.f32 %v1258, %v1384
  %v1417 = vadd.f32 %v1259, %v1385
  %v1418 = vadd.f32 %v1260, %v1386
  %v1419 = vadd.f32 %v1261, %v1387
  %v1420 = vadd.f32 %v1262, %v1388
  %v1421 = vadd.f32 %v1263, %v1389
  %v1422 = vadd.f32 %v1264, %v1390
  %v1423 = vlaneseq
  %v1424 = vshrl.u32 %v1423, 7
  %v1425 = vsub.s32 6, %v1424
  %v1426 = vrot.slane %v436, %v1425
  %v1427 = vlaneseq
  %v1428 = vshrl.u32 %v1427, 7
  %v1429 = vsub.s32 6, %v1428
  %v1430 = vrot.slane %v437, %v1429
  %v1431 = vlaneseq
  %v1432 = vshrl.u32 %v1431, 7
  %v1433 = vsub.s32 6, %v1432
  %v1434 = vrot.slane %v438, %v1433
  %v1435 = vlaneseq
  %v1436 = vshrl.u32 %v1435, 7
  %v1437 = vsub.s32 6, %v1436
  %v1438 = vrot.slane %v439, %v1437
  %v1439 = vlaneseq
  %v1440 = vshrl.u32 %v1439, 7
  %v1441 = vsub.s32 6, %v1440
  %v1442 = vrot.slane %v440, %v1441
  %v1443 = vlaneseq
  %v1444 = vshrl.u32 %v1443, 7
  %v1445 = vsub.s32 6, %v1444
  %v1446 = vrot.slane %v441, %v1445
  %v1447 = vlaneseq
  %v1448 = vshrl.u32 %v1447, 7
  %v1449 = vsub.s32 6, %v1448
  %v1450 = vrot.slane %v442, %v1449
  %v1451 = vlaneseq
  %v1452 = vshrl.u32 %v1451, 7
  %v1453 = vsub.s32 6, %v1452
  %v1454 = vrot.slane %v443, %v1453
  %v1455 = vlaneseq
  %v1456 = vshrl.u32 %v1455, 7
  %v1457 = vsub.s32 6, %v1456
  %v1458 = vrot.slane %v444, %v1457
  %v1459 = vlaneseq
  %v1460 = vshrl.u32 %v1459, 7
  %v1461 = vsub.s32 6, %v1460
  %v1462 = vrot.slane %v445, %v1461
  %v1463 = vlaneseq
  %v1464 = vshrl.u32 %v1463, 7
  %v1465 = vsub.s32 6, %v1464
  %v1466 = vrot.slane %v446, %v1465
  %v1467 = vlaneseq
  %v1468 = vshrl.u32 %v1467, 7
  %v1469 = vsub.s32 6, %v1468
  %v1470 = vrot.slane %v447, %v1469
  %v1471 = vlaneseq
  %v1472 = vshrl.u32 %v1471, 7
  %v1473 = vsub.s32 6, %v1472
  %v1474 = vrot.slane %v448, %v1473
  %v1475 = vlaneseq
  %v1476 = vshrl.u32 %v1475, 7
  %v1477 = vsub.s32 6, %v1476
  %v1478 = vrot.slane %v449, %v1477
  %v1479 = vlaneseq
  %v1480 = vshrl.u32 %v1479, 7
  %v1481 = vsub.s32 6, %v1480
  %v1482 = vrot.slane %v450, %v1481
  %v1483 = vlaneseq
  %v1484 = vshrl.u32 %v1483, 7
  %v1485 = vsub.s32 6, %v1484
  %v1486 = vrot.slane %v451, %v1485
  %v1487 = vrot.slane %v418, 6
  %v1488 = vrot.slane %v419, 5
  %v1489 = vsel %vm533, %v1488, %v1487
  %v1490 = vrot.slane %v420, 4
  %v1491 = vsel %vm536, %v1490, %v1489
  %v1492 = vrot.slane %v421, 3
  %v1493 = vsel %vm539, %v1492, %v1491
  %v1494 = vrot.slane %v422, 2
  %v1495 = vsel %vm542, %v1494, %v1493
  %v1496 = vrot.slane %v423, 1
  %v1497 = vsel %vm545, %v1496, %v1495
  %v1498 = vsel %vm548, %v424, %v1497
  %v1499 = vrot.slane %v425, 7
  %v1500 = vsel %vm551, %v1499, %v1498
  %v1501 = vrot.slane %v426, 6
  %v1502 = vrot.slane %v427, 5
  %v1503 = vsel %vm533, %v1502, %v1501
  %v1504 = vrot.slane %v428, 4
  %v1505 = vsel %vm536, %v1504, %v1503
  %v1506 = vrot.slane %v429, 3
  %v1507 = vsel %vm539, %v1506, %v1505
  %v1508 = vrot.slane %v430, 2
  %v1509 = vsel %vm542, %v1508, %v1507
  %v1510 = vrot.slane %v431, 1
  %v1511 = vsel %vm545, %v1510, %v1509
  %v1512 = vsel %vm548, %v432, %v1511
  %v1513 = vrot.slane %v433, 7
  %v1514 = vsel %vm551, %v1513, %v1512
  %v1517 = vmul.f32 %v1426, %v1500
  %v1518 = vmul.f32 %v1426, %v1514
  %v1519 = vmul.f32 %v1430, %v1500
  %v1520 = vmul.f32 %v1430, %v1514
  %v1521 = vmul.f32 %v1434, %v1500
  %v1522 = vmul.f32 %v1434, %v1514
  %v1523 = vmul.f32 %v1438, %v1500
  %v1524 = vmul.f32 %v1438, %v1514
  %v1525 = vmul.f32 %v1442, %v1500
  %v1526 = vmul.f32 %v1442, %v1514
  %v1527 = vmul.f32 %v1446, %v1500
  %v1528 = vmul.f32 %v1446, %v1514
  %v1529 = vmul.f32 %v1450, %v1500
  %v1530 = vmul.f32 %v1450, %v1514
  %v1531 = vmul.f32 %v1454, %v1500
  %v1532 = vmul.f32 %v1454, %v1514
  %v1533 = vmul.f32 %v1458, %v1500
  %v1534 = vmul.f32 %v1458, %v1514
  %v1535 = vmul.f32 %v1462, %v1500
  %v1536 = vmul.f32 %v1462, %v1514
  %v1537 = vmul.f32 %v1466, %v1500
  %v1538 = vmul.f32 %v1466, %v1514
  %v1539 = vmul.f32 %v1470, %v1500
  %v1540 = vmul.f32 %v1470, %v1514
  %v1541 = vmul.f32 %v1474, %v1500
  %v1542 = vmul.f32 %v1474, %v1514
  %v1543 = vmul.f32 %v1478, %v1500
  %v1544 = vmul.f32 %v1478, %v1514
  %v1545 = vmul.f32 %v1482, %v1500
  %v1546 = vmul.f32 %v1482, %v1514
  %v1547 = vmul.f32 %v1486, %v1500
  %v1548 = vmul.f32 %v1486, %v1514
  %v1549 = vadd.f32 %v1391, %v1517
  %v1550 = vadd.f32 %v1392, %v1518
  %v1551 = vadd.f32 %v1393, %v1519
  %v1552 = vadd.f32 %v1394, %v1520
  %v1553 = vadd.f32 %v1395, %v1521
  %v1554 = vadd.f32 %v1396, %v1522
  %v1555 = vadd.f32 %v1397, %v1523
  %v1556 = vadd.f32 %v1398, %v1524
  %v1557 = vadd.f32 %v1399, %v1525
  %v1558 = vadd.f32 %v1400, %v1526
  %v1559 = vadd.f32 %v1401, %v1527
  %v1560 = vadd.f32 %v1402, %v1528
  %v1561 = vadd.f32 %v1403, %v1529
  %v1562 = vadd.f32 %v1404, %v1530
  %v1563 = vadd.f32 %v1405, %v1531
  %v1564 = vadd.f32 %v1406, %v1532
  %v1565 = vadd.f32 %v1407, %v1533
  %v1566 = vadd.f32 %v1408, %v1534
  %v1567 = vadd.f32 %v1409, %v1535
  %v1568 = vadd.f32 %v1410, %v1536
  %v1569 = vadd.f32 %v1411, %v1537
  %v1570 = vadd.f32 %v1412, %v1538
  %v1571 = vadd.f32 %v1413, %v1539
  %v1572 = vadd.f32 %v1414, %v1540
  %v1573 = vadd.f32 %v1415, %v1541
  %v1574 = vadd.f32 %v1416, %v1542
  %v1575 = vadd.f32 %v1417, %v1543
  %v1576 = vadd.f32 %v1418, %v1544
  %v1577 = vadd.f32 %v1419, %v1545
  %v1578 = vadd.f32 %v1420, %v1546
  %v1579 = vadd.f32 %v1421, %v1547
  %v1580 = vadd.f32 %v1422, %v1548
  %v1581 = vlaneseq
  %v1582 = vshrl.u32 %v1581, 7
  %v1583 = vsub.s32 7, %v1582
  %v1584 = vrot.slane %v436, %v1583
  %v1585 = vlaneseq
  %v1586 = vshrl.u32 %v1585, 7
  %v1587 = vsub.s32 7, %v1586
  %v1588 = vrot.slane %v437, %v1587
  %v1589 = vlaneseq
  %v1590 = vshrl.u32 %v1589, 7
  %v1591 = vsub.s32 7, %v1590
  %v1592 = vrot.slane %v438, %v1591
  %v1593 = vlaneseq
  %v1594 = vshrl.u32 %v1593, 7
  %v1595 = vsub.s32 7, %v1594
  %v1596 = vrot.slane %v439, %v1595
  %v1597 = vlaneseq
  %v1598 = vshrl.u32 %v1597, 7
  %v1599 = vsub.s32 7, %v1598
  %v1600 = vrot.slane %v440, %v1599
  %v1601 = vlaneseq
  %v1602 = vshrl.u32 %v1601, 7
  %v1603 = vsub.s32 7, %v1602
  %v1604 = vrot.slane %v441, %v1603
  %v1605 = vlaneseq
  %v1606 = vshrl.u32 %v1605, 7
  %v1607 = vsub.s32 7, %v1606
  %v1608 = vrot.slane %v442, %v1607
  %v1609 = vlaneseq
  %v1610 = vshrl.u32 %v1609, 7
  %v1611 = vsub.s32 7, %v1610
  %v1612 = vrot.slane %v443, %v1611
  %v1613 = vlaneseq
  %v1614 = vshrl.u32 %v1613, 7
  %v1615 = vsub.s32 7, %v1614
  %v1616 = vrot.slane %v444, %v1615
  %v1617 = vlaneseq
  %v1618 = vshrl.u32 %v1617, 7
  %v1619 = vsub.s32 7, %v1618
  %v1620 = vrot.slane %v445, %v1619
  %v1621 = vlaneseq
  %v1622 = vshrl.u32 %v1621, 7
  %v1623 = vsub.s32 7, %v1622
  %v1624 = vrot.slane %v446, %v1623
  %v1625 = vlaneseq
  %v1626 = vshrl.u32 %v1625, 7
  %v1627 = vsub.s32 7, %v1626
  %v1628 = vrot.slane %v447, %v1627
  %v1629 = vlaneseq
  %v1630 = vshrl.u32 %v1629, 7
  %v1631 = vsub.s32 7, %v1630
  %v1632 = vrot.slane %v448, %v1631
  %v1633 = vlaneseq
  %v1634 = vshrl.u32 %v1633, 7
  %v1635 = vsub.s32 7, %v1634
  %v1636 = vrot.slane %v449, %v1635
  %v1637 = vlaneseq
  %v1638 = vshrl.u32 %v1637, 7
  %v1639 = vsub.s32 7, %v1638
  %v1640 = vrot.slane %v450, %v1639
  %v1641 = vlaneseq
  %v1642 = vshrl.u32 %v1641, 7
  %v1643 = vsub.s32 7, %v1642
  %v1644 = vrot.slane %v451, %v1643
  %v1645 = vrot.slane %v418, 7
  %v1646 = vrot.slane %v419, 6
  %v1647 = vsel %vm533, %v1646, %v1645
  %v1648 = vrot.slane %v420, 5
  %v1649 = vsel %vm536, %v1648, %v1647
  %v1650 = vrot.slane %v421, 4
  %v1651 = vsel %vm539, %v1650, %v1649
  %v1652 = vrot.slane %v422, 3
  %v1653 = vsel %vm542, %v1652, %v1651
  %v1654 = vrot.slane %v423, 2
  %v1655 = vsel %vm545, %v1654, %v1653
  %v1656 = vrot.slane %v424, 1
  %v1657 = vsel %vm548, %v1656, %v1655
  %v1658 = vsel %vm551, %v425, %v1657
  %v1659 = vrot.slane %v426, 7
  %v1660 = vrot.slane %v427, 6
  %v1661 = vsel %vm533, %v1660, %v1659
  %v1662 = vrot.slane %v428, 5
  %v1663 = vsel %vm536, %v1662, %v1661
  %v1664 = vrot.slane %v429, 4
  %v1665 = vsel %vm539, %v1664, %v1663
  %v1666 = vrot.slane %v430, 3
  %v1667 = vsel %vm542, %v1666, %v1665
  %v1668 = vrot.slane %v431, 2
  %v1669 = vsel %vm545, %v1668, %v1667
  %v1670 = vrot.slane %v432, 1
  %v1671 = vsel %vm548, %v1670, %v1669
  %v1672 = vsel %vm551, %v433, %v1671
  %v1675 = vmul.f32 %v1584, %v1658
  %v1676 = vmul.f32 %v1584, %v1672
  %v1677 = vmul.f32 %v1588, %v1658
  %v1678 = vmul.f32 %v1588, %v1672
  %v1679 = vmul.f32 %v1592, %v1658
  %v1680 = vmul.f32 %v1592, %v1672
  %v1681 = vmul.f32 %v1596, %v1658
  %v1682 = vmul.f32 %v1596, %v1672
  %v1683 = vmul.f32 %v1600, %v1658
  %v1684 = vmul.f32 %v1600, %v1672
  %v1685 = vmul.f32 %v1604, %v1658
  %v1686 = vmul.f32 %v1604, %v1672
  %v1687 = vmul.f32 %v1608, %v1658
  %v1688 = vmul.f32 %v1608, %v1672
  %v1689 = vmul.f32 %v1612, %v1658
  %v1690 = vmul.f32 %v1612, %v1672
  %v1691 = vmul.f32 %v1616, %v1658
  %v1692 = vmul.f32 %v1616, %v1672
  %v1693 = vmul.f32 %v1620, %v1658
  %v1694 = vmul.f32 %v1620, %v1672
  %v1695 = vmul.f32 %v1624, %v1658
  %v1696 = vmul.f32 %v1624, %v1672
  %v1697 = vmul.f32 %v1628, %v1658
  %v1698 = vmul.f32 %v1628, %v1672
  %v1699 = vmul.f32 %v1632, %v1658
  %v1700 = vmul.f32 %v1632, %v1672
  %v1701 = vmul.f32 %v1636, %v1658
  %v1702 = vmul.f32 %v1636, %v1672
  %v1703 = vmul.f32 %v1640, %v1658
  %v1704 = vmul.f32 %v1640, %v1672
  %v1705 = vmul.f32 %v1644, %v1658
  %v1706 = vmul.f32 %v1644, %v1672
  %v1707 = vadd.f32 %v1549, %v1675
  %v1708 = vadd.f32 %v1550, %v1676
  %v1709 = vadd.f32 %v1551, %v1677
  %v1710 = vadd.f32 %v1552, %v1678
  %v1711 = vadd.f32 %v1553, %v1679
  %v1712 = vadd.f32 %v1554, %v1680
  %v1713 = vadd.f32 %v1555, %v1681
  %v1714 = vadd.f32 %v1556, %v1682
  %v1715 = vadd.f32 %v1557, %v1683
  %v1716 = vadd.f32 %v1558, %v1684
  %v1717 = vadd.f32 %v1559, %v1685
  %v1718 = vadd.f32 %v1560, %v1686
  %v1719 = vadd.f32 %v1561, %v1687
  %v1720 = vadd.f32 %v1562, %v1688
  %v1721 = vadd.f32 %v1563, %v1689
  %v1722 = vadd.f32 %v1564, %v1690
  %v1723 = vadd.f32 %v1565, %v1691
  %v1724 = vadd.f32 %v1566, %v1692
  %v1725 = vadd.f32 %v1567, %v1693
  %v1726 = vadd.f32 %v1568, %v1694
  %v1727 = vadd.f32 %v1569, %v1695
  %v1728 = vadd.f32 %v1570, %v1696
  %v1729 = vadd.f32 %v1571, %v1697
  %v1730 = vadd.f32 %v1572, %v1698
  %v1731 = vadd.f32 %v1573, %v1699
  %v1732 = vadd.f32 %v1574, %v1700
  %v1733 = vadd.f32 %v1575, %v1701
  %v1734 = vadd.f32 %v1576, %v1702
  %v1735 = vadd.f32 %v1577, %v1703
  %v1736 = vadd.f32 %v1578, %v1704
  %v1737 = vadd.f32 %v1579, %v1705
  %v1738 = vadd.f32 %v1580, %v1706
  %v1739 = vmax.f32 %v1707, %v1708
  %v1740 = vrot.slane %v1739, 4
  %v1741 = vmax.f32 %v1739, %v1740
  %v1742 = vrot.slane %v1741, 2
  %v1743 = vmax.f32 %v1741, %v1742
  %v1744 = vrot.slane %v1743, 1
  %v1745 = vmax.f32 %v1743, %v1744
  %v1746 = vmax.f32 %v1709, %v1710
  %v1747 = vrot.slane %v1746, 4
  %v1748 = vmax.f32 %v1746, %v1747
  %v1749 = vrot.slane %v1748, 2
  %v1750 = vmax.f32 %v1748, %v1749
  %v1751 = vrot.slane %v1750, 1
  %v1752 = vmax.f32 %v1750, %v1751
  %v1753 = vmax.f32 %v1711, %v1712
  %v1754 = vrot.slane %v1753, 4
  %v1755 = vmax.f32 %v1753, %v1754
  %v1756 = vrot.slane %v1755, 2
  %v1757 = vmax.f32 %v1755, %v1756
  %v1758 = vrot.slane %v1757, 1
  %v1759 = vmax.f32 %v1757, %v1758
  %v1760 = vmax.f32 %v1713, %v1714
  %v1761 = vrot.slane %v1760, 4
  %v1762 = vmax.f32 %v1760, %v1761
  %v1763 = vrot.slane %v1762, 2
  %v1764 = vmax.f32 %v1762, %v1763
  %v1765 = vrot.slane %v1764, 1
  %v1766 = vmax.f32 %v1764, %v1765
  %v1767 = vmax.f32 %v1715, %v1716
  %v1768 = vrot.slane %v1767, 4
  %v1769 = vmax.f32 %v1767, %v1768
  %v1770 = vrot.slane %v1769, 2
  %v1771 = vmax.f32 %v1769, %v1770
  %v1772 = vrot.slane %v1771, 1
  %v1773 = vmax.f32 %v1771, %v1772
  %v1774 = vmax.f32 %v1717, %v1718
  %v1775 = vrot.slane %v1774, 4
  %v1776 = vmax.f32 %v1774, %v1775
  %v1777 = vrot.slane %v1776, 2
  %v1778 = vmax.f32 %v1776, %v1777
  %v1779 = vrot.slane %v1778, 1
  %v1780 = vmax.f32 %v1778, %v1779
  %v1781 = vmax.f32 %v1719, %v1720
  %v1782 = vrot.slane %v1781, 4
  %v1783 = vmax.f32 %v1781, %v1782
  %v1784 = vrot.slane %v1783, 2
  %v1785 = vmax.f32 %v1783, %v1784
  %v1786 = vrot.slane %v1785, 1
  %v1787 = vmax.f32 %v1785, %v1786
  %v1788 = vmax.f32 %v1721, %v1722
  %v1789 = vrot.slane %v1788, 4
  %v1790 = vmax.f32 %v1788, %v1789
  %v1791 = vrot.slane %v1790, 2
  %v1792 = vmax.f32 %v1790, %v1791
  %v1793 = vrot.slane %v1792, 1
  %v1794 = vmax.f32 %v1792, %v1793
  %v1795 = vmax.f32 %v1723, %v1724
  %v1796 = vrot.slane %v1795, 4
  %v1797 = vmax.f32 %v1795, %v1796
  %v1798 = vrot.slane %v1797, 2
  %v1799 = vmax.f32 %v1797, %v1798
  %v1800 = vrot.slane %v1799, 1
  %v1801 = vmax.f32 %v1799, %v1800
  %v1802 = vmax.f32 %v1725, %v1726
  %v1803 = vrot.slane %v1802, 4
  %v1804 = vmax.f32 %v1802, %v1803
  %v1805 = vrot.slane %v1804, 2
  %v1806 = vmax.f32 %v1804, %v1805
  %v1807 = vrot.slane %v1806, 1
  %v1808 = vmax.f32 %v1806, %v1807
  %v1809 = vmax.f32 %v1727, %v1728
  %v1810 = vrot.slane %v1809, 4
  %v1811 = vmax.f32 %v1809, %v1810
  %v1812 = vrot.slane %v1811, 2
  %v1813 = vmax.f32 %v1811, %v1812
  %v1814 = vrot.slane %v1813, 1
  %v1815 = vmax.f32 %v1813, %v1814
  %v1816 = vmax.f32 %v1729, %v1730
  %v1817 = vrot.slane %v1816, 4
  %v1818 = vmax.f32 %v1816, %v1817
  %v1819 = vrot.slane %v1818, 2
  %v1820 = vmax.f32 %v1818, %v1819
  %v1821 = vrot.slane %v1820, 1
  %v1822 = vmax.f32 %v1820, %v1821
  %v1823 = vmax.f32 %v1731, %v1732
  %v1824 = vrot.slane %v1823, 4
  %v1825 = vmax.f32 %v1823, %v1824
  %v1826 = vrot.slane %v1825, 2
  %v1827 = vmax.f32 %v1825, %v1826
  %v1828 = vrot.slane %v1827, 1
  %v1829 = vmax.f32 %v1827, %v1828
  %v1830 = vmax.f32 %v1733, %v1734
  %v1831 = vrot.slane %v1830, 4
  %v1832 = vmax.f32 %v1830, %v1831
  %v1833 = vrot.slane %v1832, 2
  %v1834 = vmax.f32 %v1832, %v1833
  %v1835 = vrot.slane %v1834, 1
  %v1836 = vmax.f32 %v1834, %v1835
  %v1837 = vmax.f32 %v1735, %v1736
  %v1838 = vrot.slane %v1837, 4
  %v1839 = vmax.f32 %v1837, %v1838
  %v1840 = vrot.slane %v1839, 2
  %v1841 = vmax.f32 %v1839, %v1840
  %v1842 = vrot.slane %v1841, 1
  %v1843 = vmax.f32 %v1841, %v1842
  %v1844 = vmax.f32 %v1737, %v1738
  %v1845 = vrot.slane %v1844, 4
  %v1846 = vmax.f32 %v1844, %v1845
  %v1847 = vrot.slane %v1846, 2
  %v1848 = vmax.f32 %v1846, %v1847
  %v1849 = vrot.slane %v1848, 1
  %v1850 = vmax.f32 %v1848, %v1849
  %v1851 = vsub.f32 %v1707, %v1745
  %v1852 = vsub.f32 %v1708, %v1745
  %v1853 = vsub.f32 %v1709, %v1752
  %v1854 = vsub.f32 %v1710, %v1752
  %v1855 = vsub.f32 %v1711, %v1759
  %v1856 = vsub.f32 %v1712, %v1759
  %v1857 = vsub.f32 %v1713, %v1766
  %v1858 = vsub.f32 %v1714, %v1766
  %v1859 = vsub.f32 %v1715, %v1773
  %v1860 = vsub.f32 %v1716, %v1773
  %v1861 = vsub.f32 %v1717, %v1780
  %v1862 = vsub.f32 %v1718, %v1780
  %v1863 = vsub.f32 %v1719, %v1787
  %v1864 = vsub.f32 %v1720, %v1787
  %v1865 = vsub.f32 %v1721, %v1794
  %v1866 = vsub.f32 %v1722, %v1794
  %v1867 = vsub.f32 %v1723, %v1801
  %v1868 = vsub.f32 %v1724, %v1801
  %v1869 = vsub.f32 %v1725, %v1808
  %v1870 = vsub.f32 %v1726, %v1808
  %v1871 = vsub.f32 %v1727, %v1815
  %v1872 = vsub.f32 %v1728, %v1815
  %v1873 = vsub.f32 %v1729, %v1822
  %v1874 = vsub.f32 %v1730, %v1822
  %v1875 = vsub.f32 %v1731, %v1829
  %v1876 = vsub.f32 %v1732, %v1829
  %v1877 = vsub.f32 %v1733, %v1836
  %v1878 = vsub.f32 %v1734, %v1836
  %v1879 = vsub.f32 %v1735, %v1843
  %v1880 = vsub.f32 %v1736, %v1843
  %v1881 = vsub.f32 %v1737, %v1850
  %v1882 = vsub.f32 %v1738, %v1850
  %v1883 = vmul.f32 %v1851, 1.442695
  %v1884 = vpow.pop %v1883
  %v1885 = vmul.f32 %v1852, 1.442695
  %v1886 = vpow.pop %v1885
  %v1887 = vmul.f32 %v1853, 1.442695
  %v1888 = vpow.pop %v1887
  %v1889 = vmul.f32 %v1854, 1.442695
  %v1890 = vpow.pop %v1889
  %v1891 = vmul.f32 %v1855, 1.442695
  %v1892 = vpow.pop %v1891
  %v1893 = vmul.f32 %v1856, 1.442695
  %v1894 = vpow.pop %v1893
  %v1895 = vmul.f32 %v1857, 1.442695
  %v1896 = vpow.pop %v1895
  %v1897 = vmul.f32 %v1858, 1.442695
  %v1898 = vpow.pop %v1897
  %v1899 = vmul.f32 %v1859, 1.442695
  %v1900 = vpow.pop %v1899
  %v1901 = vmul.f32 %v1860, 1.442695
  %v1902 = vpow.pop %v1901
  %v1903 = vmul.f32 %v1861, 1.442695
  %v1904 = vpow.pop %v1903
  %v1905 = vmul.f32 %v1862, 1.442695
  %v1906 = vpow.pop %v1905
  %v1907 = vmul.f32 %v1863, 1.442695
  %v1908 = vpow.pop %v1907
  %v1909 = vmul.f32 %v1864, 1.442695
  %v1910 = vpow.pop %v1909
  %v1911 = vmul.f32 %v1865, 1.442695
  %v1912 = vpow.pop %v1911
  %v1913 = vmul.f32 %v1866, 1.442695
  %v1914 = vpow.pop %v1913
  %v1915 = vmul.f32 %v1867, 1.442695
  %v1916 = vpow.pop %v1915
  %v1917 = vmul.f32 %v1868, 1.442695
  %v1918 = vpow.pop %v1917
  %v1919 = vmul.f32 %v1869, 1.442695
  %v1920 = vpow.pop %v1919
  %v1921 = vmul.f32 %v1870, 1.442695
  %v1922 = vpow.pop %v1921
  %v1923 = vmul.f32 %v1871, 1.442695
  %v1924 = vpow.pop %v1923
  %v1925 = vmul.f32 %v1872, 1.442695
  %v1926 = vpow.pop %v1925
  %v1927 = vmul.f32 %v1873, 1.442695
  %v1928 = vpow.pop %v1927
  %v1929 = vmul.f32 %v1874, 1.442695
  %v1930 = vpow.pop %v1929
  %v1931 = vmul.f32 %v1875, 1.442695
  %v1932 = vpow.pop %v1931
  %v1933 = vmul.f32 %v1876, 1.442695
  %v1934 = vpow.pop %v1933
  %v1935 = vmul.f32 %v1877, 1.442695
  %v1936 = vpow.pop %v1935
  %v1937 = vmul.f32 %v1878, 1.442695
  %v1938 = vpow.pop %v1937
  %v1939 = vmul.f32 %v1879, 1.442695
  %v1940 = vpow.pop %v1939
  %v1941 = vmul.f32 %v1880, 1.442695
  %v1942 = vpow.pop %v1941
  %v1943 = vmul.f32 %v1881, 1.442695
  %v1944 = vpow.pop %v1943
  %v1945 = vmul.f32 %v1882, 1.442695
  %v1946 = vpow.pop %v1945
  %v1947 = vadd.f32 %v1884, %v1886
  %v1948 = vrot.slane %v1947, 4
  %v1949 = vadd.f32 %v1947, %v1948
  %v1950 = vrot.slane %v1949, 2
  %v1951 = vadd.f32 %v1949, %v1950
  %v1952 = vrot.slane %v1951, 1
  %v1953 = vadd.f32 %v1951, %v1952
  %v1954 = vadd.f32 %v1888, %v1890
  %v1955 = vrot.slane %v1954, 4
  %v1956 = vadd.f32 %v1954, %v1955
  %v1957 = vrot.slane %v1956, 2
  %v1958 = vadd.f32 %v1956, %v1957
  %v1959 = vrot.slane %v1958, 1
  %v1960 = vadd.f32 %v1958, %v1959
  %v1961 = vadd.f32 %v1892, %v1894
  %v1962 = vrot.slane %v1961, 4
  %v1963 = vadd.f32 %v1961, %v1962
  %v1964 = vrot.slane %v1963, 2
  %v1965 = vadd.f32 %v1963, %v1964
  %v1966 = vrot.slane %v1965, 1
  %v1967 = vadd.f32 %v1965, %v1966
  %v1968 = vadd.f32 %v1896, %v1898
  %v1969 = vrot.slane %v1968, 4
  %v1970 = vadd.f32 %v1968, %v1969
  %v1971 = vrot.slane %v1970, 2
  %v1972 = vadd.f32 %v1970, %v1971
  %v1973 = vrot.slane %v1972, 1
  %v1974 = vadd.f32 %v1972, %v1973
  %v1975 = vadd.f32 %v1900, %v1902
  %v1976 = vrot.slane %v1975, 4
  %v1977 = vadd.f32 %v1975, %v1976
  %v1978 = vrot.slane %v1977, 2
  %v1979 = vadd.f32 %v1977, %v1978
  %v1980 = vrot.slane %v1979, 1
  %v1981 = vadd.f32 %v1979, %v1980
  %v1982 = vadd.f32 %v1904, %v1906
  %v1983 = vrot.slane %v1982, 4
  %v1984 = vadd.f32 %v1982, %v1983
  %v1985 = vrot.slane %v1984, 2
  %v1986 = vadd.f32 %v1984, %v1985
  %v1987 = vrot.slane %v1986, 1
  %v1988 = vadd.f32 %v1986, %v1987
  %v1989 = vadd.f32 %v1908, %v1910
  %v1990 = vrot.slane %v1989, 4
  %v1991 = vadd.f32 %v1989, %v1990
  %v1992 = vrot.slane %v1991, 2
  %v1993 = vadd.f32 %v1991, %v1992
  %v1994 = vrot.slane %v1993, 1
  %v1995 = vadd.f32 %v1993, %v1994
  %v1996 = vadd.f32 %v1912, %v1914
  %v1997 = vrot.slane %v1996, 4
  %v1998 = vadd.f32 %v1996, %v1997
  %v1999 = vrot.slane %v1998, 2
  %v2000 = vadd.f32 %v1998, %v1999
  %v2001 = vrot.slane %v2000, 1
  %v2002 = vadd.f32 %v2000, %v2001
  %v2003 = vadd.f32 %v1916, %v1918
  %v2004 = vrot.slane %v2003, 4
  %v2005 = vadd.f32 %v2003, %v2004
  %v2006 = vrot.slane %v2005, 2
  %v2007 = vadd.f32 %v2005, %v2006
  %v2008 = vrot.slane %v2007, 1
  %v2009 = vadd.f32 %v2007, %v2008
  %v2010 = vadd.f32 %v1920, %v1922
  %v2011 = vrot.slane %v2010, 4
  %v2012 = vadd.f32 %v2010, %v2011
  %v2013 = vrot.slane %v2012, 2
  %v2014 = vadd.f32 %v2012, %v2013
  %v2015 = vrot.slane %v2014, 1
  %v2016 = vadd.f32 %v2014, %v2015
  %v2017 = vadd.f32 %v1924, %v1926
  %v2018 = vrot.slane %v2017, 4
  %v2019 = vadd.f32 %v2017, %v2018
  %v2020 = vrot.slane %v2019, 2
  %v2021 = vadd.f32 %v2019, %v2020
  %v2022 = vrot.slane %v2021, 1
  %v2023 = vadd.f32 %v2021, %v2022
  %v2024 = vadd.f32 %v1928, %v1930
  %v2025 = vrot.slane %v2024, 4
  %v2026 = vadd.f32 %v2024, %v2025
  %v2027 = vrot.slane %v2026, 2
  %v2028 = vadd.f32 %v2026, %v2027
  %v2029 = vrot.slane %v2028, 1
  %v2030 = vadd.f32 %v2028, %v2029
  %v2031 = vadd.f32 %v1932, %v1934
  %v2032 = vrot.slane %v2031, 4
  %v2033 = vadd.f32 %v2031, %v2032
  %v2034 = vrot.slane %v2033, 2
  %v2035 = vadd.f32 %v2033, %v2034
  %v2036 = vrot.slane %v2035, 1
  %v2037 = vadd.f32 %v2035, %v2036
  %v2038 = vadd.f32 %v1936, %v1938
  %v2039 = vrot.slane %v2038, 4
  %v2040 = vadd.f32 %v2038, %v2039
  %v2041 = vrot.slane %v2040, 2
  %v2042 = vadd.f32 %v2040, %v2041
  %v2043 = vrot.slane %v2042, 1
  %v2044 = vadd.f32 %v2042, %v2043
  %v2045 = vadd.f32 %v1940, %v1942
  %v2046 = vrot.slane %v2045, 4
  %v2047 = vadd.f32 %v2045, %v2046
  %v2048 = vrot.slane %v2047, 2
  %v2049 = vadd.f32 %v2047, %v2048
  %v2050 = vrot.slane %v2049, 1
  %v2051 = vadd.f32 %v2049, %v2050
  %v2052 = vadd.f32 %v1944, %v1946
  %v2053 = vrot.slane %v2052, 4
  %v2054 = vadd.f32 %v2052, %v2053
  %v2055 = vrot.slane %v2054, 2
  %v2056 = vadd.f32 %v2054, %v2055
  %v2057 = vrot.slane %v2056, 1
  %v2058 = vadd.f32 %v2056, %v2057
  %v2059 = vrcp.pop %v1953
  %v2060 = vrcp.pop %v1960
  %v2061 = vrcp.pop %v1967
  %v2062 = vrcp.pop %v1974
  %v2063 = vrcp.pop %v1981
  %v2064 = vrcp.pop %v1988
  %v2065 = vrcp.pop %v1995
  %v2066 = vrcp.pop %v2002
  %v2067 = vrcp.pop %v2009
  %v2068 = vrcp.pop %v2016
  %v2069 = vrcp.pop %v2023
  %v2070 = vrcp.pop %v2030
  %v2071 = vrcp.pop %v2037
  %v2072 = vrcp.pop %v2044
  %v2073 = vrcp.pop %v2051
  %v2074 = vrcp.pop %v2058
  %v2075 = vmul.f32 %v1884, %v2059
  %v2076 = vmul.f32 %v1886, %v2059
  %v2077 = vmul.f32 %v1888, %v2060
  %v2078 = vmul.f32 %v1890, %v2060
  %v2079 = vmul.f32 %v1892, %v2061
  %v2080 = vmul.f32 %v1894, %v2061
  %v2081 = vmul.f32 %v1896, %v2062
  %v2082 = vmul.f32 %v1898, %v2062
  %v2083 = vmul.f32 %v1900, %v2063
  %v2084 = vmul.f32 %v1902, %v2063
  %v2085 = vmul.f32 %v1904, %v2064
  %v2086 = vmul.f32 %v1906, %v2064
  %v2087 = vmul.f32 %v1908, %v2065
  %v2088 = vmul.f32 %v1910, %v2065
  %v2089 = vmul.f32 %v1912, %v2066
  %v2090 = vmul.f32 %v1914, %v2066
  %v2091 = vmul.f32 %v1916, %v2067
  %v2092 = vmul.f32 %v1918, %v2067
  %v2093 = vmul.f32 %v1920, %v2068
  %v2094 = vmul.f32 %v1922, %v2068
  %v2095 = vmul.f32 %v1924, %v2069
  %v2096 = vmul.f32 %v1926, %v2069
  %v2097 = vmul.f32 %v1928, %v2070
  %v2098 = vmul.f32 %v1930, %v2070
  %v2099 = vmul.f32 %v1932, %v2071
  %v2100 = vmul.f32 %v1934, %v2071
  %v2101 = vmul.f32 %v1936, %v2072
  %v2102 = vmul.f32 %v1938, %v2072
  %v2103 = vmul.f32 %v1940, %v2073
  %v2104 = vmul.f32 %v1942, %v2073
  %v2105 = vmul.f32 %v1944, %v2074
  %v2106 = vmul.f32 %v1946, %v2074
  %v2107 = vlaneseq
  %v2108 = vshrl.u32 %v2107, 7
  %v2109 = vsub.s32 0, %v2108
  %v2110 = vrot.slane %v2075, %v2109
  %v2111 = vlaneseq
  %v2112 = vshrl.u32 %v2111, 7
  %v2113 = vsub.s32 0, %v2112
  %v2114 = vrot.slane %v2077, %v2113
  %v2115 = vlaneseq
  %v2116 = vshrl.u32 %v2115, 7
  %v2117 = vsub.s32 0, %v2116
  %v2118 = vrot.slane %v2079, %v2117
  %v2119 = vlaneseq
  %v2120 = vshrl.u32 %v2119, 7
  %v2121 = vsub.s32 0, %v2120
  %v2122 = vrot.slane %v2081, %v2121
  %v2123 = vlaneseq
  %v2124 = vshrl.u32 %v2123, 7
  %v2125 = vsub.s32 0, %v2124
  %v2126 = vrot.slane %v2083, %v2125
  %v2127 = vlaneseq
  %v2128 = vshrl.u32 %v2127, 7
  %v2129 = vsub.s32 0, %v2128
  %v2130 = vrot.slane %v2085, %v2129
  %v2131 = vlaneseq
  %v2132 = vshrl.u32 %v2131, 7
  %v2133 = vsub.s32 0, %v2132
  %v2134 = vrot.slane %v2087, %v2133
  %v2135 = vlaneseq
  %v2136 = vshrl.u32 %v2135, 7
  %v2137 = vsub.s32 0, %v2136
  %v2138 = vrot.slane %v2089, %v2137
  %v2139 = vlaneseq
  %v2140 = vshrl.u32 %v2139, 7
  %v2141 = vsub.s32 0, %v2140
  %v2142 = vrot.slane %v2091, %v2141
  %v2143 = vlaneseq
  %v2144 = vshrl.u32 %v2143, 7
  %v2145 = vsub.s32 0, %v2144
  %v2146 = vrot.slane %v2093, %v2145
  %v2147 = vlaneseq
  %v2148 = vshrl.u32 %v2147, 7
  %v2149 = vsub.s32 0, %v2148
  %v2150 = vrot.slane %v2095, %v2149
  %v2151 = vlaneseq
  %v2152 = vshrl.u32 %v2151, 7
  %v2153 = vsub.s32 0, %v2152
  %v2154 = vrot.slane %v2097, %v2153
  %v2155 = vlaneseq
  %v2156 = vshrl.u32 %v2155, 7
  %v2157 = vsub.s32 0, %v2156
  %v2158 = vrot.slane %v2099, %v2157
  %v2159 = vlaneseq
  %v2160 = vshrl.u32 %v2159, 7
  %v2161 = vsub.s32 0, %v2160
  %v2162 = vrot.slane %v2101, %v2161
  %v2163 = vlaneseq
  %v2164 = vshrl.u32 %v2163, 7
  %v2165 = vsub.s32 0, %v2164
  %v2166 = vrot.slane %v2103, %v2165
  %v2167 = vlaneseq
  %v2168 = vshrl.u32 %v2167, 7
  %v2169 = vsub.s32 0, %v2168
  %v2170 = vrot.slane %v2105, %v2169
  %v2171 = vmul.f32 %v2110, %v98
  %v2172 = vmul.f32 %v2114, %v98
  %v2173 = vmul.f32 %v2118, %v98
  %v2174 = vmul.f32 %v2122, %v98
  %v2175 = vmul.f32 %v2126, %v98
  %v2176 = vmul.f32 %v2130, %v98
  %v2177 = vmul.f32 %v2134, %v98
  %v2178 = vmul.f32 %v2138, %v98
  %v2179 = vmul.f32 %v2142, %v98
  %v2180 = vmul.f32 %v2146, %v98
  %v2181 = vmul.f32 %v2150, %v98
  %v2182 = vmul.f32 %v2154, %v98
  %v2183 = vmul.f32 %v2158, %v98
  %v2184 = vmul.f32 %v2162, %v98
  %v2185 = vmul.f32 %v2166, %v98
  %v2186 = vmul.f32 %v2170, %v98
  %v2187 = vadd.f32 %v2171, 0.0
  %v2188 = vadd.f32 %v2172, 0.0
  %v2189 = vadd.f32 %v2173, 0.0
  %v2190 = vadd.f32 %v2174, 0.0
  %v2191 = vadd.f32 %v2175, 0.0
  %v2192 = vadd.f32 %v2176, 0.0
  %v2193 = vadd.f32 %v2177, 0.0
  %v2194 = vadd.f32 %v2178, 0.0
  %v2195 = vadd.f32 %v2179, 0.0
  %v2196 = vadd.f32 %v2180, 0.0
  %v2197 = vadd.f32 %v2181, 0.0
  %v2198 = vadd.f32 %v2182, 0.0
  %v2199 = vadd.f32 %v2183, 0.0
  %v2200 = vadd.f32 %v2184, 0.0
  %v2201 = vadd.f32 %v2185, 0.0
  %v2202 = vadd.f32 %v2186, 0.0
  %v2203 = vlaneseq
  %v2204 = vshrl.u32 %v2203, 7
  %v2205 = vsub.s32 1, %v2204
  %v2206 = vrot.slane %v2075, %v2205
  %v2207 = vlaneseq
  %v2208 = vshrl.u32 %v2207, 7
  %v2209 = vsub.s32 1, %v2208
  %v2210 = vrot.slane %v2077, %v2209
  %v2211 = vlaneseq
  %v2212 = vshrl.u32 %v2211, 7
  %v2213 = vsub.s32 1, %v2212
  %v2214 = vrot.slane %v2079, %v2213
  %v2215 = vlaneseq
  %v2216 = vshrl.u32 %v2215, 7
  %v2217 = vsub.s32 1, %v2216
  %v2218 = vrot.slane %v2081, %v2217
  %v2219 = vlaneseq
  %v2220 = vshrl.u32 %v2219, 7
  %v2221 = vsub.s32 1, %v2220
  %v2222 = vrot.slane %v2083, %v2221
  %v2223 = vlaneseq
  %v2224 = vshrl.u32 %v2223, 7
  %v2225 = vsub.s32 1, %v2224
  %v2226 = vrot.slane %v2085, %v2225
  %v2227 = vlaneseq
  %v2228 = vshrl.u32 %v2227, 7
  %v2229 = vsub.s32 1, %v2228
  %v2230 = vrot.slane %v2087, %v2229
  %v2231 = vlaneseq
  %v2232 = vshrl.u32 %v2231, 7
  %v2233 = vsub.s32 1, %v2232
  %v2234 = vrot.slane %v2089, %v2233
  %v2235 = vlaneseq
  %v2236 = vshrl.u32 %v2235, 7
  %v2237 = vsub.s32 1, %v2236
  %v2238 = vrot.slane %v2091, %v2237
  %v2239 = vlaneseq
  %v2240 = vshrl.u32 %v2239, 7
  %v2241 = vsub.s32 1, %v2240
  %v2242 = vrot.slane %v2093, %v2241
  %v2243 = vlaneseq
  %v2244 = vshrl.u32 %v2243, 7
  %v2245 = vsub.s32 1, %v2244
  %v2246 = vrot.slane %v2095, %v2245
  %v2247 = vlaneseq
  %v2248 = vshrl.u32 %v2247, 7
  %v2249 = vsub.s32 1, %v2248
  %v2250 = vrot.slane %v2097, %v2249
  %v2251 = vlaneseq
  %v2252 = vshrl.u32 %v2251, 7
  %v2253 = vsub.s32 1, %v2252
  %v2254 = vrot.slane %v2099, %v2253
  %v2255 = vlaneseq
  %v2256 = vshrl.u32 %v2255, 7
  %v2257 = vsub.s32 1, %v2256
  %v2258 = vrot.slane %v2101, %v2257
  %v2259 = vlaneseq
  %v2260 = vshrl.u32 %v2259, 7
  %v2261 = vsub.s32 1, %v2260
  %v2262 = vrot.slane %v2103, %v2261
  %v2263 = vlaneseq
  %v2264 = vshrl.u32 %v2263, 7
  %v2265 = vsub.s32 1, %v2264
  %v2266 = vrot.slane %v2105, %v2265
  %v2267 = vmul.f32 %v2206, %v99
  %v2268 = vmul.f32 %v2210, %v99
  %v2269 = vmul.f32 %v2214, %v99
  %v2270 = vmul.f32 %v2218, %v99
  %v2271 = vmul.f32 %v2222, %v99
  %v2272 = vmul.f32 %v2226, %v99
  %v2273 = vmul.f32 %v2230, %v99
  %v2274 = vmul.f32 %v2234, %v99
  %v2275 = vmul.f32 %v2238, %v99
  %v2276 = vmul.f32 %v2242, %v99
  %v2277 = vmul.f32 %v2246, %v99
  %v2278 = vmul.f32 %v2250, %v99
  %v2279 = vmul.f32 %v2254, %v99
  %v2280 = vmul.f32 %v2258, %v99
  %v2281 = vmul.f32 %v2262, %v99
  %v2282 = vmul.f32 %v2266, %v99
  %v2283 = vadd.f32 %v2187, %v2267
  %v2284 = vadd.f32 %v2188, %v2268
  %v2285 = vadd.f32 %v2189, %v2269
  %v2286 = vadd.f32 %v2190, %v2270
  %v2287 = vadd.f32 %v2191, %v2271
  %v2288 = vadd.f32 %v2192, %v2272
  %v2289 = vadd.f32 %v2193, %v2273
  %v2290 = vadd.f32 %v2194, %v2274
  %v2291 = vadd.f32 %v2195, %v2275
  %v2292 = vadd.f32 %v2196, %v2276
  %v2293 = vadd.f32 %v2197, %v2277
  %v2294 = vadd.f32 %v2198, %v2278
  %v2295 = vadd.f32 %v2199, %v2279
  %v2296 = vadd.f32 %v2200, %v2280
  %v2297 = vadd.f32 %v2201, %v2281
  %v2298 = vadd.f32 %v2202, %v2282
  %v2299 = vlaneseq
  %v2300 = vshrl.u32 %v2299, 7
  %v2301 = vsub.s32 2, %v2300
  %v2302 = vrot.slane %v2075, %v2301
  %v2303 = vlaneseq
  %v2304 = vshrl.u32 %v2303, 7
  %v2305 = vsub.s32 2, %v2304
  %v2306 = vrot.slane %v2077, %v2305
  %v2307 = vlaneseq
  %v2308 = vshrl.u32 %v2307, 7
  %v2309 = vsub.s32 2, %v2308
  %v2310 = vrot.slane %v2079, %v2309
  %v2311 = vlaneseq
  %v2312 = vshrl.u32 %v2311, 7
  %v2313 = vsub.s32 2, %v2312
  %v2314 = vrot.slane %v2081, %v2313
  %v2315 = vlaneseq
  %v2316 = vshrl.u32 %v2315, 7
  %v2317 = vsub.s32 2, %v2316
  %v2318 = vrot.slane %v2083, %v2317
  %v2319 = vlaneseq
  %v2320 = vshrl.u32 %v2319, 7
  %v2321 = vsub.s32 2, %v2320
  %v2322 = vrot.slane %v2085, %v2321
  %v2323 = vlaneseq
  %v2324 = vshrl.u32 %v2323, 7
  %v2325 = vsub.s32 2, %v2324
  %v2326 = vrot.slane %v2087, %v2325
  %v2327 = vlaneseq
  %v2328 = vshrl.u32 %v2327, 7
  %v2329 = vsub.s32 2, %v2328
  %v2330 = vrot.slane %v2089, %v2329
  %v2331 = vlaneseq
  %v2332 = vshrl.u32 %v2331, 7
  %v2333 = vsub.s32 2, %v2332
  %v2334 = vrot.slane %v2091, %v2333
  %v2335 = vlaneseq
  %v2336 = vshrl.u32 %v2335, 7
  %v2337 = vsub.s32 2, %v2336
  %v2338 = vrot.slane %v2093, %v2337
  %v2339 = vlaneseq
  %v2340 = vshrl.u32 %v2339, 7
  %v2341 = vsub.s32 2, %v2340
  %v2342 = vrot.slane %v2095, %v2341
  %v2343 = vlaneseq
  %v2344 = vshrl.u32 %v2343, 7
  %v2345 = vsub.s32 2, %v2344
  %v2346 = vrot.slane %v2097, %v2345
  %v2347 = vlaneseq
  %v2348 = vshrl.u32 %v2347, 7
  %v2349 = vsub.s32 2, %v2348
  %v2350 = vrot.slane %v2099, %v2349
  %v2351 = vlaneseq
  %v2352 = vshrl.u32 %v2351, 7
  %v2353 = vsub.s32 2, %v2352
  %v2354 = vrot.slane %v2101, %v2353
  %v2355 = vlaneseq
  %v2356 = vshrl.u32 %v2355, 7
  %v2357 = vsub.s32 2, %v2356
  %v2358 = vrot.slane %v2103, %v2357
  %v2359 = vlaneseq
  %v2360 = vshrl.u32 %v2359, 7
  %v2361 = vsub.s32 2, %v2360
  %v2362 = vrot.slane %v2105, %v2361
  %v2363 = vmul.f32 %v2302, %v100
  %v2364 = vmul.f32 %v2306, %v100
  %v2365 = vmul.f32 %v2310, %v100
  %v2366 = vmul.f32 %v2314, %v100
  %v2367 = vmul.f32 %v2318, %v100
  %v2368 = vmul.f32 %v2322, %v100
  %v2369 = vmul.f32 %v2326, %v100
  %v2370 = vmul.f32 %v2330, %v100
  %v2371 = vmul.f32 %v2334, %v100
  %v2372 = vmul.f32 %v2338, %v100
  %v2373 = vmul.f32 %v2342, %v100
  %v2374 = vmul.f32 %v2346, %v100
  %v2375 = vmul.f32 %v2350, %v100
  %v2376 = vmul.f32 %v2354, %v100
  %v2377 = vmul.f32 %v2358, %v100
  %v2378 = vmul.f32 %v2362, %v100
  %v2379 = vadd.f32 %v2283, %v2363
  %v2380 = vadd.f32 %v2284, %v2364
  %v2381 = vadd.f32 %v2285, %v2365
  %v2382 = vadd.f32 %v2286, %v2366
  %v2383 = vadd.f32 %v2287, %v2367
  %v2384 = vadd.f32 %v2288, %v2368
  %v2385 = vadd.f32 %v2289, %v2369
  %v2386 = vadd.f32 %v2290, %v2370
  %v2387 = vadd.f32 %v2291, %v2371
  %v2388 = vadd.f32 %v2292, %v2372
  %v2389 = vadd.f32 %v2293, %v2373
  %v2390 = vadd.f32 %v2294, %v2374
  %v2391 = vadd.f32 %v2295, %v2375
  %v2392 = vadd.f32 %v2296, %v2376
  %v2393 = vadd.f32 %v2297, %v2377
  %v2394 = vadd.f32 %v2298, %v2378
  %v2395 = vlaneseq
  %v2396 = vshrl.u32 %v2395, 7
  %v2397 = vsub.s32 3, %v2396
  %v2398 = vrot.slane %v2075, %v2397
  %v2399 = vlaneseq
  %v2400 = vshrl.u32 %v2399, 7
  %v2401 = vsub.s32 3, %v2400
  %v2402 = vrot.slane %v2077, %v2401
  %v2403 = vlaneseq
  %v2404 = vshrl.u32 %v2403, 7
  %v2405 = vsub.s32 3, %v2404
  %v2406 = vrot.slane %v2079, %v2405
  %v2407 = vlaneseq
  %v2408 = vshrl.u32 %v2407, 7
  %v2409 = vsub.s32 3, %v2408
  %v2410 = vrot.slane %v2081, %v2409
  %v2411 = vlaneseq
  %v2412 = vshrl.u32 %v2411, 7
  %v2413 = vsub.s32 3, %v2412
  %v2414 = vrot.slane %v2083, %v2413
  %v2415 = vlaneseq
  %v2416 = vshrl.u32 %v2415, 7
  %v2417 = vsub.s32 3, %v2416
  %v2418 = vrot.slane %v2085, %v2417
  %v2419 = vlaneseq
  %v2420 = vshrl.u32 %v2419, 7
  %v2421 = vsub.s32 3, %v2420
  %v2422 = vrot.slane %v2087, %v2421
  %v2423 = vlaneseq
  %v2424 = vshrl.u32 %v2423, 7
  %v2425 = vsub.s32 3, %v2424
  %v2426 = vrot.slane %v2089, %v2425
  %v2427 = vlaneseq
  %v2428 = vshrl.u32 %v2427, 7
  %v2429 = vsub.s32 3, %v2428
  %v2430 = vrot.slane %v2091, %v2429
  %v2431 = vlaneseq
  %v2432 = vshrl.u32 %v2431, 7
  %v2433 = vsub.s32 3, %v2432
  %v2434 = vrot.slane %v2093, %v2433
  %v2435 = vlaneseq
  %v2436 = vshrl.u32 %v2435, 7
  %v2437 = vsub.s32 3, %v2436
  %v2438 = vrot.slane %v2095, %v2437
  %v2439 = vlaneseq
  %v2440 = vshrl.u32 %v2439, 7
  %v2441 = vsub.s32 3, %v2440
  %v2442 = vrot.slane %v2097, %v2441
  %v2443 = vlaneseq
  %v2444 = vshrl.u32 %v2443, 7
  %v2445 = vsub.s32 3, %v2444
  %v2446 = vrot.slane %v2099, %v2445
  %v2447 = vlaneseq
  %v2448 = vshrl.u32 %v2447, 7
  %v2449 = vsub.s32 3, %v2448
  %v2450 = vrot.slane %v2101, %v2449
  %v2451 = vlaneseq
  %v2452 = vshrl.u32 %v2451, 7
  %v2453 = vsub.s32 3, %v2452
  %v2454 = vrot.slane %v2103, %v2453
  %v2455 = vlaneseq
  %v2456 = vshrl.u32 %v2455, 7
  %v2457 = vsub.s32 3, %v2456
  %v2458 = vrot.slane %v2105, %v2457
  %v2459 = vmul.f32 %v2398, %v101
  %v2460 = vmul.f32 %v2402, %v101
  %v2461 = vmul.f32 %v2406, %v101
  %v2462 = vmul.f32 %v2410, %v101
  %v2463 = vmul.f32 %v2414, %v101
  %v2464 = vmul.f32 %v2418, %v101
  %v2465 = vmul.f32 %v2422, %v101
  %v2466 = vmul.f32 %v2426, %v101
  %v2467 = vmul.f32 %v2430, %v101
  %v2468 = vmul.f32 %v2434, %v101
  %v2469 = vmul.f32 %v2438, %v101
  %v2470 = vmul.f32 %v2442, %v101
  %v2471 = vmul.f32 %v2446, %v101
  %v2472 = vmul.f32 %v2450, %v101
  %v2473 = vmul.f32 %v2454, %v101
  %v2474 = vmul.f32 %v2458, %v101
  %v2475 = vadd.f32 %v2379, %v2459
  %v2476 = vadd.f32 %v2380, %v2460
  %v2477 = vadd.f32 %v2381, %v2461
  %v2478 = vadd.f32 %v2382, %v2462
  %v2479 = vadd.f32 %v2383, %v2463
  %v2480 = vadd.f32 %v2384, %v2464
  %v2481 = vadd.f32 %v2385, %v2465
  %v2482 = vadd.f32 %v2386, %v2466
  %v2483 = vadd.f32 %v2387, %v2467
  %v2484 = vadd.f32 %v2388, %v2468
  %v2485 = vadd.f32 %v2389, %v2469
  %v2486 = vadd.f32 %v2390, %v2470
  %v2487 = vadd.f32 %v2391, %v2471
  %v2488 = vadd.f32 %v2392, %v2472
  %v2489 = vadd.f32 %v2393, %v2473
  %v2490 = vadd.f32 %v2394, %v2474
  %v2491 = vlaneseq
  %v2492 = vshrl.u32 %v2491, 7
  %v2493 = vsub.s32 4, %v2492
  %v2494 = vrot.slane %v2075, %v2493
  %v2495 = vlaneseq
  %v2496 = vshrl.u32 %v2495, 7
  %v2497 = vsub.s32 4, %v2496
  %v2498 = vrot.slane %v2077, %v2497
  %v2499 = vlaneseq
  %v2500 = vshrl.u32 %v2499, 7
  %v2501 = vsub.s32 4, %v2500
  %v2502 = vrot.slane %v2079, %v2501
  %v2503 = vlaneseq
  %v2504 = vshrl.u32 %v2503, 7
  %v2505 = vsub.s32 4, %v2504
  %v2506 = vrot.slane %v2081, %v2505
  %v2507 = vlaneseq
  %v2508 = vshrl.u32 %v2507, 7
  %v2509 = vsub.s32 4, %v2508
  %v2510 = vrot.slane %v2083, %v2509
  %v2511 = vlaneseq
  %v2512 = vshrl.u32 %v2511, 7
  %v2513 = vsub.s32 4, %v2512
  %v2514 = vrot.slane %v2085, %v2513
  %v2515 = vlaneseq
  %v2516 = vshrl.u32 %v2515, 7
  %v2517 = vsub.s32 4, %v2516
  %v2518 = vrot.slane %v2087, %v2517
  %v2519 = vlaneseq
  %v2520 = vshrl.u32 %v2519, 7
  %v2521 = vsub.s32 4, %v2520
  %v2522 = vrot.slane %v2089, %v2521
  %v2523 = vlaneseq
  %v2524 = vshrl.u32 %v2523, 7
  %v2525 = vsub.s32 4, %v2524
  %v2526 = vrot.slane %v2091, %v2525
  %v2527 = vlaneseq
  %v2528 = vshrl.u32 %v2527, 7
  %v2529 = vsub.s32 4, %v2528
  %v2530 = vrot.slane %v2093, %v2529
  %v2531 = vlaneseq
  %v2532 = vshrl.u32 %v2531, 7
  %v2533 = vsub.s32 4, %v2532
  %v2534 = vrot.slane %v2095, %v2533
  %v2535 = vlaneseq
  %v2536 = vshrl.u32 %v2535, 7
  %v2537 = vsub.s32 4, %v2536
  %v2538 = vrot.slane %v2097, %v2537
  %v2539 = vlaneseq
  %v2540 = vshrl.u32 %v2539, 7
  %v2541 = vsub.s32 4, %v2540
  %v2542 = vrot.slane %v2099, %v2541
  %v2543 = vlaneseq
  %v2544 = vshrl.u32 %v2543, 7
  %v2545 = vsub.s32 4, %v2544
  %v2546 = vrot.slane %v2101, %v2545
  %v2547 = vlaneseq
  %v2548 = vshrl.u32 %v2547, 7
  %v2549 = vsub.s32 4, %v2548
  %v2550 = vrot.slane %v2103, %v2549
  %v2551 = vlaneseq
  %v2552 = vshrl.u32 %v2551, 7
  %v2553 = vsub.s32 4, %v2552
  %v2554 = vrot.slane %v2105, %v2553
  %v2555 = vmul.f32 %v2494, %v102
  %v2556 = vmul.f32 %v2498, %v102
  %v2557 = vmul.f32 %v2502, %v102
  %v2558 = vmul.f32 %v2506, %v102
  %v2559 = vmul.f32 %v2510, %v102
  %v2560 = vmul.f32 %v2514, %v102
  %v2561 = vmul.f32 %v2518, %v102
  %v2562 = vmul.f32 %v2522, %v102
  %v2563 = vmul.f32 %v2526, %v102
  %v2564 = vmul.f32 %v2530, %v102
  %v2565 = vmul.f32 %v2534, %v102
  %v2566 = vmul.f32 %v2538, %v102
  %v2567 = vmul.f32 %v2542, %v102
  %v2568 = vmul.f32 %v2546, %v102
  %v2569 = vmul.f32 %v2550, %v102
  %v2570 = vmul.f32 %v2554, %v102
  %v2571 = vadd.f32 %v2475, %v2555
  %v2572 = vadd.f32 %v2476, %v2556
  %v2573 = vadd.f32 %v2477, %v2557
  %v2574 = vadd.f32 %v2478, %v2558
  %v2575 = vadd.f32 %v2479, %v2559
  %v2576 = vadd.f32 %v2480, %v2560
  %v2577 = vadd.f32 %v2481, %v2561
  %v2578 = vadd.f32 %v2482, %v2562
  %v2579 = vadd.f32 %v2483, %v2563
  %v2580 = vadd.f32 %v2484, %v2564
  %v2581 = vadd.f32 %v2485, %v2565
  %v2582 = vadd.f32 %v2486, %v2566
  %v2583 = vadd.f32 %v2487, %v2567
  %v2584 = vadd.f32 %v2488, %v2568
  %v2585 = vadd.f32 %v2489, %v2569
  %v2586 = vadd.f32 %v2490, %v2570
  %v2587 = vlaneseq
  %v2588 = vshrl.u32 %v2587, 7
  %v2589 = vsub.s32 5, %v2588
  %v2590 = vrot.slane %v2075, %v2589
  %v2591 = vlaneseq
  %v2592 = vshrl.u32 %v2591, 7
  %v2593 = vsub.s32 5, %v2592
  %v2594 = vrot.slane %v2077, %v2593
  %v2595 = vlaneseq
  %v2596 = vshrl.u32 %v2595, 7
  %v2597 = vsub.s32 5, %v2596
  %v2598 = vrot.slane %v2079, %v2597
  %v2599 = vlaneseq
  %v2600 = vshrl.u32 %v2599, 7
  %v2601 = vsub.s32 5, %v2600
  %v2602 = vrot.slane %v2081, %v2601
  %v2603 = vlaneseq
  %v2604 = vshrl.u32 %v2603, 7
  %v2605 = vsub.s32 5, %v2604
  %v2606 = vrot.slane %v2083, %v2605
  %v2607 = vlaneseq
  %v2608 = vshrl.u32 %v2607, 7
  %v2609 = vsub.s32 5, %v2608
  %v2610 = vrot.slane %v2085, %v2609
  %v2611 = vlaneseq
  %v2612 = vshrl.u32 %v2611, 7
  %v2613 = vsub.s32 5, %v2612
  %v2614 = vrot.slane %v2087, %v2613
  %v2615 = vlaneseq
  %v2616 = vshrl.u32 %v2615, 7
  %v2617 = vsub.s32 5, %v2616
  %v2618 = vrot.slane %v2089, %v2617
  %v2619 = vlaneseq
  %v2620 = vshrl.u32 %v2619, 7
  %v2621 = vsub.s32 5, %v2620
  %v2622 = vrot.slane %v2091, %v2621
  %v2623 = vlaneseq
  %v2624 = vshrl.u32 %v2623, 7
  %v2625 = vsub.s32 5, %v2624
  %v2626 = vrot.slane %v2093, %v2625
  %v2627 = vlaneseq
  %v2628 = vshrl.u32 %v2627, 7
  %v2629 = vsub.s32 5, %v2628
  %v2630 = vrot.slane %v2095, %v2629
  %v2631 = vlaneseq
  %v2632 = vshrl.u32 %v2631, 7
  %v2633 = vsub.s32 5, %v2632
  %v2634 = vrot.slane %v2097, %v2633
  %v2635 = vlaneseq
  %v2636 = vshrl.u32 %v2635, 7
  %v2637 = vsub.s32 5, %v2636
  %v2638 = vrot.slane %v2099, %v2637
  %v2639 = vlaneseq
  %v2640 = vshrl.u32 %v2639, 7
  %v2641 = vsub.s32 5, %v2640
  %v2642 = vrot.slane %v2101, %v2641
  %v2643 = vlaneseq
  %v2644 = vshrl.u32 %v2643, 7
  %v2645 = vsub.s32 5, %v2644
  %v2646 = vrot.slane %v2103, %v2645
  %v2647 = vlaneseq
  %v2648 = vshrl.u32 %v2647, 7
  %v2649 = vsub.s32 5, %v2648
  %v2650 = vrot.slane %v2105, %v2649
  %v2651 = vmul.f32 %v2590, %v103
  %v2652 = vmul.f32 %v2594, %v103
  %v2653 = vmul.f32 %v2598, %v103
  %v2654 = vmul.f32 %v2602, %v103
  %v2655 = vmul.f32 %v2606, %v103
  %v2656 = vmul.f32 %v2610, %v103
  %v2657 = vmul.f32 %v2614, %v103
  %v2658 = vmul.f32 %v2618, %v103
  %v2659 = vmul.f32 %v2622, %v103
  %v2660 = vmul.f32 %v2626, %v103
  %v2661 = vmul.f32 %v2630, %v103
  %v2662 = vmul.f32 %v2634, %v103
  %v2663 = vmul.f32 %v2638, %v103
  %v2664 = vmul.f32 %v2642, %v103
  %v2665 = vmul.f32 %v2646, %v103
  %v2666 = vmul.f32 %v2650, %v103
  %v2667 = vadd.f32 %v2571, %v2651
  %v2668 = vadd.f32 %v2572, %v2652
  %v2669 = vadd.f32 %v2573, %v2653
  %v2670 = vadd.f32 %v2574, %v2654
  %v2671 = vadd.f32 %v2575, %v2655
  %v2672 = vadd.f32 %v2576, %v2656
  %v2673 = vadd.f32 %v2577, %v2657
  %v2674 = vadd.f32 %v2578, %v2658
  %v2675 = vadd.f32 %v2579, %v2659
  %v2676 = vadd.f32 %v2580, %v2660
  %v2677 = vadd.f32 %v2581, %v2661
  %v2678 = vadd.f32 %v2582, %v2662
  %v2679 = vadd.f32 %v2583, %v2663
  %v2680 = vadd.f32 %v2584, %v2664
  %v2681 = vadd.f32 %v2585, %v2665
  %v2682 = vadd.f32 %v2586, %v2666
  %v2683 = vlaneseq
  %v2684 = vshrl.u32 %v2683, 7
  %v2685 = vsub.s32 6, %v2684
  %v2686 = vrot.slane %v2075, %v2685
  %v2687 = vlaneseq
  %v2688 = vshrl.u32 %v2687, 7
  %v2689 = vsub.s32 6, %v2688
  %v2690 = vrot.slane %v2077, %v2689
  %v2691 = vlaneseq
  %v2692 = vshrl.u32 %v2691, 7
  %v2693 = vsub.s32 6, %v2692
  %v2694 = vrot.slane %v2079, %v2693
  %v2695 = vlaneseq
  %v2696 = vshrl.u32 %v2695, 7
  %v2697 = vsub.s32 6, %v2696
  %v2698 = vrot.slane %v2081, %v2697
  %v2699 = vlaneseq
  %v2700 = vshrl.u32 %v2699, 7
  %v2701 = vsub.s32 6, %v2700
  %v2702 = vrot.slane %v2083, %v2701
  %v2703 = vlaneseq
  %v2704 = vshrl.u32 %v2703, 7
  %v2705 = vsub.s32 6, %v2704
  %v2706 = vrot.slane %v2085, %v2705
  %v2707 = vlaneseq
  %v2708 = vshrl.u32 %v2707, 7
  %v2709 = vsub.s32 6, %v2708
  %v2710 = vrot.slane %v2087, %v2709
  %v2711 = vlaneseq
  %v2712 = vshrl.u32 %v2711, 7
  %v2713 = vsub.s32 6, %v2712
  %v2714 = vrot.slane %v2089, %v2713
  %v2715 = vlaneseq
  %v2716 = vshrl.u32 %v2715, 7
  %v2717 = vsub.s32 6, %v2716
  %v2718 = vrot.slane %v2091, %v2717
  %v2719 = vlaneseq
  %v2720 = vshrl.u32 %v2719, 7
  %v2721 = vsub.s32 6, %v2720
  %v2722 = vrot.slane %v2093, %v2721
  %v2723 = vlaneseq
  %v2724 = vshrl.u32 %v2723, 7
  %v2725 = vsub.s32 6, %v2724
  %v2726 = vrot.slane %v2095, %v2725
  %v2727 = vlaneseq
  %v2728 = vshrl.u32 %v2727, 7
  %v2729 = vsub.s32 6, %v2728
  %v2730 = vrot.slane %v2097, %v2729
  %v2731 = vlaneseq
  %v2732 = vshrl.u32 %v2731, 7
  %v2733 = vsub.s32 6, %v2732
  %v2734 = vrot.slane %v2099, %v2733
  %v2735 = vlaneseq
  %v2736 = vshrl.u32 %v2735, 7
  %v2737 = vsub.s32 6, %v2736
  %v2738 = vrot.slane %v2101, %v2737
  %v2739 = vlaneseq
  %v2740 = vshrl.u32 %v2739, 7
  %v2741 = vsub.s32 6, %v2740
  %v2742 = vrot.slane %v2103, %v2741
  %v2743 = vlaneseq
  %v2744 = vshrl.u32 %v2743, 7
  %v2745 = vsub.s32 6, %v2744
  %v2746 = vrot.slane %v2105, %v2745
  %v2747 = vmul.f32 %v2686, %v104
  %v2748 = vmul.f32 %v2690, %v104
  %v2749 = vmul.f32 %v2694, %v104
  %v2750 = vmul.f32 %v2698, %v104
  %v2751 = vmul.f32 %v2702, %v104
  %v2752 = vmul.f32 %v2706, %v104
  %v2753 = vmul.f32 %v2710, %v104
  %v2754 = vmul.f32 %v2714, %v104
  %v2755 = vmul.f32 %v2718, %v104
  %v2756 = vmul.f32 %v2722, %v104
  %v2757 = vmul.f32 %v2726, %v104
  %v2758 = vmul.f32 %v2730, %v104
  %v2759 = vmul.f32 %v2734, %v104
  %v2760 = vmul.f32 %v2738, %v104
  %v2761 = vmul.f32 %v2742, %v104
  %v2762 = vmul.f32 %v2746, %v104
  %v2763 = vadd.f32 %v2667, %v2747
  %v2764 = vadd.f32 %v2668, %v2748
  %v2765 = vadd.f32 %v2669, %v2749
  %v2766 = vadd.f32 %v2670, %v2750
  %v2767 = vadd.f32 %v2671, %v2751
  %v2768 = vadd.f32 %v2672, %v2752
  %v2769 = vadd.f32 %v2673, %v2753
  %v2770 = vadd.f32 %v2674, %v2754
  %v2771 = vadd.f32 %v2675, %v2755
  %v2772 = vadd.f32 %v2676, %v2756
  %v2773 = vadd.f32 %v2677, %v2757
  %v2774 = vadd.f32 %v2678, %v2758
  %v2775 = vadd.f32 %v2679, %v2759
  %v2776 = vadd.f32 %v2680, %v2760
  %v2777 = vadd.f32 %v2681, %v2761
  %v2778 = vadd.f32 %v2682, %v2762
  %v2779 = vlaneseq
  %v2780 = vshrl.u32 %v2779, 7
  %v2781 = vsub.s32 7, %v2780
  %v2782 = vrot.slane %v2075, %v2781
  %v2783 = vlaneseq
  %v2784 = vshrl.u32 %v2783, 7
  %v2785 = vsub.s32 7, %v2784
  %v2786 = vrot.slane %v2077, %v2785
  %v2787 = vlaneseq
  %v2788 = vshrl.u32 %v2787, 7
  %v2789 = vsub.s32 7, %v2788
  %v2790 = vrot.slane %v2079, %v2789
  %v2791 = vlaneseq
  %v2792 = vshrl.u32 %v2791, 7
  %v2793 = vsub.s32 7, %v2792
  %v2794 = vrot.slane %v2081, %v2793
  %v2795 = vlaneseq
  %v2796 = vshrl.u32 %v2795, 7
  %v2797 = vsub.s32 7, %v2796
  %v2798 = vrot.slane %v2083, %v2797
  %v2799 = vlaneseq
  %v2800 = vshrl.u32 %v2799, 7
  %v2801 = vsub.s32 7, %v2800
  %v2802 = vrot.slane %v2085, %v2801
  %v2803 = vlaneseq
  %v2804 = vshrl.u32 %v2803, 7
  %v2805 = vsub.s32 7, %v2804
  %v2806 = vrot.slane %v2087, %v2805
  %v2807 = vlaneseq
  %v2808 = vshrl.u32 %v2807, 7
  %v2809 = vsub.s32 7, %v2808
  %v2810 = vrot.slane %v2089, %v2809
  %v2811 = vlaneseq
  %v2812 = vshrl.u32 %v2811, 7
  %v2813 = vsub.s32 7, %v2812
  %v2814 = vrot.slane %v2091, %v2813
  %v2815 = vlaneseq
  %v2816 = vshrl.u32 %v2815, 7
  %v2817 = vsub.s32 7, %v2816
  %v2818 = vrot.slane %v2093, %v2817
  %v2819 = vlaneseq
  %v2820 = vshrl.u32 %v2819, 7
  %v2821 = vsub.s32 7, %v2820
  %v2822 = vrot.slane %v2095, %v2821
  %v2823 = vlaneseq
  %v2824 = vshrl.u32 %v2823, 7
  %v2825 = vsub.s32 7, %v2824
  %v2826 = vrot.slane %v2097, %v2825
  %v2827 = vlaneseq
  %v2828 = vshrl.u32 %v2827, 7
  %v2829 = vsub.s32 7, %v2828
  %v2830 = vrot.slane %v2099, %v2829
  %v2831 = vlaneseq
  %v2832 = vshrl.u32 %v2831, 7
  %v2833 = vsub.s32 7, %v2832
  %v2834 = vrot.slane %v2101, %v2833
  %v2835 = vlaneseq
  %v2836 = vshrl.u32 %v2835, 7
  %v2837 = vsub.s32 7, %v2836
  %v2838 = vrot.slane %v2103, %v2837
  %v2839 = vlaneseq
  %v2840 = vshrl.u32 %v2839, 7
  %v2841 = vsub.s32 7, %v2840
  %v2842 = vrot.slane %v2105, %v2841
  %v2843 = vmul.f32 %v2782, %v105
  %v2844 = vmul.f32 %v2786, %v105
  %v2845 = vmul.f32 %v2790, %v105
  %v2846 = vmul.f32 %v2794, %v105
  %v2847 = vmul.f32 %v2798, %v105
  %v2848 = vmul.f32 %v2802, %v105
  %v2849 = vmul.f32 %v2806, %v105
  %v2850 = vmul.f32 %v2810, %v105
  %v2851 = vmul.f32 %v2814, %v105
  %v2852 = vmul.f32 %v2818, %v105
  %v2853 = vmul.f32 %v2822, %v105
  %v2854 = vmul.f32 %v2826, %v105
  %v2855 = vmul.f32 %v2830, %v105
  %v2856 = vmul.f32 %v2834, %v105
  %v2857 = vmul.f32 %v2838, %v105
  %v2858 = vmul.f32 %v2842, %v105
  %v2859 = vadd.f32 %v2763, %v2843
  %v2860 = vadd.f32 %v2764, %v2844
  %v2861 = vadd.f32 %v2765, %v2845
  %v2862 = vadd.f32 %v2766, %v2846
  %v2863 = vadd.f32 %v2767, %v2847
  %v2864 = vadd.f32 %v2768, %v2848
  %v2865 = vadd.f32 %v2769, %v2849
  %v2866 = vadd.f32 %v2770, %v2850
  %v2867 = vadd.f32 %v2771, %v2851
  %v2868 = vadd.f32 %v2772, %v2852
  %v2869 = vadd.f32 %v2773, %v2853
  %v2870 = vadd.f32 %v2774, %v2854
  %v2871 = vadd.f32 %v2775, %v2855
  %v2872 = vadd.f32 %v2776, %v2856
  %v2873 = vadd.f32 %v2777, %v2857
  %v2874 = vadd.f32 %v2778, %v2858
  %v2875 = vlaneseq
  %v2876 = vshrl.u32 %v2875, 7
  %v2877 = vsub.s32 0, %v2876
  %v2878 = vrot.slane %v2076, %v2877
  %v2879 = vlaneseq
  %v2880 = vshrl.u32 %v2879, 7
  %v2881 = vsub.s32 0, %v2880
  %v2882 = vrot.slane %v2078, %v2881
  %v2883 = vlaneseq
  %v2884 = vshrl.u32 %v2883, 7
  %v2885 = vsub.s32 0, %v2884
  %v2886 = vrot.slane %v2080, %v2885
  %v2887 = vlaneseq
  %v2888 = vshrl.u32 %v2887, 7
  %v2889 = vsub.s32 0, %v2888
  %v2890 = vrot.slane %v2082, %v2889
  %v2891 = vlaneseq
  %v2892 = vshrl.u32 %v2891, 7
  %v2893 = vsub.s32 0, %v2892
  %v2894 = vrot.slane %v2084, %v2893
  %v2895 = vlaneseq
  %v2896 = vshrl.u32 %v2895, 7
  %v2897 = vsub.s32 0, %v2896
  %v2898 = vrot.slane %v2086, %v2897
  %v2899 = vlaneseq
  %v2900 = vshrl.u32 %v2899, 7
  %v2901 = vsub.s32 0, %v2900
  %v2902 = vrot.slane %v2088, %v2901
  %v2903 = vlaneseq
  %v2904 = vshrl.u32 %v2903, 7
  %v2905 = vsub.s32 0, %v2904
  %v2906 = vrot.slane %v2090, %v2905
  %v2907 = vlaneseq
  %v2908 = vshrl.u32 %v2907, 7
  %v2909 = vsub.s32 0, %v2908
  %v2910 = vrot.slane %v2092, %v2909
  %v2911 = vlaneseq
  %v2912 = vshrl.u32 %v2911, 7
  %v2913 = vsub.s32 0, %v2912
  %v2914 = vrot.slane %v2094, %v2913
  %v2915 = vlaneseq
  %v2916 = vshrl.u32 %v2915, 7
  %v2917 = vsub.s32 0, %v2916
  %v2918 = vrot.slane %v2096, %v2917
  %v2919 = vlaneseq
  %v2920 = vshrl.u32 %v2919, 7
  %v2921 = vsub.s32 0, %v2920
  %v2922 = vrot.slane %v2098, %v2921
  %v2923 = vlaneseq
  %v2924 = vshrl.u32 %v2923, 7
  %v2925 = vsub.s32 0, %v2924
  %v2926 = vrot.slane %v2100, %v2925
  %v2927 = vlaneseq
  %v2928 = vshrl.u32 %v2927, 7
  %v2929 = vsub.s32 0, %v2928
  %v2930 = vrot.slane %v2102, %v2929
  %v2931 = vlaneseq
  %v2932 = vshrl.u32 %v2931, 7
  %v2933 = vsub.s32 0, %v2932
  %v2934 = vrot.slane %v2104, %v2933
  %v2935 = vlaneseq
  %v2936 = vshrl.u32 %v2935, 7
  %v2937 = vsub.s32 0, %v2936
  %v2938 = vrot.slane %v2106, %v2937
  %v2939 = vmul.f32 %v2878, %v106
  %v2940 = vmul.f32 %v2882, %v106
  %v2941 = vmul.f32 %v2886, %v106
  %v2942 = vmul.f32 %v2890, %v106
  %v2943 = vmul.f32 %v2894, %v106
  %v2944 = vmul.f32 %v2898, %v106
  %v2945 = vmul.f32 %v2902, %v106
  %v2946 = vmul.f32 %v2906, %v106
  %v2947 = vmul.f32 %v2910, %v106
  %v2948 = vmul.f32 %v2914, %v106
  %v2949 = vmul.f32 %v2918, %v106
  %v2950 = vmul.f32 %v2922, %v106
  %v2951 = vmul.f32 %v2926, %v106
  %v2952 = vmul.f32 %v2930, %v106
  %v2953 = vmul.f32 %v2934, %v106
  %v2954 = vmul.f32 %v2938, %v106
  %v2955 = vadd.f32 %v2859, %v2939
  %v2956 = vadd.f32 %v2860, %v2940
  %v2957 = vadd.f32 %v2861, %v2941
  %v2958 = vadd.f32 %v2862, %v2942
  %v2959 = vadd.f32 %v2863, %v2943
  %v2960 = vadd.f32 %v2864, %v2944
  %v2961 = vadd.f32 %v2865, %v2945
  %v2962 = vadd.f32 %v2866, %v2946
  %v2963 = vadd.f32 %v2867, %v2947
  %v2964 = vadd.f32 %v2868, %v2948
  %v2965 = vadd.f32 %v2869, %v2949
  %v2966 = vadd.f32 %v2870, %v2950
  %v2967 = vadd.f32 %v2871, %v2951
  %v2968 = vadd.f32 %v2872, %v2952
  %v2969 = vadd.f32 %v2873, %v2953
  %v2970 = vadd.f32 %v2874, %v2954
  %v2971 = vlaneseq
  %v2972 = vshrl.u32 %v2971, 7
  %v2973 = vsub.s32 1, %v2972
  %v2974 = vrot.slane %v2076, %v2973
  %v2975 = vlaneseq
  %v2976 = vshrl.u32 %v2975, 7
  %v2977 = vsub.s32 1, %v2976
  %v2978 = vrot.slane %v2078, %v2977
  %v2979 = vlaneseq
  %v2980 = vshrl.u32 %v2979, 7
  %v2981 = vsub.s32 1, %v2980
  %v2982 = vrot.slane %v2080, %v2981
  %v2983 = vlaneseq
  %v2984 = vshrl.u32 %v2983, 7
  %v2985 = vsub.s32 1, %v2984
  %v2986 = vrot.slane %v2082, %v2985
  %v2987 = vlaneseq
  %v2988 = vshrl.u32 %v2987, 7
  %v2989 = vsub.s32 1, %v2988
  %v2990 = vrot.slane %v2084, %v2989
  %v2991 = vlaneseq
  %v2992 = vshrl.u32 %v2991, 7
  %v2993 = vsub.s32 1, %v2992
  %v2994 = vrot.slane %v2086, %v2993
  %v2995 = vlaneseq
  %v2996 = vshrl.u32 %v2995, 7
  %v2997 = vsub.s32 1, %v2996
  %v2998 = vrot.slane %v2088, %v2997
  %v2999 = vlaneseq
  %v3000 = vshrl.u32 %v2999, 7
  %v3001 = vsub.s32 1, %v3000
  %v3002 = vrot.slane %v2090, %v3001
  %v3003 = vlaneseq
  %v3004 = vshrl.u32 %v3003, 7
  %v3005 = vsub.s32 1, %v3004
  %v3006 = vrot.slane %v2092, %v3005
  %v3007 = vlaneseq
  %v3008 = vshrl.u32 %v3007, 7
  %v3009 = vsub.s32 1, %v3008
  %v3010 = vrot.slane %v2094, %v3009
  %v3011 = vlaneseq
  %v3012 = vshrl.u32 %v3011, 7
  %v3013 = vsub.s32 1, %v3012
  %v3014 = vrot.slane %v2096, %v3013
  %v3015 = vlaneseq
  %v3016 = vshrl.u32 %v3015, 7
  %v3017 = vsub.s32 1, %v3016
  %v3018 = vrot.slane %v2098, %v3017
  %v3019 = vlaneseq
  %v3020 = vshrl.u32 %v3019, 7
  %v3021 = vsub.s32 1, %v3020
  %v3022 = vrot.slane %v2100, %v3021
  %v3023 = vlaneseq
  %v3024 = vshrl.u32 %v3023, 7
  %v3025 = vsub.s32 1, %v3024
  %v3026 = vrot.slane %v2102, %v3025
  %v3027 = vlaneseq
  %v3028 = vshrl.u32 %v3027, 7
  %v3029 = vsub.s32 1, %v3028
  %v3030 = vrot.slane %v2104, %v3029
  %v3031 = vlaneseq
  %v3032 = vshrl.u32 %v3031, 7
  %v3033 = vsub.s32 1, %v3032
  %v3034 = vrot.slane %v2106, %v3033
  %v3035 = vmul.f32 %v2974, %v107
  %v3036 = vmul.f32 %v2978, %v107
  %v3037 = vmul.f32 %v2982, %v107
  %v3038 = vmul.f32 %v2986, %v107
  %v3039 = vmul.f32 %v2990, %v107
  %v3040 = vmul.f32 %v2994, %v107
  %v3041 = vmul.f32 %v2998, %v107
  %v3042 = vmul.f32 %v3002, %v107
  %v3043 = vmul.f32 %v3006, %v107
  %v3044 = vmul.f32 %v3010, %v107
  %v3045 = vmul.f32 %v3014, %v107
  %v3046 = vmul.f32 %v3018, %v107
  %v3047 = vmul.f32 %v3022, %v107
  %v3048 = vmul.f32 %v3026, %v107
  %v3049 = vmul.f32 %v3030, %v107
  %v3050 = vmul.f32 %v3034, %v107
  %v3051 = vadd.f32 %v2955, %v3035
  %v3052 = vadd.f32 %v2956, %v3036
  %v3053 = vadd.f32 %v2957, %v3037
  %v3054 = vadd.f32 %v2958, %v3038
  %v3055 = vadd.f32 %v2959, %v3039
  %v3056 = vadd.f32 %v2960, %v3040
  %v3057 = vadd.f32 %v2961, %v3041
  %v3058 = vadd.f32 %v2962, %v3042
  %v3059 = vadd.f32 %v2963, %v3043
  %v3060 = vadd.f32 %v2964, %v3044
  %v3061 = vadd.f32 %v2965, %v3045
  %v3062 = vadd.f32 %v2966, %v3046
  %v3063 = vadd.f32 %v2967, %v3047
  %v3064 = vadd.f32 %v2968, %v3048
  %v3065 = vadd.f32 %v2969, %v3049
  %v3066 = vadd.f32 %v2970, %v3050
  %v3067 = vlaneseq
  %v3068 = vshrl.u32 %v3067, 7
  %v3069 = vsub.s32 2, %v3068
  %v3070 = vrot.slane %v2076, %v3069
  %v3071 = vlaneseq
  %v3072 = vshrl.u32 %v3071, 7
  %v3073 = vsub.s32 2, %v3072
  %v3074 = vrot.slane %v2078, %v3073
  %v3075 = vlaneseq
  %v3076 = vshrl.u32 %v3075, 7
  %v3077 = vsub.s32 2, %v3076
  %v3078 = vrot.slane %v2080, %v3077
  %v3079 = vlaneseq
  %v3080 = vshrl.u32 %v3079, 7
  %v3081 = vsub.s32 2, %v3080
  %v3082 = vrot.slane %v2082, %v3081
  %v3083 = vlaneseq
  %v3084 = vshrl.u32 %v3083, 7
  %v3085 = vsub.s32 2, %v3084
  %v3086 = vrot.slane %v2084, %v3085
  %v3087 = vlaneseq
  %v3088 = vshrl.u32 %v3087, 7
  %v3089 = vsub.s32 2, %v3088
  %v3090 = vrot.slane %v2086, %v3089
  %v3091 = vlaneseq
  %v3092 = vshrl.u32 %v3091, 7
  %v3093 = vsub.s32 2, %v3092
  %v3094 = vrot.slane %v2088, %v3093
  %v3095 = vlaneseq
  %v3096 = vshrl.u32 %v3095, 7
  %v3097 = vsub.s32 2, %v3096
  %v3098 = vrot.slane %v2090, %v3097
  %v3099 = vlaneseq
  %v3100 = vshrl.u32 %v3099, 7
  %v3101 = vsub.s32 2, %v3100
  %v3102 = vrot.slane %v2092, %v3101
  %v3103 = vlaneseq
  %v3104 = vshrl.u32 %v3103, 7
  %v3105 = vsub.s32 2, %v3104
  %v3106 = vrot.slane %v2094, %v3105
  %v3107 = vlaneseq
  %v3108 = vshrl.u32 %v3107, 7
  %v3109 = vsub.s32 2, %v3108
  %v3110 = vrot.slane %v2096, %v3109
  %v3111 = vlaneseq
  %v3112 = vshrl.u32 %v3111, 7
  %v3113 = vsub.s32 2, %v3112
  %v3114 = vrot.slane %v2098, %v3113
  %v3115 = vlaneseq
  %v3116 = vshrl.u32 %v3115, 7
  %v3117 = vsub.s32 2, %v3116
  %v3118 = vrot.slane %v2100, %v3117
  %v3119 = vlaneseq
  %v3120 = vshrl.u32 %v3119, 7
  %v3121 = vsub.s32 2, %v3120
  %v3122 = vrot.slane %v2102, %v3121
  %v3123 = vlaneseq
  %v3124 = vshrl.u32 %v3123, 7
  %v3125 = vsub.s32 2, %v3124
  %v3126 = vrot.slane %v2104, %v3125
  %v3127 = vlaneseq
  %v3128 = vshrl.u32 %v3127, 7
  %v3129 = vsub.s32 2, %v3128
  %v3130 = vrot.slane %v2106, %v3129
  %v3131 = vmul.f32 %v3070, %v108
  %v3132 = vmul.f32 %v3074, %v108
  %v3133 = vmul.f32 %v3078, %v108
  %v3134 = vmul.f32 %v3082, %v108
  %v3135 = vmul.f32 %v3086, %v108
  %v3136 = vmul.f32 %v3090, %v108
  %v3137 = vmul.f32 %v3094, %v108
  %v3138 = vmul.f32 %v3098, %v108
  %v3139 = vmul.f32 %v3102, %v108
  %v3140 = vmul.f32 %v3106, %v108
  %v3141 = vmul.f32 %v3110, %v108
  %v3142 = vmul.f32 %v3114, %v108
  %v3143 = vmul.f32 %v3118, %v108
  %v3144 = vmul.f32 %v3122, %v108
  %v3145 = vmul.f32 %v3126, %v108
  %v3146 = vmul.f32 %v3130, %v108
  %v3147 = vadd.f32 %v3051, %v3131
  %v3148 = vadd.f32 %v3052, %v3132
  %v3149 = vadd.f32 %v3053, %v3133
  %v3150 = vadd.f32 %v3054, %v3134
  %v3151 = vadd.f32 %v3055, %v3135
  %v3152 = vadd.f32 %v3056, %v3136
  %v3153 = vadd.f32 %v3057, %v3137
  %v3154 = vadd.f32 %v3058, %v3138
  %v3155 = vadd.f32 %v3059, %v3139
  %v3156 = vadd.f32 %v3060, %v3140
  %v3157 = vadd.f32 %v3061, %v3141
  %v3158 = vadd.f32 %v3062, %v3142
  %v3159 = vadd.f32 %v3063, %v3143
  %v3160 = vadd.f32 %v3064, %v3144
  %v3161 = vadd.f32 %v3065, %v3145
  %v3162 = vadd.f32 %v3066, %v3146
  %v3163 = vlaneseq
  %v3164 = vshrl.u32 %v3163, 7
  %v3165 = vsub.s32 3, %v3164
  %v3166 = vrot.slane %v2076, %v3165
  %v3167 = vlaneseq
  %v3168 = vshrl.u32 %v3167, 7
  %v3169 = vsub.s32 3, %v3168
  %v3170 = vrot.slane %v2078, %v3169
  %v3171 = vlaneseq
  %v3172 = vshrl.u32 %v3171, 7
  %v3173 = vsub.s32 3, %v3172
  %v3174 = vrot.slane %v2080, %v3173
  %v3175 = vlaneseq
  %v3176 = vshrl.u32 %v3175, 7
  %v3177 = vsub.s32 3, %v3176
  %v3178 = vrot.slane %v2082, %v3177
  %v3179 = vlaneseq
  %v3180 = vshrl.u32 %v3179, 7
  %v3181 = vsub.s32 3, %v3180
  %v3182 = vrot.slane %v2084, %v3181
  %v3183 = vlaneseq
  %v3184 = vshrl.u32 %v3183, 7
  %v3185 = vsub.s32 3, %v3184
  %v3186 = vrot.slane %v2086, %v3185
  %v3187 = vlaneseq
  %v3188 = vshrl.u32 %v3187, 7
  %v3189 = vsub.s32 3, %v3188
  %v3190 = vrot.slane %v2088, %v3189
  %v3191 = vlaneseq
  %v3192 = vshrl.u32 %v3191, 7
  %v3193 = vsub.s32 3, %v3192
  %v3194 = vrot.slane %v2090, %v3193
  %v3195 = vlaneseq
  %v3196 = vshrl.u32 %v3195, 7
  %v3197 = vsub.s32 3, %v3196
  %v3198 = vrot.slane %v2092, %v3197
  %v3199 = vlaneseq
  %v3200 = vshrl.u32 %v3199, 7
  %v3201 = vsub.s32 3, %v3200
  %v3202 = vrot.slane %v2094, %v3201
  %v3203 = vlaneseq
  %v3204 = vshrl.u32 %v3203, 7
  %v3205 = vsub.s32 3, %v3204
  %v3206 = vrot.slane %v2096, %v3205
  %v3207 = vlaneseq
  %v3208 = vshrl.u32 %v3207, 7
  %v3209 = vsub.s32 3, %v3208
  %v3210 = vrot.slane %v2098, %v3209
  %v3211 = vlaneseq
  %v3212 = vshrl.u32 %v3211, 7
  %v3213 = vsub.s32 3, %v3212
  %v3214 = vrot.slane %v2100, %v3213
  %v3215 = vlaneseq
  %v3216 = vshrl.u32 %v3215, 7
  %v3217 = vsub.s32 3, %v3216
  %v3218 = vrot.slane %v2102, %v3217
  %v3219 = vlaneseq
  %v3220 = vshrl.u32 %v3219, 7
  %v3221 = vsub.s32 3, %v3220
  %v3222 = vrot.slane %v2104, %v3221
  %v3223 = vlaneseq
  %v3224 = vshrl.u32 %v3223, 7
  %v3225 = vsub.s32 3, %v3224
  %v3226 = vrot.slane %v2106, %v3225
  %v3227 = vmul.f32 %v3166, %v109
  %v3228 = vmul.f32 %v3170, %v109
  %v3229 = vmul.f32 %v3174, %v109
  %v3230 = vmul.f32 %v3178, %v109
  %v3231 = vmul.f32 %v3182, %v109
  %v3232 = vmul.f32 %v3186, %v109
  %v3233 = vmul.f32 %v3190, %v109
  %v3234 = vmul.f32 %v3194, %v109
  %v3235 = vmul.f32 %v3198, %v109
  %v3236 = vmul.f32 %v3202, %v109
  %v3237 = vmul.f32 %v3206, %v109
  %v3238 = vmul.f32 %v3210, %v109
  %v3239 = vmul.f32 %v3214, %v109
  %v3240 = vmul.f32 %v3218, %v109
  %v3241 = vmul.f32 %v3222, %v109
  %v3242 = vmul.f32 %v3226, %v109
  %v3243 = vadd.f32 %v3147, %v3227
  %v3244 = vadd.f32 %v3148, %v3228
  %v3245 = vadd.f32 %v3149, %v3229
  %v3246 = vadd.f32 %v3150, %v3230
  %v3247 = vadd.f32 %v3151, %v3231
  %v3248 = vadd.f32 %v3152, %v3232
  %v3249 = vadd.f32 %v3153, %v3233
  %v3250 = vadd.f32 %v3154, %v3234
  %v3251 = vadd.f32 %v3155, %v3235
  %v3252 = vadd.f32 %v3156, %v3236
  %v3253 = vadd.f32 %v3157, %v3237
  %v3254 = vadd.f32 %v3158, %v3238
  %v3255 = vadd.f32 %v3159, %v3239
  %v3256 = vadd.f32 %v3160, %v3240
  %v3257 = vadd.f32 %v3161, %v3241
  %v3258 = vadd.f32 %v3162, %v3242
  %v3259 = vlaneseq
  %v3260 = vshrl.u32 %v3259, 7
  %v3261 = vsub.s32 4, %v3260
  %v3262 = vrot.slane %v2076, %v3261
  %v3263 = vlaneseq
  %v3264 = vshrl.u32 %v3263, 7
  %v3265 = vsub.s32 4, %v3264
  %v3266 = vrot.slane %v2078, %v3265
  %v3267 = vlaneseq
  %v3268 = vshrl.u32 %v3267, 7
  %v3269 = vsub.s32 4, %v3268
  %v3270 = vrot.slane %v2080, %v3269
  %v3271 = vlaneseq
  %v3272 = vshrl.u32 %v3271, 7
  %v3273 = vsub.s32 4, %v3272
  %v3274 = vrot.slane %v2082, %v3273
  %v3275 = vlaneseq
  %v3276 = vshrl.u32 %v3275, 7
  %v3277 = vsub.s32 4, %v3276
  %v3278 = vrot.slane %v2084, %v3277
  %v3279 = vlaneseq
  %v3280 = vshrl.u32 %v3279, 7
  %v3281 = vsub.s32 4, %v3280
  %v3282 = vrot.slane %v2086, %v3281
  %v3283 = vlaneseq
  %v3284 = vshrl.u32 %v3283, 7
  %v3285 = vsub.s32 4, %v3284
  %v3286 = vrot.slane %v2088, %v3285
  %v3287 = vlaneseq
  %v3288 = vshrl.u32 %v3287, 7
  %v3289 = vsub.s32 4, %v3288
  %v3290 = vrot.slane %v2090, %v3289
  %v3291 = vlaneseq
  %v3292 = vshrl.u32 %v3291, 7
  %v3293 = vsub.s32 4, %v3292
  %v3294 = vrot.slane %v2092, %v3293
  %v3295 = vlaneseq
  %v3296 = vshrl.u32 %v3295, 7
  %v3297 = vsub.s32 4, %v3296
  %v3298 = vrot.slane %v2094, %v3297
  %v3299 = vlaneseq
  %v3300 = vshrl.u32 %v3299, 7
  %v3301 = vsub.s32 4, %v3300
  %v3302 = vrot.slane %v2096, %v3301
  %v3303 = vlaneseq
  %v3304 = vshrl.u32 %v3303, 7
  %v3305 = vsub.s32 4, %v3304
  %v3306 = vrot.slane %v2098, %v3305
  %v3307 = vlaneseq
  %v3308 = vshrl.u32 %v3307, 7
  %v3309 = vsub.s32 4, %v3308
  %v3310 = vrot.slane %v2100, %v3309
  %v3311 = vlaneseq
  %v3312 = vshrl.u32 %v3311, 7
  %v3313 = vsub.s32 4, %v3312
  %v3314 = vrot.slane %v2102, %v3313
  %v3315 = vlaneseq
  %v3316 = vshrl.u32 %v3315, 7
  %v3317 = vsub.s32 4, %v3316
  %v3318 = vrot.slane %v2104, %v3317
  %v3319 = vlaneseq
  %v3320 = vshrl.u32 %v3319, 7
  %v3321 = vsub.s32 4, %v3320
  %v3322 = vrot.slane %v2106, %v3321
  %v3323 = vmul.f32 %v3262, %v110
  %v3324 = vmul.f32 %v3266, %v110
  %v3325 = vmul.f32 %v3270, %v110
  %v3326 = vmul.f32 %v3274, %v110
  %v3327 = vmul.f32 %v3278, %v110
  %v3328 = vmul.f32 %v3282, %v110
  %v3329 = vmul.f32 %v3286, %v110
  %v3330 = vmul.f32 %v3290, %v110
  %v3331 = vmul.f32 %v3294, %v110
  %v3332 = vmul.f32 %v3298, %v110
  %v3333 = vmul.f32 %v3302, %v110
  %v3334 = vmul.f32 %v3306, %v110
  %v3335 = vmul.f32 %v3310, %v110
  %v3336 = vmul.f32 %v3314, %v110
  %v3337 = vmul.f32 %v3318, %v110
  %v3338 = vmul.f32 %v3322, %v110
  %v3339 = vadd.f32 %v3243, %v3323
  %v3340 = vadd.f32 %v3244, %v3324
  %v3341 = vadd.f32 %v3245, %v3325
  %v3342 = vadd.f32 %v3246, %v3326
  %v3343 = vadd.f32 %v3247, %v3327
  %v3344 = vadd.f32 %v3248, %v3328
  %v3345 = vadd.f32 %v3249, %v3329
  %v3346 = vadd.f32 %v3250, %v3330
  %v3347 = vadd.f32 %v3251, %v3331
  %v3348 = vadd.f32 %v3252, %v3332
  %v3349 = vadd.f32 %v3253, %v3333
  %v3350 = vadd.f32 %v3254, %v3334
  %v3351 = vadd.f32 %v3255, %v3335
  %v3352 = vadd.f32 %v3256, %v3336
  %v3353 = vadd.f32 %v3257, %v3337
  %v3354 = vadd.f32 %v3258, %v3338
  %v3355 = vlaneseq
  %v3356 = vshrl.u32 %v3355, 7
  %v3357 = vsub.s32 5, %v3356
  %v3358 = vrot.slane %v2076, %v3357
  %v3359 = vlaneseq
  %v3360 = vshrl.u32 %v3359, 7
  %v3361 = vsub.s32 5, %v3360
  %v3362 = vrot.slane %v2078, %v3361
  %v3363 = vlaneseq
  %v3364 = vshrl.u32 %v3363, 7
  %v3365 = vsub.s32 5, %v3364
  %v3366 = vrot.slane %v2080, %v3365
  %v3367 = vlaneseq
  %v3368 = vshrl.u32 %v3367, 7
  %v3369 = vsub.s32 5, %v3368
  %v3370 = vrot.slane %v2082, %v3369
  %v3371 = vlaneseq
  %v3372 = vshrl.u32 %v3371, 7
  %v3373 = vsub.s32 5, %v3372
  %v3374 = vrot.slane %v2084, %v3373
  %v3375 = vlaneseq
  %v3376 = vshrl.u32 %v3375, 7
  %v3377 = vsub.s32 5, %v3376
  %v3378 = vrot.slane %v2086, %v3377
  %v3379 = vlaneseq
  %v3380 = vshrl.u32 %v3379, 7
  %v3381 = vsub.s32 5, %v3380
  %v3382 = vrot.slane %v2088, %v3381
  %v3383 = vlaneseq
  %v3384 = vshrl.u32 %v3383, 7
  %v3385 = vsub.s32 5, %v3384
  %v3386 = vrot.slane %v2090, %v3385
  %v3387 = vlaneseq
  %v3388 = vshrl.u32 %v3387, 7
  %v3389 = vsub.s32 5, %v3388
  %v3390 = vrot.slane %v2092, %v3389
  %v3391 = vlaneseq
  %v3392 = vshrl.u32 %v3391, 7
  %v3393 = vsub.s32 5, %v3392
  %v3394 = vrot.slane %v2094, %v3393
  %v3395 = vlaneseq
  %v3396 = vshrl.u32 %v3395, 7
  %v3397 = vsub.s32 5, %v3396
  %v3398 = vrot.slane %v2096, %v3397
  %v3399 = vlaneseq
  %v3400 = vshrl.u32 %v3399, 7
  %v3401 = vsub.s32 5, %v3400
  %v3402 = vrot.slane %v2098, %v3401
  %v3403 = vlaneseq
  %v3404 = vshrl.u32 %v3403, 7
  %v3405 = vsub.s32 5, %v3404
  %v3406 = vrot.slane %v2100, %v3405
  %v3407 = vlaneseq
  %v3408 = vshrl.u32 %v3407, 7
  %v3409 = vsub.s32 5, %v3408
  %v3410 = vrot.slane %v2102, %v3409
  %v3411 = vlaneseq
  %v3412 = vshrl.u32 %v3411, 7
  %v3413 = vsub.s32 5, %v3412
  %v3414 = vrot.slane %v2104, %v3413
  %v3415 = vlaneseq
  %v3416 = vshrl.u32 %v3415, 7
  %v3417 = vsub.s32 5, %v3416
  %v3418 = vrot.slane %v2106, %v3417
  %v3419 = vmul.f32 %v3358, %v111
  %v3420 = vmul.f32 %v3362, %v111
  %v3421 = vmul.f32 %v3366, %v111
  %v3422 = vmul.f32 %v3370, %v111
  %v3423 = vmul.f32 %v3374, %v111
  %v3424 = vmul.f32 %v3378, %v111
  %v3425 = vmul.f32 %v3382, %v111
  %v3426 = vmul.f32 %v3386, %v111
  %v3427 = vmul.f32 %v3390, %v111
  %v3428 = vmul.f32 %v3394, %v111
  %v3429 = vmul.f32 %v3398, %v111
  %v3430 = vmul.f32 %v3402, %v111
  %v3431 = vmul.f32 %v3406, %v111
  %v3432 = vmul.f32 %v3410, %v111
  %v3433 = vmul.f32 %v3414, %v111
  %v3434 = vmul.f32 %v3418, %v111
  %v3435 = vadd.f32 %v3339, %v3419
  %v3436 = vadd.f32 %v3340, %v3420
  %v3437 = vadd.f32 %v3341, %v3421
  %v3438 = vadd.f32 %v3342, %v3422
  %v3439 = vadd.f32 %v3343, %v3423
  %v3440 = vadd.f32 %v3344, %v3424
  %v3441 = vadd.f32 %v3345, %v3425
  %v3442 = vadd.f32 %v3346, %v3426
  %v3443 = vadd.f32 %v3347, %v3427
  %v3444 = vadd.f32 %v3348, %v3428
  %v3445 = vadd.f32 %v3349, %v3429
  %v3446 = vadd.f32 %v3350, %v3430
  %v3447 = vadd.f32 %v3351, %v3431
  %v3448 = vadd.f32 %v3352, %v3432
  %v3449 = vadd.f32 %v3353, %v3433
  %v3450 = vadd.f32 %v3354, %v3434
  %v3451 = vlaneseq
  %v3452 = vshrl.u32 %v3451, 7
  %v3453 = vsub.s32 6, %v3452
  %v3454 = vrot.slane %v2076, %v3453
  %v3455 = vlaneseq
  %v3456 = vshrl.u32 %v3455, 7
  %v3457 = vsub.s32 6, %v3456
  %v3458 = vrot.slane %v2078, %v3457
  %v3459 = vlaneseq
  %v3460 = vshrl.u32 %v3459, 7
  %v3461 = vsub.s32 6, %v3460
  %v3462 = vrot.slane %v2080, %v3461
  %v3463 = vlaneseq
  %v3464 = vshrl.u32 %v3463, 7
  %v3465 = vsub.s32 6, %v3464
  %v3466 = vrot.slane %v2082, %v3465
  %v3467 = vlaneseq
  %v3468 = vshrl.u32 %v3467, 7
  %v3469 = vsub.s32 6, %v3468
  %v3470 = vrot.slane %v2084, %v3469
  %v3471 = vlaneseq
  %v3472 = vshrl.u32 %v3471, 7
  %v3473 = vsub.s32 6, %v3472
  %v3474 = vrot.slane %v2086, %v3473
  %v3475 = vlaneseq
  %v3476 = vshrl.u32 %v3475, 7
  %v3477 = vsub.s32 6, %v3476
  %v3478 = vrot.slane %v2088, %v3477
  %v3479 = vlaneseq
  %v3480 = vshrl.u32 %v3479, 7
  %v3481 = vsub.s32 6, %v3480
  %v3482 = vrot.slane %v2090, %v3481
  %v3483 = vlaneseq
  %v3484 = vshrl.u32 %v3483, 7
  %v3485 = vsub.s32 6, %v3484
  %v3486 = vrot.slane %v2092, %v3485
  %v3487 = vlaneseq
  %v3488 = vshrl.u32 %v3487, 7
  %v3489 = vsub.s32 6, %v3488
  %v3490 = vrot.slane %v2094, %v3489
  %v3491 = vlaneseq
  %v3492 = vshrl.u32 %v3491, 7
  %v3493 = vsub.s32 6, %v3492
  %v3494 = vrot.slane %v2096, %v3493
  %v3495 = vlaneseq
  %v3496 = vshrl.u32 %v3495, 7
  %v3497 = vsub.s32 6, %v3496
  %v3498 = vrot.slane %v2098, %v3497
  %v3499 = vlaneseq
  %v3500 = vshrl.u32 %v3499, 7
  %v3501 = vsub.s32 6, %v3500
  %v3502 = vrot.slane %v2100, %v3501
  %v3503 = vlaneseq
  %v3504 = vshrl.u32 %v3503, 7
  %v3505 = vsub.s32 6, %v3504
  %v3506 = vrot.slane %v2102, %v3505
  %v3507 = vlaneseq
  %v3508 = vshrl.u32 %v3507, 7
  %v3509 = vsub.s32 6, %v3508
  %v3510 = vrot.slane %v2104, %v3509
  %v3511 = vlaneseq
  %v3512 = vshrl.u32 %v3511, 7
  %v3513 = vsub.s32 6, %v3512
  %v3514 = vrot.slane %v2106, %v3513
  %v3515 = vmul.f32 %v3454, %v112
  %v3516 = vmul.f32 %v3458, %v112
  %v3517 = vmul.f32 %v3462, %v112
  %v3518 = vmul.f32 %v3466, %v112
  %v3519 = vmul.f32 %v3470, %v112
  %v3520 = vmul.f32 %v3474, %v112
  %v3521 = vmul.f32 %v3478, %v112
  %v3522 = vmul.f32 %v3482, %v112
  %v3523 = vmul.f32 %v3486, %v112
  %v3524 = vmul.f32 %v3490, %v112
  %v3525 = vmul.f32 %v3494, %v112
  %v3526 = vmul.f32 %v3498, %v112
  %v3527 = vmul.f32 %v3502, %v112
  %v3528 = vmul.f32 %v3506, %v112
  %v3529 = vmul.f32 %v3510, %v112
  %v3530 = vmul.f32 %v3514, %v112
  %v3531 = vadd.f32 %v3435, %v3515
  %v3532 = vadd.f32 %v3436, %v3516
  %v3533 = vadd.f32 %v3437, %v3517
  %v3534 = vadd.f32 %v3438, %v3518
  %v3535 = vadd.f32 %v3439, %v3519
  %v3536 = vadd.f32 %v3440, %v3520
  %v3537 = vadd.f32 %v3441, %v3521
  %v3538 = vadd.f32 %v3442, %v3522
  %v3539 = vadd.f32 %v3443, %v3523
  %v3540 = vadd.f32 %v3444, %v3524
  %v3541 = vadd.f32 %v3445, %v3525
  %v3542 = vadd.f32 %v3446, %v3526
  %v3543 = vadd.f32 %v3447, %v3527
  %v3544 = vadd.f32 %v3448, %v3528
  %v3545 = vadd.f32 %v3449, %v3529
  %v3546 = vadd.f32 %v3450, %v3530
  %v3547 = vlaneseq
  %v3548 = vshrl.u32 %v3547, 7
  %v3549 = vsub.s32 7, %v3548
  %v3550 = vrot.slane %v2076, %v3549
  %v3551 = vlaneseq
  %v3552 = vshrl.u32 %v3551, 7
  %v3553 = vsub.s32 7, %v3552
  %v3554 = vrot.slane %v2078, %v3553
  %v3555 = vlaneseq
  %v3556 = vshrl.u32 %v3555, 7
  %v3557 = vsub.s32 7, %v3556
  %v3558 = vrot.slane %v2080, %v3557
  %v3559 = vlaneseq
  %v3560 = vshrl.u32 %v3559, 7
  %v3561 = vsub.s32 7, %v3560
  %v3562 = vrot.slane %v2082, %v3561
  %v3563 = vlaneseq
  %v3564 = vshrl.u32 %v3563, 7
  %v3565 = vsub.s32 7, %v3564
  %v3566 = vrot.slane %v2084, %v3565
  %v3567 = vlaneseq
  %v3568 = vshrl.u32 %v3567, 7
  %v3569 = vsub.s32 7, %v3568
  %v3570 = vrot.slane %v2086, %v3569
  %v3571 = vlaneseq
  %v3572 = vshrl.u32 %v3571, 7
  %v3573 = vsub.s32 7, %v3572
  %v3574 = vrot.slane %v2088, %v3573
  %v3575 = vlaneseq
  %v3576 = vshrl.u32 %v3575, 7
  %v3577 = vsub.s32 7, %v3576
  %v3578 = vrot.slane %v2090, %v3577
  %v3579 = vlaneseq
  %v3580 = vshrl.u32 %v3579, 7
  %v3581 = vsub.s32 7, %v3580
  %v3582 = vrot.slane %v2092, %v3581
  %v3583 = vlaneseq
  %v3584 = vshrl.u32 %v3583, 7
  %v3585 = vsub.s32 7, %v3584
  %v3586 = vrot.slane %v2094, %v3585
  %v3587 = vlaneseq
  %v3588 = vshrl.u32 %v3587, 7
  %v3589 = vsub.s32 7, %v3588
  %v3590 = vrot.slane %v2096, %v3589
  %v3591 = vlaneseq
  %v3592 = vshrl.u32 %v3591, 7
  %v3593 = vsub.s32 7, %v3592
  %v3594 = vrot.slane %v2098, %v3593
  %v3595 = vlaneseq
  %v3596 = vshrl.u32 %v3595, 7
  %v3597 = vsub.s32 7, %v3596
  %v3598 = vrot.slane %v2100, %v3597
  %v3599 = vlaneseq
  %v3600 = vshrl.u32 %v3599, 7
  %v3601 = vsub.s32 7, %v3600
  %v3602 = vrot.slane %v2102, %v3601
  %v3603 = vlaneseq
  %v3604 = vshrl.u32 %v3603, 7
  %v3605 = vsub.s32 7, %v3604
  %v3606 = vrot.slane %v2104, %v3605
  %v3607 = vlaneseq
  %v3608 = vshrl.u32 %v3607, 7
  %v3609 = vsub.s32 7, %v3608
  %v3610 = vrot.slane %v2106, %v3609
  %v3611 = vmul.f32 %v3550, %v113
  %v3612 = vmul.f32 %v3554, %v113
  %v3613 = vmul.f32 %v3558, %v113
  %v3614 = vmul.f32 %v3562, %v113
  %v3615 = vmul.f32 %v3566, %v113
  %v3616 = vmul.f32 %v3570, %v113
  %v3617 = vmul.f32 %v3574, %v113
  %v3618 = vmul.f32 %v3578, %v113
  %v3619 = vmul.f32 %v3582, %v113
  %v3620 = vmul.f32 %v3586, %v113
  %v3621 = vmul.f32 %v3590, %v113
  %v3622 = vmul.f32 %v3594, %v113
  %v3623 = vmul.f32 %v3598, %v113
  %v3624 = vmul.f32 %v3602, %v113
  %v3625 = vmul.f32 %v3606, %v113
  %v3626 = vmul.f32 %v3610, %v113
  %v3627 = vadd.f32 %v3531, %v3611
  %v3628 = vadd.f32 %v3532, %v3612
  %v3629 = vadd.f32 %v3533, %v3613
  %v3630 = vadd.f32 %v3534, %v3614
  %v3631 = vadd.f32 %v3535, %v3615
  %v3632 = vadd.f32 %v3536, %v3616
  %v3633 = vadd.f32 %v3537, %v3617
  %v3634 = vadd.f32 %v3538, %v3618
  %v3635 = vadd.f32 %v3539, %v3619
  %v3636 = vadd.f32 %v3540, %v3620
  %v3637 = vadd.f32 %v3541, %v3621
  %v3638 = vadd.f32 %v3542, %v3622
  %v3639 = vadd.f32 %v3543, %v3623
  %v3640 = vadd.f32 %v3544, %v3624
  %v3641 = vadd.f32 %v3545, %v3625
  %v3642 = vadd.f32 %v3546, %v3626
  %v3643 = vpack.c.bf16 %v3627, %v3627
  %v3644 = vpack.c.bf16 %v3628, %v3628
  %v3645 = vpack.c.bf16 %v3629, %v3629
  %v3646 = vpack.c.bf16 %v3630, %v3630
  %v3647 = vpack.c.bf16 %v3631, %v3631
  %v3648 = vpack.c.bf16 %v3632, %v3632
  %v3649 = vpack.c.bf16 %v3633, %v3633
  %v3650 = vpack.c.bf16 %v3634, %v3634
  %v3651 = vpack.c.bf16 %v3635, %v3635
  %v3652 = vpack.c.bf16 %v3636, %v3636
  %v3653 = vpack.c.bf16 %v3637, %v3637
  %v3654 = vpack.c.bf16 %v3638, %v3638
  %v3655 = vpack.c.bf16 %v3639, %v3639
  %v3656 = vpack.c.bf16 %v3640, %v3640
  %v3657 = vpack.c.bf16 %v3641, %v3641
  %v3658 = vpack.c.bf16 %v3642, %v3642
  %3659 = vst [vmem:[%s4] sm:$0xf] %v3643
  %3660 = vst [vmem:[%s4 + $0x4] sm:$0xf] %v3644
  %3661 = vst [vmem:[%s4 + $0x8] sm:$0xf] %v3645
  %3662 = vst [vmem:[%s4 + $0xc] sm:$0xf] %v3646
  %3663 = vst [vmem:[%s4 + $0x10] sm:$0xf] %v3647
  %3664 = vst [vmem:[%s4 + $0x14] sm:$0xf] %v3648
  %3665 = vst [vmem:[%s4 + $0x18] sm:$0xf] %v3649
  %3666 = vst [vmem:[%s4 + $0x1c] sm:$0xf] %v3650
  %3667 = vst [vmem:[%s4 + $0x20] sm:$0xf] %v3651
  %3668 = vst [vmem:[%s4 + $0x24] sm:$0xf] %v3652
  %3669 = vst [vmem:[%s4 + $0x28] sm:$0xf] %v3653
  %3670 = vst [vmem:[%s4 + $0x2c] sm:$0xf] %v3654
  %3671 = vst [vmem:[%s4 + $0x30] sm:$0xf] %v3655
  %3672 = vst [vmem:[%s4 + $0x34] sm:$0xf] %v3656
  %3673 = vst [vmem:[%s4 + $0x38] sm:$0xf] %v3657
  %3674 = vst [vmem:[%s4 + $0x3c] sm:$0xf] %v3658
  // Predicated region
  $region18: #{_lambda_.7} parent=0 // pred_check
    _
  $region19: #{_lambda_.7} parent=0 // pred_check_branch
    %3676 = sbr.rel (0) target = $region21
  $region20: #{_lambda_.7} parent=0 // pred_region
    _
  $region21: #{_lambda_.7} parent=0 // pred_fallthru
    _
  // Predicated region
  $region22: #{_lambda_.7} parent=0 // pred_check
    _
  $region23: #{_lambda_.7} parent=0 // pred_check_branch
    %3678 = sbr.rel (0) target = $region25
  $region24: #{_lambda_.7} parent=0 // pred_region
    _
  $region25: #{_lambda_.7} parent=0 // pred_fallthru
    _

// kernel: _lambda_.9
$region0: #{_lambda_.9}
  #allocation0 [shape = 'u32[]', space=smem, size = 0x4, offset = 0x4, fixed_abs, tag = 'smem constant byte address 0x4 - core index']
  #allocation1 [shape = 'u32[144,128]{1,0:T(1,128)}', space=vmem, size = 0x12000, scoped, tag = 'internal scratch']
  %s0 = inlined_call_operand.vmem [shape: bf16[512,32], index: 0, kind: input, shape index: {}]
  %s1 = inlined_call_operand.vmem [shape: bf16[32,32], index: 1, kind: input, shape index: {}]
  %s2 = inlined_call_operand.vmem [shape: f32[1,32], index: 2, kind: input, shape index: {}]
  %s3 = inlined_call_operand.hbm [shape: f32[512,32], index: 3, kind: output, shape index: {}]
  %s4 = sld [smem:[#allocation0]]
  $region45: #{_lambda_.9} parent=0
    _
  %s6 = ssub.s32 1, %s4
  %s7 = scalar_select 0, %s6, %s4
  $region1: #{_lambda_.9} parent=0
    #allocation2 [shape = 'u8[262144]{0}', space=vmem, size = 0x40000, scoped, tag = 'output window, operand 0']
    #allocation3 [shape = 's32[2]{0}', space=sflag, size = 0x8, scoped, tag = 'scoped memory for _lambda_.9']
    %8 = vsyncpa [#allocation3], 0
    %s9 = scalar_lea.sflag [#allocation3], 1
    %10 = vsyncpa %s9, 0
    loop: start=0, step=1, limit=4
    $region2: #{_lambda_.9} parent=1 // loop_pre_header
      _
    $region3: #{_lambda_.9} parent=1 // loop_header
      %s12 = sphi 0, %s16
      %p13 = scmp.ge.s32.totalorder %s12, 4
      %s22 = sphi 0, %s24
      %s25 = sphi 0, %s22
      %s26 = sphi 0, %s25
      %s42 = sphi 0, %s26
      %s46 = sphi 0, %s46
      %s48 = sphi 0, %s46
      %s49 = sphi 0, %s48
      %s63 = sphi 0, %s49
      %s67 = sphi 0, %s67
      %s69 = sphi 0, %s67
      %s70 = sphi 0, %s69
      %s84 = sphi 0, %s70
      %s90 = sphi 0, %s92
      %s93 = sphi 0, %s90
      %s94 = sphi 0, %s93
      %s110 = sphi 0, %s94
    $region4: #{_lambda_.9} parent=1 // loop_header_branch
      %15 = sbr.rel (%p13) target = $region8
    $region5: #{_lambda_.9} parent=1 // loop_body
      %s17 = ssub.s32 %s12, 1
      %s18 = ssub.s32 %s12, 2
      %s19 = sadd.s32 %s12, 1
      %s20 = ssub.s32 %s12, %s19
      %p21 = scmp.eq.s32.totalorder %s20, 0
      %s23 = sadd.s32 %s22, 1
      %s24 = scalar_select %p21, %s22, %s23
      %p27 = pneg %p21
      %p28 = scmp.eq.s32.totalorder %s12, 1
      %p29 = por %p27, %p28
      %p30 = scmp.ne.s32.totalorder %s22, %s25
      %p31 = scmp.eq.s32.totalorder %s12, 0
      %p32 = por %p30, %p31
      %p33 = scmp.ne.s32.totalorder %s22, %s25
      %p34 = scmp.eq.s32.totalorder %s17, 1
      %p35 = por %p33, %p34
      %p36 = scmp.ne.s32.totalorder %s25, %s26
      %p37 = scmp.eq.s32.totalorder %s17, 0
      %p38 = por %p36, %p37
      %p39 = scmp.ne.s32.totalorder %s25, %s26
      %p40 = scmp.eq.s32.totalorder %s18, 1
      %p41 = por %p39, %p40
      %p43 = scmp.ne.s32.totalorder %s26, %s42
      %p44 = scmp.eq.s32.totalorder %s18, 0
      %p45 = por %p43, %p44
      %s47 = sadd.s32 %s46, 1
      %p50 = scmp.eq.s32.totalorder %s12, 1
      %p51 = scmp.ne.s32.totalorder %s46, %s48
      %p52 = scmp.eq.s32.totalorder %s12, 0
      %p53 = por %p51, %p52
      %p54 = scmp.ne.s32.totalorder %s46, %s48
      %p55 = scmp.eq.s32.totalorder %s17, 1
      %p56 = por %p54, %p55
      %p57 = scmp.ne.s32.totalorder %s48, %s49
      %p58 = scmp.eq.s32.totalorder %s17, 0
      %p59 = por %p57, %p58
      %p60 = scmp.ne.s32.totalorder %s48, %s49
      %p61 = scmp.eq.s32.totalorder %s18, 1
      %p62 = por %p60, %p61
      %p64 = scmp.ne.s32.totalorder %s49, %s63
      %p65 = scmp.eq.s32.totalorder %s18, 0
      %p66 = por %p64, %p65
      %s68 = sadd.s32 %s67, 1
      %p71 = scmp.eq.s32.totalorder %s12, 1
      %p72 = scmp.ne.s32.totalorder %s67, %s69
      %p73 = scmp.eq.s32.totalorder %s12, 0
      %p74 = por %p72, %p73
      %p75 = scmp.ne.s32.totalorder %s67, %s69
      %p76 = scmp.eq.s32.totalorder %s17, 1
      %p77 = por %p75, %p76
      %p78 = scmp.ne.s32.totalorder %s69, %s70
      %p79 = scmp.eq.s32.totalorder %s17, 0
      %p80 = por %p78, %p79
      %p81 = scmp.ne.s32.totalorder %s69, %s70
      %p82 = scmp.eq.s32.totalorder %s18, 1
      %p83 = por %p81, %p82
      %p85 = scmp.ne.s32.totalorder %s70, %s84
      %p86 = scmp.eq.s32.totalorder %s18, 0
      %p87 = por %p85, %p86
      %s88 = ssub.s32 %s12, %s19
      %p89 = scmp.eq.s32.totalorder %s88, 0
      %s91 = sadd.s32 %s90, 1
      %s92 = scalar_select %p89, %s90, %s91
      %p95 = pneg %p89
      %p96 = scmp.eq.s32.totalorder %s12, 1
      %p97 = por %p95, %p96
      %p98 = scmp.ne.s32.totalorder %s90, %s93
      %p99 = scmp.eq.s32.totalorder %s12, 0
      %p100 = por %p98, %p99
      %p101 = scmp.ne.s32.totalorder %s90, %s93
      %p102 = scmp.eq.s32.totalorder %s17, 1
      %p103 = por %p101, %p102
      %p104 = scmp.ne.s32.totalorder %s93, %s94
      %p105 = scmp.eq.s32.totalorder %s17, 0
      %p106 = por %p104, %p105
      %p107 = scmp.ne.s32.totalorder %s93, %s94
      %p108 = scmp.eq.s32.totalorder %s18, 1
      %p109 = por %p107, %p108
      %p111 = scmp.ne.s32.totalorder %s94, %s110
      %p112 = scmp.eq.s32.totalorder %s18, 0
      %p113 = por %p111, %p112
      %p114 = scmp.le.s32.totalorder 1, %s12
      %p115 = scmp.lt.s32.totalorder %s12, 3
      %p116 = pnand %p114, %p115
      %p117 = pneg %p116
      // Predicated region
      $region9: #{_lambda_.9} parent=5 // pred_check
        _
      $region10: #{_lambda_.9} parent=5 // pred_check_branch
        %119 = sbr.rel (%p116) target = $region12
      $region11: #{_lambda_.9} parent=5 // pred_region
        %s120 = ssub.s32 %s12, 1
        // Predicated region
        $region13: #{_lambda_.9} parent=11 // pred_check
          %p121 = pneg %p59
        $region14: #{_lambda_.9} parent=11 // pred_check_branch
          %123 = sbr.rel (%p121) target = $region16
        $region15: #{_lambda_.9} parent=11 // pred_region
          _
        $region16: #{_lambda_.9} parent=11 // pred_fallthru
          _
        // Predicated region
        $region17: #{_lambda_.9} parent=11 // pred_check
          %p124 = pneg %p80
        $region18: #{_lambda_.9} parent=11 // pred_check_branch
          %126 = sbr.rel (%p124) target = $region20
        $region19: #{_lambda_.9} parent=11 // pred_region
          _
        $region20: #{_lambda_.9} parent=11 // pred_fallthru
          _
      $region12: #{_lambda_.9} parent=5 // pred_fallthru
        _
      %p127 = scmp.lt.s32.totalorder %s12, 2
      // Predicated region
      $region21: #{_lambda_.9} parent=5 // pred_check
        %p128 = pneg %p127
      $region22: #{_lambda_.9} parent=5 // pred_check_branch
        %130 = sbr.rel (%p128) target = $region24
      $region23: #{_lambda_.9} parent=5 // pred_region
        // Predicated region
        $region25: #{_lambda_.9} parent=23 // pred_check
          %p131 = pneg %p32
        $region26: #{_lambda_.9} parent=23 // pred_check_branch
          %133 = sbr.rel (%p131) target = $region28
        $region27: #{_lambda_.9} parent=23 // pred_region
          %s134 = smul.u32 32, %s12
          %p135 = scmp.lt.s32.totalorder %s134, 63
          %s136 = scalar_select %p135, %s134, 63
          %s137 = smul.addr %s136, 4
          %s138 = scalar_lea.vmem %s0, %s137
          %s139 = smul.u32 32, %s12
        $region28: #{_lambda_.9} parent=23 // pred_fallthru
          _
      $region24: #{_lambda_.9} parent=5 // pred_fallthru
        _
      %p140 = scmp.le.s32.totalorder 1, %s12
      %p141 = scmp.lt.s32.totalorder %s12, 3
      %p142 = pnand %p140, %p141
      %p143 = pneg %p142
      // Predicated region
      $region29: #{_lambda_.9} parent=5 // pred_check
        _
      $region30: #{_lambda_.9} parent=5 // pred_check_branch
        %145 = sbr.rel (%p142) target = $region32
      $region31: #{_lambda_.9} parent=5 // pred_region
        %s146 = ssub.s32 %s12, 1
        %s147 = smul.u32 32, %s17
        %p148 = scmp.lt.s32.totalorder %s147, 63
        %s149 = scalar_select %p148, %s147, 63
        %s150 = smul.addr %s149, 4
        %s151 = scalar_lea.vmem %s0, %s150
        %p152 = pneg %p38
        %p153 = pneg %p35
        %p154 = pneg %p59
        %p155 = pneg %p56
        %p156 = pneg %p80
        %p157 = pneg %p77
        %p158 = pneg %p106
        %p159 = pneg %p103
        %s160 = sand.u32 %s93, 1
        %s161 = scalar_lea.sflag [#allocation3], %s160
        %s162 = sand.u32 %s93, 1
        %s163 = smul.addr %s162, 256
        %s164 = scalar_lea.vmem [#allocation2], %s163
        %s165 = smul.u32 32, %s17
        %p166 = scmp.lt.s32.totalorder %s165, 63
        %s167 = scalar_select %p166, %s165, 63
        %s168 = smul.addr %s167, 4
        %s169 = scalar_lea.vmem %s0, %s168
        %s170 = smul.u32 32, %s17
        %s171 = smul.u32 32, %s17
        %v173 = vld [vmem:[%s169] sm:$0xf]
        %v174 = vld [vmem:[%s169 + $0x4] sm:$0xf]
        %v175 = vld [vmem:[%s169 + $0x8] sm:$0xf]
        %v176 = vld [vmem:[%s169 + $0xc] sm:$0xf]
        %v177 = vld [vmem:[%s169 + $0x10] sm:$0xf]
        %v178 = vld [vmem:[%s169 + $0x14] sm:$0xf]
        %v179 = vld [vmem:[%s169 + $0x18] sm:$0xf]
        %v180 = vld [vmem:[%s169 + $0x1c] sm:$0xf]
        %v181 = vld [vmem:[%s169 + $0x20] sm:$0xf]
        %v182 = vld [vmem:[%s169 + $0x24] sm:$0xf]
        %v183 = vld [vmem:[%s169 + $0x28] sm:$0xf]
        %v184 = vld [vmem:[%s169 + $0x2c] sm:$0xf]
        %v185 = vld [vmem:[%s169 + $0x30] sm:$0xf]
        %v186 = vld [vmem:[%s169 + $0x34] sm:$0xf]
        %v187 = vld [vmem:[%s169 + $0x38] sm:$0xf]
        %v188 = vld [vmem:[%s169 + $0x3c] sm:$0xf]
        %v189 = vld [vmem:[%s169 + $0x40] sm:$0xf]
        %v190 = vld [vmem:[%s169 + $0x44] sm:$0xf]
        %v191 = vld [vmem:[%s169 + $0x48] sm:$0xf]
        %v192 = vld [vmem:[%s169 + $0x4c] sm:$0xf]
        %v193 = vld [vmem:[%s169 + $0x50] sm:$0xf]
        %v194 = vld [vmem:[%s169 + $0x54] sm:$0xf]
        %v195 = vld [vmem:[%s169 + $0x58] sm:$0xf]
        %v196 = vld [vmem:[%s169 + $0x5c] sm:$0xf]
        %v197 = vld [vmem:[%s169 + $0x60] sm:$0xf]
        %v198 = vld [vmem:[%s169 + $0x64] sm:$0xf]
        %v199 = vld [vmem:[%s169 + $0x68] sm:$0xf]
        %v200 = vld [vmem:[%s169 + $0x6c] sm:$0xf]
        %v201 = vld [vmem:[%s169 + $0x70] sm:$0xf]
        %v202 = vld [vmem:[%s169 + $0x74] sm:$0xf]
        %v203 = vld [vmem:[%s169 + $0x78] sm:$0xf]
        %v204 = vld [vmem:[%s169 + $0x7c] sm:$0xf]
        %v205 = vld [vmem:[%s1] sm:$0xf]
        %v206 = vld [vmem:[%s1 + $0x4] sm:$0xf]
        %v207 = vld [vmem:[%s1 + $0x8] sm:$0xf]
        %v208 = vld [vmem:[%s1 + $0xc] sm:$0xf]
        %v209 = vld [vmem:[%s2] sm:$0x1]
        %v211 = vlaneseq
        %v212 = vshrl.u32 %v211, 7
        %v213 = vsub.s32 0, %v212
        %v214 = vrot.slane %v209, %v213
        %v248 = vunpack.c.l.b16 %v173
        %v249 = vunpack.c.l.b16 %v174
        %v250 = vunpack.c.l.b16 %v175
        %v251 = vunpack.c.l.b16 %v176
        %v252 = vunpack.c.l.b16 %v177
        %v253 = vunpack.c.l.b16 %v178
        %v254 = vunpack.c.l.b16 %v179
        %v255 = vunpack.c.l.b16 %v180
        %v256 = vunpack.c.l.b16 %v181
        %v257 = vunpack.c.l.b16 %v182
        %v258 = vunpack.c.l.b16 %v183
        %v259 = vunpack.c.l.b16 %v184
        %v260 = vunpack.c.l.b16 %v185
        %v261 = vunpack.c.l.b16 %v186
        %v262 = vunpack.c.l.b16 %v187
        %v263 = vunpack.c.l.b16 %v188
        %v264 = vunpack.c.l.b16 %v189
        %v265 = vunpack.c.l.b16 %v190
        %v266 = vunpack.c.l.b16 %v191
        %v267 = vunpack.c.l.b16 %v192
        %v268 = vunpack.c.l.b16 %v193
        %v269 = vunpack.c.l.b16 %v194
        %v270 = vunpack.c.l.b16 %v195
        %v271 = vunpack.c.l.b16 %v196
        %v272 = vunpack.c.l.b16 %v197
        %v273 = vunpack.c.l.b16 %v198
        %v274 = vunpack.c.l.b16 %v199
        %v275 = vunpack.c.l.b16 %v200
        %v276 = vunpack.c.l.b16 %v201
        %v277 = vunpack.c.l.b16 %v202
        %v278 = vunpack.c.l.b16 %v203
        %v279 = vunpack.c.l.b16 %v204
        %v280 = vpack.c.b16 %v249, %v248
        %v281 = vpack.c.b16 %v251, %v250
        %v282 = vpack.c.b16 %v253, %v252
        %v283 = vpack.c.b16 %v255, %v254
        %v284 = vpack.c.b16 %v257, %v256
        %v285 = vpack.c.b16 %v259, %v258
        %v286 = vpack.c.b16 %v261, %v260
        %v287 = vpack.c.b16 %v263, %v262
        %v288 = vpack.c.b16 %v265, %v264
        %v289 = vpack.c.b16 %v267, %v266
        %v290 = vpack.c.b16 %v269, %v268
        %v291 = vpack.c.b16 %v271, %v270
        %v292 = vpack.c.b16 %v273, %v272
        %v293 = vpack.c.b16 %v275, %v274
        %v294 = vpack.c.b16 %v277, %v276
        %v295 = vpack.c.b16 %v279, %v278
        %v300 = vunpack.c.l.b16 %v205
        %v301 = vunpack.c.l.b16 %v206
        %v302 = vunpack.c.l.b16 %v207
        %v303 = vunpack.c.l.b16 %v208
        %v304 = vpack.c.b16 %v301, %v300
        %v305 = vpack.c.b16 %v303, %v302
        %vm308 = vcmask 261120
        %v310 = vsel %vm308, %v280, 0
        %v313 = vsel %vm308, %v281, 0
        %v316 = vsel %vm308, %v282, 0
        %v319 = vsel %vm308, %v283, 0
        %v322 = vsel %vm308, %v284, 0
        %v325 = vsel %vm308, %v285, 0
        %v328 = vsel %vm308, %v286, 0
        %v331 = vsel %vm308, %v287, 0
        %v334 = vsel %vm308, %v288, 0
        %v337 = vsel %vm308, %v289, 0
        %v340 = vsel %vm308, %v290, 0
        %v343 = vsel %vm308, %v291, 0
        %v346 = vsel %vm308, %v292, 0
        %v349 = vsel %vm308, %v293, 0
        %v352 = vsel %vm308, %v294, 0
        %v355 = vsel %vm308, %v295, 0
        %357 = vmatprep.subr.bf16.mxu0 0
        %358 = vmatpush1.bf16.msra.mxu0 0
        %359 = vmatprep.subr.bf16.mxu0 0
        %360 = vmatpush1.bf16.msra.mxu0 0
        %361 = vmatprep.subr.bf16.mxu0 0
        %362 = vmatpush1.bf16.msra.mxu0 0
        %363 = vmatprep.subr.bf16.mxu0 0
        %364 = vmatpush1.bf16.msra.mxu0 0
        %365 = vmatprep.subr.bf16.mxu0 0
        %366 = vmatpush1.bf16.msra.mxu0 0
        %367 = vmatprep.subr.bf16.mxu0 0
        %368 = vmatpush1.bf16.msra.mxu0 0
        %369 = vmatprep.subr.bf16.mxu0 0
        %370 = vmatpush1.bf16.msra.mxu0 %v305
        %371 = vmatprep.subr.bf16.mxu0 0
        %372 = vmatpush1.bf16.msra.mxu0 %v304
        %373 = vmatprep.subr.bf16.mxu0 0
        %374 = vmatpush2.bf16.msra.mxu0 0
        %375 = vmatprep.subr.bf16.mxu0 0
        %376 = vmatpush2.bf16.msra.mxu0 0
        %377 = vmatprep.subr.bf16.mxu0 0
        %378 = vmatpush2.bf16.msra.mxu0 0
        %379 = vmatprep.subr.bf16.mxu0 0
        %380 = vmatpush2.bf16.msra.mxu0 0
        %381 = vmatprep.subr.bf16.mxu0 0
        %382 = vmatpush2.bf16.msra.mxu0 0
        %383 = vmatprep.subr.bf16.mxu0 0
        %384 = vmatpush2.bf16.msra.mxu0 0
        %385 = vmatprep.subr.bf16.mxu0 0
        %386 = vmatpush2.bf16.msra.mxu0 0
        %387 = vmatprep.subr.bf16.mxu0 0
        %388 = vmatpush2.bf16.msra.mxu0 0
        %389 = vmatprep.mubr.bf16.mxu0 0
        %390 = vmatmul.mubr.bf16.gmra.mxu0 %v310
        %v391 = vpop.f32.mrf.mxu0
        %v392 = vadd.f32 %v214, %v391
        %v393 = vpop.f32.mrf.mxu0
        %v394 = vpop.f32.mrf.mxu0
        %v395 = vadd.f32 %v214, %v394
        %v396 = vpop.f32.mrf.mxu0
        %397 = vmatprep.mubr.bf16.mxu0 0
        %398 = vmatmul.mubr.bf16.gmra.mxu0 %v313
        %v399 = vpop.f32.mrf.mxu0
        %v400 = vadd.f32 %v214, %v399
        %v401 = vpop.f32.mrf.mxu0
        %v402 = vpop.f32.mrf.mxu0
        %v403 = vadd.f32 %v214, %v402
        %v404 = vpop.f32.mrf.mxu0
        %405 = vmatprep.mubr.bf16.mxu0 0
        %406 = vmatmul.mubr.bf16.gmra.mxu0 %v316
        %v407 = vpop.f32.mrf.mxu0
        %v408 = vadd.f32 %v214, %v407
        %v409 = vpop.f32.mrf.mxu0
        %v410 = vpop.f32.mrf.mxu0
        %v411 = vadd.f32 %v214, %v410
        %v412 = vpop.f32.mrf.mxu0
        %413 = vmatprep.mubr.bf16.mxu0 0
        %414 = vmatmul.mubr.bf16.gmra.mxu0 %v319
        %v415 = vpop.f32.mrf.mxu0
        %v416 = vadd.f32 %v214, %v415
        %v417 = vpop.f32.mrf.mxu0
        %v418 = vpop.f32.mrf.mxu0
        %v419 = vadd.f32 %v214, %v418
        %v420 = vpop.f32.mrf.mxu0
        %421 = vmatprep.mubr.bf16.mxu0 0
        %422 = vmatmul.mubr.bf16.gmra.mxu0 %v322
        %v423 = vpop.f32.mrf.mxu0
        %v424 = vadd.f32 %v214, %v423
        %v425 = vpop.f32.mrf.mxu0
        %v426 = vpop.f32.mrf.mxu0
        %v427 = vadd.f32 %v214, %v426
        %v428 = vpop.f32.mrf.mxu0
        %429 = vmatprep.mubr.bf16.mxu0 0
        %430 = vmatmul.mubr.bf16.gmra.mxu0 %v325
        %v431 = vpop.f32.mrf.mxu0
        %v432 = vadd.f32 %v214, %v431
        %v433 = vpop.f32.mrf.mxu0
        %v434 = vpop.f32.mrf.mxu0
        %v435 = vadd.f32 %v214, %v434
        %v436 = vpop.f32.mrf.mxu0
        %437 = vmatprep.mubr.bf16.mxu0 0
        %438 = vmatmul.mubr.bf16.gmra.mxu0 %v328
        %v439 = vpop.f32.mrf.mxu0
        %v440 = vadd.f32 %v214, %v439
        %v441 = vpop.f32.mrf.mxu0
        %v442 = vpop.f32.mrf.mxu0
        %v443 = vadd.f32 %v214, %v442
        %v444 = vpop.f32.mrf.mxu0
        %445 = vmatprep.mubr.bf16.mxu0 0
        %446 = vmatmul.mubr.bf16.gmra.mxu0 %v331
        %v447 = vpop.f32.mrf.mxu0
        %v448 = vadd.f32 %v214, %v447
        %v449 = vpop.f32.mrf.mxu0
        %v450 = vpop.f32.mrf.mxu0
        %v451 = vadd.f32 %v214, %v450
        %v452 = vpop.f32.mrf.mxu0
        %453 = vmatprep.mubr.bf16.mxu0 0
        %454 = vmatmul.mubr.bf16.gmra.mxu0 %v334
        %v455 = vpop.f32.mrf.mxu0
        %v456 = vadd.f32 %v214, %v455
        %v457 = vpop.f32.mrf.mxu0
        %v458 = vpop.f32.mrf.mxu0
        %v459 = vadd.f32 %v214, %v458
        %v460 = vpop.f32.mrf.mxu0
        %461 = vmatprep.mubr.bf16.mxu0 0
        %462 = vmatmul.mubr.bf16.gmra.mxu0 %v337
        %v463 = vpop.f32.mrf.mxu0
        %v464 = vadd.f32 %v214, %v463
        %v465 = vpop.f32.mrf.mxu0
        %v466 = vpop.f32.mrf.mxu0
        %v467 = vadd.f32 %v214, %v466
        %v468 = vpop.f32.mrf.mxu0
        %469 = vmatprep.mubr.bf16.mxu0 0
        %470 = vmatmul.mubr.bf16.gmra.mxu0 %v340
        %v471 = vpop.f32.mrf.mxu0
        %v472 = vadd.f32 %v214, %v471
        %v473 = vpop.f32.mrf.mxu0
        %v474 = vpop.f32.mrf.mxu0
        %v475 = vadd.f32 %v214, %v474
        %v476 = vpop.f32.mrf.mxu0
        %477 = vmatprep.mubr.bf16.mxu0 0
        %478 = vmatmul.mubr.bf16.gmra.mxu0 %v343
        %v479 = vpop.f32.mrf.mxu0
        %v480 = vadd.f32 %v214, %v479
        %v481 = vpop.f32.mrf.mxu0
        %v482 = vpop.f32.mrf.mxu0
        %v483 = vadd.f32 %v214, %v482
        %v484 = vpop.f32.mrf.mxu0
        %485 = vmatprep.mubr.bf16.mxu0 0
        %486 = vmatmul.mubr.bf16.gmra.mxu0 %v346
        %v487 = vpop.f32.mrf.mxu0
        %v488 = vadd.f32 %v214, %v487
        %v489 = vpop.f32.mrf.mxu0
        %v490 = vpop.f32.mrf.mxu0
        %v491 = vadd.f32 %v214, %v490
        %v492 = vpop.f32.mrf.mxu0
        %493 = vmatprep.mubr.bf16.mxu0 0
        %494 = vmatmul.mubr.bf16.gmra.mxu0 %v349
        %v495 = vpop.f32.mrf.mxu0
        %v496 = vadd.f32 %v214, %v495
        %v497 = vpop.f32.mrf.mxu0
        %v498 = vpop.f32.mrf.mxu0
        %v499 = vadd.f32 %v214, %v498
        %v500 = vpop.f32.mrf.mxu0
        %501 = vmatprep.mubr.bf16.mxu0 0
        %502 = vmatmul.mubr.bf16.gmra.mxu0 %v352
        %v503 = vpop.f32.mrf.mxu0
        %v504 = vadd.f32 %v214, %v503
        %v505 = vpop.f32.mrf.mxu0
        %v506 = vpop.f32.mrf.mxu0
        %v507 = vadd.f32 %v214, %v506
        %v508 = vpop.f32.mrf.mxu0
        %509 = vmatprep.mubr.bf16.mxu0 0
        %510 = vmatmul.mubr.bf16.gmra.mxu0 %v355
        %v511 = vpop.f32.mrf.mxu0
        %v512 = vadd.f32 %v214, %v511
        %v513 = vpop.f32.mrf.mxu0
        %v514 = vpop.f32.mrf.mxu0
        %v515 = vadd.f32 %v214, %v514
        %v516 = vpop.f32.mrf.mxu0
        %517 = vdwg.mxu0
        %518 = vst.msk [vmem:[%s164] sm:$0xff] %vm308, %v392
        %519 = vst.msk [vmem:[%s164 + $0x8] sm:$0xff] %vm308, %v395
        %520 = vst.msk [vmem:[%s164 + $0x10] sm:$0xff] %vm308, %v400
        %521 = vst.msk [vmem:[%s164 + $0x18] sm:$0xff] %vm308, %v403
        %522 = vst.msk [vmem:[%s164 + $0x20] sm:$0xff] %vm308, %v408
        %523 = vst.msk [vmem:[%s164 + $0x28] sm:$0xff] %vm308, %v411
        %524 = vst.msk [vmem:[%s164 + $0x30] sm:$0xff] %vm308, %v416
        %525 = vst.msk [vmem:[%s164 + $0x38] sm:$0xff] %vm308, %v419
        %526 = vst.msk [vmem:[%s164 + $0x40] sm:$0xff] %vm308, %v424
        %527 = vst.msk [vmem:[%s164 + $0x48] sm:$0xff] %vm308, %v427
        %528 = vst.msk [vmem:[%s164 + $0x50] sm:$0xff] %vm308, %v432
        %529 = vst.msk [vmem:[%s164 + $0x58] sm:$0xff] %vm308, %v435
        %530 = vst.msk [vmem:[%s164 + $0x60] sm:$0xff] %vm308, %v440
        %531 = vst.msk [vmem:[%s164 + $0x68] sm:$0xff] %vm308, %v443
        %532 = vst.msk [vmem:[%s164 + $0x70] sm:$0xff] %vm308, %v448
        %533 = vst.msk [vmem:[%s164 + $0x78] sm:$0xff] %vm308, %v451
        %534 = vst.msk [vmem:[%s164 + $0x80] sm:$0xff] %vm308, %v456
        %535 = vst.msk [vmem:[%s164 + $0x88] sm:$0xff] %vm308, %v459
        %536 = vst.msk [vmem:[%s164 + $0x90] sm:$0xff] %vm308, %v464
        %537 = vst.msk [vmem:[%s164 + $0x98] sm:$0xff] %vm308, %v467
        %538 = vst.msk [vmem:[%s164 + $0xa0] sm:$0xff] %vm308, %v472
        %539 = vst.msk [vmem:[%s164 + $0xa8] sm:$0xff] %vm308, %v475
        %540 = vst.msk [vmem:[%s164 + $0xb0] sm:$0xff] %vm308, %v480
        %541 = vst.msk [vmem:[%s164 + $0xb8] sm:$0xff] %vm308, %v483
        %542 = vst.msk [vmem:[%s164 + $0xc0] sm:$0xff] %vm308, %v488
        %543 = vst.msk [vmem:[%s164 + $0xc8] sm:$0xff] %vm308, %v491
        %544 = vst.msk [vmem:[%s164 + $0xd0] sm:$0xff] %vm308, %v496
        %545 = vst.msk [vmem:[%s164 + $0xd8] sm:$0xff] %vm308, %v499
        %546 = vst.msk [vmem:[%s164 + $0xe0] sm:$0xff] %vm308, %v504
        %547 = vst.msk [vmem:[%s164 + $0xe8] sm:$0xff] %vm308, %v507
        %548 = vst.msk [vmem:[%s164 + $0xf0] sm:$0xff] %vm308, %v512
        %549 = vst.msk [vmem:[%s164 + $0xf8] sm:$0xff] %vm308, %v515
        %s550 = sand.u32 %s93, 1
        %s551 = scalar_lea.sflag [#allocation3], %s550
        %s552 = sand.u32 %s93, 1
        %s553 = smul.addr %s552, 256
        %s554 = scalar_lea.vmem [#allocation2], %s553
        // Predicated region
        $region33: #{_lambda_.9} parent=31 // pred_check
          %p555 = pneg %p103
        $region34: #{_lambda_.9} parent=31 // pred_check_branch
          %557 = sbr.rel (%p555) target = $region36
        $region35: #{_lambda_.9} parent=31 // pred_region
          %s558 = smul.u32 32, %s17
          %s560 = ssub.s32 4096, 4096
          %561 = vsyncadd %s551, %s560
          %s562 = smul.addr %s558, 128
          %s563 = scalar_lea.hbm %s3, %s562
          %s564 = sshll.u32 %s554, 4
          %s565 = int_to_ptr.vmem [resolvable:$true] %s564
          %570 = dma.vmem_to_hbm [thread:$0]  %s565, 4096, %s563, %s551, 128, 128, 8
        $region36: #{_lambda_.9} parent=31 // pred_fallthru
          _
      $region32: #{_lambda_.9} parent=5 // pred_fallthru
        _
      %p571 = scmp.le.s32.totalorder 2, %s12
      // Predicated region
      $region37: #{_lambda_.9} parent=5 // pred_check
        %p572 = pneg %p571
      $region38: #{_lambda_.9} parent=5 // pred_check_branch
        %574 = sbr.rel (%p572) target = $region40
      $region39: #{_lambda_.9} parent=5 // pred_region
        %s575 = ssub.s32 %s12, 2
        // Predicated region
        $region41: #{_lambda_.9} parent=39 // pred_check
          %p576 = pneg %p109
        $region42: #{_lambda_.9} parent=39 // pred_check_branch
          %578 = sbr.rel (%p576) target = $region44
        $region43: #{_lambda_.9} parent=39 // pred_region
          %s579 = sand.u32 %s94, 1
          %s580 = scalar_lea.sflag [#allocation3], %s579
          %s581 = sand.u32 %s94, 1
          %s582 = smul.addr %s581, 256
          %s583 = scalar_lea.vmem [#allocation2], %s582
          %584 = dma.done %s580, 4096
        $region44: #{_lambda_.9} parent=39 // pred_fallthru
          _
      $region40: #{_lambda_.9} parent=5 // pred_fallthru
        _
    $region6: #{_lambda_.9} parent=1 // loop_footer
      %s16 = sadd.s32 1, %s12
    $region7: #{_lambda_.9} parent=1 // loop_footer_branch
      %11 = sbr.rel target = $region3
    $region8: #{_lambda_.9} parent=1 // loop_exit
      _
    %585 = vsyncpa [#allocation3], 1
    %s586 = scalar_lea.sflag [#allocation3], 1
    %587 = vsyncpa %s586, 1

</llo_original>
